<compile_context>
chip_gen: v6e
topology: v6e:2x2x1
jax: 0.10.0
libtpu: 0.0.40
codegen_flags: <defaults>
</compile_context>

<pallas_src>
import functools
import numpy as np
import jax
import jax.numpy as jnp
from jax import lax
from jax.experimental import pallas as pl
from jax.experimental.pallas import tpu as pltpu

EPS = 1e-5
LEAKY_SLOPE = 0.01  # F.leaky_relu default


def _round_up(x, m):
    return (x + m - 1) // m * m


def _pick_m_tiling(M):
    """Adaptive M tile: pad M only to a multiple of 8, cap the tile at 512 rows."""
    Mp = _round_up(M, 8)
    if Mp <= 512:
        return Mp, Mp
    for tm in (512, 256, 128):
        if Mp % tm == 0:
            return Mp, tm
    Mp = _round_up(M, 128)
    return Mp, 128


# ------------------------------------------------------------------
# Pallas kernels: fused matmul + bias (+ leaky_relu) (+ folded BN affine)
# ------------------------------------------------------------------
def _mm_kernel(x_ref, w_ref, b_ref, o_ref, *, act, slope):
    acc = jnp.dot(x_ref[...], w_ref[...], preferred_element_type=jnp.float32)
    acc = acc + b_ref[...]
    if act:
        acc = jnp.where(acc >= 0.0, acc, slope * acc)
    o_ref[...] = acc.astype(o_ref.dtype)


def _mm_bn_kernel(x_ref, w_ref, b_ref, s_ref, t_ref, o_ref, *, act, slope):
    acc = jnp.dot(x_ref[...], w_ref[...], preferred_element_type=jnp.float32)
    acc = acc + b_ref[...]
    if act:
        acc = jnp.where(acc >= 0.0, acc, slope * acc)
    acc = acc * s_ref[...] + t_ref[...]          # eval-mode BatchNorm (applied AFTER the act)
    o_ref[...] = acc.astype(o_ref.dtype)


# ------------------------------------------------------------------
# Pallas wrapper
# ------------------------------------------------------------------
def matmul_fused(x, w, b, bn=None, act=True, out_dtype=jnp.bfloat16):
    """out = [bn_scale*]leaky_relu(x @ w + b)[+bn_shift];  x:(M,K)  w:(K,N)."""
    M, K = x.shape
    Kw, N = w.shape
    assert Kw == K
    Mp, tm = _pick_m_tiling(M)

    xp = x if Mp == M else jnp.pad(x, ((0, Mp - M), (0, 0)))
    xp = xp.astype(jnp.bfloat16)                 # bf16 on the MXU path
    wp = w.astype(jnp.bfloat16)
    bp = b.reshape(1, N).astype(jnp.float32)

    in_specs = [
        pl.BlockSpec((tm, K), lambda i: (i, 0)),   # full-K block (no K padding needed)
        pl.BlockSpec((K, N), lambda i: (0, 0)),    # weight resident across M tiles
        pl.BlockSpec((1, N), lambda i: (0, 0)),
    ]
    args = [xp, wp, bp]

    if bn is not None:
        s, t = bn
        args += [s.reshape(1, N).astype(jnp.float32),
                 t.reshape(1, N).astype(jnp.float32)]
        in_specs += [pl.BlockSpec((1, N), lambda i: (0, 0)),
                     pl.BlockSpec((1, N), lambda i: (0, 0))]
        kernel = functools.partial(_mm_bn_kernel, act=act, slope=LEAKY_SLOPE)
    else:
        kernel = functools.partial(_mm_kernel, act=act, slope=LEAKY_SLOPE)

    out_itemsize = jnp.dtype(out_dtype).itemsize
    cost = pl.CostEstimate(
        flops=2 * Mp * K * N,
        transcendentals=0,
        bytes_accessed=int(Mp * K * 2 + K * N * 2 + Mp * N * out_itemsize),
    )

    out = pl.pallas_call(
        kernel,
        out_shape=jax.ShapeDtypeStruct((Mp, N), out_dtype),
        grid=(Mp // tm,),
        in_specs=in_specs,
        out_specs=pl.BlockSpec((tm, N), lambda i: (i, 0)),
        compiler_params=pltpu.CompilerParams(dimension_semantics=("parallel",)),
        cost_estimate=cost,
    )(*args)
    return out if Mp == M else out[:M]


# ------------------------------------------------------------------
# Convolution wrappers (NHWC activations)
# ------------------------------------------------------------------
def conv1x1(x, w, b, act, bn=None, out_dtype=jnp.bfloat16):
    N, H, W, Cin = x.shape
    Cout = w.shape[-1]
    out = matmul_fused(x.reshape(N * H * W, Cin), w.reshape(Cin, Cout), b,
                       bn=bn, act=act, out_dtype=out_dtype)
    return out.reshape(N, H, W, Cout)


def conv3x3(x, w, b, act, bn=None, out_dtype=jnp.bfloat16):
    """3x3, stride 1, padding 1 conv via im2col + fused matmul."""
    N, H, W, Cin = x.shape
    Cout = w.shape[-1]
    xp = jnp.pad(x, ((0, 0), (1, 1), (1, 1), (0, 0)))
    cols = [xp[:, i:i + H, j:j + W, :] for i in range(3) for j in range(3)]
    patches = jnp.concatenate(cols, axis=-1).reshape(N * H * W, 9 * Cin)
    out = matmul_fused(patches, w.reshape(9 * Cin, Cout), b,
                       bn=bn, act=act, out_dtype=out_dtype)
    return out.reshape(N, H, W, Cout)


# ------------------------------------------------------------------
# Bilinear 2x upsample (align_corners=False), matches F.interpolate
# ------------------------------------------------------------------
def upsample2x_bilinear(x):
    """x: NHWC -> NHWC with H,W doubled. Pure data-movement glue (separable)."""
    def up_axis(a, axis):
        n = a.shape[axis]
        first = lax.slice_in_dim(a, 0, 1, axis=axis)
        last = lax.slice_in_dim(a, n - 1, n, axis=axis)
        prev = jnp.concatenate([first, lax.slice_in_dim(a, 0, n - 1, axis=axis)], axis=axis)
        nxt = jnp.concatenate([lax.slice_in_dim(a, 1, n, axis=axis), last], axis=axis)
        even = 0.25 * prev + 0.75 * a           # out[2k]   = .25*in[k-1] + .75*in[k]  (clamped)
        odd = 0.75 * a + 0.25 * nxt             # out[2k+1] = .75*in[k]   + .25*in[k+1](clamped)
        out = jnp.stack([even, odd], axis=axis + 1)
        new_shape = a.shape[:axis] + (2 * n,) + a.shape[axis + 1:]
        return out.reshape(new_shape)
    x = up_axis(x, 1)
    x = up_axis(x, 2)
    return x


# ------------------------------------------------------------------
# Module forward (all params are jnp arrays; no python scalars in the pytree)
# ------------------------------------------------------------------
def up_block_forward(p, prev, x):
    x = upsample2x_bilinear(x)
    x = jnp.concatenate([x, prev], axis=-1)
    w11, b11 = p["conv11"]
    w12, b12 = p["conv12"]
    x1 = conv1x1(x, w11, b11, act=False)                  # conv11 (no act in between)
    x1 = conv3x3(x1, w12, b12, act=True)                  # lrelu(conv12(conv11(x)))
    x21 = jnp.concatenate([x, x1], axis=-1)
    w21, b21 = p["conv21"]
    w22, b22 = p["conv22"]
    out = conv1x1(x21, w21, b21, act=False)
    out = conv3x3(out, w22, b22, act=True)                # lrelu(conv22(conv21(x21)))
    return out


def conv_block_forward(p, x):
    w1, b1 = p["conv1"]
    w2, b2 = p["conv2"]
    x = conv3x3(x, w1, b1, act=True)
    # conv2 + leaky_relu + folded BatchNorm fused in one kernel epilogue; f32 output.
    x = conv3x3(x, w2, b2, act=True, bn=p["bn"], out_dtype=jnp.float32)
    return x


def decoder_forward(params, skip4, skip3, skip2, skip1, x):
    to_nhwc = lambda a: jnp.transpose(a, (0, 2, 3, 1)).astype(jnp.bfloat16)
    x = to_nhwc(x)
    s4, s3, s2, s1 = map(to_nhwc, (skip4, skip3, skip2, skip1))

    x3 = up_block_forward(params["up4"], s4, x)
    x2 = up_block_forward(params["up3"], s3, x3)
    x1 = up_block_forward(params["up2"], s2, x2)
    xo = up_block_forward(params["up1"], s1, x1)
    o = conv_block_forward(params["final"], xo)
    return jnp.transpose(o, (0, 3, 1, 2))                 # back to NCHW, f32


# ------------------------------------------------------------------
# Channel sizing (mirrors getSizes) and synthetic parameter construction
# ------------------------------------------------------------------
def get_sizes(chz, growth, blks=4):
    enc_inter = np.array([chz * (i + 1) for i in range(blks)])
    enc_op = np.array([int(growth * chz * (i + 1)) for i in range(blks)])
    enc_ip = np.array([chz] + [int(growth * chz * (i + 1)) for i in range(blks - 1)])
    dec_skip = enc_ip[::-1] + enc_inter[::-1]
    dec_ip = enc_op[::-1]
    dec_op = np.append(enc_op[::-1][1:], chz)
    return dec_skip, dec_ip, dec_op


def init_params(key, chz, out_c, growth):
    dec_skip, dec_ip, dec_op = get_sizes(chz, growth)
    cnt = [0]

    def nk():
        cnt[0] += 1
        return jax.random.fold_in(key, cnt[0])

    def conv(kh, kw, cin, cout):
        fan_in = kh * kw * cin
        w = (jax.random.normal(nk(), (kh, kw, cin, cout), jnp.float32)
             * np.sqrt(2.0 / fan_in))
        b = 0.01 * jax.random.normal(nk(), (cout,), jnp.float32)
        return w.astype(jnp.bfloat16), b            # weights stored bf16 once, at build time

    def bn(c):
        gamma = 1.0 + 0.1 * jax.random.normal(nk(), (c,), jnp.float32)
        beta = 0.1 * jax.random.normal(nk(), (c,), jnp.float32)
        rmean = 0.1 * jax.random.normal(nk(), (c,), jnp.float32)
        rvar = 1.0 + 0.1 * jax.random.uniform(nk(), (c,), jnp.float32)
        scale = gamma / jnp.sqrt(rvar + EPS)
        shift = beta - rmean * scale
        return scale, shift

    def up_blk(skip_c, in_c, out_ch):
        return {
            "conv11": conv(1, 1, skip_c + in_c, out_ch),
            "conv12": conv(3, 3, out_ch, out_ch),
            "conv21": conv(1, 1, skip_c + in_c + out_ch, out_ch),
            "conv22": conv(3, 3, out_ch, out_ch),
        }

    params = {
        "up4": up_blk(int(dec_skip[0]), int(dec_ip[0]), int(dec_op[0])),
        "up3": up_blk(int(dec_skip[1]), int(dec_ip[1]), int(dec_op[1])),
        "up2": up_blk(int(dec_skip[2]), int(dec_ip[2]), int(dec_op[2])),
        "up1": up_blk(int(dec_skip[3]), int(dec_ip[3]), int(dec_op[3])),
        "final": {
            "conv1": conv(3, 3, chz, chz),
            "conv2": conv(3, 3, chz, out_c),
            "bn": bn(out_c),
        },
    }
    return params


if __name__ == "__main__":
    key = jax.random.PRNGKey(0)
    chz, out_c, growth = 8, 3, 1.5
    N, H, W = 2, 32, 32

    dec_skip, dec_ip, dec_op = get_sizes(chz, growth)
    params = init_params(jax.random.fold_in(key, 1), chz, out_c, growth)

    def inp(k, c, h, w):
        return jax.random.normal(jax.random.fold_in(key, k), (N, c, h, w), jnp.float32)

    x = inp(10, int(dec_ip[0]), H // 16, W // 16)        # deepest feature
    skip4 = inp(11, int(dec_skip[0]), H // 8, W // 8)
    skip3 = inp(12, int(dec_skip[1]), H // 4, W // 4)
    skip2 = inp(13, int(dec_skip[2]), H // 2, W // 2)
    skip1 = inp(14, int(dec_skip[3]), H, W)

    fwd = jax.jit(decoder_forward)
    out = jax.block_until_ready(fwd(params, skip4, skip3, skip2, skip1, x))

    assert out.shape == (N, out_c, H, W), out.shape
    assert out.dtype == jnp.float32
    assert bool(jnp.all(jnp.isfinite(out)))
    print("KERNEL_OK")
</pallas_src>

<mosaic_0001>
module attributes {stable_mosaic.version = 11 : i64} {
  func.func @_mm_kernel(%arg0: i32, %arg1: memref<32x116xbf16, #tpu.memory_space<vmem>>, %arg2: memref<116x36xbf16, #tpu.memory_space<vmem>>, %arg3: memref<1x36xf32, #tpu.memory_space<vmem>>, %arg4: memref<32x36xbf16, #tpu.memory_space<vmem>>) attributes {dimension_semantics = [#tpu.dimension_semantics<parallel>], iteration_bounds = array<i64: 1>, scalar_prefetch = 0 : i64, scratch_operands = 0 : i64, tpu.core_type = #tpu.core_type<tc>, window_params = [{transform_indices = @transform_0, window_bounds = array<i64: 32, 116>}, {pipeline_mode = #tpu.pipeline_mode<synchronous>, transform_indices = @transform_1, window_bounds = array<i64: 116, 36>}, {pipeline_mode = #tpu.pipeline_mode<synchronous>, transform_indices = @transform_2, window_bounds = array<i64: 1, 36>}, {transform_indices = @transform_3, window_bounds = array<i64: 32, 36>}]} {
    %c0 = arith.constant 0 : index
    %c0_0 = arith.constant 0 : index
    %0 = vector.load %arg1[%c0, %c0_0] : memref<32x116xbf16, #tpu.memory_space<vmem>>, vector<32x116xbf16>
    %c0_1 = arith.constant 0 : index
    %c0_2 = arith.constant 0 : index
    %1 = vector.load %arg2[%c0_1, %c0_2] : memref<116x36xbf16, #tpu.memory_space<vmem>>, vector<116x36xbf16>
    %cst = arith.constant dense<0.000000e+00> : vector<32x36xf32>
    %2 = tpu.matmul %0, %1, %cst {dimension_numbers = #tpu.dot_dimension_numbers<[1], [0], [0], [1], [0, 0, 1, 1], [], []>} : vector<32x116xbf16>, vector<116x36xbf16>, vector<32x36xf32> -> vector<32x36xf32>
    %c0_3 = arith.constant 0 : index
    %c0_4 = arith.constant 0 : index
    %3 = vector.load %arg3[%c0_3, %c0_4] : memref<1x36xf32, #tpu.memory_space<vmem>>, vector<1x36xf32>
    %4 = vector.broadcast %3 : vector<1x36xf32> to vector<32x36xf32>
    %5 = arith.addf %2, %4 : vector<32x36xf32>
    %6 = arith.truncf %5 : vector<32x36xf32> to vector<32x36xbf16>
    %c0_5 = arith.constant 0 : index
    %c0_6 = arith.constant 0 : index
    %7 = vector.load %arg4[%c0_5, %c0_6] : memref<32x36xbf16, #tpu.memory_space<vmem>>, vector<32x36xbf16>
    tpu.vector_store %arg4[%c0_5, %c0_6], %6 {strides = array<i32>} : memref<32x36xbf16, #tpu.memory_space<vmem>>, vector<32x36xbf16>,
    return
  }
  func.func @transform_0(%arg0: i32) -> (i32, i32) {
    %c0_i32 = arith.constant 0 : i32
    %c0_i32_0 = arith.constant 0 : i32
    return %arg0, %c0_i32 : i32, i32
  }
  func.func @transform_1(%arg0: i32) -> (i32, i32) {
    %c0_i32 = arith.constant 0 : i32
    %c0_i32_0 = arith.constant 0 : i32
    %c0_i32_1 = arith.constant 0 : i32
    return %c0_i32, %c0_i32_0 : i32, i32
  }
  func.func @transform_2(%arg0: i32) -> (i32, i32) {
    %c0_i32 = arith.constant 0 : i32
    %c0_i32_0 = arith.constant 0 : i32
    %c0_i32_1 = arith.constant 0 : i32
    return %c0_i32, %c0_i32_0 : i32, i32
  }
  func.func @transform_3(%arg0: i32) -> (i32, i32) {
    %c0_i32 = arith.constant 0 : i32
    %c0_i32_0 = arith.constant 0 : i32
    return %arg0, %c0_i32 : i32, i32
  }
}

module attributes {stable_mosaic.version = 11 : i64} {
  func.func @_mm_kernel(%arg0: i32, %arg1: memref<32x324xbf16, #tpu.memory_space<vmem>>, %arg2: memref<324x36xbf16, #tpu.memory_space<vmem>>, %arg3: memref<1x36xf32, #tpu.memory_space<vmem>>, %arg4: memref<32x36xbf16, #tpu.memory_space<vmem>>) attributes {dimension_semantics = [#tpu.dimension_semantics<parallel>], iteration_bounds = array<i64: 1>, scalar_prefetch = 0 : i64, scratch_operands = 0 : i64, tpu.core_type = #tpu.core_type<tc>, window_params = [{transform_indices = @transform_0, window_bounds = array<i64: 32, 324>}, {pipeline_mode = #tpu.pipeline_mode<synchronous>, transform_indices = @transform_1, window_bounds = array<i64: 324, 36>}, {pipeline_mode = #tpu.pipeline_mode<synchronous>, transform_indices = @transform_2, window_bounds = array<i64: 1, 36>}, {transform_indices = @transform_3, window_bounds = array<i64: 32, 36>}]} {
    %c0 = arith.constant 0 : index
    %c0_0 = arith.constant 0 : index
    %0 = vector.load %arg1[%c0, %c0_0] : memref<32x324xbf16, #tpu.memory_space<vmem>>, vector<32x324xbf16>
    %c0_1 = arith.constant 0 : index
    %c0_2 = arith.constant 0 : index
    %1 = vector.load %arg2[%c0_1, %c0_2] : memref<324x36xbf16, #tpu.memory_space<vmem>>, vector<324x36xbf16>
    %cst = arith.constant dense<0.000000e+00> : vector<32x36xf32>
    %2 = tpu.matmul %0, %1, %cst {dimension_numbers = #tpu.dot_dimension_numbers<[1], [0], [0], [1], [0, 0, 1, 1], [], []>} : vector<32x324xbf16>, vector<324x36xbf16>, vector<32x36xf32> -> vector<32x36xf32>
    %c0_3 = arith.constant 0 : index
    %c0_4 = arith.constant 0 : index
    %3 = vector.load %arg3[%c0_3, %c0_4] : memref<1x36xf32, #tpu.memory_space<vmem>>, vector<1x36xf32>
    %4 = vector.broadcast %3 : vector<1x36xf32> to vector<32x36xf32>
    %5 = arith.addf %2, %4 : vector<32x36xf32>
    %cst_5 = arith.constant 0.000000e+00 : f32
    %6 = vector.broadcast %cst_5 : f32 to vector<32x36xf32>
    %7 = arith.cmpf oge, %5, %6 : vector<32x36xf32>
    %cst_6 = arith.constant 0.00999999977 : f32
    %8 = vector.broadcast %cst_6 : f32 to vector<32x36xf32>
    %9 = arith.mulf %8, %5 : vector<32x36xf32>
    %10 = arith.select %7, %5, %9 : vector<32x36xi1>, vector<32x36xf32>
    %11 = arith.truncf %10 : vector<32x36xf32> to vector<32x36xbf16>
    %c0_7 = arith.constant 0 : index
    %c0_8 = arith.constant 0 : index
    %12 = vector.load %arg4[%c0_7, %c0_8] : memref<32x36xbf16, #tpu.memory_space<vmem>>, vector<32x36xbf16>
    tpu.vector_store %arg4[%c0_7, %c0_8], %11 {strides = array<i32>} : memref<32x36xbf16, #tpu.memory_space<vmem>>, vector<32x36xbf16>,
    return
  }
  func.func @transform_0(%arg0: i32) -> (i32, i32) {
    %c0_i32 = arith.constant 0 : i32
    %c0_i32_0 = arith.constant 0 : i32
    return %arg0, %c0_i32 : i32, i32
  }
  func.func @transform_1(%arg0: i32) -> (i32, i32) {
    %c0_i32 = arith.constant 0 : i32
    %c0_i32_0 = arith.constant 0 : i32
    %c0_i32_1 = arith.constant 0 : i32
    return %c0_i32, %c0_i32_0 : i32, i32
  }
  func.func @transform_2(%arg0: i32) -> (i32, i32) {
    %c0_i32 = arith.constant 0 : i32
    %c0_i32_0 = arith.constant 0 : i32
    %c0_i32_1 = arith.constant 0 : i32
    return %c0_i32, %c0_i32_0 : i32, i32
  }
  func.func @transform_3(%arg0: i32) -> (i32, i32) {
    %c0_i32 = arith.constant 0 : i32
    %c0_i32_0 = arith.constant 0 : i32
    return %arg0, %c0_i32 : i32, i32
  }
}

module attributes {stable_mosaic.version = 11 : i64} {
  func.func @_mm_kernel(%arg0: i32, %arg1: memref<32x152xbf16, #tpu.memory_space<vmem>>, %arg2: memref<152x36xbf16, #tpu.memory_space<vmem>>, %arg3: memref<1x36xf32, #tpu.memory_space<vmem>>, %arg4: memref<32x36xbf16, #tpu.memory_space<vmem>>) attributes {dimension_semantics = [#tpu.dimension_semantics<parallel>], iteration_bounds = array<i64: 1>, scalar_prefetch = 0 : i64, scratch_operands = 0 : i64, tpu.core_type = #tpu.core_type<tc>, window_params = [{transform_indices = @transform_0, window_bounds = array<i64: 32, 152>}, {pipeline_mode = #tpu.pipeline_mode<synchronous>, transform_indices = @transform_1, window_bounds = array<i64: 152, 36>}, {pipeline_mode = #tpu.pipeline_mode<synchronous>, transform_indices = @transform_2, window_bounds = array<i64: 1, 36>}, {transform_indices = @transform_3, window_bounds = array<i64: 32, 36>}]} {
    %c0 = arith.constant 0 : index
    %c0_0 = arith.constant 0 : index
    %0 = vector.load %arg1[%c0, %c0_0] : memref<32x152xbf16, #tpu.memory_space<vmem>>, vector<32x152xbf16>
    %c0_1 = arith.constant 0 : index
    %c0_2 = arith.constant 0 : index
    %1 = vector.load %arg2[%c0_1, %c0_2] : memref<152x36xbf16, #tpu.memory_space<vmem>>, vector<152x36xbf16>
    %cst = arith.constant dense<0.000000e+00> : vector<32x36xf32>
    %2 = tpu.matmul %0, %1, %cst {dimension_numbers = #tpu.dot_dimension_numbers<[1], [0], [0], [1], [0, 0, 1, 1], [], []>} : vector<32x152xbf16>, vector<152x36xbf16>, vector<32x36xf32> -> vector<32x36xf32>
    %c0_3 = arith.constant 0 : index
    %c0_4 = arith.constant 0 : index
    %3 = vector.load %arg3[%c0_3, %c0_4] : memref<1x36xf32, #tpu.memory_space<vmem>>, vector<1x36xf32>
    %4 = vector.broadcast %3 : vector<1x36xf32> to vector<32x36xf32>
    %5 = arith.addf %2, %4 : vector<32x36xf32>
    %6 = arith.truncf %5 : vector<32x36xf32> to vector<32x36xbf16>
    %c0_5 = arith.constant 0 : index
    %c0_6 = arith.constant 0 : index
    %7 = vector.load %arg4[%c0_5, %c0_6] : memref<32x36xbf16, #tpu.memory_space<vmem>>, vector<32x36xbf16>
    tpu.vector_store %arg4[%c0_5, %c0_6], %6 {strides = array<i32>} : memref<32x36xbf16, #tpu.memory_space<vmem>>, vector<32x36xbf16>,
    return
  }
  func.func @transform_0(%arg0: i32) -> (i32, i32) {
    %c0_i32 = arith.constant 0 : i32
    %c0_i32_0 = arith.constant 0 : i32
    return %arg0, %c0_i32 : i32, i32
  }
  func.func @transform_1(%arg0: i32) -> (i32, i32) {
    %c0_i32 = arith.constant 0 : i32
    %c0_i32_0 = arith.constant 0 : i32
    %c0_i32_1 = arith.constant 0 : i32
    return %c0_i32, %c0_i32_0 : i32, i32
  }
  func.func @transform_2(%arg0: i32) -> (i32, i32) {
    %c0_i32 = arith.constant 0 : i32
    %c0_i32_0 = arith.constant 0 : i32
    %c0_i32_1 = arith.constant 0 : i32
    return %c0_i32, %c0_i32_0 : i32, i32
  }
  func.func @transform_3(%arg0: i32) -> (i32, i32) {
    %c0_i32 = arith.constant 0 : i32
    %c0_i32_0 = arith.constant 0 : i32
    return %arg0, %c0_i32 : i32, i32
  }
}

module attributes {stable_mosaic.version = 11 : i64} {
  func.func @_mm_kernel(%arg0: i32, %arg1: memref<128x84xbf16, #tpu.memory_space<vmem>>, %arg2: memref<84x24xbf16, #tpu.memory_space<vmem>>, %arg3: memref<1x24xf32, #tpu.memory_space<vmem>>, %arg4: memref<128x24xbf16, #tpu.memory_space<vmem>>) attributes {dimension_semantics = [#tpu.dimension_semantics<parallel>], iteration_bounds = array<i64: 1>, scalar_prefetch = 0 : i64, scratch_operands = 0 : i64, tpu.core_type = #tpu.core_type<tc>, window_params = [{transform_indices = @transform_0, window_bounds = array<i64: 128, 84>}, {pipeline_mode = #tpu.pipeline_mode<synchronous>, transform_indices = @transform_1, window_bounds = array<i64: 84, 24>}, {pipeline_mode = #tpu.pipeline_mode<synchronous>, transform_indices = @transform_2, window_bounds = array<i64: 1, 24>}, {transform_indices = @transform_3, window_bounds = array<i64: 128, 24>}]} {
    %c0 = arith.constant 0 : index
    %c0_0 = arith.constant 0 : index
    %0 = vector.load %arg1[%c0, %c0_0] : memref<128x84xbf16, #tpu.memory_space<vmem>>, vector<128x84xbf16>
    %c0_1 = arith.constant 0 : index
    %c0_2 = arith.constant 0 : index
    %1 = vector.load %arg2[%c0_1, %c0_2] : memref<84x24xbf16, #tpu.memory_space<vmem>>, vector<84x24xbf16>
    %cst = arith.constant dense<0.000000e+00> : vector<128x24xf32>
    %2 = tpu.matmul %0, %1, %cst {dimension_numbers = #tpu.dot_dimension_numbers<[1], [0], [0], [1], [0, 0, 1, 1], [], []>} : vector<128x84xbf16>, vector<84x24xbf16>, vector<128x24xf32> -> vector<128x24xf32>
    %c0_3 = arith.constant 0 : index
    %c0_4 = arith.constant 0 : index
    %3 = vector.load %arg3[%c0_3, %c0_4] : memref<1x24xf32, #tpu.memory_space<vmem>>, vector<1x24xf32>
    %4 = vector.broadcast %3 : vector<1x24xf32> to vector<128x24xf32>
    %5 = arith.addf %2, %4 : vector<128x24xf32>
    %6 = arith.truncf %5 : vector<128x24xf32> to vector<128x24xbf16>
    %c0_5 = arith.constant 0 : index
    %c0_6 = arith.constant 0 : index
    %7 = vector.load %arg4[%c0_5, %c0_6] : memref<128x24xbf16, #tpu.memory_space<vmem>>, vector<128x24xbf16>
    tpu.vector_store %arg4[%c0_5, %c0_6], %6 {strides = array<i32>} : memref<128x24xbf16, #tpu.memory_space<vmem>>, vector<128x24xbf16>,
    return
  }
  func.func @transform_0(%arg0: i32) -> (i32, i32) {
    %c0_i32 = arith.constant 0 : i32
    %c0_i32_0 = arith.constant 0 : i32
    return %arg0, %c0_i32 : i32, i32
  }
  func.func @transform_1(%arg0: i32) -> (i32, i32) {
    %c0_i32 = arith.constant 0 : i32
    %c0_i32_0 = arith.constant 0 : i32
    %c0_i32_1 = arith.constant 0 : i32
    return %c0_i32, %c0_i32_0 : i32, i32
  }
  func.func @transform_2(%arg0: i32) -> (i32, i32) {
    %c0_i32 = arith.constant 0 : i32
    %c0_i32_0 = arith.constant 0 : i32
    %c0_i32_1 = arith.constant 0 : i32
    return %c0_i32, %c0_i32_0 : i32, i32
  }
  func.func @transform_3(%arg0: i32) -> (i32, i32) {
    %c0_i32 = arith.constant 0 : i32
    %c0_i32_0 = arith.constant 0 : i32
    return %arg0, %c0_i32 : i32, i32
  }
}

module attributes {stable_mosaic.version = 11 : i64} {
  func.func @_mm_kernel(%arg0: i32, %arg1: memref<128x216xbf16, #tpu.memory_space<vmem>>, %arg2: memref<216x24xbf16, #tpu.memory_space<vmem>>, %arg3: memref<1x24xf32, #tpu.memory_space<vmem>>, %arg4: memref<128x24xbf16, #tpu.memory_space<vmem>>) attributes {dimension_semantics = [#tpu.dimension_semantics<parallel>], iteration_bounds = array<i64: 1>, scalar_prefetch = 0 : i64, scratch_operands = 0 : i64, tpu.core_type = #tpu.core_type<tc>, window_params = [{transform_indices = @transform_0, window_bounds = array<i64: 128, 216>}, {pipeline_mode = #tpu.pipeline_mode<synchronous>, transform_indices = @transform_1, window_bounds = array<i64: 216, 24>}, {pipeline_mode = #tpu.pipeline_mode<synchronous>, transform_indices = @transform_2, window_bounds = array<i64: 1, 24>}, {transform_indices = @transform_3, window_bounds = array<i64: 128, 24>}]} {
    %c0 = arith.constant 0 : index
    %c0_0 = arith.constant 0 : index
    %0 = vector.load %arg1[%c0, %c0_0] : memref<128x216xbf16, #tpu.memory_space<vmem>>, vector<128x216xbf16>
    %c0_1 = arith.constant 0 : index
    %c0_2 = arith.constant 0 : index
    %1 = vector.load %arg2[%c0_1, %c0_2] : memref<216x24xbf16, #tpu.memory_space<vmem>>, vector<216x24xbf16>
    %cst = arith.constant dense<0.000000e+00> : vector<128x24xf32>
    %2 = tpu.matmul %0, %1, %cst {dimension_numbers = #tpu.dot_dimension_numbers<[1], [0], [0], [1], [0, 0, 1, 1], [], []>} : vector<128x216xbf16>, vector<216x24xbf16>, vector<128x24xf32> -> vector<128x24xf32>
    %c0_3 = arith.constant 0 : index
    %c0_4 = arith.constant 0 : index
    %3 = vector.load %arg3[%c0_3, %c0_4] : memref<1x24xf32, #tpu.memory_space<vmem>>, vector<1x24xf32>
    %4 = vector.broadcast %3 : vector<1x24xf32> to vector<128x24xf32>
    %5 = arith.addf %2, %4 : vector<128x24xf32>
    %cst_5 = arith.constant 0.000000e+00 : f32
    %6 = vector.broadcast %cst_5 : f32 to vector<128x24xf32>
    %7 = arith.cmpf oge, %5, %6 : vector<128x24xf32>
    %cst_6 = arith.constant 0.00999999977 : f32
    %8 = vector.broadcast %cst_6 : f32 to vector<128x24xf32>
    %9 = arith.mulf %8, %5 : vector<128x24xf32>
    %10 = arith.select %7, %5, %9 : vector<128x24xi1>, vector<128x24xf32>
    %11 = arith.truncf %10 : vector<128x24xf32> to vector<128x24xbf16>
    %c0_7 = arith.constant 0 : index
    %c0_8 = arith.constant 0 : index
    %12 = vector.load %arg4[%c0_7, %c0_8] : memref<128x24xbf16, #tpu.memory_space<vmem>>, vector<128x24xbf16>
    tpu.vector_store %arg4[%c0_7, %c0_8], %11 {strides = array<i32>} : memref<128x24xbf16, #tpu.memory_space<vmem>>, vector<128x24xbf16>,
    return
  }
  func.func @transform_0(%arg0: i32) -> (i32, i32) {
    %c0_i32 = arith.constant 0 : i32
    %c0_i32_0 = arith.constant 0 : i32
    return %arg0, %c0_i32 : i32, i32
  }
  func.func @transform_1(%arg0: i32) -> (i32, i32) {
    %c0_i32 = arith.constant 0 : i32
    %c0_i32_0 = arith.constant 0 : i32
    %c0_i32_1 = arith.constant 0 : i32
    return %c0_i32, %c0_i32_0 : i32, i32
  }
  func.func @transform_2(%arg0: i32) -> (i32, i32) {
    %c0_i32 = arith.constant 0 : i32
    %c0_i32_0 = arith.constant 0 : i32
    %c0_i32_1 = arith.constant 0 : i32
    return %c0_i32, %c0_i32_0 : i32, i32
  }
  func.func @transform_3(%arg0: i32) -> (i32, i32) {
    %c0_i32 = arith.constant 0 : i32
    %c0_i32_0 = arith.constant 0 : i32
    return %arg0, %c0_i32 : i32, i32
  }
}

module attributes {stable_mosaic.version = 11 : i64} {
  func.func @_mm_kernel(%arg0: i32, %arg1: memref<128x108xbf16, #tpu.memory_space<vmem>>, %arg2: memref<108x24xbf16, #tpu.memory_space<vmem>>, %arg3: memref<1x24xf32, #tpu.memory_space<vmem>>, %arg4: memref<128x24xbf16, #tpu.memory_space<vmem>>) attributes {dimension_semantics = [#tpu.dimension_semantics<parallel>], iteration_bounds = array<i64: 1>, scalar_prefetch = 0 : i64, scratch_operands = 0 : i64, tpu.core_type = #tpu.core_type<tc>, window_params = [{transform_indices = @transform_0, window_bounds = array<i64: 128, 108>}, {pipeline_mode = #tpu.pipeline_mode<synchronous>, transform_indices = @transform_1, window_bounds = array<i64: 108, 24>}, {pipeline_mode = #tpu.pipeline_mode<synchronous>, transform_indices = @transform_2, window_bounds = array<i64: 1, 24>}, {transform_indices = @transform_3, window_bounds = array<i64: 128, 24>}]} {
    %c0 = arith.constant 0 : index
    %c0_0 = arith.constant 0 : index
    %0 = vector.load %arg1[%c0, %c0_0] : memref<128x108xbf16, #tpu.memory_space<vmem>>, vector<128x108xbf16>
    %c0_1 = arith.constant 0 : index
    %c0_2 = arith.constant 0 : index
    %1 = vector.load %arg2[%c0_1, %c0_2] : memref<108x24xbf16, #tpu.memory_space<vmem>>, vector<108x24xbf16>
    %cst = arith.constant dense<0.000000e+00> : vector<128x24xf32>
    %2 = tpu.matmul %0, %1, %cst {dimension_numbers = #tpu.dot_dimension_numbers<[1], [0], [0], [1], [0, 0, 1, 1], [], []>} : vector<128x108xbf16>, vector<108x24xbf16>, vector<128x24xf32> -> vector<128x24xf32>
    %c0_3 = arith.constant 0 : index
    %c0_4 = arith.constant 0 : index
    %3 = vector.load %arg3[%c0_3, %c0_4] : memref<1x24xf32, #tpu.memory_space<vmem>>, vector<1x24xf32>
    %4 = vector.broadcast %3 : vector<1x24xf32> to vector<128x24xf32>
    %5 = arith.addf %2, %4 : vector<128x24xf32>
    %6 = arith.truncf %5 : vector<128x24xf32> to vector<128x24xbf16>
    %c0_5 = arith.constant 0 : index
    %c0_6 = arith.constant 0 : index
    %7 = vector.load %arg4[%c0_5, %c0_6] : memref<128x24xbf16, #tpu.memory_space<vmem>>, vector<128x24xbf16>
    tpu.vector_store %arg4[%c0_5, %c0_6], %6 {strides = array<i32>} : memref<128x24xbf16, #tpu.memory_space<vmem>>, vector<128x24xbf16>,
    return
  }
  func.func @transform_0(%arg0: i32) -> (i32, i32) {
    %c0_i32 = arith.constant 0 : i32
    %c0_i32_0 = arith.constant 0 : i32
    return %arg0, %c0_i32 : i32, i32
  }
  func.func @transform_1(%arg0: i32) -> (i32, i32) {
    %c0_i32 = arith.constant 0 : i32
    %c0_i32_0 = arith.constant 0 : i32
    %c0_i32_1 = arith.constant 0 : i32
    return %c0_i32, %c0_i32_0 : i32, i32
  }
  func.func @transform_2(%arg0: i32) -> (i32, i32) {
    %c0_i32 = arith.constant 0 : i32
    %c0_i32_0 = arith.constant 0 : i32
    %c0_i32_1 = arith.constant 0 : i32
    return %c0_i32, %c0_i32_0 : i32, i32
  }
  func.func @transform_3(%arg0: i32) -> (i32, i32) {
    %c0_i32 = arith.constant 0 : i32
    %c0_i32_0 = arith.constant 0 : i32
    return %arg0, %c0_i32 : i32, i32
  }
}

module attributes {stable_mosaic.version = 11 : i64} {
  func.func @_mm_kernel(%arg0: i32, %arg1: memref<512x52xbf16, #tpu.memory_space<vmem>>, %arg2: memref<52x12xbf16, #tpu.memory_space<vmem>>, %arg3: memref<1x12xf32, #tpu.memory_space<vmem>>, %arg4: memref<512x12xbf16, #tpu.memory_space<vmem>>) attributes {dimension_semantics = [#tpu.dimension_semantics<parallel>], iteration_bounds = array<i64: 1>, scalar_prefetch = 0 : i64, scratch_operands = 0 : i64, tpu.core_type = #tpu.core_type<tc>, window_params = [{transform_indices = @transform_0, window_bounds = array<i64: 512, 52>}, {pipeline_mode = #tpu.pipeline_mode<synchronous>, transform_indices = @transform_1, window_bounds = array<i64: 52, 12>}, {pipeline_mode = #tpu.pipeline_mode<synchronous>, transform_indices = @transform_2, window_bounds = array<i64: 1, 12>}, {transform_indices = @transform_3, window_bounds = array<i64: 512, 12>}]} {
    %c0 = arith.constant 0 : index
    %c0_0 = arith.constant 0 : index
    %0 = vector.load %arg1[%c0, %c0_0] : memref<512x52xbf16, #tpu.memory_space<vmem>>, vector<512x52xbf16>
    %c0_1 = arith.constant 0 : index
    %c0_2 = arith.constant 0 : index
    %1 = vector.load %arg2[%c0_1, %c0_2] : memref<52x12xbf16, #tpu.memory_space<vmem>>, vector<52x12xbf16>
    %cst = arith.constant dense<0.000000e+00> : vector<512x12xf32>
    %2 = tpu.matmul %0, %1, %cst {dimension_numbers = #tpu.dot_dimension_numbers<[1], [0], [0], [1], [0, 0, 1, 1], [], []>} : vector<512x52xbf16>, vector<52x12xbf16>, vector<512x12xf32> -> vector<512x12xf32>
    %c0_3 = arith.constant 0 : index
    %c0_4 = arith.constant 0 : index
    %3 = vector.load %arg3[%c0_3, %c0_4] : memref<1x12xf32, #tpu.memory_space<vmem>>, vector<1x12xf32>
    %4 = vector.broadcast %3 : vector<1x12xf32> to vector<512x12xf32>
    %5 = arith.addf %2, %4 : vector<512x12xf32>
    %6 = arith.truncf %5 : vector<512x12xf32> to vector<512x12xbf16>
    %c0_5 = arith.constant 0 : index
    %c0_6 = arith.constant 0 : index
    %7 = vector.load %arg4[%c0_5, %c0_6] : memref<512x12xbf16, #tpu.memory_space<vmem>>, vector<512x12xbf16>
    tpu.vector_store %arg4[%c0_5, %c0_6], %6 {strides = array<i32>} : memref<512x12xbf16, #tpu.memory_space<vmem>>, vector<512x12xbf16>,
    return
  }
  func.func @transform_0(%arg0: i32) -> (i32, i32) {
    %c0_i32 = arith.constant 0 : i32
    %c0_i32_0 = arith.constant 0 : i32
    return %arg0, %c0_i32 : i32, i32
  }
  func.func @transform_1(%arg0: i32) -> (i32, i32) {
    %c0_i32 = arith.constant 0 : i32
    %c0_i32_0 = arith.constant 0 : i32
    %c0_i32_1 = arith.constant 0 : i32
    return %c0_i32, %c0_i32_0 : i32, i32
  }
  func.func @transform_2(%arg0: i32) -> (i32, i32) {
    %c0_i32 = arith.constant 0 : i32
    %c0_i32_0 = arith.constant 0 : i32
    %c0_i32_1 = arith.constant 0 : i32
    return %c0_i32, %c0_i32_0 : i32, i32
  }
  func.func @transform_3(%arg0: i32) -> (i32, i32) {
    %c0_i32 = arith.constant 0 : i32
    %c0_i32_0 = arith.constant 0 : i32
    return %arg0, %c0_i32 : i32, i32
  }
}

module attributes {stable_mosaic.version = 11 : i64} {
  func.func @_mm_kernel(%arg0: i32, %arg1: memref<512x108xbf16, #tpu.memory_space<vmem>>, %arg2: memref<108x12xbf16, #tpu.memory_space<vmem>>, %arg3: memref<1x12xf32, #tpu.memory_space<vmem>>, %arg4: memref<512x12xbf16, #tpu.memory_space<vmem>>) attributes {dimension_semantics = [#tpu.dimension_semantics<parallel>], iteration_bounds = array<i64: 1>, scalar_prefetch = 0 : i64, scratch_operands = 0 : i64, tpu.core_type = #tpu.core_type<tc>, window_params = [{transform_indices = @transform_0, window_bounds = array<i64: 512, 108>}, {pipeline_mode = #tpu.pipeline_mode<synchronous>, transform_indices = @transform_1, window_bounds = array<i64: 108, 12>}, {pipeline_mode = #tpu.pipeline_mode<synchronous>, transform_indices = @transform_2, window_bounds = array<i64: 1, 12>}, {transform_indices = @transform_3, window_bounds = array<i64: 512, 12>}]} {
    %c0 = arith.constant 0 : index
    %c0_0 = arith.constant 0 : index
    %0 = vector.load %arg1[%c0, %c0_0] : memref<512x108xbf16, #tpu.memory_space<vmem>>, vector<512x108xbf16>
    %c0_1 = arith.constant 0 : index
    %c0_2 = arith.constant 0 : index
    %1 = vector.load %arg2[%c0_1, %c0_2] : memref<108x12xbf16, #tpu.memory_space<vmem>>, vector<108x12xbf16>
    %cst = arith.constant dense<0.000000e+00> : vector<512x12xf32>
    %2 = tpu.matmul %0, %1, %cst {dimension_numbers = #tpu.dot_dimension_numbers<[1], [0], [0], [1], [0, 0, 1, 1], [], []>} : vector<512x108xbf16>, vector<108x12xbf16>, vector<512x12xf32> -> vector<512x12xf32>
    %c0_3 = arith.constant 0 : index
    %c0_4 = arith.constant 0 : index
    %3 = vector.load %arg3[%c0_3, %c0_4] : memref<1x12xf32, #tpu.memory_space<vmem>>, vector<1x12xf32>
    %4 = vector.broadcast %3 : vector<1x12xf32> to vector<512x12xf32>
    %5 = arith.addf %2, %4 : vector<512x12xf32>
    %cst_5 = arith.constant 0.000000e+00 : f32
    %6 = vector.broadcast %cst_5 : f32 to vector<512x12xf32>
    %7 = arith.cmpf oge, %5, %6 : vector<512x12xf32>
    %cst_6 = arith.constant 0.00999999977 : f32
    %8 = vector.broadcast %cst_6 : f32 to vector<512x12xf32>
    %9 = arith.mulf %8, %5 : vector<512x12xf32>
    %10 = arith.select %7, %5, %9 : vector<512x12xi1>, vector<512x12xf32>
    %11 = arith.truncf %10 : vector<512x12xf32> to vector<512x12xbf16>
    %c0_7 = arith.constant 0 : index
    %c0_8 = arith.constant 0 : index
    %12 = vector.load %arg4[%c0_7, %c0_8] : memref<512x12xbf16, #tpu.memory_space<vmem>>, vector<512x12xbf16>
    tpu.vector_store %arg4[%c0_7, %c0_8], %11 {strides = array<i32>} : memref<512x12xbf16, #tpu.memory_space<vmem>>, vector<512x12xbf16>,
    return
  }
  func.func @transform_0(%arg0: i32) -> (i32, i32) {
    %c0_i32 = arith.constant 0 : i32
    %c0_i32_0 = arith.constant 0 : i32
    return %arg0, %c0_i32 : i32, i32
  }
  func.func @transform_1(%arg0: i32) -> (i32, i32) {
    %c0_i32 = arith.constant 0 : i32
    %c0_i32_0 = arith.constant 0 : i32
    %c0_i32_1 = arith.constant 0 : i32
    return %c0_i32, %c0_i32_0 : i32, i32
  }
  func.func @transform_2(%arg0: i32) -> (i32, i32) {
    %c0_i32 = arith.constant 0 : i32
    %c0_i32_0 = arith.constant 0 : i32
    %c0_i32_1 = arith.constant 0 : i32
    return %c0_i32, %c0_i32_0 : i32, i32
  }
  func.func @transform_3(%arg0: i32) -> (i32, i32) {
    %c0_i32 = arith.constant 0 : i32
    %c0_i32_0 = arith.constant 0 : i32
    return %arg0, %c0_i32 : i32, i32
  }
}

module attributes {stable_mosaic.version = 11 : i64} {
  func.func @_mm_kernel(%arg0: i32, %arg1: memref<512x64xbf16, #tpu.memory_space<vmem>>, %arg2: memref<64x12xbf16, #tpu.memory_space<vmem>>, %arg3: memref<1x12xf32, #tpu.memory_space<vmem>>, %arg4: memref<512x12xbf16, #tpu.memory_space<vmem>>) attributes {dimension_semantics = [#tpu.dimension_semantics<parallel>], iteration_bounds = array<i64: 1>, scalar_prefetch = 0 : i64, scratch_operands = 0 : i64, tpu.core_type = #tpu.core_type<tc>, window_params = [{transform_indices = @transform_0, window_bounds = array<i64: 512, 64>}, {pipeline_mode = #tpu.pipeline_mode<synchronous>, transform_indices = @transform_1, window_bounds = array<i64: 64, 12>}, {pipeline_mode = #tpu.pipeline_mode<synchronous>, transform_indices = @transform_2, window_bounds = array<i64: 1, 12>}, {transform_indices = @transform_3, window_bounds = array<i64: 512, 12>}]} {
    %c0 = arith.constant 0 : index
    %c0_0 = arith.constant 0 : index
    %0 = vector.load %arg1[%c0, %c0_0] : memref<512x64xbf16, #tpu.memory_space<vmem>>, vector<512x64xbf16>
    %c0_1 = arith.constant 0 : index
    %c0_2 = arith.constant 0 : index
    %1 = vector.load %arg2[%c0_1, %c0_2] : memref<64x12xbf16, #tpu.memory_space<vmem>>, vector<64x12xbf16>
    %cst = arith.constant dense<0.000000e+00> : vector<512x12xf32>
    %2 = tpu.matmul %0, %1, %cst {dimension_numbers = #tpu.dot_dimension_numbers<[1], [0], [0], [1], [0, 0, 1, 1], [], []>} : vector<512x64xbf16>, vector<64x12xbf16>, vector<512x12xf32> -> vector<512x12xf32>
    %c0_3 = arith.constant 0 : index
    %c0_4 = arith.constant 0 : index
    %3 = vector.load %arg3[%c0_3, %c0_4] : memref<1x12xf32, #tpu.memory_space<vmem>>, vector<1x12xf32>
    %4 = vector.broadcast %3 : vector<1x12xf32> to vector<512x12xf32>
    %5 = arith.addf %2, %4 : vector<512x12xf32>
    %6 = arith.truncf %5 : vector<512x12xf32> to vector<512x12xbf16>
    %c0_5 = arith.constant 0 : index
    %c0_6 = arith.constant 0 : index
    %7 = vector.load %arg4[%c0_5, %c0_6] : memref<512x12xbf16, #tpu.memory_space<vmem>>, vector<512x12xbf16>
    tpu.vector_store %arg4[%c0_5, %c0_6], %6 {strides = array<i32>} : memref<512x12xbf16, #tpu.memory_space<vmem>>, vector<512x12xbf16>,
    return
  }
  func.func @transform_0(%arg0: i32) -> (i32, i32) {
    %c0_i32 = arith.constant 0 : i32
    %c0_i32_0 = arith.constant 0 : i32
    return %arg0, %c0_i32 : i32, i32
  }
  func.func @transform_1(%arg0: i32) -> (i32, i32) {
    %c0_i32 = arith.constant 0 : i32
    %c0_i32_0 = arith.constant 0 : i32
    %c0_i32_1 = arith.constant 0 : i32
    return %c0_i32, %c0_i32_0 : i32, i32
  }
  func.func @transform_2(%arg0: i32) -> (i32, i32) {
    %c0_i32 = arith.constant 0 : i32
    %c0_i32_0 = arith.constant 0 : i32
    %c0_i32_1 = arith.constant 0 : i32
    return %c0_i32, %c0_i32_0 : i32, i32
  }
  func.func @transform_3(%arg0: i32) -> (i32, i32) {
    %c0_i32 = arith.constant 0 : i32
    %c0_i32_0 = arith.constant 0 : i32
    return %arg0, %c0_i32 : i32, i32
  }
}

module attributes {stable_mosaic.version = 11 : i64} {
  func.func @_mm_kernel(%arg0: i32, %arg1: memref<512x28xbf16, #tpu.memory_space<vmem>>, %arg2: memref<28x8xbf16, #tpu.memory_space<vmem>>, %arg3: memref<1x8xf32, #tpu.memory_space<vmem>>, %arg4: memref<512x8xbf16, #tpu.memory_space<vmem>>) attributes {dimension_semantics = [#tpu.dimension_semantics<parallel>], iteration_bounds = array<i64: 4>, scalar_prefetch = 0 : i64, scratch_operands = 0 : i64, tpu.core_type = #tpu.core_type<tc>, window_params = [{transform_indices = @transform_0, window_bounds = array<i64: 512, 28>}, {pipeline_mode = #tpu.pipeline_mode<synchronous>, transform_indices = @transform_1, window_bounds = array<i64: 28, 8>}, {pipeline_mode = #tpu.pipeline_mode<synchronous>, transform_indices = @transform_2, window_bounds = array<i64: 1, 8>}, {transform_indices = @transform_3, window_bounds = array<i64: 512, 8>}]} {
    %c0 = arith.constant 0 : index
    %c0_0 = arith.constant 0 : index
    %0 = vector.load %arg1[%c0, %c0_0] : memref<512x28xbf16, #tpu.memory_space<vmem>>, vector<512x28xbf16>
    %c0_1 = arith.constant 0 : index
    %c0_2 = arith.constant 0 : index
    %1 = vector.load %arg2[%c0_1, %c0_2] : memref<28x8xbf16, #tpu.memory_space<vmem>>, vector<28x8xbf16>
    %cst = arith.constant dense<0.000000e+00> : vector<512x8xf32>
    %2 = tpu.matmul %0, %1, %cst {dimension_numbers = #tpu.dot_dimension_numbers<[1], [0], [0], [1], [0, 0, 1, 1], [], []>} : vector<512x28xbf16>, vector<28x8xbf16>, vector<512x8xf32> -> vector<512x8xf32>
    %c0_3 = arith.constant 0 : index
    %c0_4 = arith.constant 0 : index
    %3 = vector.load %arg3[%c0_3, %c0_4] : memref<1x8xf32, #tpu.memory_space<vmem>>, vector<1x8xf32>
    %4 = vector.broadcast %3 : vector<1x8xf32> to vector<512x8xf32>
    %5 = arith.addf %2, %4 : vector<512x8xf32>
    %6 = arith.truncf %5 : vector<512x8xf32> to vector<512x8xbf16>
    %c0_5 = arith.constant 0 : index
    %c0_6 = arith.constant 0 : index
    %7 = vector.load %arg4[%c0_5, %c0_6] : memref<512x8xbf16, #tpu.memory_space<vmem>>, vector<512x8xbf16>
    tpu.vector_store %arg4[%c0_5, %c0_6], %6 {strides = array<i32>} : memref<512x8xbf16, #tpu.memory_space<vmem>>, vector<512x8xbf16>,
    return
  }
  func.func @transform_0(%arg0: i32) -> (i32, i32) {
    %c0_i32 = arith.constant 0 : i32
    %c0_i32_0 = arith.constant 0 : i32
    return %arg0, %c0_i32 : i32, i32
  }
  func.func @transform_1(%arg0: i32) -> (i32, i32) {
    %c0_i32 = arith.constant 0 : i32
    %c0_i32_0 = arith.constant 0 : i32
    %c0_i32_1 = arith.constant 0 : i32
    return %c0_i32, %c0_i32_0 : i32, i32
  }
  func.func @transform_2(%arg0: i32) -> (i32, i32) {
    %c0_i32 = arith.constant 0 : i32
    %c0_i32_0 = arith.constant 0 : i32
    %c0_i32_1 = arith.constant 0 : i32
    return %c0_i32, %c0_i32_0 : i32, i32
  }
  func.func @transform_3(%arg0: i32) -> (i32, i32) {
    %c0_i32 = arith.constant 0 : i32
    %c0_i32_0 = arith.constant 0 : i32
    return %arg0, %c0_i32 : i32, i32
  }
}

module attributes {stable_mosaic.version = 11 : i64} {
  func.func @_mm_kernel(%arg0: i32, %arg1: memref<512x72xbf16, #tpu.memory_space<vmem>>, %arg2: memref<72x8xbf16, #tpu.memory_space<vmem>>, %arg3: memref<1x8xf32, #tpu.memory_space<vmem>>, %arg4: memref<512x8xbf16, #tpu.memory_space<vmem>>) attributes {dimension_semantics = [#tpu.dimension_semantics<parallel>], iteration_bounds = array<i64: 4>, scalar_prefetch = 0 : i64, scratch_operands = 0 : i64, tpu.core_type = #tpu.core_type<tc>, window_params = [{transform_indices = @transform_0, window_bounds = array<i64: 512, 72>}, {pipeline_mode = #tpu.pipeline_mode<synchronous>, transform_indices = @transform_1, window_bounds = array<i64: 72, 8>}, {pipeline_mode = #tpu.pipeline_mode<synchronous>, transform_indices = @transform_2, window_bounds = array<i64: 1, 8>}, {transform_indices = @transform_3, window_bounds = array<i64: 512, 8>}]} {
    %c0 = arith.constant 0 : index
    %c0_0 = arith.constant 0 : index
    %0 = vector.load %arg1[%c0, %c0_0] : memref<512x72xbf16, #tpu.memory_space<vmem>>, vector<512x72xbf16>
    %c0_1 = arith.constant 0 : index
    %c0_2 = arith.constant 0 : index
    %1 = vector.load %arg2[%c0_1, %c0_2] : memref<72x8xbf16, #tpu.memory_space<vmem>>, vector<72x8xbf16>
    %cst = arith.constant dense<0.000000e+00> : vector<512x8xf32>
    %2 = tpu.matmul %0, %1, %cst {dimension_numbers = #tpu.dot_dimension_numbers<[1], [0], [0], [1], [0, 0, 1, 1], [], []>} : vector<512x72xbf16>, vector<72x8xbf16>, vector<512x8xf32> -> vector<512x8xf32>
    %c0_3 = arith.constant 0 : index
    %c0_4 = arith.constant 0 : index
    %3 = vector.load %arg3[%c0_3, %c0_4] : memref<1x8xf32, #tpu.memory_space<vmem>>, vector<1x8xf32>
    %4 = vector.broadcast %3 : vector<1x8xf32> to vector<512x8xf32>
    %5 = arith.addf %2, %4 : vector<512x8xf32>
    %cst_5 = arith.constant 0.000000e+00 : f32
    %6 = vector.broadcast %cst_5 : f32 to vector<512x8xf32>
    %7 = arith.cmpf oge, %5, %6 : vector<512x8xf32>
    %cst_6 = arith.constant 0.00999999977 : f32
    %8 = vector.broadcast %cst_6 : f32 to vector<512x8xf32>
    %9 = arith.mulf %8, %5 : vector<512x8xf32>
    %10 = arith.select %7, %5, %9 : vector<512x8xi1>, vector<512x8xf32>
    %11 = arith.truncf %10 : vector<512x8xf32> to vector<512x8xbf16>
    %c0_7 = arith.constant 0 : index
    %c0_8 = arith.constant 0 : index
    %12 = vector.load %arg4[%c0_7, %c0_8] : memref<512x8xbf16, #tpu.memory_space<vmem>>, vector<512x8xbf16>
    tpu.vector_store %arg4[%c0_7, %c0_8], %11 {strides = array<i32>} : memref<512x8xbf16, #tpu.memory_space<vmem>>, vector<512x8xbf16>,
    return
  }
  func.func @transform_0(%arg0: i32) -> (i32, i32) {
    %c0_i32 = arith.constant 0 : i32
    %c0_i32_0 = arith.constant 0 : i32
    return %arg0, %c0_i32 : i32, i32
  }
  func.func @transform_1(%arg0: i32) -> (i32, i32) {
    %c0_i32 = arith.constant 0 : i32
    %c0_i32_0 = arith.constant 0 : i32
    %c0_i32_1 = arith.constant 0 : i32
    return %c0_i32, %c0_i32_0 : i32, i32
  }
  func.func @transform_2(%arg0: i32) -> (i32, i32) {
    %c0_i32 = arith.constant 0 : i32
    %c0_i32_0 = arith.constant 0 : i32
    %c0_i32_1 = arith.constant 0 : i32
    return %c0_i32, %c0_i32_0 : i32, i32
  }
  func.func @transform_3(%arg0: i32) -> (i32, i32) {
    %c0_i32 = arith.constant 0 : i32
    %c0_i32_0 = arith.constant 0 : i32
    return %arg0, %c0_i32 : i32, i32
  }
}

module attributes {stable_mosaic.version = 11 : i64} {
  func.func @_mm_kernel(%arg0: i32, %arg1: memref<512x36xbf16, #tpu.memory_space<vmem>>, %arg2: memref<36x8xbf16, #tpu.memory_space<vmem>>, %arg3: memref<1x8xf32, #tpu.memory_space<vmem>>, %arg4: memref<512x8xbf16, #tpu.memory_space<vmem>>) attributes {dimension_semantics = [#tpu.dimension_semantics<parallel>], iteration_bounds = array<i64: 4>, scalar_prefetch = 0 : i64, scratch_operands = 0 : i64, tpu.core_type = #tpu.core_type<tc>, window_params = [{transform_indices = @transform_0, window_bounds = array<i64: 512, 36>}, {pipeline_mode = #tpu.pipeline_mode<synchronous>, transform_indices = @transform_1, window_bounds = array<i64: 36, 8>}, {pipeline_mode = #tpu.pipeline_mode<synchronous>, transform_indices = @transform_2, window_bounds = array<i64: 1, 8>}, {transform_indices = @transform_3, window_bounds = array<i64: 512, 8>}]} {
    %c0 = arith.constant 0 : index
    %c0_0 = arith.constant 0 : index
    %0 = vector.load %arg1[%c0, %c0_0] : memref<512x36xbf16, #tpu.memory_space<vmem>>, vector<512x36xbf16>
    %c0_1 = arith.constant 0 : index
    %c0_2 = arith.constant 0 : index
    %1 = vector.load %arg2[%c0_1, %c0_2] : memref<36x8xbf16, #tpu.memory_space<vmem>>, vector<36x8xbf16>
    %cst = arith.constant dense<0.000000e+00> : vector<512x8xf32>
    %2 = tpu.matmul %0, %1, %cst {dimension_numbers = #tpu.dot_dimension_numbers<[1], [0], [0], [1], [0, 0, 1, 1], [], []>} : vector<512x36xbf16>, vector<36x8xbf16>, vector<512x8xf32> -> vector<512x8xf32>
    %c0_3 = arith.constant 0 : index
    %c0_4 = arith.constant 0 : index
    %3 = vector.load %arg3[%c0_3, %c0_4] : memref<1x8xf32, #tpu.memory_space<vmem>>, vector<1x8xf32>
    %4 = vector.broadcast %3 : vector<1x8xf32> to vector<512x8xf32>
    %5 = arith.addf %2, %4 : vector<512x8xf32>
    %6 = arith.truncf %5 : vector<512x8xf32> to vector<512x8xbf16>
    %c0_5 = arith.constant 0 : index
    %c0_6 = arith.constant 0 : index
    %7 = vector.load %arg4[%c0_5, %c0_6] : memref<512x8xbf16, #tpu.memory_space<vmem>>, vector<512x8xbf16>
    tpu.vector_store %arg4[%c0_5, %c0_6], %6 {strides = array<i32>} : memref<512x8xbf16, #tpu.memory_space<vmem>>, vector<512x8xbf16>,
    return
  }
  func.func @transform_0(%arg0: i32) -> (i32, i32) {
    %c0_i32 = arith.constant 0 : i32
    %c0_i32_0 = arith.constant 0 : i32
    return %arg0, %c0_i32 : i32, i32
  }
  func.func @transform_1(%arg0: i32) -> (i32, i32) {
    %c0_i32 = arith.constant 0 : i32
    %c0_i32_0 = arith.constant 0 : i32
    %c0_i32_1 = arith.constant 0 : i32
    return %c0_i32, %c0_i32_0 : i32, i32
  }
  func.func @transform_2(%arg0: i32) -> (i32, i32) {
    %c0_i32 = arith.constant 0 : i32
    %c0_i32_0 = arith.constant 0 : i32
    %c0_i32_1 = arith.constant 0 : i32
    return %c0_i32, %c0_i32_0 : i32, i32
  }
  func.func @transform_3(%arg0: i32) -> (i32, i32) {
    %c0_i32 = arith.constant 0 : i32
    %c0_i32_0 = arith.constant 0 : i32
    return %arg0, %c0_i32 : i32, i32
  }
}

module attributes {stable_mosaic.version = 11 : i64} {
  func.func @_mm_bn_kernel(%arg0: i32, %arg1: memref<512x72xbf16, #tpu.memory_space<vmem>>, %arg2: memref<72x3xbf16, #tpu.memory_space<vmem>>, %arg3: memref<1x3xf32, #tpu.memory_space<vmem>>, %arg4: memref<1x3xf32, #tpu.memory_space<vmem>>, %arg5: memref<1x3xf32, #tpu.memory_space<vmem>>, %arg6: memref<512x3xf32, #tpu.memory_space<vmem>>) attributes {dimension_semantics = [#tpu.dimension_semantics<parallel>], iteration_bounds = array<i64: 4>, scalar_prefetch = 0 : i64, scratch_operands = 0 : i64, tpu.core_type = #tpu.core_type<tc>, window_params = [{transform_indices = @transform_0, window_bounds = array<i64: 512, 72>}, {pipeline_mode = #tpu.pipeline_mode<synchronous>, transform_indices = @transform_1, window_bounds = array<i64: 72, 3>}, {pipeline_mode = #tpu.pipeline_mode<synchronous>, transform_indices = @transform_2, window_bounds = array<i64: 1, 3>}, {pipeline_mode = #tpu.pipeline_mode<synchronous>, transform_indices = @transform_3, window_bounds = array<i64: 1, 3>}, {pipeline_mode = #tpu.pipeline_mode<synchronous>, transform_indices = @transform_4, window_bounds = array<i64: 1, 3>}, {transform_indices = @transform_5, window_bounds = array<i64: 512, 3>}]} {
    %c0 = arith.constant 0 : index
    %c0_0 = arith.constant 0 : index
    %0 = vector.load %arg1[%c0, %c0_0] : memref<512x72xbf16, #tpu.memory_space<vmem>>, vector<512x72xbf16>
    %c0_1 = arith.constant 0 : index
    %c0_2 = arith.constant 0 : index
    %1 = vector.load %arg2[%c0_1, %c0_2] : memref<72x3xbf16, #tpu.memory_space<vmem>>, vector<72x3xbf16>
    %cst = arith.constant dense<0.000000e+00> : vector<512x3xf32>
    %2 = tpu.matmul %0, %1, %cst {dimension_numbers = #tpu.dot_dimension_numbers<[1], [0], [0], [1], [0, 0, 1, 1], [], []>} : vector<512x72xbf16>, vector<72x3xbf16>, vector<512x3xf32> -> vector<512x3xf32>
    %c0_3 = arith.constant 0 : index
    %c0_4 = arith.constant 0 : index
    %3 = vector.load %arg3[%c0_3, %c0_4] : memref<1x3xf32, #tpu.memory_space<vmem>>, vector<1x3xf32>
    %4 = vector.broadcast %3 : vector<1x3xf32> to vector<512x3xf32>
    %5 = arith.addf %2, %4 : vector<512x3xf32>
    %cst_5 = arith.constant 0.000000e+00 : f32
    %6 = vector.broadcast %cst_5 : f32 to vector<512x3xf32>
    %7 = arith.cmpf oge, %5, %6 : vector<512x3xf32>
    %cst_6 = arith.constant 0.00999999977 : f32
    %8 = vector.broadcast %cst_6 : f32 to vector<512x3xf32>
    %9 = arith.mulf %8, %5 : vector<512x3xf32>
    %10 = arith.select %7, %5, %9 : vector<512x3xi1>, vector<512x3xf32>
    %c0_7 = arith.constant 0 : index
    %c0_8 = arith.constant 0 : index
    %11 = vector.load %arg4[%c0_7, %c0_8] : memref<1x3xf32, #tpu.memory_space<vmem>>, vector<1x3xf32>
    %12 = vector.broadcast %11 : vector<1x3xf32> to vector<512x3xf32>
    %13 = arith.mulf %10, %12 : vector<512x3xf32>
    %c0_9 = arith.constant 0 : index
    %c0_10 = arith.constant 0 : index
    %14 = vector.load %arg5[%c0_9, %c0_10] : memref<1x3xf32, #tpu.memory_space<vmem>>, vector<1x3xf32>
    %15 = vector.broadcast %14 : vector<1x3xf32> to vector<512x3xf32>
    %16 = arith.addf %13, %15 : vector<512x3xf32>
    %c0_11 = arith.constant 0 : index
    %c0_12 = arith.constant 0 : index
    %17 = vector.load %arg6[%c0_11, %c0_12] : memref<512x3xf32, #tpu.memory_space<vmem>>, vector<512x3xf32>
    tpu.vector_store %arg6[%c0_11, %c0_12], %16 {strides = array<i32>} : memref<512x3xf32, #tpu.memory_space<vmem>>, vector<512x3xf32>,
    return
  }
  func.func @transform_0(%arg0: i32) -> (i32, i32) {
    %c0_i32 = arith.constant 0 : i32
    %c0_i32_0 = arith.constant 0 : i32
    return %arg0, %c0_i32 : i32, i32
  }
  func.func @transform_1(%arg0: i32) -> (i32, i32) {
    %c0_i32 = arith.constant 0 : i32
    %c0_i32_0 = arith.constant 0 : i32
    %c0_i32_1 = arith.constant 0 : i32
    return %c0_i32, %c0_i32_0 : i32, i32
  }
  func.func @transform_2(%arg0: i32) -> (i32, i32) {
    %c0_i32 = arith.constant 0 : i32
    %c0_i32_0 = arith.constant 0 : i32
    %c0_i32_1 = arith.constant 0 : i32
    return %c0_i32, %c0_i32_0 : i32, i32
  }
  func.func @transform_3(%arg0: i32) -> (i32, i32) {
    %c0_i32 = arith.constant 0 : i32
    %c0_i32_0 = arith.constant 0 : i32
    %c0_i32_1 = arith.constant 0 : i32
    return %c0_i32, %c0_i32_0 : i32, i32
  }
  func.func @transform_4(%arg0: i32) -> (i32, i32) {
    %c0_i32 = arith.constant 0 : i32
    %c0_i32_0 = arith.constant 0 : i32
    %c0_i32_1 = arith.constant 0 : i32
    return %c0_i32, %c0_i32_0 : i32, i32
  }
  func.func @transform_5(%arg0: i32) -> (i32, i32) {
    %c0_i32 = arith.constant 0 : i32
    %c0_i32_0 = arith.constant 0 : i32
    return %arg0, %c0_i32 : i32, i32
  }
}

</mosaic_0001>

<llo_original>
// kernel: decoder_forward.18
$region0: #{decoder_forward.18}
  #allocation0 [shape = 'u32[]', space=smem, size = 0x4, offset = 0x4, fixed_abs, tag = 'smem constant byte address 0x4 - core index']
  #allocation1 [shape = 'u32[144,128]{1,0:T(1,128)}', space=vmem, size = 0x12000, scoped, tag = 'internal scratch']
  %s0 = inlined_call_operand.vmem [shape: bf16[32,116], index: 0, kind: input, shape index: {}]
  %s1 = inlined_call_operand.vmem [shape: bf16[116,36], index: 1, kind: input, shape index: {}]
  %s2 = inlined_call_operand.vmem [shape: f32[1,36], index: 2, kind: input, shape index: {}]
  %s3 = inlined_call_operand.vmem [shape: bf16[32,36], index: 3, kind: output, shape index: {}]
  %s4 = sld [smem:[#allocation0]]
  $region22: #{decoder_forward.18} parent=0
    _
  %s6 = ssub.s32 1, %s4
  %s7 = scalar_select 0, %s6, %s4
  // Predicated region
  $region2: #{decoder_forward.18} parent=0 // pred_check
    _
  $region3: #{decoder_forward.18} parent=0 // pred_check_branch
    %9 = sbr.rel (0) target = $region5
  $region4: #{decoder_forward.18} parent=0 // pred_region
    _
  $region5: #{decoder_forward.18} parent=0 // pred_fallthru
    _
  // Predicated region
  $region6: #{decoder_forward.18} parent=0 // pred_check
    _
  $region7: #{decoder_forward.18} parent=0 // pred_check_branch
    %11 = sbr.rel (0) target = $region9
  $region8: #{decoder_forward.18} parent=0 // pred_region
    _
  $region9: #{decoder_forward.18} parent=0 // pred_fallthru
    _
  // Predicated region
  $region10: #{decoder_forward.18} parent=0 // pred_check
    _
  $region11: #{decoder_forward.18} parent=0 // pred_check_branch
    %13 = sbr.rel (0) target = $region13
  $region12: #{decoder_forward.18} parent=0 // pred_region
    _
  $region13: #{decoder_forward.18} parent=0 // pred_fallthru
    _
  %v15 = vld [vmem:[%s0] sm:$0xf]
  %v16 = vld [vmem:[%s0 + $0x4] sm:$0xf]
  %v17 = vld [vmem:[%s0 + $0x8] sm:$0xf]
  %v18 = vld [vmem:[%s0 + $0xc] sm:$0xf]
  %v19 = vld [vmem:[%s1] sm:$0xf]
  %v20 = vld [vmem:[%s1 + $0x4] sm:$0xf]
  %v21 = vld [vmem:[%s1 + $0x8] sm:$0xf]
  %v22 = vld [vmem:[%s1 + $0xc] sm:$0xf]
  %v23 = vld [vmem:[%s1 + $0x10] sm:$0xf]
  %v24 = vld [vmem:[%s1 + $0x14] sm:$0xf]
  %v25 = vld [vmem:[%s1 + $0x18] sm:$0xf]
  %v26 = vld [vmem:[%s1 + $0x1c] sm:$0xf]
  %v27 = vld [vmem:[%s1 + $0x20] sm:$0xf]
  %v28 = vld [vmem:[%s1 + $0x24] sm:$0xf]
  %v29 = vld [vmem:[%s1 + $0x28] sm:$0xf]
  %v30 = vld [vmem:[%s1 + $0x2c] sm:$0xf]
  %v31 = vld [vmem:[%s1 + $0x30] sm:$0xf]
  %v32 = vld [vmem:[%s1 + $0x34] sm:$0xf]
  %v33 = vld [vmem:[%s1 + $0x38] sm:$0x3]
  %v34 = vld [vmem:[%s2] sm:$0x1]
  %v36 = vlaneseq
  %v37 = vshrl.u32 %v36, 7
  %v38 = vsub.s32 0, %v37
  %v39 = vrot.slane %v34, %v38
  %v45 = vunpack.c.l.b16 %v15
  %v46 = vunpack.c.l.b16 %v16
  %v47 = vunpack.c.l.b16 %v17
  %v48 = vunpack.c.l.b16 %v18
  %v49 = vpack.c.b16 %v46, %v45
  %v50 = vpack.c.b16 %v48, %v47
  %v66 = vunpack.c.l.b16 %v19
  %v67 = vunpack.c.l.b16 %v20
  %v68 = vunpack.c.l.b16 %v21
  %v69 = vunpack.c.l.b16 %v22
  %v70 = vunpack.c.l.b16 %v23
  %v71 = vunpack.c.l.b16 %v24
  %v72 = vunpack.c.l.b16 %v25
  %v73 = vunpack.c.l.b16 %v26
  %v74 = vunpack.c.l.b16 %v27
  %v75 = vunpack.c.l.b16 %v28
  %v76 = vunpack.c.l.b16 %v29
  %v77 = vunpack.c.l.b16 %v30
  %v78 = vunpack.c.l.b16 %v31
  %v79 = vunpack.c.l.b16 %v32
  %v80 = vunpack.c.l.b16 %v33
  %v81 = vpack.c.b16 %v67, %v66
  %v82 = vpack.c.b16 %v69, %v68
  %v83 = vpack.c.b16 %v71, %v70
  %v84 = vpack.c.b16 %v73, %v72
  %v85 = vpack.c.b16 %v75, %v74
  %v86 = vpack.c.b16 %v77, %v76
  %v87 = vpack.c.b16 %v79, %v78
  %v88 = vpack.c.b16 %v80, %v80
  %vm96 = vcmask 949248
  %v98 = vsel %vm96, %v49, 0
  %v101 = vsel %vm96, %v50, 0
  %vm103 = vcmask 1041408
  %v105 = vsel %vm103, %v88, 0
  %107 = vmatprep.subr.bf16.mxu0 0
  %108 = vmatpush1.bf16.msra.mxu0 %v105
  %109 = vmatprep.subr.bf16.mxu0 0
  %110 = vmatpush1.bf16.msra.mxu0 %v87
  %111 = vmatprep.subr.bf16.mxu0 0
  %112 = vmatpush1.bf16.msra.mxu0 %v86
  %113 = vmatprep.subr.bf16.mxu0 0
  %114 = vmatpush1.bf16.msra.mxu0 %v85
  %115 = vmatprep.subr.bf16.mxu0 0
  %116 = vmatpush1.bf16.msra.mxu0 %v84
  %117 = vmatprep.subr.bf16.mxu0 0
  %118 = vmatpush1.bf16.msra.mxu0 %v83
  %119 = vmatprep.subr.bf16.mxu0 0
  %120 = vmatpush1.bf16.msra.mxu0 %v82
  %121 = vmatprep.subr.bf16.mxu0 0
  %122 = vmatpush1.bf16.msra.mxu0 %v81
  %123 = vmatprep.subr.bf16.mxu0 0
  %124 = vmatpush2.bf16.msra.mxu0 0
  %125 = vmatprep.subr.bf16.mxu0 0
  %126 = vmatpush2.bf16.msra.mxu0 0
  %127 = vmatprep.subr.bf16.mxu0 0
  %128 = vmatpush2.bf16.msra.mxu0 0
  %129 = vmatprep.subr.bf16.mxu0 0
  %130 = vmatpush2.bf16.msra.mxu0 0
  %131 = vmatprep.subr.bf16.mxu0 0
  %132 = vmatpush2.bf16.msra.mxu0 0
  %133 = vmatprep.subr.bf16.mxu0 0
  %134 = vmatpush2.bf16.msra.mxu0 0
  %135 = vmatprep.subr.bf16.mxu0 0
  %136 = vmatpush2.bf16.msra.mxu0 0
  %137 = vmatprep.subr.bf16.mxu0 0
  %138 = vmatpush2.bf16.msra.mxu0 0
  %139 = vmatprep.mubr.bf16.mxu0 0
  %140 = vmatmul.mubr.bf16.gmra.mxu0 %v98
  %v141 = vpop.f32.mrf.mxu0
  %v142 = vadd.f32 %v39, %v141
  %v143 = vpop.f32.mrf.mxu0
  %v144 = vpop.f32.mrf.mxu0
  %v145 = vadd.f32 %v39, %v144
  %v146 = vpop.f32.mrf.mxu0
  %147 = vmatprep.mubr.bf16.mxu0 0
  %148 = vmatmul.mubr.bf16.gmra.mxu0 %v101
  %v149 = vpop.f32.mrf.mxu0
  %v150 = vadd.f32 %v39, %v149
  %v151 = vpop.f32.mrf.mxu0
  %v152 = vpop.f32.mrf.mxu0
  %v153 = vadd.f32 %v39, %v152
  %v154 = vpop.f32.mrf.mxu0
  %155 = vdwg.mxu0
  %v156 = vpack.c.bf16 %v145, %v142
  %v157 = vpack.c.bf16 %v153, %v150
  %v160 = vunpack.c.l.b16 %v156
  %v161 = vunpack.c.h.b16 %v156
  %v162 = vunpack.c.l.b16 %v157
  %v163 = vunpack.c.h.b16 %v157
  %v164 = vpack.c.b16 %v160, %v160
  %v165 = vpack.c.b16 %v161, %v161
  %v166 = vpack.c.b16 %v162, %v162
  %v167 = vpack.c.b16 %v163, %v163
  %vm172 = vcmask 289792
  %173 = vst.msk [vmem:[%s3] sm:$0xf] %vm172, %v164
  %174 = vst.msk [vmem:[%s3 + $0x4] sm:$0xf] %vm172, %v165
  %175 = vst.msk [vmem:[%s3 + $0x8] sm:$0xf] %vm172, %v166
  %176 = vst.msk [vmem:[%s3 + $0xc] sm:$0xf] %vm172, %v167
  // Predicated region
  $region14: #{decoder_forward.18} parent=0 // pred_check
    _
  $region15: #{decoder_forward.18} parent=0 // pred_check_branch
    %178 = sbr.rel (0) target = $region17
  $region16: #{decoder_forward.18} parent=0 // pred_region
    _
  $region17: #{decoder_forward.18} parent=0 // pred_fallthru
    _
  // Predicated region
  $region18: #{decoder_forward.18} parent=0 // pred_check
    _
  $region19: #{decoder_forward.18} parent=0 // pred_check_branch
    %180 = sbr.rel (0) target = $region21
  $region20: #{decoder_forward.18} parent=0 // pred_region
    _
  $region21: #{decoder_forward.18} parent=0 // pred_fallthru
    _

// kernel: decoder_forward.19
$region0: #{decoder_forward.19}
  #allocation0 [shape = 'u32[]', space=smem, size = 0x4, offset = 0x4, fixed_abs, tag = 'smem constant byte address 0x4 - core index']
  #allocation1 [shape = 'u32[144,128]{1,0:T(1,128)}', space=vmem, size = 0x12000, scoped, tag = 'internal scratch']
  %s0 = inlined_call_operand.vmem [shape: bf16[32,324], index: 0, kind: input, shape index: {}]
  %s1 = inlined_call_operand.vmem [shape: bf16[324,36], index: 1, kind: input, shape index: {}]
  %s2 = inlined_call_operand.vmem [shape: f32[1,36], index: 2, kind: input, shape index: {}]
  %s3 = inlined_call_operand.vmem [shape: bf16[32,36], index: 3, kind: output, shape index: {}]
  %s4 = sld [smem:[#allocation0]]
  $region22: #{decoder_forward.19} parent=0
    _
  %s6 = ssub.s32 1, %s4
  %s7 = scalar_select 0, %s6, %s4
  // Predicated region
  $region2: #{decoder_forward.19} parent=0 // pred_check
    _
  $region3: #{decoder_forward.19} parent=0 // pred_check_branch
    %9 = sbr.rel (0) target = $region5
  $region4: #{decoder_forward.19} parent=0 // pred_region
    _
  $region5: #{decoder_forward.19} parent=0 // pred_fallthru
    _
  // Predicated region
  $region6: #{decoder_forward.19} parent=0 // pred_check
    _
  $region7: #{decoder_forward.19} parent=0 // pred_check_branch
    %11 = sbr.rel (0) target = $region9
  $region8: #{decoder_forward.19} parent=0 // pred_region
    _
  $region9: #{decoder_forward.19} parent=0 // pred_fallthru
    _
  // Predicated region
  $region10: #{decoder_forward.19} parent=0 // pred_check
    _
  $region11: #{decoder_forward.19} parent=0 // pred_check_branch
    %13 = sbr.rel (0) target = $region13
  $region12: #{decoder_forward.19} parent=0 // pred_region
    _
  $region13: #{decoder_forward.19} parent=0 // pred_fallthru
    _
  %v15 = vld [vmem:[%s0] sm:$0xff]
  %v16 = vld [vmem:[%s0 + $0x8] sm:$0xf]
  %v17 = vld [vmem:[%s0 + $0xc] sm:$0xff]
  %v18 = vld [vmem:[%s0 + $0x14] sm:$0xf]
  %v19 = vld [vmem:[%s0 + $0x18] sm:$0xff]
  %v20 = vld [vmem:[%s0 + $0x20] sm:$0xf]
  %v21 = vld [vmem:[%s0 + $0x24] sm:$0xff]
  %v22 = vld [vmem:[%s0 + $0x2c] sm:$0xf]
  %v23 = vld [vmem:[%s1] sm:$0xf]
  %v24 = vld [vmem:[%s1 + $0x4] sm:$0xf]
  %v25 = vld [vmem:[%s1 + $0x8] sm:$0xf]
  %v26 = vld [vmem:[%s1 + $0xc] sm:$0xf]
  %v27 = vld [vmem:[%s1 + $0x10] sm:$0xf]
  %v28 = vld [vmem:[%s1 + $0x14] sm:$0xf]
  %v29 = vld [vmem:[%s1 + $0x18] sm:$0xf]
  %v30 = vld [vmem:[%s1 + $0x1c] sm:$0xf]
  %v31 = vld [vmem:[%s1 + $0x20] sm:$0xf]
  %v32 = vld [vmem:[%s1 + $0x24] sm:$0xf]
  %v33 = vld [vmem:[%s1 + $0x28] sm:$0xf]
  %v34 = vld [vmem:[%s1 + $0x2c] sm:$0xf]
  %v35 = vld [vmem:[%s1 + $0x30] sm:$0xf]
  %v36 = vld [vmem:[%s1 + $0x34] sm:$0xf]
  %v37 = vld [vmem:[%s1 + $0x38] sm:$0xf]
  %v38 = vld [vmem:[%s1 + $0x3c] sm:$0xf]
  %v39 = vld [vmem:[%s1 + $0x40] sm:$0xf]
  %v40 = vld [vmem:[%s1 + $0x44] sm:$0xf]
  %v41 = vld [vmem:[%s1 + $0x48] sm:$0xf]
  %v42 = vld [vmem:[%s1 + $0x4c] sm:$0xf]
  %v43 = vld [vmem:[%s1 + $0x50] sm:$0xf]
  %v44 = vld [vmem:[%s1 + $0x54] sm:$0xf]
  %v45 = vld [vmem:[%s1 + $0x58] sm:$0xf]
  %v46 = vld [vmem:[%s1 + $0x5c] sm:$0xf]
  %v47 = vld [vmem:[%s1 + $0x60] sm:$0xf]
  %v48 = vld [vmem:[%s1 + $0x64] sm:$0xf]
  %v49 = vld [vmem:[%s1 + $0x68] sm:$0xf]
  %v50 = vld [vmem:[%s1 + $0x6c] sm:$0xf]
  %v51 = vld [vmem:[%s1 + $0x70] sm:$0xf]
  %v52 = vld [vmem:[%s1 + $0x74] sm:$0xf]
  %v53 = vld [vmem:[%s1 + $0x78] sm:$0xf]
  %v54 = vld [vmem:[%s1 + $0x7c] sm:$0xf]
  %v55 = vld [vmem:[%s1 + $0x80] sm:$0xf]
  %v56 = vld [vmem:[%s1 + $0x84] sm:$0xf]
  %v57 = vld [vmem:[%s1 + $0x88] sm:$0xf]
  %v58 = vld [vmem:[%s1 + $0x8c] sm:$0xf]
  %v59 = vld [vmem:[%s1 + $0x90] sm:$0xf]
  %v60 = vld [vmem:[%s1 + $0x94] sm:$0xf]
  %v61 = vld [vmem:[%s1 + $0x98] sm:$0xf]
  %v62 = vld [vmem:[%s1 + $0x9c] sm:$0xf]
  %v63 = vld [vmem:[%s1 + $0xa0] sm:$0x3]
  %v64 = vld [vmem:[%s2] sm:$0x1]
  %v66 = vlaneseq
  %v67 = vshrl.u32 %v66, 7
  %v68 = vsub.s32 0, %v67
  %v69 = vrot.slane %v64, %v68
  %v79 = vunpack.c.l.b16 %v15
  %v80 = vunpack.c.h.b16 %v15
  %v81 = vunpack.c.l.b16 %v16
  %v82 = vunpack.c.l.b16 %v17
  %v83 = vunpack.c.h.b16 %v17
  %v84 = vunpack.c.l.b16 %v18
  %v85 = vunpack.c.l.b16 %v19
  %v86 = vunpack.c.h.b16 %v19
  %v87 = vunpack.c.l.b16 %v20
  %v88 = vunpack.c.l.b16 %v21
  %v89 = vunpack.c.h.b16 %v21
  %v90 = vunpack.c.l.b16 %v22
  %v91 = vpack.c.b16 %v82, %v79
  %v92 = vpack.c.b16 %v83, %v80
  %v93 = vpack.c.b16 %v84, %v81
  %v94 = vpack.c.b16 %v88, %v85
  %v95 = vpack.c.b16 %v89, %v86
  %v96 = vpack.c.b16 %v90, %v87
  %v142 = vunpack.c.l.b16 %v23
  %v143 = vunpack.c.l.b16 %v24
  %v144 = vunpack.c.l.b16 %v25
  %v145 = vunpack.c.l.b16 %v26
  %v146 = vunpack.c.l.b16 %v27
  %v147 = vunpack.c.l.b16 %v28
  %v148 = vunpack.c.l.b16 %v29
  %v149 = vunpack.c.l.b16 %v30
  %v150 = vunpack.c.l.b16 %v31
  %v151 = vunpack.c.l.b16 %v32
  %v152 = vunpack.c.l.b16 %v33
  %v153 = vunpack.c.l.b16 %v34
  %v154 = vunpack.c.l.b16 %v35
  %v155 = vunpack.c.l.b16 %v36
  %v156 = vunpack.c.l.b16 %v37
  %v157 = vunpack.c.l.b16 %v38
  %v158 = vunpack.c.l.b16 %v39
  %v159 = vunpack.c.l.b16 %v40
  %v160 = vunpack.c.l.b16 %v41
  %v161 = vunpack.c.l.b16 %v42
  %v162 = vunpack.c.l.b16 %v43
  %v163 = vunpack.c.l.b16 %v44
  %v164 = vunpack.c.l.b16 %v45
  %v165 = vunpack.c.l.b16 %v46
  %v166 = vunpack.c.l.b16 %v47
  %v167 = vunpack.c.l.b16 %v48
  %v168 = vunpack.c.l.b16 %v49
  %v169 = vunpack.c.l.b16 %v50
  %v170 = vunpack.c.l.b16 %v51
  %v171 = vunpack.c.l.b16 %v52
  %v172 = vunpack.c.l.b16 %v53
  %v173 = vunpack.c.l.b16 %v54
  %v174 = vunpack.c.l.b16 %v55
  %v175 = vunpack.c.l.b16 %v56
  %v176 = vunpack.c.l.b16 %v57
  %v177 = vunpack.c.l.b16 %v58
  %v178 = vunpack.c.l.b16 %v59
  %v179 = vunpack.c.l.b16 %v60
  %v180 = vunpack.c.l.b16 %v61
  %v181 = vunpack.c.l.b16 %v62
  %v182 = vunpack.c.l.b16 %v63
  %v183 = vpack.c.b16 %v143, %v142
  %v184 = vpack.c.b16 %v145, %v144
  %v185 = vpack.c.b16 %v147, %v146
  %v186 = vpack.c.b16 %v149, %v148
  %v187 = vpack.c.b16 %v151, %v150
  %v188 = vpack.c.b16 %v153, %v152
  %v189 = vpack.c.b16 %v155, %v154
  %v190 = vpack.c.b16 %v157, %v156
  %v191 = vpack.c.b16 %v159, %v158
  %v192 = vpack.c.b16 %v161, %v160
  %v193 = vpack.c.b16 %v163, %v162
  %v194 = vpack.c.b16 %v165, %v164
  %v195 = vpack.c.b16 %v167, %v166
  %v196 = vpack.c.b16 %v169, %v168
  %v197 = vpack.c.b16 %v171, %v170
  %v198 = vpack.c.b16 %v173, %v172
  %v199 = vpack.c.b16 %v175, %v174
  %v200 = vpack.c.b16 %v177, %v176
  %v201 = vpack.c.b16 %v179, %v178
  %v202 = vpack.c.b16 %v181, %v180
  %v203 = vpack.c.b16 %v182, %v182
  %vm224 = vcmask 556032
  %v226 = vsel %vm224, %v93, 0
  %v229 = vsel %vm224, %v96, 0
  %vm231 = vcmask 1041408
  %v233 = vsel %vm231, %v203, 0
  %235 = vmatprep.subr.bf16.mxu0 0
  %236 = vmatpush1.bf16.msra.mxu0 %v190
  %237 = vmatprep.subr.bf16.mxu0 0
  %238 = vmatpush1.bf16.msra.mxu0 %v189
  %239 = vmatprep.subr.bf16.mxu0 0
  %240 = vmatpush1.bf16.msra.mxu0 %v188
  %241 = vmatprep.subr.bf16.mxu0 0
  %242 = vmatpush1.bf16.msra.mxu0 %v187
  %243 = vmatprep.subr.bf16.mxu0 0
  %244 = vmatpush1.bf16.msra.mxu0 %v186
  %245 = vmatprep.subr.bf16.mxu0 0
  %246 = vmatpush1.bf16.msra.mxu0 %v185
  %247 = vmatprep.subr.bf16.mxu0 0
  %248 = vmatpush1.bf16.msra.mxu0 %v184
  %249 = vmatprep.subr.bf16.mxu0 0
  %250 = vmatpush1.bf16.msra.mxu0 %v183
  %251 = vmatprep.subr.bf16.mxu0 0
  %252 = vmatpush2.bf16.msra.mxu0 %v198
  %253 = vmatprep.subr.bf16.mxu0 0
  %254 = vmatpush2.bf16.msra.mxu0 %v197
  %255 = vmatprep.subr.bf16.mxu0 0
  %256 = vmatpush2.bf16.msra.mxu0 %v196
  %257 = vmatprep.subr.bf16.mxu0 0
  %258 = vmatpush2.bf16.msra.mxu0 %v195
  %259 = vmatprep.subr.bf16.mxu0 0
  %260 = vmatpush2.bf16.msra.mxu0 %v194
  %261 = vmatprep.subr.bf16.mxu0 0
  %262 = vmatpush2.bf16.msra.mxu0 %v193
  %263 = vmatprep.subr.bf16.mxu0 0
  %264 = vmatpush2.bf16.msra.mxu0 %v192
  %265 = vmatprep.subr.bf16.mxu0 0
  %266 = vmatpush2.bf16.msra.mxu0 %v191
  %267 = vmatprep.mubr.bf16.mxu0 %v92
  %268 = vmatmul.mubr.bf16.gmra.mxu0 %v91
  %v269 = vpop.f32.mrf.mxu0
  %v270 = vadd.f32 %v69, %v269
  %v271 = vpop.f32.mrf.mxu0
  %v272 = vpop.f32.mrf.mxu0
  %v273 = vadd.f32 %v69, %v272
  %v274 = vpop.f32.mrf.mxu0
  %275 = vmatprep.mubr.bf16.mxu0 %v95
  %276 = vmatmul.mubr.bf16.gmra.mxu0 %v94
  %v277 = vpop.f32.mrf.mxu0
  %v278 = vadd.f32 %v69, %v277
  %v279 = vpop.f32.mrf.mxu0
  %v280 = vpop.f32.mrf.mxu0
  %v281 = vadd.f32 %v69, %v280
  %v282 = vpop.f32.mrf.mxu0
  %283 = vdwg.mxu0
  %284 = vmatprep.subr.bf16.mxu0 0
  %285 = vmatpush1.bf16.msra.mxu0 0
  %286 = vmatprep.subr.bf16.mxu0 0
  %287 = vmatpush1.bf16.msra.mxu0 0
  %288 = vmatprep.subr.bf16.mxu0 0
  %289 = vmatpush1.bf16.msra.mxu0 0
  %290 = vmatprep.subr.bf16.mxu0 0
  %291 = vmatpush1.bf16.msra.mxu0 %v233
  %292 = vmatprep.subr.bf16.mxu0 0
  %293 = vmatpush1.bf16.msra.mxu0 %v202
  %294 = vmatprep.subr.bf16.mxu0 0
  %295 = vmatpush1.bf16.msra.mxu0 %v201
  %296 = vmatprep.subr.bf16.mxu0 0
  %297 = vmatpush1.bf16.msra.mxu0 %v200
  %298 = vmatprep.subr.bf16.mxu0 0
  %299 = vmatpush1.bf16.msra.mxu0 %v199
  %300 = vmatprep.subr.bf16.mxu0 0
  %301 = vmatpush2.bf16.msra.mxu0 0
  %302 = vmatprep.subr.bf16.mxu0 0
  %303 = vmatpush2.bf16.msra.mxu0 0
  %304 = vmatprep.subr.bf16.mxu0 0
  %305 = vmatpush2.bf16.msra.mxu0 0
  %306 = vmatprep.subr.bf16.mxu0 0
  %307 = vmatpush2.bf16.msra.mxu0 0
  %308 = vmatprep.subr.bf16.mxu0 0
  %309 = vmatpush2.bf16.msra.mxu0 0
  %310 = vmatprep.subr.bf16.mxu0 0
  %311 = vmatpush2.bf16.msra.mxu0 0
  %312 = vmatprep.subr.bf16.mxu0 0
  %313 = vmatpush2.bf16.msra.mxu0 0
  %314 = vmatprep.subr.bf16.mxu0 0
  %315 = vmatpush2.bf16.msra.mxu0 0
  %316 = vmatprep.mubr.bf16.mxu0 0
  %317 = vmatmul.mubr.bf16.gmra.mxu0 %v226
  %v318 = vpop.f32.mrf.mxu0
  %v319 = vadd.f32 %v270, %v318
  %v320 = vpop.f32.mrf.mxu0
  %v321 = vpop.f32.mrf.mxu0
  %v322 = vadd.f32 %v273, %v321
  %v323 = vpop.f32.mrf.mxu0
  %324 = vmatprep.mubr.bf16.mxu0 0
  %325 = vmatmul.mubr.bf16.gmra.mxu0 %v229
  %v326 = vpop.f32.mrf.mxu0
  %v327 = vadd.f32 %v278, %v326
  %v328 = vpop.f32.mrf.mxu0
  %v329 = vpop.f32.mrf.mxu0
  %v330 = vadd.f32 %v281, %v329
  %v331 = vpop.f32.mrf.mxu0
  %332 = vdwg.mxu0
  %vm333 = vcmp.ge.f32.partialorder %v319, 0.0
  %vm334 = vcmp.ge.f32.partialorder %v322, 0.0
  %vm335 = vcmp.ge.f32.partialorder %v327, 0.0
  %vm336 = vcmp.ge.f32.partialorder %v330, 0.0
  %v337 = vmul.f32 %v319, 0.01
  %v338 = vmul.f32 %v322, 0.01
  %v339 = vmul.f32 %v327, 0.01
  %v340 = vmul.f32 %v330, 0.01
  %v341 = vsel %vm333, %v319, %v337
  %v342 = vsel %vm334, %v322, %v338
  %v343 = vsel %vm335, %v327, %v339
  %v344 = vsel %vm336, %v330, %v340
  %v345 = vpack.c.bf16 %v342, %v341
  %v346 = vpack.c.bf16 %v344, %v343
  %v349 = vunpack.c.l.b16 %v345
  %v350 = vunpack.c.h.b16 %v345
  %v351 = vunpack.c.l.b16 %v346
  %v352 = vunpack.c.h.b16 %v346
  %v353 = vpack.c.b16 %v349, %v349
  %v354 = vpack.c.b16 %v350, %v350
  %v355 = vpack.c.b16 %v351, %v351
  %v356 = vpack.c.b16 %v352, %v352
  %vm361 = vcmask 289792
  %362 = vst.msk [vmem:[%s3] sm:$0xf] %vm361, %v353
  %363 = vst.msk [vmem:[%s3 + $0x4] sm:$0xf] %vm361, %v354
  %364 = vst.msk [vmem:[%s3 + $0x8] sm:$0xf] %vm361, %v355
  %365 = vst.msk [vmem:[%s3 + $0xc] sm:$0xf] %vm361, %v356
  // Predicated region
  $region14: #{decoder_forward.19} parent=0 // pred_check
    _
  $region15: #{decoder_forward.19} parent=0 // pred_check_branch
    %367 = sbr.rel (0) target = $region17
  $region16: #{decoder_forward.19} parent=0 // pred_region
    _
  $region17: #{decoder_forward.19} parent=0 // pred_fallthru
    _
  // Predicated region
  $region18: #{decoder_forward.19} parent=0 // pred_check
    _
  $region19: #{decoder_forward.19} parent=0 // pred_check_branch
    %369 = sbr.rel (0) target = $region21
  $region20: #{decoder_forward.19} parent=0 // pred_region
    _
  $region21: #{decoder_forward.19} parent=0 // pred_fallthru
    _

// kernel: decoder_forward.20
$region0: #{decoder_forward.20}
  #allocation0 [shape = 'u32[]', space=smem, size = 0x4, offset = 0x4, fixed_abs, tag = 'smem constant byte address 0x4 - core index']
  #allocation1 [shape = 'u32[144,128]{1,0:T(1,128)}', space=vmem, size = 0x12000, scoped, tag = 'internal scratch']
  %s0 = inlined_call_operand.vmem [shape: bf16[32,152], index: 0, kind: input, shape index: {}]
  %s1 = inlined_call_operand.vmem [shape: bf16[152,36], index: 1, kind: input, shape index: {}]
  %s2 = inlined_call_operand.vmem [shape: f32[1,36], index: 2, kind: input, shape index: {}]
  %s3 = inlined_call_operand.vmem [shape: bf16[32,36], index: 3, kind: output, shape index: {}]
  %s4 = sld [smem:[#allocation0]]
  $region22: #{decoder_forward.20} parent=0
    _
  %s6 = ssub.s32 1, %s4
  %s7 = scalar_select 0, %s6, %s4
  // Predicated region
  $region2: #{decoder_forward.20} parent=0 // pred_check
    _
  $region3: #{decoder_forward.20} parent=0 // pred_check_branch
    %9 = sbr.rel (0) target = $region5
  $region4: #{decoder_forward.20} parent=0 // pred_region
    _
  $region5: #{decoder_forward.20} parent=0 // pred_fallthru
    _
  // Predicated region
  $region6: #{decoder_forward.20} parent=0 // pred_check
    _
  $region7: #{decoder_forward.20} parent=0 // pred_check_branch
    %11 = sbr.rel (0) target = $region9
  $region8: #{decoder_forward.20} parent=0 // pred_region
    _
  $region9: #{decoder_forward.20} parent=0 // pred_fallthru
    _
  // Predicated region
  $region10: #{decoder_forward.20} parent=0 // pred_check
    _
  $region11: #{decoder_forward.20} parent=0 // pred_check_branch
    %13 = sbr.rel (0) target = $region13
  $region12: #{decoder_forward.20} parent=0 // pred_region
    _
  $region13: #{decoder_forward.20} parent=0 // pred_fallthru
    _
  %v15 = vld [vmem:[%s0] sm:$0xff]
  %v16 = vld [vmem:[%s0 + $0x8] sm:$0xff]
  %v17 = vld [vmem:[%s0 + $0x10] sm:$0xff]
  %v18 = vld [vmem:[%s0 + $0x18] sm:$0xff]
  %v19 = vld [vmem:[%s1] sm:$0xf]
  %v20 = vld [vmem:[%s1 + $0x4] sm:$0xf]
  %v21 = vld [vmem:[%s1 + $0x8] sm:$0xf]
  %v22 = vld [vmem:[%s1 + $0xc] sm:$0xf]
  %v23 = vld [vmem:[%s1 + $0x10] sm:$0xf]
  %v24 = vld [vmem:[%s1 + $0x14] sm:$0xf]
  %v25 = vld [vmem:[%s1 + $0x18] sm:$0xf]
  %v26 = vld [vmem:[%s1 + $0x1c] sm:$0xf]
  %v27 = vld [vmem:[%s1 + $0x20] sm:$0xf]
  %v28 = vld [vmem:[%s1 + $0x24] sm:$0xf]
  %v29 = vld [vmem:[%s1 + $0x28] sm:$0xf]
  %v30 = vld [vmem:[%s1 + $0x2c] sm:$0xf]
  %v31 = vld [vmem:[%s1 + $0x30] sm:$0xf]
  %v32 = vld [vmem:[%s1 + $0x34] sm:$0xf]
  %v33 = vld [vmem:[%s1 + $0x38] sm:$0xf]
  %v34 = vld [vmem:[%s1 + $0x3c] sm:$0xf]
  %v35 = vld [vmem:[%s1 + $0x40] sm:$0xf]
  %v36 = vld [vmem:[%s1 + $0x44] sm:$0xf]
  %v37 = vld [vmem:[%s1 + $0x48] sm:$0xf]
  %v38 = vld [vmem:[%s2] sm:$0x1]
  %v40 = vlaneseq
  %v41 = vshrl.u32 %v40, 7
  %v42 = vsub.s32 0, %v41
  %v43 = vrot.slane %v38, %v42
  %v49 = vunpack.c.l.b16 %v15
  %v50 = vunpack.c.h.b16 %v15
  %v51 = vunpack.c.l.b16 %v16
  %v52 = vunpack.c.h.b16 %v16
  %v53 = vunpack.c.l.b16 %v17
  %v54 = vunpack.c.h.b16 %v17
  %v55 = vunpack.c.l.b16 %v18
  %v56 = vunpack.c.h.b16 %v18
  %v57 = vpack.c.b16 %v51, %v49
  %v58 = vpack.c.b16 %v52, %v50
  %v59 = vpack.c.b16 %v55, %v53
  %v60 = vpack.c.b16 %v56, %v54
  %v82 = vunpack.c.l.b16 %v19
  %v83 = vunpack.c.l.b16 %v20
  %v84 = vunpack.c.l.b16 %v21
  %v85 = vunpack.c.l.b16 %v22
  %v86 = vunpack.c.l.b16 %v23
  %v87 = vunpack.c.l.b16 %v24
  %v88 = vunpack.c.l.b16 %v25
  %v89 = vunpack.c.l.b16 %v26
  %v90 = vunpack.c.l.b16 %v27
  %v91 = vunpack.c.l.b16 %v28
  %v92 = vunpack.c.l.b16 %v29
  %v93 = vunpack.c.l.b16 %v30
  %v94 = vunpack.c.l.b16 %v31
  %v95 = vunpack.c.l.b16 %v32
  %v96 = vunpack.c.l.b16 %v33
  %v97 = vunpack.c.l.b16 %v34
  %v98 = vunpack.c.l.b16 %v35
  %v99 = vunpack.c.l.b16 %v36
  %v100 = vunpack.c.l.b16 %v37
  %v101 = vpack.c.b16 %v83, %v82
  %v102 = vpack.c.b16 %v85, %v84
  %v103 = vpack.c.b16 %v87, %v86
  %v104 = vpack.c.b16 %v89, %v88
  %v105 = vpack.c.b16 %v91, %v90
  %v106 = vpack.c.b16 %v93, %v92
  %v107 = vpack.c.b16 %v95, %v94
  %v108 = vpack.c.b16 %v97, %v96
  %v109 = vpack.c.b16 %v99, %v98
  %v110 = vpack.c.b16 %v100, %v100
  %vm120 = vcmask 195584
  %v122 = vsel %vm120, %v58, 0
  %v125 = vsel %vm120, %v60, 0
  %vm127 = vcmask 1043456
  %v129 = vsel %vm127, %v110, 0
  %131 = vmatprep.subr.bf16.mxu0 0
  %132 = vmatpush1.bf16.msra.mxu0 %v108
  %133 = vmatprep.subr.bf16.mxu0 0
  %134 = vmatpush1.bf16.msra.mxu0 %v107
  %135 = vmatprep.subr.bf16.mxu0 0
  %136 = vmatpush1.bf16.msra.mxu0 %v106
  %137 = vmatprep.subr.bf16.mxu0 0
  %138 = vmatpush1.bf16.msra.mxu0 %v105
  %139 = vmatprep.subr.bf16.mxu0 0
  %140 = vmatpush1.bf16.msra.mxu0 %v104
  %141 = vmatprep.subr.bf16.mxu0 0
  %142 = vmatpush1.bf16.msra.mxu0 %v103
  %143 = vmatprep.subr.bf16.mxu0 0
  %144 = vmatpush1.bf16.msra.mxu0 %v102
  %145 = vmatprep.subr.bf16.mxu0 0
  %146 = vmatpush1.bf16.msra.mxu0 %v101
  %147 = vmatprep.subr.bf16.mxu0 0
  %148 = vmatpush2.bf16.msra.mxu0 0
  %149 = vmatprep.subr.bf16.mxu0 0
  %150 = vmatpush2.bf16.msra.mxu0 0
  %151 = vmatprep.subr.bf16.mxu0 0
  %152 = vmatpush2.bf16.msra.mxu0 0
  %153 = vmatprep.subr.bf16.mxu0 0
  %154 = vmatpush2.bf16.msra.mxu0 0
  %155 = vmatprep.subr.bf16.mxu0 0
  %156 = vmatpush2.bf16.msra.mxu0 0
  %157 = vmatprep.subr.bf16.mxu0 0
  %158 = vmatpush2.bf16.msra.mxu0 0
  %159 = vmatprep.subr.bf16.mxu0 0
  %160 = vmatpush2.bf16.msra.mxu0 %v129
  %161 = vmatprep.subr.bf16.mxu0 0
  %162 = vmatpush2.bf16.msra.mxu0 %v109
  %163 = vmatprep.mubr.bf16.mxu0 %v122
  %164 = vmatmul.mubr.bf16.gmra.mxu0 %v57
  %v165 = vpop.f32.mrf.mxu0
  %v166 = vadd.f32 %v43, %v165
  %v167 = vpop.f32.mrf.mxu0
  %v168 = vpop.f32.mrf.mxu0
  %v169 = vadd.f32 %v43, %v168
  %v170 = vpop.f32.mrf.mxu0
  %171 = vmatprep.mubr.bf16.mxu0 %v125
  %172 = vmatmul.mubr.bf16.gmra.mxu0 %v59
  %v173 = vpop.f32.mrf.mxu0
  %v174 = vadd.f32 %v43, %v173
  %v175 = vpop.f32.mrf.mxu0
  %v176 = vpop.f32.mrf.mxu0
  %v177 = vadd.f32 %v43, %v176
  %v178 = vpop.f32.mrf.mxu0
  %179 = vdwg.mxu0
  %v180 = vpack.c.bf16 %v169, %v166
  %v181 = vpack.c.bf16 %v177, %v174
  %v184 = vunpack.c.l.b16 %v180
  %v185 = vunpack.c.h.b16 %v180
  %v186 = vunpack.c.l.b16 %v181
  %v187 = vunpack.c.h.b16 %v181
  %v188 = vpack.c.b16 %v184, %v184
  %v189 = vpack.c.b16 %v185, %v185
  %v190 = vpack.c.b16 %v186, %v186
  %v191 = vpack.c.b16 %v187, %v187
  %vm196 = vcmask 289792
  %197 = vst.msk [vmem:[%s3] sm:$0xf] %vm196, %v188
  %198 = vst.msk [vmem:[%s3 + $0x4] sm:$0xf] %vm196, %v189
  %199 = vst.msk [vmem:[%s3 + $0x8] sm:$0xf] %vm196, %v190
  %200 = vst.msk [vmem:[%s3 + $0xc] sm:$0xf] %vm196, %v191
  // Predicated region
  $region14: #{decoder_forward.20} parent=0 // pred_check
    _
  $region15: #{decoder_forward.20} parent=0 // pred_check_branch
    %202 = sbr.rel (0) target = $region17
  $region16: #{decoder_forward.20} parent=0 // pred_region
    _
  $region17: #{decoder_forward.20} parent=0 // pred_fallthru
    _
  // Predicated region
  $region18: #{decoder_forward.20} parent=0 // pred_check
    _
  $region19: #{decoder_forward.20} parent=0 // pred_check_branch
    %204 = sbr.rel (0) target = $region21
  $region20: #{decoder_forward.20} parent=0 // pred_region
    _
  $region21: #{decoder_forward.20} parent=0 // pred_fallthru
    _

// kernel: decoder_forward.22
$region0: #{decoder_forward.22}
  #allocation0 [shape = 'u32[]', space=smem, size = 0x4, offset = 0x4, fixed_abs, tag = 'smem constant byte address 0x4 - core index']
  #allocation1 [shape = 'u32[144,128]{1,0:T(1,128)}', space=vmem, size = 0x12000, scoped, tag = 'internal scratch']
  %s0 = inlined_call_operand.vmem [shape: bf16[128,84], index: 0, kind: input, shape index: {}]
  %s1 = inlined_call_operand.vmem [shape: bf16[84,24], index: 1, kind: input, shape index: {}]
  %s2 = inlined_call_operand.vmem [shape: f32[1,24], index: 2, kind: input, shape index: {}]
  %s3 = inlined_call_operand.vmem [shape: bf16[128,24], index: 3, kind: output, shape index: {}]
  %s4 = sld [smem:[#allocation0]]
  $region22: #{decoder_forward.22} parent=0
    _
  %s6 = ssub.s32 1, %s4
  %s7 = scalar_select 0, %s6, %s4
  // Predicated region
  $region2: #{decoder_forward.22} parent=0 // pred_check
    _
  $region3: #{decoder_forward.22} parent=0 // pred_check_branch
    %9 = sbr.rel (0) target = $region5
  $region4: #{decoder_forward.22} parent=0 // pred_region
    _
  $region5: #{decoder_forward.22} parent=0 // pred_fallthru
    _
  // Predicated region
  $region6: #{decoder_forward.22} parent=0 // pred_check
    _
  $region7: #{decoder_forward.22} parent=0 // pred_check_branch
    %11 = sbr.rel (0) target = $region9
  $region8: #{decoder_forward.22} parent=0 // pred_region
    _
  $region9: #{decoder_forward.22} parent=0 // pred_fallthru
    _
  // Predicated region
  $region10: #{decoder_forward.22} parent=0 // pred_check
    _
  $region11: #{decoder_forward.22} parent=0 // pred_check_branch
    %13 = sbr.rel (0) target = $region13
  $region12: #{decoder_forward.22} parent=0 // pred_region
    _
  $region13: #{decoder_forward.22} parent=0 // pred_fallthru
    _
  %v15 = vld [vmem:[%s0] sm:$0xf]
  %v16 = vld [vmem:[%s0 + $0x4] sm:$0xf]
  %v17 = vld [vmem:[%s0 + $0x8] sm:$0xf]
  %v18 = vld [vmem:[%s0 + $0xc] sm:$0xf]
  %v19 = vld [vmem:[%s0 + $0x10] sm:$0xf]
  %v20 = vld [vmem:[%s0 + $0x14] sm:$0xf]
  %v21 = vld [vmem:[%s0 + $0x18] sm:$0xf]
  %v22 = vld [vmem:[%s0 + $0x1c] sm:$0xf]
  %v23 = vld [vmem:[%s0 + $0x20] sm:$0xf]
  %v24 = vld [vmem:[%s0 + $0x24] sm:$0xf]
  %v25 = vld [vmem:[%s0 + $0x28] sm:$0xf]
  %v26 = vld [vmem:[%s0 + $0x2c] sm:$0xf]
  %v27 = vld [vmem:[%s0 + $0x30] sm:$0xf]
  %v28 = vld [vmem:[%s0 + $0x34] sm:$0xf]
  %v29 = vld [vmem:[%s0 + $0x38] sm:$0xf]
  %v30 = vld [vmem:[%s0 + $0x3c] sm:$0xf]
  %v31 = vld [vmem:[%s1] sm:$0xf]
  %v32 = vld [vmem:[%s1 + $0x4] sm:$0xf]
  %v33 = vld [vmem:[%s1 + $0x8] sm:$0xf]
  %v34 = vld [vmem:[%s1 + $0xc] sm:$0xf]
  %v35 = vld [vmem:[%s1 + $0x10] sm:$0xf]
  %v36 = vld [vmem:[%s1 + $0x14] sm:$0xf]
  %v37 = vld [vmem:[%s1 + $0x18] sm:$0xf]
  %v38 = vld [vmem:[%s1 + $0x1c] sm:$0xf]
  %v39 = vld [vmem:[%s1 + $0x20] sm:$0xf]
  %v40 = vld [vmem:[%s1 + $0x24] sm:$0xf]
  %v41 = vld [vmem:[%s1 + $0x28] sm:$0x3]
  %v42 = vld [vmem:[%s2] sm:$0x1]
  %v44 = vlaneseq
  %v45 = vshrl.u32 %v44, 7
  %v46 = vsub.s32 0, %v45
  %v47 = vrot.slane %v42, %v46
  %v65 = vunpack.c.l.b16 %v15
  %v66 = vunpack.c.l.b16 %v16
  %v67 = vunpack.c.l.b16 %v17
  %v68 = vunpack.c.l.b16 %v18
  %v69 = vunpack.c.l.b16 %v19
  %v70 = vunpack.c.l.b16 %v20
  %v71 = vunpack.c.l.b16 %v21
  %v72 = vunpack.c.l.b16 %v22
  %v73 = vunpack.c.l.b16 %v23
  %v74 = vunpack.c.l.b16 %v24
  %v75 = vunpack.c.l.b16 %v25
  %v76 = vunpack.c.l.b16 %v26
  %v77 = vunpack.c.l.b16 %v27
  %v78 = vunpack.c.l.b16 %v28
  %v79 = vunpack.c.l.b16 %v29
  %v80 = vunpack.c.l.b16 %v30
  %v81 = vpack.c.b16 %v66, %v65
  %v82 = vpack.c.b16 %v68, %v67
  %v83 = vpack.c.b16 %v70, %v69
  %v84 = vpack.c.b16 %v72, %v71
  %v85 = vpack.c.b16 %v74, %v73
  %v86 = vpack.c.b16 %v76, %v75
  %v87 = vpack.c.b16 %v78, %v77
  %v88 = vpack.c.b16 %v80, %v79
  %v100 = vunpack.c.l.b16 %v31
  %v101 = vunpack.c.l.b16 %v32
  %v102 = vunpack.c.l.b16 %v33
  %v103 = vunpack.c.l.b16 %v34
  %v104 = vunpack.c.l.b16 %v35
  %v105 = vunpack.c.l.b16 %v36
  %v106 = vunpack.c.l.b16 %v37
  %v107 = vunpack.c.l.b16 %v38
  %v108 = vunpack.c.l.b16 %v39
  %v109 = vunpack.c.l.b16 %v40
  %v110 = vunpack.c.l.b16 %v41
  %v111 = vpack.c.b16 %v101, %v100
  %v112 = vpack.c.b16 %v103, %v102
  %v113 = vpack.c.b16 %v105, %v104
  %v114 = vpack.c.b16 %v107, %v106
  %v115 = vpack.c.b16 %v109, %v108
  %v116 = vpack.c.b16 %v110, %v110
  %vm122 = vcmask 687104
  %v124 = vsel %vm122, %v81, 0
  %v127 = vsel %vm122, %v82, 0
  %v130 = vsel %vm122, %v83, 0
  %v133 = vsel %vm122, %v84, 0
  %v136 = vsel %vm122, %v85, 0
  %v139 = vsel %vm122, %v86, 0
  %v142 = vsel %vm122, %v87, 0
  %v145 = vsel %vm122, %v88, 0
  %vm147 = vcmask 1041408
  %v149 = vsel %vm147, %v116, 0
  %151 = vmatprep.subr.bf16.mxu0 0
  %152 = vmatpush1.bf16.msra.mxu0 0
  %153 = vmatprep.subr.bf16.mxu0 0
  %154 = vmatpush1.bf16.msra.mxu0 0
  %155 = vmatprep.subr.bf16.mxu0 0
  %156 = vmatpush1.bf16.msra.mxu0 %v149
  %157 = vmatprep.subr.bf16.mxu0 0
  %158 = vmatpush1.bf16.msra.mxu0 %v115
  %159 = vmatprep.subr.bf16.mxu0 0
  %160 = vmatpush1.bf16.msra.mxu0 %v114
  %161 = vmatprep.subr.bf16.mxu0 0
  %162 = vmatpush1.bf16.msra.mxu0 %v113
  %163 = vmatprep.subr.bf16.mxu0 0
  %164 = vmatpush1.bf16.msra.mxu0 %v112
  %165 = vmatprep.subr.bf16.mxu0 0
  %166 = vmatpush1.bf16.msra.mxu0 %v111
  %167 = vmatprep.subr.bf16.mxu0 0
  %168 = vmatpush2.bf16.msra.mxu0 0
  %169 = vmatprep.subr.bf16.mxu0 0
  %170 = vmatpush2.bf16.msra.mxu0 0
  %171 = vmatprep.subr.bf16.mxu0 0
  %172 = vmatpush2.bf16.msra.mxu0 0
  %173 = vmatprep.subr.bf16.mxu0 0
  %174 = vmatpush2.bf16.msra.mxu0 0
  %175 = vmatprep.subr.bf16.mxu0 0
  %176 = vmatpush2.bf16.msra.mxu0 0
  %177 = vmatprep.subr.bf16.mxu0 0
  %178 = vmatpush2.bf16.msra.mxu0 0
  %179 = vmatprep.subr.bf16.mxu0 0
  %180 = vmatpush2.bf16.msra.mxu0 0
  %181 = vmatprep.subr.bf16.mxu0 0
  %182 = vmatpush2.bf16.msra.mxu0 0
  %183 = vmatprep.mubr.bf16.mxu0 0
  %184 = vmatmul.mubr.bf16.gmra.mxu0 %v124
  %v185 = vpop.f32.mrf.mxu0
  %v186 = vadd.f32 %v47, %v185
  %v187 = vpop.f32.mrf.mxu0
  %v188 = vpop.f32.mrf.mxu0
  %v189 = vadd.f32 %v47, %v188
  %v190 = vpop.f32.mrf.mxu0
  %191 = vmatprep.mubr.bf16.mxu0 0
  %192 = vmatmul.mubr.bf16.gmra.mxu0 %v127
  %v193 = vpop.f32.mrf.mxu0
  %v194 = vadd.f32 %v47, %v193
  %v195 = vpop.f32.mrf.mxu0
  %v196 = vpop.f32.mrf.mxu0
  %v197 = vadd.f32 %v47, %v196
  %v198 = vpop.f32.mrf.mxu0
  %199 = vmatprep.mubr.bf16.mxu0 0
  %200 = vmatmul.mubr.bf16.gmra.mxu0 %v130
  %v201 = vpop.f32.mrf.mxu0
  %v202 = vadd.f32 %v47, %v201
  %v203 = vpop.f32.mrf.mxu0
  %v204 = vpop.f32.mrf.mxu0
  %v205 = vadd.f32 %v47, %v204
  %v206 = vpop.f32.mrf.mxu0
  %207 = vmatprep.mubr.bf16.mxu0 0
  %208 = vmatmul.mubr.bf16.gmra.mxu0 %v133
  %v209 = vpop.f32.mrf.mxu0
  %v210 = vadd.f32 %v47, %v209
  %v211 = vpop.f32.mrf.mxu0
  %v212 = vpop.f32.mrf.mxu0
  %v213 = vadd.f32 %v47, %v212
  %v214 = vpop.f32.mrf.mxu0
  %215 = vmatprep.mubr.bf16.mxu0 0
  %216 = vmatmul.mubr.bf16.gmra.mxu0 %v136
  %v217 = vpop.f32.mrf.mxu0
  %v218 = vadd.f32 %v47, %v217
  %v219 = vpop.f32.mrf.mxu0
  %v220 = vpop.f32.mrf.mxu0
  %v221 = vadd.f32 %v47, %v220
  %v222 = vpop.f32.mrf.mxu0
  %223 = vmatprep.mubr.bf16.mxu0 0
  %224 = vmatmul.mubr.bf16.gmra.mxu0 %v139
  %v225 = vpop.f32.mrf.mxu0
  %v226 = vadd.f32 %v47, %v225
  %v227 = vpop.f32.mrf.mxu0
  %v228 = vpop.f32.mrf.mxu0
  %v229 = vadd.f32 %v47, %v228
  %v230 = vpop.f32.mrf.mxu0
  %231 = vmatprep.mubr.bf16.mxu0 0
  %232 = vmatmul.mubr.bf16.gmra.mxu0 %v142
  %v233 = vpop.f32.mrf.mxu0
  %v234 = vadd.f32 %v47, %v233
  %v235 = vpop.f32.mrf.mxu0
  %v236 = vpop.f32.mrf.mxu0
  %v237 = vadd.f32 %v47, %v236
  %v238 = vpop.f32.mrf.mxu0
  %239 = vmatprep.mubr.bf16.mxu0 0
  %240 = vmatmul.mubr.bf16.gmra.mxu0 %v145
  %v241 = vpop.f32.mrf.mxu0
  %v242 = vadd.f32 %v47, %v241
  %v243 = vpop.f32.mrf.mxu0
  %v244 = vpop.f32.mrf.mxu0
  %v245 = vadd.f32 %v47, %v244
  %v246 = vpop.f32.mrf.mxu0
  %247 = vdwg.mxu0
  %v248 = vpack.c.bf16 %v189, %v186
  %v249 = vpack.c.bf16 %v197, %v194
  %v250 = vpack.c.bf16 %v205, %v202
  %v251 = vpack.c.bf16 %v213, %v210
  %v252 = vpack.c.bf16 %v221, %v218
  %v253 = vpack.c.bf16 %v229, %v226
  %v254 = vpack.c.bf16 %v237, %v234
  %v255 = vpack.c.bf16 %v245, %v242
  %v264 = vunpack.c.l.b16 %v248
  %v265 = vunpack.c.h.b16 %v248
  %v266 = vunpack.c.l.b16 %v249
  %v267 = vunpack.c.h.b16 %v249
  %v268 = vunpack.c.l.b16 %v250
  %v269 = vunpack.c.h.b16 %v250
  %v270 = vunpack.c.l.b16 %v251
  %v271 = vunpack.c.h.b16 %v251
  %v272 = vunpack.c.l.b16 %v252
  %v273 = vunpack.c.h.b16 %v252
  %v274 = vunpack.c.l.b16 %v253
  %v275 = vunpack.c.h.b16 %v253
  %v276 = vunpack.c.l.b16 %v254
  %v277 = vunpack.c.h.b16 %v254
  %v278 = vunpack.c.l.b16 %v255
  %v279 = vunpack.c.h.b16 %v255
  %v280 = vpack.c.b16 %v264, %v264
  %v281 = vpack.c.b16 %v265, %v265
  %v282 = vpack.c.b16 %v266, %v266
  %v283 = vpack.c.b16 %v267, %v267
  %v284 = vpack.c.b16 %v268, %v268
  %v285 = vpack.c.b16 %v269, %v269
  %v286 = vpack.c.b16 %v270, %v270
  %v287 = vpack.c.b16 %v271, %v271
  %v288 = vpack.c.b16 %v272, %v272
  %v289 = vpack.c.b16 %v273, %v273
  %v290 = vpack.c.b16 %v274, %v274
  %v291 = vpack.c.b16 %v275, %v275
  %v292 = vpack.c.b16 %v276, %v276
  %v293 = vpack.c.b16 %v277, %v277
  %v294 = vpack.c.b16 %v278, %v278
  %v295 = vpack.c.b16 %v279, %v279
  %vm312 = vcmask 191488
  %313 = vst.msk [vmem:[%s3] sm:$0xf] %vm312, %v280
  %314 = vst.msk [vmem:[%s3 + $0x4] sm:$0xf] %vm312, %v281
  %315 = vst.msk [vmem:[%s3 + $0x8] sm:$0xf] %vm312, %v282
  %316 = vst.msk [vmem:[%s3 + $0xc] sm:$0xf] %vm312, %v283
  %317 = vst.msk [vmem:[%s3 + $0x10] sm:$0xf] %vm312, %v284
  %318 = vst.msk [vmem:[%s3 + $0x14] sm:$0xf] %vm312, %v285
  %319 = vst.msk [vmem:[%s3 + $0x18] sm:$0xf] %vm312, %v286
  %320 = vst.msk [vmem:[%s3 + $0x1c] sm:$0xf] %vm312, %v287
  %321 = vst.msk [vmem:[%s3 + $0x20] sm:$0xf] %vm312, %v288
  %322 = vst.msk [vmem:[%s3 + $0x24] sm:$0xf] %vm312, %v289
  %323 = vst.msk [vmem:[%s3 + $0x28] sm:$0xf] %vm312, %v290
  %324 = vst.msk [vmem:[%s3 + $0x2c] sm:$0xf] %vm312, %v291
  %325 = vst.msk [vmem:[%s3 + $0x30] sm:$0xf] %vm312, %v292
  %326 = vst.msk [vmem:[%s3 + $0x34] sm:$0xf] %vm312, %v293
  %327 = vst.msk [vmem:[%s3 + $0x38] sm:$0xf] %vm312, %v294
  %328 = vst.msk [vmem:[%s3 + $0x3c] sm:$0xf] %vm312, %v295
  // Predicated region
  $region14: #{decoder_forward.22} parent=0 // pred_check
    _
  $region15: #{decoder_forward.22} parent=0 // pred_check_branch
    %330 = sbr.rel (0) target = $region17
  $region16: #{decoder_forward.22} parent=0 // pred_region
    _
  $region17: #{decoder_forward.22} parent=0 // pred_fallthru
    _
  // Predicated region
  $region18: #{decoder_forward.22} parent=0 // pred_check
    _
  $region19: #{decoder_forward.22} parent=0 // pred_check_branch
    %332 = sbr.rel (0) target = $region21
  $region20: #{decoder_forward.22} parent=0 // pred_region
    _
  $region21: #{decoder_forward.22} parent=0 // pred_fallthru
    _

// kernel: decoder_forward.23
$region0: #{decoder_forward.23}
  #allocation0 [shape = 'u32[]', space=smem, size = 0x4, offset = 0x4, fixed_abs, tag = 'smem constant byte address 0x4 - core index']
  #allocation1 [shape = 'u32[144,128]{1,0:T(1,128)}', space=vmem, size = 0x12000, scoped, tag = 'internal scratch']
  %s0 = inlined_call_operand.vmem [shape: bf16[128,216], index: 0, kind: input, shape index: {}]
  %s1 = inlined_call_operand.vmem [shape: bf16[216,24], index: 1, kind: input, shape index: {}]
  %s2 = inlined_call_operand.vmem [shape: f32[1,24], index: 2, kind: input, shape index: {}]
  %s3 = inlined_call_operand.vmem [shape: bf16[128,24], index: 3, kind: output, shape index: {}]
  %s4 = sld [smem:[#allocation0]]
  $region22: #{decoder_forward.23} parent=0
    _
  %s6 = ssub.s32 1, %s4
  %s7 = scalar_select 0, %s6, %s4
  // Predicated region
  $region2: #{decoder_forward.23} parent=0 // pred_check
    _
  $region3: #{decoder_forward.23} parent=0 // pred_check_branch
    %9 = sbr.rel (0) target = $region5
  $region4: #{decoder_forward.23} parent=0 // pred_region
    _
  $region5: #{decoder_forward.23} parent=0 // pred_fallthru
    _
  // Predicated region
  $region6: #{decoder_forward.23} parent=0 // pred_check
    _
  $region7: #{decoder_forward.23} parent=0 // pred_check_branch
    %11 = sbr.rel (0) target = $region9
  $region8: #{decoder_forward.23} parent=0 // pred_region
    _
  $region9: #{decoder_forward.23} parent=0 // pred_fallthru
    _
  // Predicated region
  $region10: #{decoder_forward.23} parent=0 // pred_check
    _
  $region11: #{decoder_forward.23} parent=0 // pred_check_branch
    %13 = sbr.rel (0) target = $region13
  $region12: #{decoder_forward.23} parent=0 // pred_region
    _
  $region13: #{decoder_forward.23} parent=0 // pred_fallthru
    _
  %v15 = vld [vmem:[%s0] sm:$0xff]
  %v16 = vld [vmem:[%s0 + $0x8] sm:$0xff]
  %v17 = vld [vmem:[%s0 + $0x10] sm:$0xff]
  %v18 = vld [vmem:[%s0 + $0x18] sm:$0xff]
  %v19 = vld [vmem:[%s0 + $0x20] sm:$0xff]
  %v20 = vld [vmem:[%s0 + $0x28] sm:$0xff]
  %v21 = vld [vmem:[%s0 + $0x30] sm:$0xff]
  %v22 = vld [vmem:[%s0 + $0x38] sm:$0xff]
  %v23 = vld [vmem:[%s0 + $0x40] sm:$0xff]
  %v24 = vld [vmem:[%s0 + $0x48] sm:$0xff]
  %v25 = vld [vmem:[%s0 + $0x50] sm:$0xff]
  %v26 = vld [vmem:[%s0 + $0x58] sm:$0xff]
  %v27 = vld [vmem:[%s0 + $0x60] sm:$0xff]
  %v28 = vld [vmem:[%s0 + $0x68] sm:$0xff]
  %v29 = vld [vmem:[%s0 + $0x70] sm:$0xff]
  %v30 = vld [vmem:[%s0 + $0x78] sm:$0xff]
  %v31 = vld [vmem:[%s1] sm:$0xf]
  %v32 = vld [vmem:[%s1 + $0x4] sm:$0xf]
  %v33 = vld [vmem:[%s1 + $0x8] sm:$0xf]
  %v34 = vld [vmem:[%s1 + $0xc] sm:$0xf]
  %v35 = vld [vmem:[%s1 + $0x10] sm:$0xf]
  %v36 = vld [vmem:[%s1 + $0x14] sm:$0xf]
  %v37 = vld [vmem:[%s1 + $0x18] sm:$0xf]
  %v38 = vld [vmem:[%s1 + $0x1c] sm:$0xf]
  %v39 = vld [vmem:[%s1 + $0x20] sm:$0xf]
  %v40 = vld [vmem:[%s1 + $0x24] sm:$0xf]
  %v41 = vld [vmem:[%s1 + $0x28] sm:$0xf]
  %v42 = vld [vmem:[%s1 + $0x2c] sm:$0xf]
  %v43 = vld [vmem:[%s1 + $0x30] sm:$0xf]
  %v44 = vld [vmem:[%s1 + $0x34] sm:$0xf]
  %v45 = vld [vmem:[%s1 + $0x38] sm:$0xf]
  %v46 = vld [vmem:[%s1 + $0x3c] sm:$0xf]
  %v47 = vld [vmem:[%s1 + $0x40] sm:$0xf]
  %v48 = vld [vmem:[%s1 + $0x44] sm:$0xf]
  %v49 = vld [vmem:[%s1 + $0x48] sm:$0xf]
  %v50 = vld [vmem:[%s1 + $0x4c] sm:$0xf]
  %v51 = vld [vmem:[%s1 + $0x50] sm:$0xf]
  %v52 = vld [vmem:[%s1 + $0x54] sm:$0xf]
  %v53 = vld [vmem:[%s1 + $0x58] sm:$0xf]
  %v54 = vld [vmem:[%s1 + $0x5c] sm:$0xf]
  %v55 = vld [vmem:[%s1 + $0x60] sm:$0xf]
  %v56 = vld [vmem:[%s1 + $0x64] sm:$0xf]
  %v57 = vld [vmem:[%s1 + $0x68] sm:$0xf]
  %v58 = vld [vmem:[%s2] sm:$0x1]
  %v60 = vlaneseq
  %v61 = vshrl.u32 %v60, 7
  %v62 = vsub.s32 0, %v61
  %v63 = vrot.slane %v58, %v62
  %v81 = vunpack.c.l.b16 %v15
  %v82 = vunpack.c.h.b16 %v15
  %v83 = vunpack.c.l.b16 %v16
  %v84 = vunpack.c.h.b16 %v16
  %v85 = vunpack.c.l.b16 %v17
  %v86 = vunpack.c.h.b16 %v17
  %v87 = vunpack.c.l.b16 %v18
  %v88 = vunpack.c.h.b16 %v18
  %v89 = vunpack.c.l.b16 %v19
  %v90 = vunpack.c.h.b16 %v19
  %v91 = vunpack.c.l.b16 %v20
  %v92 = vunpack.c.h.b16 %v20
  %v93 = vunpack.c.l.b16 %v21
  %v94 = vunpack.c.h.b16 %v21
  %v95 = vunpack.c.l.b16 %v22
  %v96 = vunpack.c.h.b16 %v22
  %v97 = vunpack.c.l.b16 %v23
  %v98 = vunpack.c.h.b16 %v23
  %v99 = vunpack.c.l.b16 %v24
  %v100 = vunpack.c.h.b16 %v24
  %v101 = vunpack.c.l.b16 %v25
  %v102 = vunpack.c.h.b16 %v25
  %v103 = vunpack.c.l.b16 %v26
  %v104 = vunpack.c.h.b16 %v26
  %v105 = vunpack.c.l.b16 %v27
  %v106 = vunpack.c.h.b16 %v27
  %v107 = vunpack.c.l.b16 %v28
  %v108 = vunpack.c.h.b16 %v28
  %v109 = vunpack.c.l.b16 %v29
  %v110 = vunpack.c.h.b16 %v29
  %v111 = vunpack.c.l.b16 %v30
  %v112 = vunpack.c.h.b16 %v30
  %v113 = vpack.c.b16 %v83, %v81
  %v114 = vpack.c.b16 %v84, %v82
  %v115 = vpack.c.b16 %v87, %v85
  %v116 = vpack.c.b16 %v88, %v86
  %v117 = vpack.c.b16 %v91, %v89
  %v118 = vpack.c.b16 %v92, %v90
  %v119 = vpack.c.b16 %v95, %v93
  %v120 = vpack.c.b16 %v96, %v94
  %v121 = vpack.c.b16 %v99, %v97
  %v122 = vpack.c.b16 %v100, %v98
  %v123 = vpack.c.b16 %v103, %v101
  %v124 = vpack.c.b16 %v104, %v102
  %v125 = vpack.c.b16 %v107, %v105
  %v126 = vpack.c.b16 %v108, %v106
  %v127 = vpack.c.b16 %v111, %v109
  %v128 = vpack.c.b16 %v112, %v110
  %v164 = vunpack.c.l.b16 %v31
  %v165 = vunpack.c.l.b16 %v32
  %v166 = vunpack.c.l.b16 %v33
  %v167 = vunpack.c.l.b16 %v34
  %v168 = vunpack.c.l.b16 %v35
  %v169 = vunpack.c.l.b16 %v36
  %v170 = vunpack.c.l.b16 %v37
  %v171 = vunpack.c.l.b16 %v38
  %v172 = vunpack.c.l.b16 %v39
  %v173 = vunpack.c.l.b16 %v40
  %v174 = vunpack.c.l.b16 %v41
  %v175 = vunpack.c.l.b16 %v42
  %v176 = vunpack.c.l.b16 %v43
  %v177 = vunpack.c.l.b16 %v44
  %v178 = vunpack.c.l.b16 %v45
  %v179 = vunpack.c.l.b16 %v46
  %v180 = vunpack.c.l.b16 %v47
  %v181 = vunpack.c.l.b16 %v48
  %v182 = vunpack.c.l.b16 %v49
  %v183 = vunpack.c.l.b16 %v50
  %v184 = vunpack.c.l.b16 %v51
  %v185 = vunpack.c.l.b16 %v52
  %v186 = vunpack.c.l.b16 %v53
  %v187 = vunpack.c.l.b16 %v54
  %v188 = vunpack.c.l.b16 %v55
  %v189 = vunpack.c.l.b16 %v56
  %v190 = vunpack.c.l.b16 %v57
  %v191 = vpack.c.b16 %v165, %v164
  %v192 = vpack.c.b16 %v167, %v166
  %v193 = vpack.c.b16 %v169, %v168
  %v194 = vpack.c.b16 %v171, %v170
  %v195 = vpack.c.b16 %v173, %v172
  %v196 = vpack.c.b16 %v175, %v174
  %v197 = vpack.c.b16 %v177, %v176
  %v198 = vpack.c.b16 %v179, %v178
  %v199 = vpack.c.b16 %v181, %v180
  %v200 = vpack.c.b16 %v183, %v182
  %v201 = vpack.c.b16 %v185, %v184
  %v202 = vpack.c.b16 %v187, %v186
  %v203 = vpack.c.b16 %v189, %v188
  %v204 = vpack.c.b16 %v190, %v190
  %vm218 = vcmask 719872
  %v220 = vsel %vm218, %v114, 0
  %v223 = vsel %vm218, %v116, 0
  %v226 = vsel %vm218, %v118, 0
  %v229 = vsel %vm218, %v120, 0
  %v232 = vsel %vm218, %v122, 0
  %v235 = vsel %vm218, %v124, 0
  %v238 = vsel %vm218, %v126, 0
  %v241 = vsel %vm218, %v128, 0
  %vm243 = vcmask 1043456
  %v245 = vsel %vm243, %v204, 0
  %247 = vmatprep.subr.bf16.mxu0 0
  %248 = vmatpush1.bf16.msra.mxu0 %v198
  %249 = vmatprep.subr.bf16.mxu0 0
  %250 = vmatpush1.bf16.msra.mxu0 %v197
  %251 = vmatprep.subr.bf16.mxu0 0
  %252 = vmatpush1.bf16.msra.mxu0 %v196
  %253 = vmatprep.subr.bf16.mxu0 0
  %254 = vmatpush1.bf16.msra.mxu0 %v195
  %255 = vmatprep.subr.bf16.mxu0 0
  %256 = vmatpush1.bf16.msra.mxu0 %v194
  %257 = vmatprep.subr.bf16.mxu0 0
  %258 = vmatpush1.bf16.msra.mxu0 %v193
  %259 = vmatprep.subr.bf16.mxu0 0
  %260 = vmatpush1.bf16.msra.mxu0 %v192
  %261 = vmatprep.subr.bf16.mxu0 0
  %262 = vmatpush1.bf16.msra.mxu0 %v191
  %263 = vmatprep.subr.bf16.mxu0 0
  %264 = vmatpush2.bf16.msra.mxu0 0
  %265 = vmatprep.subr.bf16.mxu0 0
  %266 = vmatpush2.bf16.msra.mxu0 0
  %267 = vmatprep.subr.bf16.mxu0 0
  %268 = vmatpush2.bf16.msra.mxu0 %v245
  %269 = vmatprep.subr.bf16.mxu0 0
  %270 = vmatpush2.bf16.msra.mxu0 %v203
  %271 = vmatprep.subr.bf16.mxu0 0
  %272 = vmatpush2.bf16.msra.mxu0 %v202
  %273 = vmatprep.subr.bf16.mxu0 0
  %274 = vmatpush2.bf16.msra.mxu0 %v201
  %275 = vmatprep.subr.bf16.mxu0 0
  %276 = vmatpush2.bf16.msra.mxu0 %v200
  %277 = vmatprep.subr.bf16.mxu0 0
  %278 = vmatpush2.bf16.msra.mxu0 %v199
  %279 = vmatprep.mubr.bf16.mxu0 %v220
  %280 = vmatmul.mubr.bf16.gmra.mxu0 %v113
  %v281 = vpop.f32.mrf.mxu0
  %v282 = vadd.f32 %v63, %v281
  %v283 = vpop.f32.mrf.mxu0
  %v284 = vpop.f32.mrf.mxu0
  %v285 = vadd.f32 %v63, %v284
  %v286 = vpop.f32.mrf.mxu0
  %287 = vmatprep.mubr.bf16.mxu0 %v223
  %288 = vmatmul.mubr.bf16.gmra.mxu0 %v115
  %v289 = vpop.f32.mrf.mxu0
  %v290 = vadd.f32 %v63, %v289
  %v291 = vpop.f32.mrf.mxu0
  %v292 = vpop.f32.mrf.mxu0
  %v293 = vadd.f32 %v63, %v292
  %v294 = vpop.f32.mrf.mxu0
  %295 = vmatprep.mubr.bf16.mxu0 %v226
  %296 = vmatmul.mubr.bf16.gmra.mxu0 %v117
  %v297 = vpop.f32.mrf.mxu0
  %v298 = vadd.f32 %v63, %v297
  %v299 = vpop.f32.mrf.mxu0
  %v300 = vpop.f32.mrf.mxu0
  %v301 = vadd.f32 %v63, %v300
  %v302 = vpop.f32.mrf.mxu0
  %303 = vmatprep.mubr.bf16.mxu0 %v229
  %304 = vmatmul.mubr.bf16.gmra.mxu0 %v119
  %v305 = vpop.f32.mrf.mxu0
  %v306 = vadd.f32 %v63, %v305
  %v307 = vpop.f32.mrf.mxu0
  %v308 = vpop.f32.mrf.mxu0
  %v309 = vadd.f32 %v63, %v308
  %v310 = vpop.f32.mrf.mxu0
  %311 = vmatprep.mubr.bf16.mxu0 %v232
  %312 = vmatmul.mubr.bf16.gmra.mxu0 %v121
  %v313 = vpop.f32.mrf.mxu0
  %v314 = vadd.f32 %v63, %v313
  %v315 = vpop.f32.mrf.mxu0
  %v316 = vpop.f32.mrf.mxu0
  %v317 = vadd.f32 %v63, %v316
  %v318 = vpop.f32.mrf.mxu0
  %319 = vmatprep.mubr.bf16.mxu0 %v235
  %320 = vmatmul.mubr.bf16.gmra.mxu0 %v123
  %v321 = vpop.f32.mrf.mxu0
  %v322 = vadd.f32 %v63, %v321
  %v323 = vpop.f32.mrf.mxu0
  %v324 = vpop.f32.mrf.mxu0
  %v325 = vadd.f32 %v63, %v324
  %v326 = vpop.f32.mrf.mxu0
  %327 = vmatprep.mubr.bf16.mxu0 %v238
  %328 = vmatmul.mubr.bf16.gmra.mxu0 %v125
  %v329 = vpop.f32.mrf.mxu0
  %v330 = vadd.f32 %v63, %v329
  %v331 = vpop.f32.mrf.mxu0
  %v332 = vpop.f32.mrf.mxu0
  %v333 = vadd.f32 %v63, %v332
  %v334 = vpop.f32.mrf.mxu0
  %335 = vmatprep.mubr.bf16.mxu0 %v241
  %336 = vmatmul.mubr.bf16.gmra.mxu0 %v127
  %v337 = vpop.f32.mrf.mxu0
  %v338 = vadd.f32 %v63, %v337
  %v339 = vpop.f32.mrf.mxu0
  %v340 = vpop.f32.mrf.mxu0
  %v341 = vadd.f32 %v63, %v340
  %v342 = vpop.f32.mrf.mxu0
  %343 = vdwg.mxu0
  %vm344 = vcmp.ge.f32.partialorder %v282, 0.0
  %vm345 = vcmp.ge.f32.partialorder %v285, 0.0
  %vm346 = vcmp.ge.f32.partialorder %v290, 0.0
  %vm347 = vcmp.ge.f32.partialorder %v293, 0.0
  %vm348 = vcmp.ge.f32.partialorder %v298, 0.0
  %vm349 = vcmp.ge.f32.partialorder %v301, 0.0
  %vm350 = vcmp.ge.f32.partialorder %v306, 0.0
  %vm351 = vcmp.ge.f32.partialorder %v309, 0.0
  %vm352 = vcmp.ge.f32.partialorder %v314, 0.0
  %vm353 = vcmp.ge.f32.partialorder %v317, 0.0
  %vm354 = vcmp.ge.f32.partialorder %v322, 0.0
  %vm355 = vcmp.ge.f32.partialorder %v325, 0.0
  %vm356 = vcmp.ge.f32.partialorder %v330, 0.0
  %vm357 = vcmp.ge.f32.partialorder %v333, 0.0
  %vm358 = vcmp.ge.f32.partialorder %v338, 0.0
  %vm359 = vcmp.ge.f32.partialorder %v341, 0.0
  %v360 = vmul.f32 %v282, 0.01
  %v361 = vmul.f32 %v285, 0.01
  %v362 = vmul.f32 %v290, 0.01
  %v363 = vmul.f32 %v293, 0.01
  %v364 = vmul.f32 %v298, 0.01
  %v365 = vmul.f32 %v301, 0.01
  %v366 = vmul.f32 %v306, 0.01
  %v367 = vmul.f32 %v309, 0.01
  %v368 = vmul.f32 %v314, 0.01
  %v369 = vmul.f32 %v317, 0.01
  %v370 = vmul.f32 %v322, 0.01
  %v371 = vmul.f32 %v325, 0.01
  %v372 = vmul.f32 %v330, 0.01
  %v373 = vmul.f32 %v333, 0.01
  %v374 = vmul.f32 %v338, 0.01
  %v375 = vmul.f32 %v341, 0.01
  %v376 = vsel %vm344, %v282, %v360
  %v377 = vsel %vm345, %v285, %v361
  %v378 = vsel %vm346, %v290, %v362
  %v379 = vsel %vm347, %v293, %v363
  %v380 = vsel %vm348, %v298, %v364
  %v381 = vsel %vm349, %v301, %v365
  %v382 = vsel %vm350, %v306, %v366
  %v383 = vsel %vm351, %v309, %v367
  %v384 = vsel %vm352, %v314, %v368
  %v385 = vsel %vm353, %v317, %v369
  %v386 = vsel %vm354, %v322, %v370
  %v387 = vsel %vm355, %v325, %v371
  %v388 = vsel %vm356, %v330, %v372
  %v389 = vsel %vm357, %v333, %v373
  %v390 = vsel %vm358, %v338, %v374
  %v391 = vsel %vm359, %v341, %v375
  %v392 = vpack.c.bf16 %v377, %v376
  %v393 = vpack.c.bf16 %v379, %v378
  %v394 = vpack.c.bf16 %v381, %v380
  %v395 = vpack.c.bf16 %v383, %v382
  %v396 = vpack.c.bf16 %v385, %v384
  %v397 = vpack.c.bf16 %v387, %v386
  %v398 = vpack.c.bf16 %v389, %v388
  %v399 = vpack.c.bf16 %v391, %v390
  %v408 = vunpack.c.l.b16 %v392
  %v409 = vunpack.c.h.b16 %v392
  %v410 = vunpack.c.l.b16 %v393
  %v411 = vunpack.c.h.b16 %v393
  %v412 = vunpack.c.l.b16 %v394
  %v413 = vunpack.c.h.b16 %v394
  %v414 = vunpack.c.l.b16 %v395
  %v415 = vunpack.c.h.b16 %v395
  %v416 = vunpack.c.l.b16 %v396
  %v417 = vunpack.c.h.b16 %v396
  %v418 = vunpack.c.l.b16 %v397
  %v419 = vunpack.c.h.b16 %v397
  %v420 = vunpack.c.l.b16 %v398
  %v421 = vunpack.c.h.b16 %v398
  %v422 = vunpack.c.l.b16 %v399
  %v423 = vunpack.c.h.b16 %v399
  %v424 = vpack.c.b16 %v408, %v408
  %v425 = vpack.c.b16 %v409, %v409
  %v426 = vpack.c.b16 %v410, %v410
  %v427 = vpack.c.b16 %v411, %v411
  %v428 = vpack.c.b16 %v412, %v412
  %v429 = vpack.c.b16 %v413, %v413
  %v430 = vpack.c.b16 %v414, %v414
  %v431 = vpack.c.b16 %v415, %v415
  %v432 = vpack.c.b16 %v416, %v416
  %v433 = vpack.c.b16 %v417, %v417
  %v434 = vpack.c.b16 %v418, %v418
  %v435 = vpack.c.b16 %v419, %v419
  %v436 = vpack.c.b16 %v420, %v420
  %v437 = vpack.c.b16 %v421, %v421
  %v438 = vpack.c.b16 %v422, %v422
  %v439 = vpack.c.b16 %v423, %v423
  %vm456 = vcmask 191488
  %457 = vst.msk [vmem:[%s3] sm:$0xf] %vm456, %v424
  %458 = vst.msk [vmem:[%s3 + $0x4] sm:$0xf] %vm456, %v425
  %459 = vst.msk [vmem:[%s3 + $0x8] sm:$0xf] %vm456, %v426
  %460 = vst.msk [vmem:[%s3 + $0xc] sm:$0xf] %vm456, %v427
  %461 = vst.msk [vmem:[%s3 + $0x10] sm:$0xf] %vm456, %v428
  %462 = vst.msk [vmem:[%s3 + $0x14] sm:$0xf] %vm456, %v429
  %463 = vst.msk [vmem:[%s3 + $0x18] sm:$0xf] %vm456, %v430
  %464 = vst.msk [vmem:[%s3 + $0x1c] sm:$0xf] %vm456, %v431
  %465 = vst.msk [vmem:[%s3 + $0x20] sm:$0xf] %vm456, %v432
  %466 = vst.msk [vmem:[%s3 + $0x24] sm:$0xf] %vm456, %v433
  %467 = vst.msk [vmem:[%s3 + $0x28] sm:$0xf] %vm456, %v434
  %468 = vst.msk [vmem:[%s3 + $0x2c] sm:$0xf] %vm456, %v435
  %469 = vst.msk [vmem:[%s3 + $0x30] sm:$0xf] %vm456, %v436
  %470 = vst.msk [vmem:[%s3 + $0x34] sm:$0xf] %vm456, %v437
  %471 = vst.msk [vmem:[%s3 + $0x38] sm:$0xf] %vm456, %v438
  %472 = vst.msk [vmem:[%s3 + $0x3c] sm:$0xf] %vm456, %v439
  // Predicated region
  $region14: #{decoder_forward.23} parent=0 // pred_check
    _
  $region15: #{decoder_forward.23} parent=0 // pred_check_branch
    %474 = sbr.rel (0) target = $region17
  $region16: #{decoder_forward.23} parent=0 // pred_region
    _
  $region17: #{decoder_forward.23} parent=0 // pred_fallthru
    _
  // Predicated region
  $region18: #{decoder_forward.23} parent=0 // pred_check
    _
  $region19: #{decoder_forward.23} parent=0 // pred_check_branch
    %476 = sbr.rel (0) target = $region21
  $region20: #{decoder_forward.23} parent=0 // pred_region
    _
  $region21: #{decoder_forward.23} parent=0 // pred_fallthru
    _

// kernel: decoder_forward.24
$region0: #{decoder_forward.24}
  #allocation0 [shape = 'u32[]', space=smem, size = 0x4, offset = 0x4, fixed_abs, tag = 'smem constant byte address 0x4 - core index']
  #allocation1 [shape = 'u32[144,128]{1,0:T(1,128)}', space=vmem, size = 0x12000, scoped, tag = 'internal scratch']
  %s0 = inlined_call_operand.vmem [shape: bf16[128,108], index: 0, kind: input, shape index: {}]
  %s1 = inlined_call_operand.vmem [shape: bf16[108,24], index: 1, kind: input, shape index: {}]
  %s2 = inlined_call_operand.vmem [shape: f32[1,24], index: 2, kind: input, shape index: {}]
  %s3 = inlined_call_operand.vmem [shape: bf16[128,24], index: 3, kind: output, shape index: {}]
  %s4 = sld [smem:[#allocation0]]
  $region22: #{decoder_forward.24} parent=0
    _
  %s6 = ssub.s32 1, %s4
  %s7 = scalar_select 0, %s6, %s4
  // Predicated region
  $region2: #{decoder_forward.24} parent=0 // pred_check
    _
  $region3: #{decoder_forward.24} parent=0 // pred_check_branch
    %9 = sbr.rel (0) target = $region5
  $region4: #{decoder_forward.24} parent=0 // pred_region
    _
  $region5: #{decoder_forward.24} parent=0 // pred_fallthru
    _
  // Predicated region
  $region6: #{decoder_forward.24} parent=0 // pred_check
    _
  $region7: #{decoder_forward.24} parent=0 // pred_check_branch
    %11 = sbr.rel (0) target = $region9
  $region8: #{decoder_forward.24} parent=0 // pred_region
    _
  $region9: #{decoder_forward.24} parent=0 // pred_fallthru
    _
  // Predicated region
  $region10: #{decoder_forward.24} parent=0 // pred_check
    _
  $region11: #{decoder_forward.24} parent=0 // pred_check_branch
    %13 = sbr.rel (0) target = $region13
  $region12: #{decoder_forward.24} parent=0 // pred_region
    _
  $region13: #{decoder_forward.24} parent=0 // pred_fallthru
    _
  %v15 = vld [vmem:[%s0] sm:$0xf]
  %v16 = vld [vmem:[%s0 + $0x4] sm:$0xf]
  %v17 = vld [vmem:[%s0 + $0x8] sm:$0xf]
  %v18 = vld [vmem:[%s0 + $0xc] sm:$0xf]
  %v19 = vld [vmem:[%s0 + $0x10] sm:$0xf]
  %v20 = vld [vmem:[%s0 + $0x14] sm:$0xf]
  %v21 = vld [vmem:[%s0 + $0x18] sm:$0xf]
  %v22 = vld [vmem:[%s0 + $0x1c] sm:$0xf]
  %v23 = vld [vmem:[%s0 + $0x20] sm:$0xf]
  %v24 = vld [vmem:[%s0 + $0x24] sm:$0xf]
  %v25 = vld [vmem:[%s0 + $0x28] sm:$0xf]
  %v26 = vld [vmem:[%s0 + $0x2c] sm:$0xf]
  %v27 = vld [vmem:[%s0 + $0x30] sm:$0xf]
  %v28 = vld [vmem:[%s0 + $0x34] sm:$0xf]
  %v29 = vld [vmem:[%s0 + $0x38] sm:$0xf]
  %v30 = vld [vmem:[%s0 + $0x3c] sm:$0xf]
  %v31 = vld [vmem:[%s1] sm:$0xf]
  %v32 = vld [vmem:[%s1 + $0x4] sm:$0xf]
  %v33 = vld [vmem:[%s1 + $0x8] sm:$0xf]
  %v34 = vld [vmem:[%s1 + $0xc] sm:$0xf]
  %v35 = vld [vmem:[%s1 + $0x10] sm:$0xf]
  %v36 = vld [vmem:[%s1 + $0x14] sm:$0xf]
  %v37 = vld [vmem:[%s1 + $0x18] sm:$0xf]
  %v38 = vld [vmem:[%s1 + $0x1c] sm:$0xf]
  %v39 = vld [vmem:[%s1 + $0x20] sm:$0xf]
  %v40 = vld [vmem:[%s1 + $0x24] sm:$0xf]
  %v41 = vld [vmem:[%s1 + $0x28] sm:$0xf]
  %v42 = vld [vmem:[%s1 + $0x2c] sm:$0xf]
  %v43 = vld [vmem:[%s1 + $0x30] sm:$0xf]
  %v44 = vld [vmem:[%s1 + $0x34] sm:$0x3]
  %v45 = vld [vmem:[%s2] sm:$0x1]
  %v47 = vlaneseq
  %v48 = vshrl.u32 %v47, 7
  %v49 = vsub.s32 0, %v48
  %v50 = vrot.slane %v45, %v49
  %v68 = vunpack.c.l.b16 %v15
  %v69 = vunpack.c.l.b16 %v16
  %v70 = vunpack.c.l.b16 %v17
  %v71 = vunpack.c.l.b16 %v18
  %v72 = vunpack.c.l.b16 %v19
  %v73 = vunpack.c.l.b16 %v20
  %v74 = vunpack.c.l.b16 %v21
  %v75 = vunpack.c.l.b16 %v22
  %v76 = vunpack.c.l.b16 %v23
  %v77 = vunpack.c.l.b16 %v24
  %v78 = vunpack.c.l.b16 %v25
  %v79 = vunpack.c.l.b16 %v26
  %v80 = vunpack.c.l.b16 %v27
  %v81 = vunpack.c.l.b16 %v28
  %v82 = vunpack.c.l.b16 %v29
  %v83 = vunpack.c.l.b16 %v30
  %v84 = vpack.c.b16 %v69, %v68
  %v85 = vpack.c.b16 %v71, %v70
  %v86 = vpack.c.b16 %v73, %v72
  %v87 = vpack.c.b16 %v75, %v74
  %v88 = vpack.c.b16 %v77, %v76
  %v89 = vpack.c.b16 %v79, %v78
  %v90 = vpack.c.b16 %v81, %v80
  %v91 = vpack.c.b16 %v83, %v82
  %v106 = vunpack.c.l.b16 %v31
  %v107 = vunpack.c.l.b16 %v32
  %v108 = vunpack.c.l.b16 %v33
  %v109 = vunpack.c.l.b16 %v34
  %v110 = vunpack.c.l.b16 %v35
  %v111 = vunpack.c.l.b16 %v36
  %v112 = vunpack.c.l.b16 %v37
  %v113 = vunpack.c.l.b16 %v38
  %v114 = vunpack.c.l.b16 %v39
  %v115 = vunpack.c.l.b16 %v40
  %v116 = vunpack.c.l.b16 %v41
  %v117 = vunpack.c.l.b16 %v42
  %v118 = vunpack.c.l.b16 %v43
  %v119 = vunpack.c.l.b16 %v44
  %v120 = vpack.c.b16 %v107, %v106
  %v121 = vpack.c.b16 %v109, %v108
  %v122 = vpack.c.b16 %v111, %v110
  %v123 = vpack.c.b16 %v113, %v112
  %v124 = vpack.c.b16 %v115, %v114
  %v125 = vpack.c.b16 %v117, %v116
  %v126 = vpack.c.b16 %v119, %v118
  %vm133 = vcmask 883712
  %v135 = vsel %vm133, %v84, 0
  %v138 = vsel %vm133, %v85, 0
  %v141 = vsel %vm133, %v86, 0
  %v144 = vsel %vm133, %v87, 0
  %v147 = vsel %vm133, %v88, 0
  %v150 = vsel %vm133, %v89, 0
  %v153 = vsel %vm133, %v90, 0
  %v156 = vsel %vm133, %v91, 0
  %vm158 = vcmask 1045504
  %v160 = vsel %vm158, %v126, 0
  %162 = vmatprep.subr.bf16.mxu0 0
  %163 = vmatpush1.bf16.msra.mxu0 0
  %164 = vmatprep.subr.bf16.mxu0 0
  %165 = vmatpush1.bf16.msra.mxu0 %v160
  %166 = vmatprep.subr.bf16.mxu0 0
  %167 = vmatpush1.bf16.msra.mxu0 %v125
  %168 = vmatprep.subr.bf16.mxu0 0
  %169 = vmatpush1.bf16.msra.mxu0 %v124
  %170 = vmatprep.subr.bf16.mxu0 0
  %171 = vmatpush1.bf16.msra.mxu0 %v123
  %172 = vmatprep.subr.bf16.mxu0 0
  %173 = vmatpush1.bf16.msra.mxu0 %v122
  %174 = vmatprep.subr.bf16.mxu0 0
  %175 = vmatpush1.bf16.msra.mxu0 %v121
  %176 = vmatprep.subr.bf16.mxu0 0
  %177 = vmatpush1.bf16.msra.mxu0 %v120
  %178 = vmatprep.subr.bf16.mxu0 0
  %179 = vmatpush2.bf16.msra.mxu0 0
  %180 = vmatprep.subr.bf16.mxu0 0
  %181 = vmatpush2.bf16.msra.mxu0 0
  %182 = vmatprep.subr.bf16.mxu0 0
  %183 = vmatpush2.bf16.msra.mxu0 0
  %184 = vmatprep.subr.bf16.mxu0 0
  %185 = vmatpush2.bf16.msra.mxu0 0
  %186 = vmatprep.subr.bf16.mxu0 0
  %187 = vmatpush2.bf16.msra.mxu0 0
  %188 = vmatprep.subr.bf16.mxu0 0
  %189 = vmatpush2.bf16.msra.mxu0 0
  %190 = vmatprep.subr.bf16.mxu0 0
  %191 = vmatpush2.bf16.msra.mxu0 0
  %192 = vmatprep.subr.bf16.mxu0 0
  %193 = vmatpush2.bf16.msra.mxu0 0
  %194 = vmatprep.mubr.bf16.mxu0 0
  %195 = vmatmul.mubr.bf16.gmra.mxu0 %v135
  %v196 = vpop.f32.mrf.mxu0
  %v197 = vadd.f32 %v50, %v196
  %v198 = vpop.f32.mrf.mxu0
  %v199 = vpop.f32.mrf.mxu0
  %v200 = vadd.f32 %v50, %v199
  %v201 = vpop.f32.mrf.mxu0
  %202 = vmatprep.mubr.bf16.mxu0 0
  %203 = vmatmul.mubr.bf16.gmra.mxu0 %v138
  %v204 = vpop.f32.mrf.mxu0
  %v205 = vadd.f32 %v50, %v204
  %v206 = vpop.f32.mrf.mxu0
  %v207 = vpop.f32.mrf.mxu0
  %v208 = vadd.f32 %v50, %v207
  %v209 = vpop.f32.mrf.mxu0
  %210 = vmatprep.mubr.bf16.mxu0 0
  %211 = vmatmul.mubr.bf16.gmra.mxu0 %v141
  %v212 = vpop.f32.mrf.mxu0
  %v213 = vadd.f32 %v50, %v212
  %v214 = vpop.f32.mrf.mxu0
  %v215 = vpop.f32.mrf.mxu0
  %v216 = vadd.f32 %v50, %v215
  %v217 = vpop.f32.mrf.mxu0
  %218 = vmatprep.mubr.bf16.mxu0 0
  %219 = vmatmul.mubr.bf16.gmra.mxu0 %v144
  %v220 = vpop.f32.mrf.mxu0
  %v221 = vadd.f32 %v50, %v220
  %v222 = vpop.f32.mrf.mxu0
  %v223 = vpop.f32.mrf.mxu0
  %v224 = vadd.f32 %v50, %v223
  %v225 = vpop.f32.mrf.mxu0
  %226 = vmatprep.mubr.bf16.mxu0 0
  %227 = vmatmul.mubr.bf16.gmra.mxu0 %v147
  %v228 = vpop.f32.mrf.mxu0
  %v229 = vadd.f32 %v50, %v228
  %v230 = vpop.f32.mrf.mxu0
  %v231 = vpop.f32.mrf.mxu0
  %v232 = vadd.f32 %v50, %v231
  %v233 = vpop.f32.mrf.mxu0
  %234 = vmatprep.mubr.bf16.mxu0 0
  %235 = vmatmul.mubr.bf16.gmra.mxu0 %v150
  %v236 = vpop.f32.mrf.mxu0
  %v237 = vadd.f32 %v50, %v236
  %v238 = vpop.f32.mrf.mxu0
  %v239 = vpop.f32.mrf.mxu0
  %v240 = vadd.f32 %v50, %v239
  %v241 = vpop.f32.mrf.mxu0
  %242 = vmatprep.mubr.bf16.mxu0 0
  %243 = vmatmul.mubr.bf16.gmra.mxu0 %v153
  %v244 = vpop.f32.mrf.mxu0
  %v245 = vadd.f32 %v50, %v244
  %v246 = vpop.f32.mrf.mxu0
  %v247 = vpop.f32.mrf.mxu0
  %v248 = vadd.f32 %v50, %v247
  %v249 = vpop.f32.mrf.mxu0
  %250 = vmatprep.mubr.bf16.mxu0 0
  %251 = vmatmul.mubr.bf16.gmra.mxu0 %v156
  %v252 = vpop.f32.mrf.mxu0
  %v253 = vadd.f32 %v50, %v252
  %v254 = vpop.f32.mrf.mxu0
  %v255 = vpop.f32.mrf.mxu0
  %v256 = vadd.f32 %v50, %v255
  %v257 = vpop.f32.mrf.mxu0
  %258 = vdwg.mxu0
  %v259 = vpack.c.bf16 %v200, %v197
  %v260 = vpack.c.bf16 %v208, %v205
  %v261 = vpack.c.bf16 %v216, %v213
  %v262 = vpack.c.bf16 %v224, %v221
  %v263 = vpack.c.bf16 %v232, %v229
  %v264 = vpack.c.bf16 %v240, %v237
  %v265 = vpack.c.bf16 %v248, %v245
  %v266 = vpack.c.bf16 %v256, %v253
  %v275 = vunpack.c.l.b16 %v259
  %v276 = vunpack.c.h.b16 %v259
  %v277 = vunpack.c.l.b16 %v260
  %v278 = vunpack.c.h.b16 %v260
  %v279 = vunpack.c.l.b16 %v261
  %v280 = vunpack.c.h.b16 %v261
  %v281 = vunpack.c.l.b16 %v262
  %v282 = vunpack.c.h.b16 %v262
  %v283 = vunpack.c.l.b16 %v263
  %v284 = vunpack.c.h.b16 %v263
  %v285 = vunpack.c.l.b16 %v264
  %v286 = vunpack.c.h.b16 %v264
  %v287 = vunpack.c.l.b16 %v265
  %v288 = vunpack.c.h.b16 %v265
  %v289 = vunpack.c.l.b16 %v266
  %v290 = vunpack.c.h.b16 %v266
  %v291 = vpack.c.b16 %v275, %v275
  %v292 = vpack.c.b16 %v276, %v276
  %v293 = vpack.c.b16 %v277, %v277
  %v294 = vpack.c.b16 %v278, %v278
  %v295 = vpack.c.b16 %v279, %v279
  %v296 = vpack.c.b16 %v280, %v280
  %v297 = vpack.c.b16 %v281, %v281
  %v298 = vpack.c.b16 %v282, %v282
  %v299 = vpack.c.b16 %v283, %v283
  %v300 = vpack.c.b16 %v284, %v284
  %v301 = vpack.c.b16 %v285, %v285
  %v302 = vpack.c.b16 %v286, %v286
  %v303 = vpack.c.b16 %v287, %v287
  %v304 = vpack.c.b16 %v288, %v288
  %v305 = vpack.c.b16 %v289, %v289
  %v306 = vpack.c.b16 %v290, %v290
  %vm323 = vcmask 191488
  %324 = vst.msk [vmem:[%s3] sm:$0xf] %vm323, %v291
  %325 = vst.msk [vmem:[%s3 + $0x4] sm:$0xf] %vm323, %v292
  %326 = vst.msk [vmem:[%s3 + $0x8] sm:$0xf] %vm323, %v293
  %327 = vst.msk [vmem:[%s3 + $0xc] sm:$0xf] %vm323, %v294
  %328 = vst.msk [vmem:[%s3 + $0x10] sm:$0xf] %vm323, %v295
  %329 = vst.msk [vmem:[%s3 + $0x14] sm:$0xf] %vm323, %v296
  %330 = vst.msk [vmem:[%s3 + $0x18] sm:$0xf] %vm323, %v297
  %331 = vst.msk [vmem:[%s3 + $0x1c] sm:$0xf] %vm323, %v298
  %332 = vst.msk [vmem:[%s3 + $0x20] sm:$0xf] %vm323, %v299
  %333 = vst.msk [vmem:[%s3 + $0x24] sm:$0xf] %vm323, %v300
  %334 = vst.msk [vmem:[%s3 + $0x28] sm:$0xf] %vm323, %v301
  %335 = vst.msk [vmem:[%s3 + $0x2c] sm:$0xf] %vm323, %v302
  %336 = vst.msk [vmem:[%s3 + $0x30] sm:$0xf] %vm323, %v303
  %337 = vst.msk [vmem:[%s3 + $0x34] sm:$0xf] %vm323, %v304
  %338 = vst.msk [vmem:[%s3 + $0x38] sm:$0xf] %vm323, %v305
  %339 = vst.msk [vmem:[%s3 + $0x3c] sm:$0xf] %vm323, %v306
  // Predicated region
  $region14: #{decoder_forward.24} parent=0 // pred_check
    _
  $region15: #{decoder_forward.24} parent=0 // pred_check_branch
    %341 = sbr.rel (0) target = $region17
  $region16: #{decoder_forward.24} parent=0 // pred_region
    _
  $region17: #{decoder_forward.24} parent=0 // pred_fallthru
    _
  // Predicated region
  $region18: #{decoder_forward.24} parent=0 // pred_check
    _
  $region19: #{decoder_forward.24} parent=0 // pred_check_branch
    %343 = sbr.rel (0) target = $region21
  $region20: #{decoder_forward.24} parent=0 // pred_region
    _
  $region21: #{decoder_forward.24} parent=0 // pred_fallthru
    _

// kernel: decoder_forward.26
$region0: #{decoder_forward.26}
  #allocation0 [shape = 'u32[]', space=smem, size = 0x4, offset = 0x4, fixed_abs, tag = 'smem constant byte address 0x4 - core index']
  #allocation1 [shape = 'u32[144,128]{1,0:T(1,128)}', space=vmem, size = 0x12000, scoped, tag = 'internal scratch']
  %s0 = inlined_call_operand.vmem [shape: bf16[512,52], index: 0, kind: input, shape index: {}]
  %s1 = inlined_call_operand.vmem [shape: bf16[52,12], index: 1, kind: input, shape index: {}]
  %s2 = inlined_call_operand.vmem [shape: f32[1,12], index: 2, kind: input, shape index: {}]
  %s3 = inlined_call_operand.vmem [shape: bf16[512,12], index: 3, kind: output, shape index: {}]
  %s4 = sld [smem:[#allocation0]]
  $region22: #{decoder_forward.26} parent=0
    _
  %s6 = ssub.s32 1, %s4
  %s7 = scalar_select 0, %s6, %s4
  // Predicated region
  $region2: #{decoder_forward.26} parent=0 // pred_check
    _
  $region3: #{decoder_forward.26} parent=0 // pred_check_branch
    %9 = sbr.rel (0) target = $region5
  $region4: #{decoder_forward.26} parent=0 // pred_region
    _
  $region5: #{decoder_forward.26} parent=0 // pred_fallthru
    _
  // Predicated region
  $region6: #{decoder_forward.26} parent=0 // pred_check
    _
  $region7: #{decoder_forward.26} parent=0 // pred_check_branch
    %11 = sbr.rel (0) target = $region9
  $region8: #{decoder_forward.26} parent=0 // pred_region
    _
  $region9: #{decoder_forward.26} parent=0 // pred_fallthru
    _
  // Predicated region
  $region10: #{decoder_forward.26} parent=0 // pred_check
    _
  $region11: #{decoder_forward.26} parent=0 // pred_check_branch
    %13 = sbr.rel (0) target = $region13
  $region12: #{decoder_forward.26} parent=0 // pred_region
    _
  $region13: #{decoder_forward.26} parent=0 // pred_fallthru
    _
  %v15 = vld [vmem:[%s0] sm:$0xf]
  %v16 = vld [vmem:[%s0 + $0x4] sm:$0xf]
  %v17 = vld [vmem:[%s0 + $0x8] sm:$0xf]
  %v18 = vld [vmem:[%s0 + $0xc] sm:$0xf]
  %v19 = vld [vmem:[%s0 + $0x10] sm:$0xf]
  %v20 = vld [vmem:[%s0 + $0x14] sm:$0xf]
  %v21 = vld [vmem:[%s0 + $0x18] sm:$0xf]
  %v22 = vld [vmem:[%s0 + $0x1c] sm:$0xf]
  %v23 = vld [vmem:[%s0 + $0x20] sm:$0xf]
  %v24 = vld [vmem:[%s0 + $0x24] sm:$0xf]
  %v25 = vld [vmem:[%s0 + $0x28] sm:$0xf]
  %v26 = vld [vmem:[%s0 + $0x2c] sm:$0xf]
  %v27 = vld [vmem:[%s0 + $0x30] sm:$0xf]
  %v28 = vld [vmem:[%s0 + $0x34] sm:$0xf]
  %v29 = vld [vmem:[%s0 + $0x38] sm:$0xf]
  %v30 = vld [vmem:[%s0 + $0x3c] sm:$0xf]
  %v31 = vld [vmem:[%s0 + $0x40] sm:$0xf]
  %v32 = vld [vmem:[%s0 + $0x44] sm:$0xf]
  %v33 = vld [vmem:[%s0 + $0x48] sm:$0xf]
  %v34 = vld [vmem:[%s0 + $0x4c] sm:$0xf]
  %v35 = vld [vmem:[%s0 + $0x50] sm:$0xf]
  %v36 = vld [vmem:[%s0 + $0x54] sm:$0xf]
  %v37 = vld [vmem:[%s0 + $0x58] sm:$0xf]
  %v38 = vld [vmem:[%s0 + $0x5c] sm:$0xf]
  %v39 = vld [vmem:[%s0 + $0x60] sm:$0xf]
  %v40 = vld [vmem:[%s0 + $0x64] sm:$0xf]
  %v41 = vld [vmem:[%s0 + $0x68] sm:$0xf]
  %v42 = vld [vmem:[%s0 + $0x6c] sm:$0xf]
  %v43 = vld [vmem:[%s0 + $0x70] sm:$0xf]
  %v44 = vld [vmem:[%s0 + $0x74] sm:$0xf]
  %v45 = vld [vmem:[%s0 + $0x78] sm:$0xf]
  %v46 = vld [vmem:[%s0 + $0x7c] sm:$0xf]
  %v47 = vld [vmem:[%s0 + $0x80] sm:$0xf]
  %v48 = vld [vmem:[%s0 + $0x84] sm:$0xf]
  %v49 = vld [vmem:[%s0 + $0x88] sm:$0xf]
  %v50 = vld [vmem:[%s0 + $0x8c] sm:$0xf]
  %v51 = vld [vmem:[%s0 + $0x90] sm:$0xf]
  %v52 = vld [vmem:[%s0 + $0x94] sm:$0xf]
  %v53 = vld [vmem:[%s0 + $0x98] sm:$0xf]
  %v54 = vld [vmem:[%s0 + $0x9c] sm:$0xf]
  %v55 = vld [vmem:[%s0 + $0xa0] sm:$0xf]
  %v56 = vld [vmem:[%s0 + $0xa4] sm:$0xf]
  %v57 = vld [vmem:[%s0 + $0xa8] sm:$0xf]
  %v58 = vld [vmem:[%s0 + $0xac] sm:$0xf]
  %v59 = vld [vmem:[%s0 + $0xb0] sm:$0xf]
  %v60 = vld [vmem:[%s0 + $0xb4] sm:$0xf]
  %v61 = vld [vmem:[%s0 + $0xb8] sm:$0xf]
  %v62 = vld [vmem:[%s0 + $0xbc] sm:$0xf]
  %v63 = vld [vmem:[%s0 + $0xc0] sm:$0xf]
  %v64 = vld [vmem:[%s0 + $0xc4] sm:$0xf]
  %v65 = vld [vmem:[%s0 + $0xc8] sm:$0xf]
  %v66 = vld [vmem:[%s0 + $0xcc] sm:$0xf]
  %v67 = vld [vmem:[%s0 + $0xd0] sm:$0xf]
  %v68 = vld [vmem:[%s0 + $0xd4] sm:$0xf]
  %v69 = vld [vmem:[%s0 + $0xd8] sm:$0xf]
  %v70 = vld [vmem:[%s0 + $0xdc] sm:$0xf]
  %v71 = vld [vmem:[%s0 + $0xe0] sm:$0xf]
  %v72 = vld [vmem:[%s0 + $0xe4] sm:$0xf]
  %v73 = vld [vmem:[%s0 + $0xe8] sm:$0xf]
  %v74 = vld [vmem:[%s0 + $0xec] sm:$0xf]
  %v75 = vld [vmem:[%s0 + $0xf0] sm:$0xf]
  %v76 = vld [vmem:[%s0 + $0xf4] sm:$0xf]
  %v77 = vld [vmem:[%s0 + $0xf8] sm:$0xf]
  %v78 = vld [vmem:[%s0 + $0xfc] sm:$0xf]
  %v79 = vld [vmem:[%s1] sm:$0xf]
  %v80 = vld [vmem:[%s1 + $0x4] sm:$0xf]
  %v81 = vld [vmem:[%s1 + $0x8] sm:$0xf]
  %v82 = vld [vmem:[%s1 + $0xc] sm:$0xf]
  %v83 = vld [vmem:[%s1 + $0x10] sm:$0xf]
  %v84 = vld [vmem:[%s1 + $0x14] sm:$0xf]
  %v85 = vld [vmem:[%s1 + $0x18] sm:$0x3]
  %v86 = vld [vmem:[%s2] sm:$0x1]
  %v88 = vlaneseq
  %v89 = vshrl.u32 %v88, 7
  %v90 = vsub.s32 0, %v89
  %v91 = vrot.slane %v86, %v90
  %v157 = vunpack.c.l.b16 %v15
  %v158 = vunpack.c.l.b16 %v16
  %v159 = vunpack.c.l.b16 %v17
  %v160 = vunpack.c.l.b16 %v18
  %v161 = vunpack.c.l.b16 %v19
  %v162 = vunpack.c.l.b16 %v20
  %v163 = vunpack.c.l.b16 %v21
  %v164 = vunpack.c.l.b16 %v22
  %v165 = vunpack.c.l.b16 %v23
  %v166 = vunpack.c.l.b16 %v24
  %v167 = vunpack.c.l.b16 %v25
  %v168 = vunpack.c.l.b16 %v26
  %v169 = vunpack.c.l.b16 %v27
  %v170 = vunpack.c.l.b16 %v28
  %v171 = vunpack.c.l.b16 %v29
  %v172 = vunpack.c.l.b16 %v30
  %v173 = vunpack.c.l.b16 %v31
  %v174 = vunpack.c.l.b16 %v32
  %v175 = vunpack.c.l.b16 %v33
  %v176 = vunpack.c.l.b16 %v34
  %v177 = vunpack.c.l.b16 %v35
  %v178 = vunpack.c.l.b16 %v36
  %v179 = vunpack.c.l.b16 %v37
  %v180 = vunpack.c.l.b16 %v38
  %v181 = vunpack.c.l.b16 %v39
  %v182 = vunpack.c.l.b16 %v40
  %v183 = vunpack.c.l.b16 %v41
  %v184 = vunpack.c.l.b16 %v42
  %v185 = vunpack.c.l.b16 %v43
  %v186 = vunpack.c.l.b16 %v44
  %v187 = vunpack.c.l.b16 %v45
  %v188 = vunpack.c.l.b16 %v46
  %v189 = vunpack.c.l.b16 %v47
  %v190 = vunpack.c.l.b16 %v48
  %v191 = vunpack.c.l.b16 %v49
  %v192 = vunpack.c.l.b16 %v50
  %v193 = vunpack.c.l.b16 %v51
  %v194 = vunpack.c.l.b16 %v52
  %v195 = vunpack.c.l.b16 %v53
  %v196 = vunpack.c.l.b16 %v54
  %v197 = vunpack.c.l.b16 %v55
  %v198 = vunpack.c.l.b16 %v56
  %v199 = vunpack.c.l.b16 %v57
  %v200 = vunpack.c.l.b16 %v58
  %v201 = vunpack.c.l.b16 %v59
  %v202 = vunpack.c.l.b16 %v60
  %v203 = vunpack.c.l.b16 %v61
  %v204 = vunpack.c.l.b16 %v62
  %v205 = vunpack.c.l.b16 %v63
  %v206 = vunpack.c.l.b16 %v64
  %v207 = vunpack.c.l.b16 %v65
  %v208 = vunpack.c.l.b16 %v66
  %v209 = vunpack.c.l.b16 %v67
  %v210 = vunpack.c.l.b16 %v68
  %v211 = vunpack.c.l.b16 %v69
  %v212 = vunpack.c.l.b16 %v70
  %v213 = vunpack.c.l.b16 %v71
  %v214 = vunpack.c.l.b16 %v72
  %v215 = vunpack.c.l.b16 %v73
  %v216 = vunpack.c.l.b16 %v74
  %v217 = vunpack.c.l.b16 %v75
  %v218 = vunpack.c.l.b16 %v76
  %v219 = vunpack.c.l.b16 %v77
  %v220 = vunpack.c.l.b16 %v78
  %v221 = vpack.c.b16 %v158, %v157
  %v222 = vpack.c.b16 %v160, %v159
  %v223 = vpack.c.b16 %v162, %v161
  %v224 = vpack.c.b16 %v164, %v163
  %v225 = vpack.c.b16 %v166, %v165
  %v226 = vpack.c.b16 %v168, %v167
  %v227 = vpack.c.b16 %v170, %v169
  %v228 = vpack.c.b16 %v172, %v171
  %v229 = vpack.c.b16 %v174, %v173
  %v230 = vpack.c.b16 %v176, %v175
  %v231 = vpack.c.b16 %v178, %v177
  %v232 = vpack.c.b16 %v180, %v179
  %v233 = vpack.c.b16 %v182, %v181
  %v234 = vpack.c.b16 %v184, %v183
  %v235 = vpack.c.b16 %v186, %v185
  %v236 = vpack.c.b16 %v188, %v187
  %v237 = vpack.c.b16 %v190, %v189
  %v238 = vpack.c.b16 %v192, %v191
  %v239 = vpack.c.b16 %v194, %v193
  %v240 = vpack.c.b16 %v196, %v195
  %v241 = vpack.c.b16 %v198, %v197
  %v242 = vpack.c.b16 %v200, %v199
  %v243 = vpack.c.b16 %v202, %v201
  %v244 = vpack.c.b16 %v204, %v203
  %v245 = vpack.c.b16 %v206, %v205
  %v246 = vpack.c.b16 %v208, %v207
  %v247 = vpack.c.b16 %v210, %v209
  %v248 = vpack.c.b16 %v212, %v211
  %v249 = vpack.c.b16 %v214, %v213
  %v250 = vpack.c.b16 %v216, %v215
  %v251 = vpack.c.b16 %v218, %v217
  %v252 = vpack.c.b16 %v220, %v219
  %v260 = vunpack.c.l.b16 %v79
  %v261 = vunpack.c.l.b16 %v80
  %v262 = vunpack.c.l.b16 %v81
  %v263 = vunpack.c.l.b16 %v82
  %v264 = vunpack.c.l.b16 %v83
  %v265 = vunpack.c.l.b16 %v84
  %v266 = vunpack.c.l.b16 %v85
  %v267 = vpack.c.b16 %v261, %v260
  %v268 = vpack.c.b16 %v263, %v262
  %v269 = vpack.c.b16 %v265, %v264
  %v270 = vpack.c.b16 %v266, %v266
  %vm274 = vcmask 424960
  %v276 = vsel %vm274, %v221, 0
  %v279 = vsel %vm274, %v222, 0
  %v282 = vsel %vm274, %v223, 0
  %v285 = vsel %vm274, %v224, 0
  %v288 = vsel %vm274, %v225, 0
  %v291 = vsel %vm274, %v226, 0
  %v294 = vsel %vm274, %v227, 0
  %v297 = vsel %vm274, %v228, 0
  %v300 = vsel %vm274, %v229, 0
  %v303 = vsel %vm274, %v230, 0
  %v306 = vsel %vm274, %v231, 0
  %v309 = vsel %vm274, %v232, 0
  %v312 = vsel %vm274, %v233, 0
  %v315 = vsel %vm274, %v234, 0
  %v318 = vsel %vm274, %v235, 0
  %v321 = vsel %vm274, %v236, 0
  %v324 = vsel %vm274, %v237, 0
  %v327 = vsel %vm274, %v238, 0
  %v330 = vsel %vm274, %v239, 0
  %v333 = vsel %vm274, %v240, 0
  %v336 = vsel %vm274, %v241, 0
  %v339 = vsel %vm274, %v242, 0
  %v342 = vsel %vm274, %v243, 0
  %v345 = vsel %vm274, %v244, 0
  %v348 = vsel %vm274, %v245, 0
  %v351 = vsel %vm274, %v246, 0
  %v354 = vsel %vm274, %v247, 0
  %v357 = vsel %vm274, %v248, 0
  %v360 = vsel %vm274, %v249, 0
  %v363 = vsel %vm274, %v250, 0
  %v366 = vsel %vm274, %v251, 0
  %v369 = vsel %vm274, %v252, 0
  %vm371 = vcmask 1041408
  %v373 = vsel %vm371, %v270, 0
  %375 = vmatprep.subr.bf16.mxu0 0
  %376 = vmatpush1.bf16.msra.mxu0 0
  %377 = vmatprep.subr.bf16.mxu0 0
  %378 = vmatpush1.bf16.msra.mxu0 0
  %379 = vmatprep.subr.bf16.mxu0 0
  %380 = vmatpush1.bf16.msra.mxu0 0
  %381 = vmatprep.subr.bf16.mxu0 0
  %382 = vmatpush1.bf16.msra.mxu0 0
  %383 = vmatprep.subr.bf16.mxu0 0
  %384 = vmatpush1.bf16.msra.mxu0 %v373
  %385 = vmatprep.subr.bf16.mxu0 0
  %386 = vmatpush1.bf16.msra.mxu0 %v269
  %387 = vmatprep.subr.bf16.mxu0 0
  %388 = vmatpush1.bf16.msra.mxu0 %v268
  %389 = vmatprep.subr.bf16.mxu0 0
  %390 = vmatpush1.bf16.msra.mxu0 %v267
  %391 = vmatprep.subr.bf16.mxu0 0
  %392 = vmatpush2.bf16.msra.mxu0 0
  %393 = vmatprep.subr.bf16.mxu0 0
  %394 = vmatpush2.bf16.msra.mxu0 0
  %395 = vmatprep.subr.bf16.mxu0 0
  %396 = vmatpush2.bf16.msra.mxu0 0
  %397 = vmatprep.subr.bf16.mxu0 0
  %398 = vmatpush2.bf16.msra.mxu0 0
  %399 = vmatprep.subr.bf16.mxu0 0
  %400 = vmatpush2.bf16.msra.mxu0 0
  %401 = vmatprep.subr.bf16.mxu0 0
  %402 = vmatpush2.bf16.msra.mxu0 0
  %403 = vmatprep.subr.bf16.mxu0 0
  %404 = vmatpush2.bf16.msra.mxu0 0
  %405 = vmatprep.subr.bf16.mxu0 0
  %406 = vmatpush2.bf16.msra.mxu0 0
  %407 = vmatprep.mubr.bf16.mxu0 0
  %408 = vmatmul.mubr.bf16.gmra.mxu0 %v276
  %v409 = vpop.f32.mrf.mxu0
  %v410 = vadd.f32 %v91, %v409
  %v411 = vpop.f32.mrf.mxu0
  %v412 = vpop.f32.mrf.mxu0
  %v413 = vadd.f32 %v91, %v412
  %v414 = vpop.f32.mrf.mxu0
  %415 = vmatprep.mubr.bf16.mxu0 0
  %416 = vmatmul.mubr.bf16.gmra.mxu0 %v279
  %v417 = vpop.f32.mrf.mxu0
  %v418 = vadd.f32 %v91, %v417
  %v419 = vpop.f32.mrf.mxu0
  %v420 = vpop.f32.mrf.mxu0
  %v421 = vadd.f32 %v91, %v420
  %v422 = vpop.f32.mrf.mxu0
  %423 = vmatprep.mubr.bf16.mxu0 0
  %424 = vmatmul.mubr.bf16.gmra.mxu0 %v282
  %v425 = vpop.f32.mrf.mxu0
  %v426 = vadd.f32 %v91, %v425
  %v427 = vpop.f32.mrf.mxu0
  %v428 = vpop.f32.mrf.mxu0
  %v429 = vadd.f32 %v91, %v428
  %v430 = vpop.f32.mrf.mxu0
  %431 = vmatprep.mubr.bf16.mxu0 0
  %432 = vmatmul.mubr.bf16.gmra.mxu0 %v285
  %v433 = vpop.f32.mrf.mxu0
  %v434 = vadd.f32 %v91, %v433
  %v435 = vpop.f32.mrf.mxu0
  %v436 = vpop.f32.mrf.mxu0
  %v437 = vadd.f32 %v91, %v436
  %v438 = vpop.f32.mrf.mxu0
  %439 = vmatprep.mubr.bf16.mxu0 0
  %440 = vmatmul.mubr.bf16.gmra.mxu0 %v288
  %v441 = vpop.f32.mrf.mxu0
  %v442 = vadd.f32 %v91, %v441
  %v443 = vpop.f32.mrf.mxu0
  %v444 = vpop.f32.mrf.mxu0
  %v445 = vadd.f32 %v91, %v444
  %v446 = vpop.f32.mrf.mxu0
  %447 = vmatprep.mubr.bf16.mxu0 0
  %448 = vmatmul.mubr.bf16.gmra.mxu0 %v291
  %v449 = vpop.f32.mrf.mxu0
  %v450 = vadd.f32 %v91, %v449
  %v451 = vpop.f32.mrf.mxu0
  %v452 = vpop.f32.mrf.mxu0
  %v453 = vadd.f32 %v91, %v452
  %v454 = vpop.f32.mrf.mxu0
  %455 = vmatprep.mubr.bf16.mxu0 0
  %456 = vmatmul.mubr.bf16.gmra.mxu0 %v294
  %v457 = vpop.f32.mrf.mxu0
  %v458 = vadd.f32 %v91, %v457
  %v459 = vpop.f32.mrf.mxu0
  %v460 = vpop.f32.mrf.mxu0
  %v461 = vadd.f32 %v91, %v460
  %v462 = vpop.f32.mrf.mxu0
  %463 = vmatprep.mubr.bf16.mxu0 0
  %464 = vmatmul.mubr.bf16.gmra.mxu0 %v297
  %v465 = vpop.f32.mrf.mxu0
  %v466 = vadd.f32 %v91, %v465
  %v467 = vpop.f32.mrf.mxu0
  %v468 = vpop.f32.mrf.mxu0
  %v469 = vadd.f32 %v91, %v468
  %v470 = vpop.f32.mrf.mxu0
  %471 = vmatprep.mubr.bf16.mxu0 0
  %472 = vmatmul.mubr.bf16.gmra.mxu0 %v300
  %v473 = vpop.f32.mrf.mxu0
  %v474 = vadd.f32 %v91, %v473
  %v475 = vpop.f32.mrf.mxu0
  %v476 = vpop.f32.mrf.mxu0
  %v477 = vadd.f32 %v91, %v476
  %v478 = vpop.f32.mrf.mxu0
  %479 = vmatprep.mubr.bf16.mxu0 0
  %480 = vmatmul.mubr.bf16.gmra.mxu0 %v303
  %v481 = vpop.f32.mrf.mxu0
  %v482 = vadd.f32 %v91, %v481
  %v483 = vpop.f32.mrf.mxu0
  %v484 = vpop.f32.mrf.mxu0
  %v485 = vadd.f32 %v91, %v484
  %v486 = vpop.f32.mrf.mxu0
  %487 = vmatprep.mubr.bf16.mxu0 0
  %488 = vmatmul.mubr.bf16.gmra.mxu0 %v306
  %v489 = vpop.f32.mrf.mxu0
  %v490 = vadd.f32 %v91, %v489
  %v491 = vpop.f32.mrf.mxu0
  %v492 = vpop.f32.mrf.mxu0
  %v493 = vadd.f32 %v91, %v492
  %v494 = vpop.f32.mrf.mxu0
  %495 = vmatprep.mubr.bf16.mxu0 0
  %496 = vmatmul.mubr.bf16.gmra.mxu0 %v309
  %v497 = vpop.f32.mrf.mxu0
  %v498 = vadd.f32 %v91, %v497
  %v499 = vpop.f32.mrf.mxu0
  %v500 = vpop.f32.mrf.mxu0
  %v501 = vadd.f32 %v91, %v500
  %v502 = vpop.f32.mrf.mxu0
  %503 = vmatprep.mubr.bf16.mxu0 0
  %504 = vmatmul.mubr.bf16.gmra.mxu0 %v312
  %v505 = vpop.f32.mrf.mxu0
  %v506 = vadd.f32 %v91, %v505
  %v507 = vpop.f32.mrf.mxu0
  %v508 = vpop.f32.mrf.mxu0
  %v509 = vadd.f32 %v91, %v508
  %v510 = vpop.f32.mrf.mxu0
  %511 = vmatprep.mubr.bf16.mxu0 0
  %512 = vmatmul.mubr.bf16.gmra.mxu0 %v315
  %v513 = vpop.f32.mrf.mxu0
  %v514 = vadd.f32 %v91, %v513
  %v515 = vpop.f32.mrf.mxu0
  %v516 = vpop.f32.mrf.mxu0
  %v517 = vadd.f32 %v91, %v516
  %v518 = vpop.f32.mrf.mxu0
  %519 = vmatprep.mubr.bf16.mxu0 0
  %520 = vmatmul.mubr.bf16.gmra.mxu0 %v318
  %v521 = vpop.f32.mrf.mxu0
  %v522 = vadd.f32 %v91, %v521
  %v523 = vpop.f32.mrf.mxu0
  %v524 = vpop.f32.mrf.mxu0
  %v525 = vadd.f32 %v91, %v524
  %v526 = vpop.f32.mrf.mxu0
  %527 = vmatprep.mubr.bf16.mxu0 0
  %528 = vmatmul.mubr.bf16.gmra.mxu0 %v321
  %v529 = vpop.f32.mrf.mxu0
  %v530 = vadd.f32 %v91, %v529
  %v531 = vpop.f32.mrf.mxu0
  %v532 = vpop.f32.mrf.mxu0
  %v533 = vadd.f32 %v91, %v532
  %v534 = vpop.f32.mrf.mxu0
  %535 = vmatprep.mubr.bf16.mxu0 0
  %536 = vmatmul.mubr.bf16.gmra.mxu0 %v324
  %v537 = vpop.f32.mrf.mxu0
  %v538 = vadd.f32 %v91, %v537
  %v539 = vpop.f32.mrf.mxu0
  %v540 = vpop.f32.mrf.mxu0
  %v541 = vadd.f32 %v91, %v540
  %v542 = vpop.f32.mrf.mxu0
  %543 = vmatprep.mubr.bf16.mxu0 0
  %544 = vmatmul.mubr.bf16.gmra.mxu0 %v327
  %v545 = vpop.f32.mrf.mxu0
  %v546 = vadd.f32 %v91, %v545
  %v547 = vpop.f32.mrf.mxu0
  %v548 = vpop.f32.mrf.mxu0
  %v549 = vadd.f32 %v91, %v548
  %v550 = vpop.f32.mrf.mxu0
  %551 = vmatprep.mubr.bf16.mxu0 0
  %552 = vmatmul.mubr.bf16.gmra.mxu0 %v330
  %v553 = vpop.f32.mrf.mxu0
  %v554 = vadd.f32 %v91, %v553
  %v555 = vpop.f32.mrf.mxu0
  %v556 = vpop.f32.mrf.mxu0
  %v557 = vadd.f32 %v91, %v556
  %v558 = vpop.f32.mrf.mxu0
  %559 = vmatprep.mubr.bf16.mxu0 0
  %560 = vmatmul.mubr.bf16.gmra.mxu0 %v333
  %v561 = vpop.f32.mrf.mxu0
  %v562 = vadd.f32 %v91, %v561
  %v563 = vpop.f32.mrf.mxu0
  %v564 = vpop.f32.mrf.mxu0
  %v565 = vadd.f32 %v91, %v564
  %v566 = vpop.f32.mrf.mxu0
  %567 = vmatprep.mubr.bf16.mxu0 0
  %568 = vmatmul.mubr.bf16.gmra.mxu0 %v336
  %v569 = vpop.f32.mrf.mxu0
  %v570 = vadd.f32 %v91, %v569
  %v571 = vpop.f32.mrf.mxu0
  %v572 = vpop.f32.mrf.mxu0
  %v573 = vadd.f32 %v91, %v572
  %v574 = vpop.f32.mrf.mxu0
  %575 = vmatprep.mubr.bf16.mxu0 0
  %576 = vmatmul.mubr.bf16.gmra.mxu0 %v339
  %v577 = vpop.f32.mrf.mxu0
  %v578 = vadd.f32 %v91, %v577
  %v579 = vpop.f32.mrf.mxu0
  %v580 = vpop.f32.mrf.mxu0
  %v581 = vadd.f32 %v91, %v580
  %v582 = vpop.f32.mrf.mxu0
  %583 = vmatprep.mubr.bf16.mxu0 0
  %584 = vmatmul.mubr.bf16.gmra.mxu0 %v342
  %v585 = vpop.f32.mrf.mxu0
  %v586 = vadd.f32 %v91, %v585
  %v587 = vpop.f32.mrf.mxu0
  %v588 = vpop.f32.mrf.mxu0
  %v589 = vadd.f32 %v91, %v588
  %v590 = vpop.f32.mrf.mxu0
  %591 = vmatprep.mubr.bf16.mxu0 0
  %592 = vmatmul.mubr.bf16.gmra.mxu0 %v345
  %v593 = vpop.f32.mrf.mxu0
  %v594 = vadd.f32 %v91, %v593
  %v595 = vpop.f32.mrf.mxu0
  %v596 = vpop.f32.mrf.mxu0
  %v597 = vadd.f32 %v91, %v596
  %v598 = vpop.f32.mrf.mxu0
  %599 = vmatprep.mubr.bf16.mxu0 0
  %600 = vmatmul.mubr.bf16.gmra.mxu0 %v348
  %v601 = vpop.f32.mrf.mxu0
  %v602 = vadd.f32 %v91, %v601
  %v603 = vpop.f32.mrf.mxu0
  %v604 = vpop.f32.mrf.mxu0
  %v605 = vadd.f32 %v91, %v604
  %v606 = vpop.f32.mrf.mxu0
  %607 = vmatprep.mubr.bf16.mxu0 0
  %608 = vmatmul.mubr.bf16.gmra.mxu0 %v351
  %v609 = vpop.f32.mrf.mxu0
  %v610 = vadd.f32 %v91, %v609
  %v611 = vpop.f32.mrf.mxu0
  %v612 = vpop.f32.mrf.mxu0
  %v613 = vadd.f32 %v91, %v612
  %v614 = vpop.f32.mrf.mxu0
  %615 = vmatprep.mubr.bf16.mxu0 0
  %616 = vmatmul.mubr.bf16.gmra.mxu0 %v354
  %v617 = vpop.f32.mrf.mxu0
  %v618 = vadd.f32 %v91, %v617
  %v619 = vpop.f32.mrf.mxu0
  %v620 = vpop.f32.mrf.mxu0
  %v621 = vadd.f32 %v91, %v620
  %v622 = vpop.f32.mrf.mxu0
  %623 = vmatprep.mubr.bf16.mxu0 0
  %624 = vmatmul.mubr.bf16.gmra.mxu0 %v357
  %v625 = vpop.f32.mrf.mxu0
  %v626 = vadd.f32 %v91, %v625
  %v627 = vpop.f32.mrf.mxu0
  %v628 = vpop.f32.mrf.mxu0
  %v629 = vadd.f32 %v91, %v628
  %v630 = vpop.f32.mrf.mxu0
  %631 = vmatprep.mubr.bf16.mxu0 0
  %632 = vmatmul.mubr.bf16.gmra.mxu0 %v360
  %v633 = vpop.f32.mrf.mxu0
  %v634 = vadd.f32 %v91, %v633
  %v635 = vpop.f32.mrf.mxu0
  %v636 = vpop.f32.mrf.mxu0
  %v637 = vadd.f32 %v91, %v636
  %v638 = vpop.f32.mrf.mxu0
  %639 = vmatprep.mubr.bf16.mxu0 0
  %640 = vmatmul.mubr.bf16.gmra.mxu0 %v363
  %v641 = vpop.f32.mrf.mxu0
  %v642 = vadd.f32 %v91, %v641
  %v643 = vpop.f32.mrf.mxu0
  %v644 = vpop.f32.mrf.mxu0
  %v645 = vadd.f32 %v91, %v644
  %v646 = vpop.f32.mrf.mxu0
  %647 = vmatprep.mubr.bf16.mxu0 0
  %648 = vmatmul.mubr.bf16.gmra.mxu0 %v366
  %v649 = vpop.f32.mrf.mxu0
  %v650 = vadd.f32 %v91, %v649
  %v651 = vpop.f32.mrf.mxu0
  %v652 = vpop.f32.mrf.mxu0
  %v653 = vadd.f32 %v91, %v652
  %v654 = vpop.f32.mrf.mxu0
  %655 = vmatprep.mubr.bf16.mxu0 0
  %656 = vmatmul.mubr.bf16.gmra.mxu0 %v369
  %v657 = vpop.f32.mrf.mxu0
  %v658 = vadd.f32 %v91, %v657
  %v659 = vpop.f32.mrf.mxu0
  %v660 = vpop.f32.mrf.mxu0
  %v661 = vadd.f32 %v91, %v660
  %v662 = vpop.f32.mrf.mxu0
  %663 = vdwg.mxu0
  %v664 = vpack.c.bf16 %v413, %v410
  %v665 = vpack.c.bf16 %v421, %v418
  %v666 = vpack.c.bf16 %v429, %v426
  %v667 = vpack.c.bf16 %v437, %v434
  %v668 = vpack.c.bf16 %v445, %v442
  %v669 = vpack.c.bf16 %v453, %v450
  %v670 = vpack.c.bf16 %v461, %v458
  %v671 = vpack.c.bf16 %v469, %v466
  %v672 = vpack.c.bf16 %v477, %v474
  %v673 = vpack.c.bf16 %v485, %v482
  %v674 = vpack.c.bf16 %v493, %v490
  %v675 = vpack.c.bf16 %v501, %v498
  %v676 = vpack.c.bf16 %v509, %v506
  %v677 = vpack.c.bf16 %v517, %v514
  %v678 = vpack.c.bf16 %v525, %v522
  %v679 = vpack.c.bf16 %v533, %v530
  %v680 = vpack.c.bf16 %v541, %v538
  %v681 = vpack.c.bf16 %v549, %v546
  %v682 = vpack.c.bf16 %v557, %v554
  %v683 = vpack.c.bf16 %v565, %v562
  %v684 = vpack.c.bf16 %v573, %v570
  %v685 = vpack.c.bf16 %v581, %v578
  %v686 = vpack.c.bf16 %v589, %v586
  %v687 = vpack.c.bf16 %v597, %v594
  %v688 = vpack.c.bf16 %v605, %v602
  %v689 = vpack.c.bf16 %v613, %v610
  %v690 = vpack.c.bf16 %v621, %v618
  %v691 = vpack.c.bf16 %v629, %v626
  %v692 = vpack.c.bf16 %v637, %v634
  %v693 = vpack.c.bf16 %v645, %v642
  %v694 = vpack.c.bf16 %v653, %v650
  %v695 = vpack.c.bf16 %v661, %v658
  %v728 = vunpack.c.l.b16 %v664
  %v729 = vunpack.c.h.b16 %v664
  %v730 = vunpack.c.l.b16 %v665
  %v731 = vunpack.c.h.b16 %v665
  %v732 = vunpack.c.l.b16 %v666
  %v733 = vunpack.c.h.b16 %v666
  %v734 = vunpack.c.l.b16 %v667
  %v735 = vunpack.c.h.b16 %v667
  %v736 = vunpack.c.l.b16 %v668
  %v737 = vunpack.c.h.b16 %v668
  %v738 = vunpack.c.l.b16 %v669
  %v739 = vunpack.c.h.b16 %v669
  %v740 = vunpack.c.l.b16 %v670
  %v741 = vunpack.c.h.b16 %v670
  %v742 = vunpack.c.l.b16 %v671
  %v743 = vunpack.c.h.b16 %v671
  %v744 = vunpack.c.l.b16 %v672
  %v745 = vunpack.c.h.b16 %v672
  %v746 = vunpack.c.l.b16 %v673
  %v747 = vunpack.c.h.b16 %v673
  %v748 = vunpack.c.l.b16 %v674
  %v749 = vunpack.c.h.b16 %v674
  %v750 = vunpack.c.l.b16 %v675
  %v751 = vunpack.c.h.b16 %v675
  %v752 = vunpack.c.l.b16 %v676
  %v753 = vunpack.c.h.b16 %v676
  %v754 = vunpack.c.l.b16 %v677
  %v755 = vunpack.c.h.b16 %v677
  %v756 = vunpack.c.l.b16 %v678
  %v757 = vunpack.c.h.b16 %v678
  %v758 = vunpack.c.l.b16 %v679
  %v759 = vunpack.c.h.b16 %v679
  %v760 = vunpack.c.l.b16 %v680
  %v761 = vunpack.c.h.b16 %v680
  %v762 = vunpack.c.l.b16 %v681
  %v763 = vunpack.c.h.b16 %v681
  %v764 = vunpack.c.l.b16 %v682
  %v765 = vunpack.c.h.b16 %v682
  %v766 = vunpack.c.l.b16 %v683
  %v767 = vunpack.c.h.b16 %v683
  %v768 = vunpack.c.l.b16 %v684
  %v769 = vunpack.c.h.b16 %v684
  %v770 = vunpack.c.l.b16 %v685
  %v771 = vunpack.c.h.b16 %v685
  %v772 = vunpack.c.l.b16 %v686
  %v773 = vunpack.c.h.b16 %v686
  %v774 = vunpack.c.l.b16 %v687
  %v775 = vunpack.c.h.b16 %v687
  %v776 = vunpack.c.l.b16 %v688
  %v777 = vunpack.c.h.b16 %v688
  %v778 = vunpack.c.l.b16 %v689
  %v779 = vunpack.c.h.b16 %v689
  %v780 = vunpack.c.l.b16 %v690
  %v781 = vunpack.c.h.b16 %v690
  %v782 = vunpack.c.l.b16 %v691
  %v783 = vunpack.c.h.b16 %v691
  %v784 = vunpack.c.l.b16 %v692
  %v785 = vunpack.c.h.b16 %v692
  %v786 = vunpack.c.l.b16 %v693
  %v787 = vunpack.c.h.b16 %v693
  %v788 = vunpack.c.l.b16 %v694
  %v789 = vunpack.c.h.b16 %v694
  %v790 = vunpack.c.l.b16 %v695
  %v791 = vunpack.c.h.b16 %v695
  %v792 = vpack.c.b16 %v728, %v728
  %v793 = vpack.c.b16 %v729, %v729
  %v794 = vpack.c.b16 %v730, %v730
  %v795 = vpack.c.b16 %v731, %v731
  %v796 = vpack.c.b16 %v732, %v732
  %v797 = vpack.c.b16 %v733, %v733
  %v798 = vpack.c.b16 %v734, %v734
  %v799 = vpack.c.b16 %v735, %v735
  %v800 = vpack.c.b16 %v736, %v736
  %v801 = vpack.c.b16 %v737, %v737
  %v802 = vpack.c.b16 %v738, %v738
  %v803 = vpack.c.b16 %v739, %v739
  %v804 = vpack.c.b16 %v740, %v740
  %v805 = vpack.c.b16 %v741, %v741
  %v806 = vpack.c.b16 %v742, %v742
  %v807 = vpack.c.b16 %v743, %v743
  %v808 = vpack.c.b16 %v744, %v744
  %v809 = vpack.c.b16 %v745, %v745
  %v810 = vpack.c.b16 %v746, %v746
  %v811 = vpack.c.b16 %v747, %v747
  %v812 = vpack.c.b16 %v748, %v748
  %v813 = vpack.c.b16 %v749, %v749
  %v814 = vpack.c.b16 %v750, %v750
  %v815 = vpack.c.b16 %v751, %v751
  %v816 = vpack.c.b16 %v752, %v752
  %v817 = vpack.c.b16 %v753, %v753
  %v818 = vpack.c.b16 %v754, %v754
  %v819 = vpack.c.b16 %v755, %v755
  %v820 = vpack.c.b16 %v756, %v756
  %v821 = vpack.c.b16 %v757, %v757
  %v822 = vpack.c.b16 %v758, %v758
  %v823 = vpack.c.b16 %v759, %v759
  %v824 = vpack.c.b16 %v760, %v760
  %v825 = vpack.c.b16 %v761, %v761
  %v826 = vpack.c.b16 %v762, %v762
  %v827 = vpack.c.b16 %v763, %v763
  %v828 = vpack.c.b16 %v764, %v764
  %v829 = vpack.c.b16 %v765, %v765
  %v830 = vpack.c.b16 %v766, %v766
  %v831 = vpack.c.b16 %v767, %v767
  %v832 = vpack.c.b16 %v768, %v768
  %v833 = vpack.c.b16 %v769, %v769
  %v834 = vpack.c.b16 %v770, %v770
  %v835 = vpack.c.b16 %v771, %v771
  %v836 = vpack.c.b16 %v772, %v772
  %v837 = vpack.c.b16 %v773, %v773
  %v838 = vpack.c.b16 %v774, %v774
  %v839 = vpack.c.b16 %v775, %v775
  %v840 = vpack.c.b16 %v776, %v776
  %v841 = vpack.c.b16 %v777, %v777
  %v842 = vpack.c.b16 %v778, %v778
  %v843 = vpack.c.b16 %v779, %v779
  %v844 = vpack.c.b16 %v780, %v780
  %v845 = vpack.c.b16 %v781, %v781
  %v846 = vpack.c.b16 %v782, %v782
  %v847 = vpack.c.b16 %v783, %v783
  %v848 = vpack.c.b16 %v784, %v784
  %v849 = vpack.c.b16 %v785, %v785
  %v850 = vpack.c.b16 %v786, %v786
  %v851 = vpack.c.b16 %v787, %v787
  %v852 = vpack.c.b16 %v788, %v788
  %v853 = vpack.c.b16 %v789, %v789
  %v854 = vpack.c.b16 %v790, %v790
  %v855 = vpack.c.b16 %v791, %v791
  %vm920 = vcmask 93184
  %921 = vst.msk [vmem:[%s3] sm:$0xf] %vm920, %v792
  %922 = vst.msk [vmem:[%s3 + $0x4] sm:$0xf] %vm920, %v793
  %923 = vst.msk [vmem:[%s3 + $0x8] sm:$0xf] %vm920, %v794
  %924 = vst.msk [vmem:[%s3 + $0xc] sm:$0xf] %vm920, %v795
  %925 = vst.msk [vmem:[%s3 + $0x10] sm:$0xf] %vm920, %v796
  %926 = vst.msk [vmem:[%s3 + $0x14] sm:$0xf] %vm920, %v797
  %927 = vst.msk [vmem:[%s3 + $0x18] sm:$0xf] %vm920, %v798
  %928 = vst.msk [vmem:[%s3 + $0x1c] sm:$0xf] %vm920, %v799
  %929 = vst.msk [vmem:[%s3 + $0x20] sm:$0xf] %vm920, %v800
  %930 = vst.msk [vmem:[%s3 + $0x24] sm:$0xf] %vm920, %v801
  %931 = vst.msk [vmem:[%s3 + $0x28] sm:$0xf] %vm920, %v802
  %932 = vst.msk [vmem:[%s3 + $0x2c] sm:$0xf] %vm920, %v803
  %933 = vst.msk [vmem:[%s3 + $0x30] sm:$0xf] %vm920, %v804
  %934 = vst.msk [vmem:[%s3 + $0x34] sm:$0xf] %vm920, %v805
  %935 = vst.msk [vmem:[%s3 + $0x38] sm:$0xf] %vm920, %v806
  %936 = vst.msk [vmem:[%s3 + $0x3c] sm:$0xf] %vm920, %v807
  %937 = vst.msk [vmem:[%s3 + $0x40] sm:$0xf] %vm920, %v808
  %938 = vst.msk [vmem:[%s3 + $0x44] sm:$0xf] %vm920, %v809
  %939 = vst.msk [vmem:[%s3 + $0x48] sm:$0xf] %vm920, %v810
  %940 = vst.msk [vmem:[%s3 + $0x4c] sm:$0xf] %vm920, %v811
  %941 = vst.msk [vmem:[%s3 + $0x50] sm:$0xf] %vm920, %v812
  %942 = vst.msk [vmem:[%s3 + $0x54] sm:$0xf] %vm920, %v813
  %943 = vst.msk [vmem:[%s3 + $0x58] sm:$0xf] %vm920, %v814
  %944 = vst.msk [vmem:[%s3 + $0x5c] sm:$0xf] %vm920, %v815
  %945 = vst.msk [vmem:[%s3 + $0x60] sm:$0xf] %vm920, %v816
  %946 = vst.msk [vmem:[%s3 + $0x64] sm:$0xf] %vm920, %v817
  %947 = vst.msk [vmem:[%s3 + $0x68] sm:$0xf] %vm920, %v818
  %948 = vst.msk [vmem:[%s3 + $0x6c] sm:$0xf] %vm920, %v819
  %949 = vst.msk [vmem:[%s3 + $0x70] sm:$0xf] %vm920, %v820
  %950 = vst.msk [vmem:[%s3 + $0x74] sm:$0xf] %vm920, %v821
  %951 = vst.msk [vmem:[%s3 + $0x78] sm:$0xf] %vm920, %v822
  %952 = vst.msk [vmem:[%s3 + $0x7c] sm:$0xf] %vm920, %v823
  %953 = vst.msk [vmem:[%s3 + $0x80] sm:$0xf] %vm920, %v824
  %954 = vst.msk [vmem:[%s3 + $0x84] sm:$0xf] %vm920, %v825
  %955 = vst.msk [vmem:[%s3 + $0x88] sm:$0xf] %vm920, %v826
  %956 = vst.msk [vmem:[%s3 + $0x8c] sm:$0xf] %vm920, %v827
  %957 = vst.msk [vmem:[%s3 + $0x90] sm:$0xf] %vm920, %v828
  %958 = vst.msk [vmem:[%s3 + $0x94] sm:$0xf] %vm920, %v829
  %959 = vst.msk [vmem:[%s3 + $0x98] sm:$0xf] %vm920, %v830
  %960 = vst.msk [vmem:[%s3 + $0x9c] sm:$0xf] %vm920, %v831
  %961 = vst.msk [vmem:[%s3 + $0xa0] sm:$0xf] %vm920, %v832
  %962 = vst.msk [vmem:[%s3 + $0xa4] sm:$0xf] %vm920, %v833
  %963 = vst.msk [vmem:[%s3 + $0xa8] sm:$0xf] %vm920, %v834
  %964 = vst.msk [vmem:[%s3 + $0xac] sm:$0xf] %vm920, %v835
  %965 = vst.msk [vmem:[%s3 + $0xb0] sm:$0xf] %vm920, %v836
  %966 = vst.msk [vmem:[%s3 + $0xb4] sm:$0xf] %vm920, %v837
  %967 = vst.msk [vmem:[%s3 + $0xb8] sm:$0xf] %vm920, %v838
  %968 = vst.msk [vmem:[%s3 + $0xbc] sm:$0xf] %vm920, %v839
  %969 = vst.msk [vmem:[%s3 + $0xc0] sm:$0xf] %vm920, %v840
  %970 = vst.msk [vmem:[%s3 + $0xc4] sm:$0xf] %vm920, %v841
  %971 = vst.msk [vmem:[%s3 + $0xc8] sm:$0xf] %vm920, %v842
  %972 = vst.msk [vmem:[%s3 + $0xcc] sm:$0xf] %vm920, %v843
  %973 = vst.msk [vmem:[%s3 + $0xd0] sm:$0xf] %vm920, %v844
  %974 = vst.msk [vmem:[%s3 + $0xd4] sm:$0xf] %vm920, %v845
  %975 = vst.msk [vmem:[%s3 + $0xd8] sm:$0xf] %vm920, %v846
  %976 = vst.msk [vmem:[%s3 + $0xdc] sm:$0xf] %vm920, %v847
  %977 = vst.msk [vmem:[%s3 + $0xe0] sm:$0xf] %vm920, %v848
  %978 = vst.msk [vmem:[%s3 + $0xe4] sm:$0xf] %vm920, %v849
  %979 = vst.msk [vmem:[%s3 + $0xe8] sm:$0xf] %vm920, %v850
  %980 = vst.msk [vmem:[%s3 + $0xec] sm:$0xf] %vm920, %v851
  %981 = vst.msk [vmem:[%s3 + $0xf0] sm:$0xf] %vm920, %v852
  %982 = vst.msk [vmem:[%s3 + $0xf4] sm:$0xf] %vm920, %v853
  %983 = vst.msk [vmem:[%s3 + $0xf8] sm:$0xf] %vm920, %v854
  %984 = vst.msk [vmem:[%s3 + $0xfc] sm:$0xf] %vm920, %v855
  // Predicated region
  $region14: #{decoder_forward.26} parent=0 // pred_check
    _
  $region15: #{decoder_forward.26} parent=0 // pred_check_branch
    %986 = sbr.rel (0) target = $region17
  $region16: #{decoder_forward.26} parent=0 // pred_region
    _
  $region17: #{decoder_forward.26} parent=0 // pred_fallthru
    _
  // Predicated region
  $region18: #{decoder_forward.26} parent=0 // pred_check
    _
  $region19: #{decoder_forward.26} parent=0 // pred_check_branch
    %988 = sbr.rel (0) target = $region21
  $region20: #{decoder_forward.26} parent=0 // pred_region
    _
  $region21: #{decoder_forward.26} parent=0 // pred_fallthru
    _

// kernel: decoder_forward.27
$region0: #{decoder_forward.27}
  #allocation0 [shape = 'u32[]', space=smem, size = 0x4, offset = 0x4, fixed_abs, tag = 'smem constant byte address 0x4 - core index']
  #allocation1 [shape = 'u32[144,128]{1,0:T(1,128)}', space=vmem, size = 0x12000, scoped, tag = 'internal scratch']
  %s0 = inlined_call_operand.vmem [shape: bf16[512,108], index: 0, kind: input, shape index: {}]
  %s1 = inlined_call_operand.vmem [shape: bf16[108,12], index: 1, kind: input, shape index: {}]
  %s2 = inlined_call_operand.vmem [shape: f32[1,12], index: 2, kind: input, shape index: {}]
  %s3 = inlined_call_operand.vmem [shape: bf16[512,12], index: 3, kind: output, shape index: {}]
  %s4 = sld [smem:[#allocation0]]
  $region22: #{decoder_forward.27} parent=0
    _
  %s6 = ssub.s32 1, %s4
  %s7 = scalar_select 0, %s6, %s4
  // Predicated region
  $region2: #{decoder_forward.27} parent=0 // pred_check
    _
  $region3: #{decoder_forward.27} parent=0 // pred_check_branch
    %9 = sbr.rel (0) target = $region5
  $region4: #{decoder_forward.27} parent=0 // pred_region
    _
  $region5: #{decoder_forward.27} parent=0 // pred_fallthru
    _
  // Predicated region
  $region6: #{decoder_forward.27} parent=0 // pred_check
    _
  $region7: #{decoder_forward.27} parent=0 // pred_check_branch
    %11 = sbr.rel (0) target = $region9
  $region8: #{decoder_forward.27} parent=0 // pred_region
    _
  $region9: #{decoder_forward.27} parent=0 // pred_fallthru
    _
  // Predicated region
  $region10: #{decoder_forward.27} parent=0 // pred_check
    _
  $region11: #{decoder_forward.27} parent=0 // pred_check_branch
    %13 = sbr.rel (0) target = $region13
  $region12: #{decoder_forward.27} parent=0 // pred_region
    _
  $region13: #{decoder_forward.27} parent=0 // pred_fallthru
    _
  %v15 = vld [vmem:[%s0] sm:$0xf]
  %v16 = vld [vmem:[%s0 + $0x4] sm:$0xf]
  %v17 = vld [vmem:[%s0 + $0x8] sm:$0xf]
  %v18 = vld [vmem:[%s0 + $0xc] sm:$0xf]
  %v19 = vld [vmem:[%s0 + $0x10] sm:$0xf]
  %v20 = vld [vmem:[%s0 + $0x14] sm:$0xf]
  %v21 = vld [vmem:[%s0 + $0x18] sm:$0xf]
  %v22 = vld [vmem:[%s0 + $0x1c] sm:$0xf]
  %v23 = vld [vmem:[%s0 + $0x20] sm:$0xf]
  %v24 = vld [vmem:[%s0 + $0x24] sm:$0xf]
  %v25 = vld [vmem:[%s0 + $0x28] sm:$0xf]
  %v26 = vld [vmem:[%s0 + $0x2c] sm:$0xf]
  %v27 = vld [vmem:[%s0 + $0x30] sm:$0xf]
  %v28 = vld [vmem:[%s0 + $0x34] sm:$0xf]
  %v29 = vld [vmem:[%s0 + $0x38] sm:$0xf]
  %v30 = vld [vmem:[%s0 + $0x3c] sm:$0xf]
  %v31 = vld [vmem:[%s0 + $0x40] sm:$0xf]
  %v32 = vld [vmem:[%s0 + $0x44] sm:$0xf]
  %v33 = vld [vmem:[%s0 + $0x48] sm:$0xf]
  %v34 = vld [vmem:[%s0 + $0x4c] sm:$0xf]
  %v35 = vld [vmem:[%s0 + $0x50] sm:$0xf]
  %v36 = vld [vmem:[%s0 + $0x54] sm:$0xf]
  %v37 = vld [vmem:[%s0 + $0x58] sm:$0xf]
  %v38 = vld [vmem:[%s0 + $0x5c] sm:$0xf]
  %v39 = vld [vmem:[%s0 + $0x60] sm:$0xf]
  %v40 = vld [vmem:[%s0 + $0x64] sm:$0xf]
  %v41 = vld [vmem:[%s0 + $0x68] sm:$0xf]
  %v42 = vld [vmem:[%s0 + $0x6c] sm:$0xf]
  %v43 = vld [vmem:[%s0 + $0x70] sm:$0xf]
  %v44 = vld [vmem:[%s0 + $0x74] sm:$0xf]
  %v45 = vld [vmem:[%s0 + $0x78] sm:$0xf]
  %v46 = vld [vmem:[%s0 + $0x7c] sm:$0xf]
  %v47 = vld [vmem:[%s0 + $0x80] sm:$0xf]
  %v48 = vld [vmem:[%s0 + $0x84] sm:$0xf]
  %v49 = vld [vmem:[%s0 + $0x88] sm:$0xf]
  %v50 = vld [vmem:[%s0 + $0x8c] sm:$0xf]
  %v51 = vld [vmem:[%s0 + $0x90] sm:$0xf]
  %v52 = vld [vmem:[%s0 + $0x94] sm:$0xf]
  %v53 = vld [vmem:[%s0 + $0x98] sm:$0xf]
  %v54 = vld [vmem:[%s0 + $0x9c] sm:$0xf]
  %v55 = vld [vmem:[%s0 + $0xa0] sm:$0xf]
  %v56 = vld [vmem:[%s0 + $0xa4] sm:$0xf]
  %v57 = vld [vmem:[%s0 + $0xa8] sm:$0xf]
  %v58 = vld [vmem:[%s0 + $0xac] sm:$0xf]
  %v59 = vld [vmem:[%s0 + $0xb0] sm:$0xf]
  %v60 = vld [vmem:[%s0 + $0xb4] sm:$0xf]
  %v61 = vld [vmem:[%s0 + $0xb8] sm:$0xf]
  %v62 = vld [vmem:[%s0 + $0xbc] sm:$0xf]
  %v63 = vld [vmem:[%s0 + $0xc0] sm:$0xf]
  %v64 = vld [vmem:[%s0 + $0xc4] sm:$0xf]
  %v65 = vld [vmem:[%s0 + $0xc8] sm:$0xf]
  %v66 = vld [vmem:[%s0 + $0xcc] sm:$0xf]
  %v67 = vld [vmem:[%s0 + $0xd0] sm:$0xf]
  %v68 = vld [vmem:[%s0 + $0xd4] sm:$0xf]
  %v69 = vld [vmem:[%s0 + $0xd8] sm:$0xf]
  %v70 = vld [vmem:[%s0 + $0xdc] sm:$0xf]
  %v71 = vld [vmem:[%s0 + $0xe0] sm:$0xf]
  %v72 = vld [vmem:[%s0 + $0xe4] sm:$0xf]
  %v73 = vld [vmem:[%s0 + $0xe8] sm:$0xf]
  %v74 = vld [vmem:[%s0 + $0xec] sm:$0xf]
  %v75 = vld [vmem:[%s0 + $0xf0] sm:$0xf]
  %v76 = vld [vmem:[%s0 + $0xf4] sm:$0xf]
  %v77 = vld [vmem:[%s0 + $0xf8] sm:$0xf]
  %v78 = vld [vmem:[%s0 + $0xfc] sm:$0xf]
  %v79 = vld [vmem:[%s1] sm:$0xf]
  %v80 = vld [vmem:[%s1 + $0x4] sm:$0xf]
  %v81 = vld [vmem:[%s1 + $0x8] sm:$0xf]
  %v82 = vld [vmem:[%s1 + $0xc] sm:$0xf]
  %v83 = vld [vmem:[%s1 + $0x10] sm:$0xf]
  %v84 = vld [vmem:[%s1 + $0x14] sm:$0xf]
  %v85 = vld [vmem:[%s1 + $0x18] sm:$0xf]
  %v86 = vld [vmem:[%s1 + $0x1c] sm:$0xf]
  %v87 = vld [vmem:[%s1 + $0x20] sm:$0xf]
  %v88 = vld [vmem:[%s1 + $0x24] sm:$0xf]
  %v89 = vld [vmem:[%s1 + $0x28] sm:$0xf]
  %v90 = vld [vmem:[%s1 + $0x2c] sm:$0xf]
  %v91 = vld [vmem:[%s1 + $0x30] sm:$0xf]
  %v92 = vld [vmem:[%s1 + $0x34] sm:$0x3]
  %v93 = vld [vmem:[%s2] sm:$0x1]
  %v95 = vlaneseq
  %v96 = vshrl.u32 %v95, 7
  %v97 = vsub.s32 0, %v96
  %v98 = vrot.slane %v93, %v97
  %v164 = vunpack.c.l.b16 %v15
  %v165 = vunpack.c.l.b16 %v16
  %v166 = vunpack.c.l.b16 %v17
  %v167 = vunpack.c.l.b16 %v18
  %v168 = vunpack.c.l.b16 %v19
  %v169 = vunpack.c.l.b16 %v20
  %v170 = vunpack.c.l.b16 %v21
  %v171 = vunpack.c.l.b16 %v22
  %v172 = vunpack.c.l.b16 %v23
  %v173 = vunpack.c.l.b16 %v24
  %v174 = vunpack.c.l.b16 %v25
  %v175 = vunpack.c.l.b16 %v26
  %v176 = vunpack.c.l.b16 %v27
  %v177 = vunpack.c.l.b16 %v28
  %v178 = vunpack.c.l.b16 %v29
  %v179 = vunpack.c.l.b16 %v30
  %v180 = vunpack.c.l.b16 %v31
  %v181 = vunpack.c.l.b16 %v32
  %v182 = vunpack.c.l.b16 %v33
  %v183 = vunpack.c.l.b16 %v34
  %v184 = vunpack.c.l.b16 %v35
  %v185 = vunpack.c.l.b16 %v36
  %v186 = vunpack.c.l.b16 %v37
  %v187 = vunpack.c.l.b16 %v38
  %v188 = vunpack.c.l.b16 %v39
  %v189 = vunpack.c.l.b16 %v40
  %v190 = vunpack.c.l.b16 %v41
  %v191 = vunpack.c.l.b16 %v42
  %v192 = vunpack.c.l.b16 %v43
  %v193 = vunpack.c.l.b16 %v44
  %v194 = vunpack.c.l.b16 %v45
  %v195 = vunpack.c.l.b16 %v46
  %v196 = vunpack.c.l.b16 %v47
  %v197 = vunpack.c.l.b16 %v48
  %v198 = vunpack.c.l.b16 %v49
  %v199 = vunpack.c.l.b16 %v50
  %v200 = vunpack.c.l.b16 %v51
  %v201 = vunpack.c.l.b16 %v52
  %v202 = vunpack.c.l.b16 %v53
  %v203 = vunpack.c.l.b16 %v54
  %v204 = vunpack.c.l.b16 %v55
  %v205 = vunpack.c.l.b16 %v56
  %v206 = vunpack.c.l.b16 %v57
  %v207 = vunpack.c.l.b16 %v58
  %v208 = vunpack.c.l.b16 %v59
  %v209 = vunpack.c.l.b16 %v60
  %v210 = vunpack.c.l.b16 %v61
  %v211 = vunpack.c.l.b16 %v62
  %v212 = vunpack.c.l.b16 %v63
  %v213 = vunpack.c.l.b16 %v64
  %v214 = vunpack.c.l.b16 %v65
  %v215 = vunpack.c.l.b16 %v66
  %v216 = vunpack.c.l.b16 %v67
  %v217 = vunpack.c.l.b16 %v68
  %v218 = vunpack.c.l.b16 %v69
  %v219 = vunpack.c.l.b16 %v70
  %v220 = vunpack.c.l.b16 %v71
  %v221 = vunpack.c.l.b16 %v72
  %v222 = vunpack.c.l.b16 %v73
  %v223 = vunpack.c.l.b16 %v74
  %v224 = vunpack.c.l.b16 %v75
  %v225 = vunpack.c.l.b16 %v76
  %v226 = vunpack.c.l.b16 %v77
  %v227 = vunpack.c.l.b16 %v78
  %v228 = vpack.c.b16 %v165, %v164
  %v229 = vpack.c.b16 %v167, %v166
  %v230 = vpack.c.b16 %v169, %v168
  %v231 = vpack.c.b16 %v171, %v170
  %v232 = vpack.c.b16 %v173, %v172
  %v233 = vpack.c.b16 %v175, %v174
  %v234 = vpack.c.b16 %v177, %v176
  %v235 = vpack.c.b16 %v179, %v178
  %v236 = vpack.c.b16 %v181, %v180
  %v237 = vpack.c.b16 %v183, %v182
  %v238 = vpack.c.b16 %v185, %v184
  %v239 = vpack.c.b16 %v187, %v186
  %v240 = vpack.c.b16 %v189, %v188
  %v241 = vpack.c.b16 %v191, %v190
  %v242 = vpack.c.b16 %v193, %v192
  %v243 = vpack.c.b16 %v195, %v194
  %v244 = vpack.c.b16 %v197, %v196
  %v245 = vpack.c.b16 %v199, %v198
  %v246 = vpack.c.b16 %v201, %v200
  %v247 = vpack.c.b16 %v203, %v202
  %v248 = vpack.c.b16 %v205, %v204
  %v249 = vpack.c.b16 %v207, %v206
  %v250 = vpack.c.b16 %v209, %v208
  %v251 = vpack.c.b16 %v211, %v210
  %v252 = vpack.c.b16 %v213, %v212
  %v253 = vpack.c.b16 %v215, %v214
  %v254 = vpack.c.b16 %v217, %v216
  %v255 = vpack.c.b16 %v219, %v218
  %v256 = vpack.c.b16 %v221, %v220
  %v257 = vpack.c.b16 %v223, %v222
  %v258 = vpack.c.b16 %v225, %v224
  %v259 = vpack.c.b16 %v227, %v226
  %v274 = vunpack.c.l.b16 %v79
  %v275 = vunpack.c.l.b16 %v80
  %v276 = vunpack.c.l.b16 %v81
  %v277 = vunpack.c.l.b16 %v82
  %v278 = vunpack.c.l.b16 %v83
  %v279 = vunpack.c.l.b16 %v84
  %v280 = vunpack.c.l.b16 %v85
  %v281 = vunpack.c.l.b16 %v86
  %v282 = vunpack.c.l.b16 %v87
  %v283 = vunpack.c.l.b16 %v88
  %v284 = vunpack.c.l.b16 %v89
  %v285 = vunpack.c.l.b16 %v90
  %v286 = vunpack.c.l.b16 %v91
  %v287 = vunpack.c.l.b16 %v92
  %v288 = vpack.c.b16 %v275, %v274
  %v289 = vpack.c.b16 %v277, %v276
  %v290 = vpack.c.b16 %v279, %v278
  %v291 = vpack.c.b16 %v281, %v280
  %v292 = vpack.c.b16 %v283, %v282
  %v293 = vpack.c.b16 %v285, %v284
  %v294 = vpack.c.b16 %v287, %v286
  %vm301 = vcmask 883712
  %v303 = vsel %vm301, %v228, 0
  %v306 = vsel %vm301, %v229, 0
  %v309 = vsel %vm301, %v230, 0
  %v312 = vsel %vm301, %v231, 0
  %v315 = vsel %vm301, %v232, 0
  %v318 = vsel %vm301, %v233, 0
  %v321 = vsel %vm301, %v234, 0
  %v324 = vsel %vm301, %v235, 0
  %v327 = vsel %vm301, %v236, 0
  %v330 = vsel %vm301, %v237, 0
  %v333 = vsel %vm301, %v238, 0
  %v336 = vsel %vm301, %v239, 0
  %v339 = vsel %vm301, %v240, 0
  %v342 = vsel %vm301, %v241, 0
  %v345 = vsel %vm301, %v242, 0
  %v348 = vsel %vm301, %v243, 0
  %v351 = vsel %vm301, %v244, 0
  %v354 = vsel %vm301, %v245, 0
  %v357 = vsel %vm301, %v246, 0
  %v360 = vsel %vm301, %v247, 0
  %v363 = vsel %vm301, %v248, 0
  %v366 = vsel %vm301, %v249, 0
  %v369 = vsel %vm301, %v250, 0
  %v372 = vsel %vm301, %v251, 0
  %v375 = vsel %vm301, %v252, 0
  %v378 = vsel %vm301, %v253, 0
  %v381 = vsel %vm301, %v254, 0
  %v384 = vsel %vm301, %v255, 0
  %v387 = vsel %vm301, %v256, 0
  %v390 = vsel %vm301, %v257, 0
  %v393 = vsel %vm301, %v258, 0
  %v396 = vsel %vm301, %v259, 0
  %vm398 = vcmask 1045504
  %v400 = vsel %vm398, %v294, 0
  %402 = vmatprep.subr.bf16.mxu0 0
  %403 = vmatpush1.bf16.msra.mxu0 0
  %404 = vmatprep.subr.bf16.mxu0 0
  %405 = vmatpush1.bf16.msra.mxu0 %v400
  %406 = vmatprep.subr.bf16.mxu0 0
  %407 = vmatpush1.bf16.msra.mxu0 %v293
  %408 = vmatprep.subr.bf16.mxu0 0
  %409 = vmatpush1.bf16.msra.mxu0 %v292
  %410 = vmatprep.subr.bf16.mxu0 0
  %411 = vmatpush1.bf16.msra.mxu0 %v291
  %412 = vmatprep.subr.bf16.mxu0 0
  %413 = vmatpush1.bf16.msra.mxu0 %v290
  %414 = vmatprep.subr.bf16.mxu0 0
  %415 = vmatpush1.bf16.msra.mxu0 %v289
  %416 = vmatprep.subr.bf16.mxu0 0
  %417 = vmatpush1.bf16.msra.mxu0 %v288
  %418 = vmatprep.subr.bf16.mxu0 0
  %419 = vmatpush2.bf16.msra.mxu0 0
  %420 = vmatprep.subr.bf16.mxu0 0
  %421 = vmatpush2.bf16.msra.mxu0 0
  %422 = vmatprep.subr.bf16.mxu0 0
  %423 = vmatpush2.bf16.msra.mxu0 0
  %424 = vmatprep.subr.bf16.mxu0 0
  %425 = vmatpush2.bf16.msra.mxu0 0
  %426 = vmatprep.subr.bf16.mxu0 0
  %427 = vmatpush2.bf16.msra.mxu0 0
  %428 = vmatprep.subr.bf16.mxu0 0
  %429 = vmatpush2.bf16.msra.mxu0 0
  %430 = vmatprep.subr.bf16.mxu0 0
  %431 = vmatpush2.bf16.msra.mxu0 0
  %432 = vmatprep.subr.bf16.mxu0 0
  %433 = vmatpush2.bf16.msra.mxu0 0
  %434 = vmatprep.mubr.bf16.mxu0 0
  %435 = vmatmul.mubr.bf16.gmra.mxu0 %v303
  %v436 = vpop.f32.mrf.mxu0
  %v437 = vadd.f32 %v98, %v436
  %v438 = vpop.f32.mrf.mxu0
  %v439 = vpop.f32.mrf.mxu0
  %v440 = vadd.f32 %v98, %v439
  %v441 = vpop.f32.mrf.mxu0
  %442 = vmatprep.mubr.bf16.mxu0 0
  %443 = vmatmul.mubr.bf16.gmra.mxu0 %v306
  %v444 = vpop.f32.mrf.mxu0
  %v445 = vadd.f32 %v98, %v444
  %v446 = vpop.f32.mrf.mxu0
  %v447 = vpop.f32.mrf.mxu0
  %v448 = vadd.f32 %v98, %v447
  %v449 = vpop.f32.mrf.mxu0
  %450 = vmatprep.mubr.bf16.mxu0 0
  %451 = vmatmul.mubr.bf16.gmra.mxu0 %v309
  %v452 = vpop.f32.mrf.mxu0
  %v453 = vadd.f32 %v98, %v452
  %v454 = vpop.f32.mrf.mxu0
  %v455 = vpop.f32.mrf.mxu0
  %v456 = vadd.f32 %v98, %v455
  %v457 = vpop.f32.mrf.mxu0
  %458 = vmatprep.mubr.bf16.mxu0 0
  %459 = vmatmul.mubr.bf16.gmra.mxu0 %v312
  %v460 = vpop.f32.mrf.mxu0
  %v461 = vadd.f32 %v98, %v460
  %v462 = vpop.f32.mrf.mxu0
  %v463 = vpop.f32.mrf.mxu0
  %v464 = vadd.f32 %v98, %v463
  %v465 = vpop.f32.mrf.mxu0
  %466 = vmatprep.mubr.bf16.mxu0 0
  %467 = vmatmul.mubr.bf16.gmra.mxu0 %v315
  %v468 = vpop.f32.mrf.mxu0
  %v469 = vadd.f32 %v98, %v468
  %v470 = vpop.f32.mrf.mxu0
  %v471 = vpop.f32.mrf.mxu0
  %v472 = vadd.f32 %v98, %v471
  %v473 = vpop.f32.mrf.mxu0
  %474 = vmatprep.mubr.bf16.mxu0 0
  %475 = vmatmul.mubr.bf16.gmra.mxu0 %v318
  %v476 = vpop.f32.mrf.mxu0
  %v477 = vadd.f32 %v98, %v476
  %v478 = vpop.f32.mrf.mxu0
  %v479 = vpop.f32.mrf.mxu0
  %v480 = vadd.f32 %v98, %v479
  %v481 = vpop.f32.mrf.mxu0
  %482 = vmatprep.mubr.bf16.mxu0 0
  %483 = vmatmul.mubr.bf16.gmra.mxu0 %v321
  %v484 = vpop.f32.mrf.mxu0
  %v485 = vadd.f32 %v98, %v484
  %v486 = vpop.f32.mrf.mxu0
  %v487 = vpop.f32.mrf.mxu0
  %v488 = vadd.f32 %v98, %v487
  %v489 = vpop.f32.mrf.mxu0
  %490 = vmatprep.mubr.bf16.mxu0 0
  %491 = vmatmul.mubr.bf16.gmra.mxu0 %v324
  %v492 = vpop.f32.mrf.mxu0
  %v493 = vadd.f32 %v98, %v492
  %v494 = vpop.f32.mrf.mxu0
  %v495 = vpop.f32.mrf.mxu0
  %v496 = vadd.f32 %v98, %v495
  %v497 = vpop.f32.mrf.mxu0
  %498 = vmatprep.mubr.bf16.mxu0 0
  %499 = vmatmul.mubr.bf16.gmra.mxu0 %v327
  %v500 = vpop.f32.mrf.mxu0
  %v501 = vadd.f32 %v98, %v500
  %v502 = vpop.f32.mrf.mxu0
  %v503 = vpop.f32.mrf.mxu0
  %v504 = vadd.f32 %v98, %v503
  %v505 = vpop.f32.mrf.mxu0
  %506 = vmatprep.mubr.bf16.mxu0 0
  %507 = vmatmul.mubr.bf16.gmra.mxu0 %v330
  %v508 = vpop.f32.mrf.mxu0
  %v509 = vadd.f32 %v98, %v508
  %v510 = vpop.f32.mrf.mxu0
  %v511 = vpop.f32.mrf.mxu0
  %v512 = vadd.f32 %v98, %v511
  %v513 = vpop.f32.mrf.mxu0
  %514 = vmatprep.mubr.bf16.mxu0 0
  %515 = vmatmul.mubr.bf16.gmra.mxu0 %v333
  %v516 = vpop.f32.mrf.mxu0
  %v517 = vadd.f32 %v98, %v516
  %v518 = vpop.f32.mrf.mxu0
  %v519 = vpop.f32.mrf.mxu0
  %v520 = vadd.f32 %v98, %v519
  %v521 = vpop.f32.mrf.mxu0
  %522 = vmatprep.mubr.bf16.mxu0 0
  %523 = vmatmul.mubr.bf16.gmra.mxu0 %v336
  %v524 = vpop.f32.mrf.mxu0
  %v525 = vadd.f32 %v98, %v524
  %v526 = vpop.f32.mrf.mxu0
  %v527 = vpop.f32.mrf.mxu0
  %v528 = vadd.f32 %v98, %v527
  %v529 = vpop.f32.mrf.mxu0
  %530 = vmatprep.mubr.bf16.mxu0 0
  %531 = vmatmul.mubr.bf16.gmra.mxu0 %v339
  %v532 = vpop.f32.mrf.mxu0
  %v533 = vadd.f32 %v98, %v532
  %v534 = vpop.f32.mrf.mxu0
  %v535 = vpop.f32.mrf.mxu0
  %v536 = vadd.f32 %v98, %v535
  %v537 = vpop.f32.mrf.mxu0
  %538 = vmatprep.mubr.bf16.mxu0 0
  %539 = vmatmul.mubr.bf16.gmra.mxu0 %v342
  %v540 = vpop.f32.mrf.mxu0
  %v541 = vadd.f32 %v98, %v540
  %v542 = vpop.f32.mrf.mxu0
  %v543 = vpop.f32.mrf.mxu0
  %v544 = vadd.f32 %v98, %v543
  %v545 = vpop.f32.mrf.mxu0
  %546 = vmatprep.mubr.bf16.mxu0 0
  %547 = vmatmul.mubr.bf16.gmra.mxu0 %v345
  %v548 = vpop.f32.mrf.mxu0
  %v549 = vadd.f32 %v98, %v548
  %v550 = vpop.f32.mrf.mxu0
  %v551 = vpop.f32.mrf.mxu0
  %v552 = vadd.f32 %v98, %v551
  %v553 = vpop.f32.mrf.mxu0
  %554 = vmatprep.mubr.bf16.mxu0 0
  %555 = vmatmul.mubr.bf16.gmra.mxu0 %v348
  %v556 = vpop.f32.mrf.mxu0
  %v557 = vadd.f32 %v98, %v556
  %v558 = vpop.f32.mrf.mxu0
  %v559 = vpop.f32.mrf.mxu0
  %v560 = vadd.f32 %v98, %v559
  %v561 = vpop.f32.mrf.mxu0
  %562 = vmatprep.mubr.bf16.mxu0 0
  %563 = vmatmul.mubr.bf16.gmra.mxu0 %v351
  %v564 = vpop.f32.mrf.mxu0
  %v565 = vadd.f32 %v98, %v564
  %v566 = vpop.f32.mrf.mxu0
  %v567 = vpop.f32.mrf.mxu0
  %v568 = vadd.f32 %v98, %v567
  %v569 = vpop.f32.mrf.mxu0
  %570 = vmatprep.mubr.bf16.mxu0 0
  %571 = vmatmul.mubr.bf16.gmra.mxu0 %v354
  %v572 = vpop.f32.mrf.mxu0
  %v573 = vadd.f32 %v98, %v572
  %v574 = vpop.f32.mrf.mxu0
  %v575 = vpop.f32.mrf.mxu0
  %v576 = vadd.f32 %v98, %v575
  %v577 = vpop.f32.mrf.mxu0
  %578 = vmatprep.mubr.bf16.mxu0 0
  %579 = vmatmul.mubr.bf16.gmra.mxu0 %v357
  %v580 = vpop.f32.mrf.mxu0
  %v581 = vadd.f32 %v98, %v580
  %v582 = vpop.f32.mrf.mxu0
  %v583 = vpop.f32.mrf.mxu0
  %v584 = vadd.f32 %v98, %v583
  %v585 = vpop.f32.mrf.mxu0
  %586 = vmatprep.mubr.bf16.mxu0 0
  %587 = vmatmul.mubr.bf16.gmra.mxu0 %v360
  %v588 = vpop.f32.mrf.mxu0
  %v589 = vadd.f32 %v98, %v588
  %v590 = vpop.f32.mrf.mxu0
  %v591 = vpop.f32.mrf.mxu0
  %v592 = vadd.f32 %v98, %v591
  %v593 = vpop.f32.mrf.mxu0
  %594 = vmatprep.mubr.bf16.mxu0 0
  %595 = vmatmul.mubr.bf16.gmra.mxu0 %v363
  %v596 = vpop.f32.mrf.mxu0
  %v597 = vadd.f32 %v98, %v596
  %v598 = vpop.f32.mrf.mxu0
  %v599 = vpop.f32.mrf.mxu0
  %v600 = vadd.f32 %v98, %v599
  %v601 = vpop.f32.mrf.mxu0
  %602 = vmatprep.mubr.bf16.mxu0 0
  %603 = vmatmul.mubr.bf16.gmra.mxu0 %v366
  %v604 = vpop.f32.mrf.mxu0
  %v605 = vadd.f32 %v98, %v604
  %v606 = vpop.f32.mrf.mxu0
  %v607 = vpop.f32.mrf.mxu0
  %v608 = vadd.f32 %v98, %v607
  %v609 = vpop.f32.mrf.mxu0
  %610 = vmatprep.mubr.bf16.mxu0 0
  %611 = vmatmul.mubr.bf16.gmra.mxu0 %v369
  %v612 = vpop.f32.mrf.mxu0
  %v613 = vadd.f32 %v98, %v612
  %v614 = vpop.f32.mrf.mxu0
  %v615 = vpop.f32.mrf.mxu0
  %v616 = vadd.f32 %v98, %v615
  %v617 = vpop.f32.mrf.mxu0
  %618 = vmatprep.mubr.bf16.mxu0 0
  %619 = vmatmul.mubr.bf16.gmra.mxu0 %v372
  %v620 = vpop.f32.mrf.mxu0
  %v621 = vadd.f32 %v98, %v620
  %v622 = vpop.f32.mrf.mxu0
  %v623 = vpop.f32.mrf.mxu0
  %v624 = vadd.f32 %v98, %v623
  %v625 = vpop.f32.mrf.mxu0
  %626 = vmatprep.mubr.bf16.mxu0 0
  %627 = vmatmul.mubr.bf16.gmra.mxu0 %v375
  %v628 = vpop.f32.mrf.mxu0
  %v629 = vadd.f32 %v98, %v628
  %v630 = vpop.f32.mrf.mxu0
  %v631 = vpop.f32.mrf.mxu0
  %v632 = vadd.f32 %v98, %v631
  %v633 = vpop.f32.mrf.mxu0
  %634 = vmatprep.mubr.bf16.mxu0 0
  %635 = vmatmul.mubr.bf16.gmra.mxu0 %v378
  %v636 = vpop.f32.mrf.mxu0
  %v637 = vadd.f32 %v98, %v636
  %v638 = vpop.f32.mrf.mxu0
  %v639 = vpop.f32.mrf.mxu0
  %v640 = vadd.f32 %v98, %v639
  %v641 = vpop.f32.mrf.mxu0
  %642 = vmatprep.mubr.bf16.mxu0 0
  %643 = vmatmul.mubr.bf16.gmra.mxu0 %v381
  %v644 = vpop.f32.mrf.mxu0
  %v645 = vadd.f32 %v98, %v644
  %v646 = vpop.f32.mrf.mxu0
  %v647 = vpop.f32.mrf.mxu0
  %v648 = vadd.f32 %v98, %v647
  %v649 = vpop.f32.mrf.mxu0
  %650 = vmatprep.mubr.bf16.mxu0 0
  %651 = vmatmul.mubr.bf16.gmra.mxu0 %v384
  %v652 = vpop.f32.mrf.mxu0
  %v653 = vadd.f32 %v98, %v652
  %v654 = vpop.f32.mrf.mxu0
  %v655 = vpop.f32.mrf.mxu0
  %v656 = vadd.f32 %v98, %v655
  %v657 = vpop.f32.mrf.mxu0
  %658 = vmatprep.mubr.bf16.mxu0 0
  %659 = vmatmul.mubr.bf16.gmra.mxu0 %v387
  %v660 = vpop.f32.mrf.mxu0
  %v661 = vadd.f32 %v98, %v660
  %v662 = vpop.f32.mrf.mxu0
  %v663 = vpop.f32.mrf.mxu0
  %v664 = vadd.f32 %v98, %v663
  %v665 = vpop.f32.mrf.mxu0
  %666 = vmatprep.mubr.bf16.mxu0 0
  %667 = vmatmul.mubr.bf16.gmra.mxu0 %v390
  %v668 = vpop.f32.mrf.mxu0
  %v669 = vadd.f32 %v98, %v668
  %v670 = vpop.f32.mrf.mxu0
  %v671 = vpop.f32.mrf.mxu0
  %v672 = vadd.f32 %v98, %v671
  %v673 = vpop.f32.mrf.mxu0
  %674 = vmatprep.mubr.bf16.mxu0 0
  %675 = vmatmul.mubr.bf16.gmra.mxu0 %v393
  %v676 = vpop.f32.mrf.mxu0
  %v677 = vadd.f32 %v98, %v676
  %v678 = vpop.f32.mrf.mxu0
  %v679 = vpop.f32.mrf.mxu0
  %v680 = vadd.f32 %v98, %v679
  %v681 = vpop.f32.mrf.mxu0
  %682 = vmatprep.mubr.bf16.mxu0 0
  %683 = vmatmul.mubr.bf16.gmra.mxu0 %v396
  %v684 = vpop.f32.mrf.mxu0
  %v685 = vadd.f32 %v98, %v684
  %v686 = vpop.f32.mrf.mxu0
  %v687 = vpop.f32.mrf.mxu0
  %v688 = vadd.f32 %v98, %v687
  %v689 = vpop.f32.mrf.mxu0
  %690 = vdwg.mxu0
  %vm691 = vcmp.ge.f32.partialorder %v437, 0.0
  %vm692 = vcmp.ge.f32.partialorder %v440, 0.0
  %vm693 = vcmp.ge.f32.partialorder %v445, 0.0
  %vm694 = vcmp.ge.f32.partialorder %v448, 0.0
  %vm695 = vcmp.ge.f32.partialorder %v453, 0.0
  %vm696 = vcmp.ge.f32.partialorder %v456, 0.0
  %vm697 = vcmp.ge.f32.partialorder %v461, 0.0
  %vm698 = vcmp.ge.f32.partialorder %v464, 0.0
  %vm699 = vcmp.ge.f32.partialorder %v469, 0.0
  %vm700 = vcmp.ge.f32.partialorder %v472, 0.0
  %vm701 = vcmp.ge.f32.partialorder %v477, 0.0
  %vm702 = vcmp.ge.f32.partialorder %v480, 0.0
  %vm703 = vcmp.ge.f32.partialorder %v485, 0.0
  %vm704 = vcmp.ge.f32.partialorder %v488, 0.0
  %vm705 = vcmp.ge.f32.partialorder %v493, 0.0
  %vm706 = vcmp.ge.f32.partialorder %v496, 0.0
  %vm707 = vcmp.ge.f32.partialorder %v501, 0.0
  %vm708 = vcmp.ge.f32.partialorder %v504, 0.0
  %vm709 = vcmp.ge.f32.partialorder %v509, 0.0
  %vm710 = vcmp.ge.f32.partialorder %v512, 0.0
  %vm711 = vcmp.ge.f32.partialorder %v517, 0.0
  %vm712 = vcmp.ge.f32.partialorder %v520, 0.0
  %vm713 = vcmp.ge.f32.partialorder %v525, 0.0
  %vm714 = vcmp.ge.f32.partialorder %v528, 0.0
  %vm715 = vcmp.ge.f32.partialorder %v533, 0.0
  %vm716 = vcmp.ge.f32.partialorder %v536, 0.0
  %vm717 = vcmp.ge.f32.partialorder %v541, 0.0
  %vm718 = vcmp.ge.f32.partialorder %v544, 0.0
  %vm719 = vcmp.ge.f32.partialorder %v549, 0.0
  %vm720 = vcmp.ge.f32.partialorder %v552, 0.0
  %vm721 = vcmp.ge.f32.partialorder %v557, 0.0
  %vm722 = vcmp.ge.f32.partialorder %v560, 0.0
  %vm723 = vcmp.ge.f32.partialorder %v565, 0.0
  %vm724 = vcmp.ge.f32.partialorder %v568, 0.0
  %vm725 = vcmp.ge.f32.partialorder %v573, 0.0
  %vm726 = vcmp.ge.f32.partialorder %v576, 0.0
  %vm727 = vcmp.ge.f32.partialorder %v581, 0.0
  %vm728 = vcmp.ge.f32.partialorder %v584, 0.0
  %vm729 = vcmp.ge.f32.partialorder %v589, 0.0
  %vm730 = vcmp.ge.f32.partialorder %v592, 0.0
  %vm731 = vcmp.ge.f32.partialorder %v597, 0.0
  %vm732 = vcmp.ge.f32.partialorder %v600, 0.0
  %vm733 = vcmp.ge.f32.partialorder %v605, 0.0
  %vm734 = vcmp.ge.f32.partialorder %v608, 0.0
  %vm735 = vcmp.ge.f32.partialorder %v613, 0.0
  %vm736 = vcmp.ge.f32.partialorder %v616, 0.0
  %vm737 = vcmp.ge.f32.partialorder %v621, 0.0
  %vm738 = vcmp.ge.f32.partialorder %v624, 0.0
  %vm739 = vcmp.ge.f32.partialorder %v629, 0.0
  %vm740 = vcmp.ge.f32.partialorder %v632, 0.0
  %vm741 = vcmp.ge.f32.partialorder %v637, 0.0
  %vm742 = vcmp.ge.f32.partialorder %v640, 0.0
  %vm743 = vcmp.ge.f32.partialorder %v645, 0.0
  %vm744 = vcmp.ge.f32.partialorder %v648, 0.0
  %vm745 = vcmp.ge.f32.partialorder %v653, 0.0
  %vm746 = vcmp.ge.f32.partialorder %v656, 0.0
  %vm747 = vcmp.ge.f32.partialorder %v661, 0.0
  %vm748 = vcmp.ge.f32.partialorder %v664, 0.0
  %vm749 = vcmp.ge.f32.partialorder %v669, 0.0
  %vm750 = vcmp.ge.f32.partialorder %v672, 0.0
  %vm751 = vcmp.ge.f32.partialorder %v677, 0.0
  %vm752 = vcmp.ge.f32.partialorder %v680, 0.0
  %vm753 = vcmp.ge.f32.partialorder %v685, 0.0
  %vm754 = vcmp.ge.f32.partialorder %v688, 0.0
  %v755 = vmul.f32 %v437, 0.01
  %v756 = vmul.f32 %v440, 0.01
  %v757 = vmul.f32 %v445, 0.01
  %v758 = vmul.f32 %v448, 0.01
  %v759 = vmul.f32 %v453, 0.01
  %v760 = vmul.f32 %v456, 0.01
  %v761 = vmul.f32 %v461, 0.01
  %v762 = vmul.f32 %v464, 0.01
  %v763 = vmul.f32 %v469, 0.01
  %v764 = vmul.f32 %v472, 0.01
  %v765 = vmul.f32 %v477, 0.01
  %v766 = vmul.f32 %v480, 0.01
  %v767 = vmul.f32 %v485, 0.01
  %v768 = vmul.f32 %v488, 0.01
  %v769 = vmul.f32 %v493, 0.01
  %v770 = vmul.f32 %v496, 0.01
  %v771 = vmul.f32 %v501, 0.01
  %v772 = vmul.f32 %v504, 0.01
  %v773 = vmul.f32 %v509, 0.01
  %v774 = vmul.f32 %v512, 0.01
  %v775 = vmul.f32 %v517, 0.01
  %v776 = vmul.f32 %v520, 0.01
  %v777 = vmul.f32 %v525, 0.01
  %v778 = vmul.f32 %v528, 0.01
  %v779 = vmul.f32 %v533, 0.01
  %v780 = vmul.f32 %v536, 0.01
  %v781 = vmul.f32 %v541, 0.01
  %v782 = vmul.f32 %v544, 0.01
  %v783 = vmul.f32 %v549, 0.01
  %v784 = vmul.f32 %v552, 0.01
  %v785 = vmul.f32 %v557, 0.01
  %v786 = vmul.f32 %v560, 0.01
  %v787 = vmul.f32 %v565, 0.01
  %v788 = vmul.f32 %v568, 0.01
  %v789 = vmul.f32 %v573, 0.01
  %v790 = vmul.f32 %v576, 0.01
  %v791 = vmul.f32 %v581, 0.01
  %v792 = vmul.f32 %v584, 0.01
  %v793 = vmul.f32 %v589, 0.01
  %v794 = vmul.f32 %v592, 0.01
  %v795 = vmul.f32 %v597, 0.01
  %v796 = vmul.f32 %v600, 0.01
  %v797 = vmul.f32 %v605, 0.01
  %v798 = vmul.f32 %v608, 0.01
  %v799 = vmul.f32 %v613, 0.01
  %v800 = vmul.f32 %v616, 0.01
  %v801 = vmul.f32 %v621, 0.01
  %v802 = vmul.f32 %v624, 0.01
  %v803 = vmul.f32 %v629, 0.01
  %v804 = vmul.f32 %v632, 0.01
  %v805 = vmul.f32 %v637, 0.01
  %v806 = vmul.f32 %v640, 0.01
  %v807 = vmul.f32 %v645, 0.01
  %v808 = vmul.f32 %v648, 0.01
  %v809 = vmul.f32 %v653, 0.01
  %v810 = vmul.f32 %v656, 0.01
  %v811 = vmul.f32 %v661, 0.01
  %v812 = vmul.f32 %v664, 0.01
  %v813 = vmul.f32 %v669, 0.01
  %v814 = vmul.f32 %v672, 0.01
  %v815 = vmul.f32 %v677, 0.01
  %v816 = vmul.f32 %v680, 0.01
  %v817 = vmul.f32 %v685, 0.01
  %v818 = vmul.f32 %v688, 0.01
  %v819 = vsel %vm691, %v437, %v755
  %v820 = vsel %vm692, %v440, %v756
  %v821 = vsel %vm693, %v445, %v757
  %v822 = vsel %vm694, %v448, %v758
  %v823 = vsel %vm695, %v453, %v759
  %v824 = vsel %vm696, %v456, %v760
  %v825 = vsel %vm697, %v461, %v761
  %v826 = vsel %vm698, %v464, %v762
  %v827 = vsel %vm699, %v469, %v763
  %v828 = vsel %vm700, %v472, %v764
  %v829 = vsel %vm701, %v477, %v765
  %v830 = vsel %vm702, %v480, %v766
  %v831 = vsel %vm703, %v485, %v767
  %v832 = vsel %vm704, %v488, %v768
  %v833 = vsel %vm705, %v493, %v769
  %v834 = vsel %vm706, %v496, %v770
  %v835 = vsel %vm707, %v501, %v771
  %v836 = vsel %vm708, %v504, %v772
  %v837 = vsel %vm709, %v509, %v773
  %v838 = vsel %vm710, %v512, %v774
  %v839 = vsel %vm711, %v517, %v775
  %v840 = vsel %vm712, %v520, %v776
  %v841 = vsel %vm713, %v525, %v777
  %v842 = vsel %vm714, %v528, %v778
  %v843 = vsel %vm715, %v533, %v779
  %v844 = vsel %vm716, %v536, %v780
  %v845 = vsel %vm717, %v541, %v781
  %v846 = vsel %vm718, %v544, %v782
  %v847 = vsel %vm719, %v549, %v783
  %v848 = vsel %vm720, %v552, %v784
  %v849 = vsel %vm721, %v557, %v785
  %v850 = vsel %vm722, %v560, %v786
  %v851 = vsel %vm723, %v565, %v787
  %v852 = vsel %vm724, %v568, %v788
  %v853 = vsel %vm725, %v573, %v789
  %v854 = vsel %vm726, %v576, %v790
  %v855 = vsel %vm727, %v581, %v791
  %v856 = vsel %vm728, %v584, %v792
  %v857 = vsel %vm729, %v589, %v793
  %v858 = vsel %vm730, %v592, %v794
  %v859 = vsel %vm731, %v597, %v795
  %v860 = vsel %vm732, %v600, %v796
  %v861 = vsel %vm733, %v605, %v797
  %v862 = vsel %vm734, %v608, %v798
  %v863 = vsel %vm735, %v613, %v799
  %v864 = vsel %vm736, %v616, %v800
  %v865 = vsel %vm737, %v621, %v801
  %v866 = vsel %vm738, %v624, %v802
  %v867 = vsel %vm739, %v629, %v803
  %v868 = vsel %vm740, %v632, %v804
  %v869 = vsel %vm741, %v637, %v805
  %v870 = vsel %vm742, %v640, %v806
  %v871 = vsel %vm743, %v645, %v807
  %v872 = vsel %vm744, %v648, %v808
  %v873 = vsel %vm745, %v653, %v809
  %v874 = vsel %vm746, %v656, %v810
  %v875 = vsel %vm747, %v661, %v811
  %v876 = vsel %vm748, %v664, %v812
  %v877 = vsel %vm749, %v669, %v813
  %v878 = vsel %vm750, %v672, %v814
  %v879 = vsel %vm751, %v677, %v815
  %v880 = vsel %vm752, %v680, %v816
  %v881 = vsel %vm753, %v685, %v817
  %v882 = vsel %vm754, %v688, %v818
  %v883 = vpack.c.bf16 %v820, %v819
  %v884 = vpack.c.bf16 %v822, %v821
  %v885 = vpack.c.bf16 %v824, %v823
  %v886 = vpack.c.bf16 %v826, %v825
  %v887 = vpack.c.bf16 %v828, %v827
  %v888 = vpack.c.bf16 %v830, %v829
  %v889 = vpack.c.bf16 %v832, %v831
  %v890 = vpack.c.bf16 %v834, %v833
  %v891 = vpack.c.bf16 %v836, %v835
  %v892 = vpack.c.bf16 %v838, %v837
  %v893 = vpack.c.bf16 %v840, %v839
  %v894 = vpack.c.bf16 %v842, %v841
  %v895 = vpack.c.bf16 %v844, %v843
  %v896 = vpack.c.bf16 %v846, %v845
  %v897 = vpack.c.bf16 %v848, %v847
  %v898 = vpack.c.bf16 %v850, %v849
  %v899 = vpack.c.bf16 %v852, %v851
  %v900 = vpack.c.bf16 %v854, %v853
  %v901 = vpack.c.bf16 %v856, %v855
  %v902 = vpack.c.bf16 %v858, %v857
  %v903 = vpack.c.bf16 %v860, %v859
  %v904 = vpack.c.bf16 %v862, %v861
  %v905 = vpack.c.bf16 %v864, %v863
  %v906 = vpack.c.bf16 %v866, %v865
  %v907 = vpack.c.bf16 %v868, %v867
  %v908 = vpack.c.bf16 %v870, %v869
  %v909 = vpack.c.bf16 %v872, %v871
  %v910 = vpack.c.bf16 %v874, %v873
  %v911 = vpack.c.bf16 %v876, %v875
  %v912 = vpack.c.bf16 %v878, %v877
  %v913 = vpack.c.bf16 %v880, %v879
  %v914 = vpack.c.bf16 %v882, %v881
  %v947 = vunpack.c.l.b16 %v883
  %v948 = vunpack.c.h.b16 %v883
  %v949 = vunpack.c.l.b16 %v884
  %v950 = vunpack.c.h.b16 %v884
  %v951 = vunpack.c.l.b16 %v885
  %v952 = vunpack.c.h.b16 %v885
  %v953 = vunpack.c.l.b16 %v886
  %v954 = vunpack.c.h.b16 %v886
  %v955 = vunpack.c.l.b16 %v887
  %v956 = vunpack.c.h.b16 %v887
  %v957 = vunpack.c.l.b16 %v888
  %v958 = vunpack.c.h.b16 %v888
  %v959 = vunpack.c.l.b16 %v889
  %v960 = vunpack.c.h.b16 %v889
  %v961 = vunpack.c.l.b16 %v890
  %v962 = vunpack.c.h.b16 %v890
  %v963 = vunpack.c.l.b16 %v891
  %v964 = vunpack.c.h.b16 %v891
  %v965 = vunpack.c.l.b16 %v892
  %v966 = vunpack.c.h.b16 %v892
  %v967 = vunpack.c.l.b16 %v893
  %v968 = vunpack.c.h.b16 %v893
  %v969 = vunpack.c.l.b16 %v894
  %v970 = vunpack.c.h.b16 %v894
  %v971 = vunpack.c.l.b16 %v895
  %v972 = vunpack.c.h.b16 %v895
  %v973 = vunpack.c.l.b16 %v896
  %v974 = vunpack.c.h.b16 %v896
  %v975 = vunpack.c.l.b16 %v897
  %v976 = vunpack.c.h.b16 %v897
  %v977 = vunpack.c.l.b16 %v898
  %v978 = vunpack.c.h.b16 %v898
  %v979 = vunpack.c.l.b16 %v899
  %v980 = vunpack.c.h.b16 %v899
  %v981 = vunpack.c.l.b16 %v900
  %v982 = vunpack.c.h.b16 %v900
  %v983 = vunpack.c.l.b16 %v901
  %v984 = vunpack.c.h.b16 %v901
  %v985 = vunpack.c.l.b16 %v902
  %v986 = vunpack.c.h.b16 %v902
  %v987 = vunpack.c.l.b16 %v903
  %v988 = vunpack.c.h.b16 %v903
  %v989 = vunpack.c.l.b16 %v904
  %v990 = vunpack.c.h.b16 %v904
  %v991 = vunpack.c.l.b16 %v905
  %v992 = vunpack.c.h.b16 %v905
  %v993 = vunpack.c.l.b16 %v906
  %v994 = vunpack.c.h.b16 %v906
  %v995 = vunpack.c.l.b16 %v907
  %v996 = vunpack.c.h.b16 %v907
  %v997 = vunpack.c.l.b16 %v908
  %v998 = vunpack.c.h.b16 %v908
  %v999 = vunpack.c.l.b16 %v909
  %v1000 = vunpack.c.h.b16 %v909
  %v1001 = vunpack.c.l.b16 %v910
  %v1002 = vunpack.c.h.b16 %v910
  %v1003 = vunpack.c.l.b16 %v911
  %v1004 = vunpack.c.h.b16 %v911
  %v1005 = vunpack.c.l.b16 %v912
  %v1006 = vunpack.c.h.b16 %v912
  %v1007 = vunpack.c.l.b16 %v913
  %v1008 = vunpack.c.h.b16 %v913
  %v1009 = vunpack.c.l.b16 %v914
  %v1010 = vunpack.c.h.b16 %v914
  %v1011 = vpack.c.b16 %v947, %v947
  %v1012 = vpack.c.b16 %v948, %v948
  %v1013 = vpack.c.b16 %v949, %v949
  %v1014 = vpack.c.b16 %v950, %v950
  %v1015 = vpack.c.b16 %v951, %v951
  %v1016 = vpack.c.b16 %v952, %v952
  %v1017 = vpack.c.b16 %v953, %v953
  %v1018 = vpack.c.b16 %v954, %v954
  %v1019 = vpack.c.b16 %v955, %v955
  %v1020 = vpack.c.b16 %v956, %v956
  %v1021 = vpack.c.b16 %v957, %v957
  %v1022 = vpack.c.b16 %v958, %v958
  %v1023 = vpack.c.b16 %v959, %v959
  %v1024 = vpack.c.b16 %v960, %v960
  %v1025 = vpack.c.b16 %v961, %v961
  %v1026 = vpack.c.b16 %v962, %v962
  %v1027 = vpack.c.b16 %v963, %v963
  %v1028 = vpack.c.b16 %v964, %v964
  %v1029 = vpack.c.b16 %v965, %v965
  %v1030 = vpack.c.b16 %v966, %v966
  %v1031 = vpack.c.b16 %v967, %v967
  %v1032 = vpack.c.b16 %v968, %v968
  %v1033 = vpack.c.b16 %v969, %v969
  %v1034 = vpack.c.b16 %v970, %v970
  %v1035 = vpack.c.b16 %v971, %v971
  %v1036 = vpack.c.b16 %v972, %v972
  %v1037 = vpack.c.b16 %v973, %v973
  %v1038 = vpack.c.b16 %v974, %v974
  %v1039 = vpack.c.b16 %v975, %v975
  %v1040 = vpack.c.b16 %v976, %v976
  %v1041 = vpack.c.b16 %v977, %v977
  %v1042 = vpack.c.b16 %v978, %v978
  %v1043 = vpack.c.b16 %v979, %v979
  %v1044 = vpack.c.b16 %v980, %v980
  %v1045 = vpack.c.b16 %v981, %v981
  %v1046 = vpack.c.b16 %v982, %v982
  %v1047 = vpack.c.b16 %v983, %v983
  %v1048 = vpack.c.b16 %v984, %v984
  %v1049 = vpack.c.b16 %v985, %v985
  %v1050 = vpack.c.b16 %v986, %v986
  %v1051 = vpack.c.b16 %v987, %v987
  %v1052 = vpack.c.b16 %v988, %v988
  %v1053 = vpack.c.b16 %v989, %v989
  %v1054 = vpack.c.b16 %v990, %v990
  %v1055 = vpack.c.b16 %v991, %v991
  %v1056 = vpack.c.b16 %v992, %v992
  %v1057 = vpack.c.b16 %v993, %v993
  %v1058 = vpack.c.b16 %v994, %v994
  %v1059 = vpack.c.b16 %v995, %v995
  %v1060 = vpack.c.b16 %v996, %v996
  %v1061 = vpack.c.b16 %v997, %v997
  %v1062 = vpack.c.b16 %v998, %v998
  %v1063 = vpack.c.b16 %v999, %v999
  %v1064 = vpack.c.b16 %v1000, %v1000
  %v1065 = vpack.c.b16 %v1001, %v1001
  %v1066 = vpack.c.b16 %v1002, %v1002
  %v1067 = vpack.c.b16 %v1003, %v1003
  %v1068 = vpack.c.b16 %v1004, %v1004
  %v1069 = vpack.c.b16 %v1005, %v1005
  %v1070 = vpack.c.b16 %v1006, %v1006
  %v1071 = vpack.c.b16 %v1007, %v1007
  %v1072 = vpack.c.b16 %v1008, %v1008
  %v1073 = vpack.c.b16 %v1009, %v1009
  %v1074 = vpack.c.b16 %v1010, %v1010
  %vm1139 = vcmask 93184
  %1140 = vst.msk [vmem:[%s3] sm:$0xf] %vm1139, %v1011
  %1141 = vst.msk [vmem:[%s3 + $0x4] sm:$0xf] %vm1139, %v1012
  %1142 = vst.msk [vmem:[%s3 + $0x8] sm:$0xf] %vm1139, %v1013
  %1143 = vst.msk [vmem:[%s3 + $0xc] sm:$0xf] %vm1139, %v1014
  %1144 = vst.msk [vmem:[%s3 + $0x10] sm:$0xf] %vm1139, %v1015
  %1145 = vst.msk [vmem:[%s3 + $0x14] sm:$0xf] %vm1139, %v1016
  %1146 = vst.msk [vmem:[%s3 + $0x18] sm:$0xf] %vm1139, %v1017
  %1147 = vst.msk [vmem:[%s3 + $0x1c] sm:$0xf] %vm1139, %v1018
  %1148 = vst.msk [vmem:[%s3 + $0x20] sm:$0xf] %vm1139, %v1019
  %1149 = vst.msk [vmem:[%s3 + $0x24] sm:$0xf] %vm1139, %v1020
  %1150 = vst.msk [vmem:[%s3 + $0x28] sm:$0xf] %vm1139, %v1021
  %1151 = vst.msk [vmem:[%s3 + $0x2c] sm:$0xf] %vm1139, %v1022
  %1152 = vst.msk [vmem:[%s3 + $0x30] sm:$0xf] %vm1139, %v1023
  %1153 = vst.msk [vmem:[%s3 + $0x34] sm:$0xf] %vm1139, %v1024
  %1154 = vst.msk [vmem:[%s3 + $0x38] sm:$0xf] %vm1139, %v1025
  %1155 = vst.msk [vmem:[%s3 + $0x3c] sm:$0xf] %vm1139, %v1026
  %1156 = vst.msk [vmem:[%s3 + $0x40] sm:$0xf] %vm1139, %v1027
  %1157 = vst.msk [vmem:[%s3 + $0x44] sm:$0xf] %vm1139, %v1028
  %1158 = vst.msk [vmem:[%s3 + $0x48] sm:$0xf] %vm1139, %v1029
  %1159 = vst.msk [vmem:[%s3 + $0x4c] sm:$0xf] %vm1139, %v1030
  %1160 = vst.msk [vmem:[%s3 + $0x50] sm:$0xf] %vm1139, %v1031
  %1161 = vst.msk [vmem:[%s3 + $0x54] sm:$0xf] %vm1139, %v1032
  %1162 = vst.msk [vmem:[%s3 + $0x58] sm:$0xf] %vm1139, %v1033
  %1163 = vst.msk [vmem:[%s3 + $0x5c] sm:$0xf] %vm1139, %v1034
  %1164 = vst.msk [vmem:[%s3 + $0x60] sm:$0xf] %vm1139, %v1035
  %1165 = vst.msk [vmem:[%s3 + $0x64] sm:$0xf] %vm1139, %v1036
  %1166 = vst.msk [vmem:[%s3 + $0x68] sm:$0xf] %vm1139, %v1037
  %1167 = vst.msk [vmem:[%s3 + $0x6c] sm:$0xf] %vm1139, %v1038
  %1168 = vst.msk [vmem:[%s3 + $0x70] sm:$0xf] %vm1139, %v1039
  %1169 = vst.msk [vmem:[%s3 + $0x74] sm:$0xf] %vm1139, %v1040
  %1170 = vst.msk [vmem:[%s3 + $0x78] sm:$0xf] %vm1139, %v1041
  %1171 = vst.msk [vmem:[%s3 + $0x7c] sm:$0xf] %vm1139, %v1042
  %1172 = vst.msk [vmem:[%s3 + $0x80] sm:$0xf] %vm1139, %v1043
  %1173 = vst.msk [vmem:[%s3 + $0x84] sm:$0xf] %vm1139, %v1044
  %1174 = vst.msk [vmem:[%s3 + $0x88] sm:$0xf] %vm1139, %v1045
  %1175 = vst.msk [vmem:[%s3 + $0x8c] sm:$0xf] %vm1139, %v1046
  %1176 = vst.msk [vmem:[%s3 + $0x90] sm:$0xf] %vm1139, %v1047
  %1177 = vst.msk [vmem:[%s3 + $0x94] sm:$0xf] %vm1139, %v1048
  %1178 = vst.msk [vmem:[%s3 + $0x98] sm:$0xf] %vm1139, %v1049
  %1179 = vst.msk [vmem:[%s3 + $0x9c] sm:$0xf] %vm1139, %v1050
  %1180 = vst.msk [vmem:[%s3 + $0xa0] sm:$0xf] %vm1139, %v1051
  %1181 = vst.msk [vmem:[%s3 + $0xa4] sm:$0xf] %vm1139, %v1052
  %1182 = vst.msk [vmem:[%s3 + $0xa8] sm:$0xf] %vm1139, %v1053
  %1183 = vst.msk [vmem:[%s3 + $0xac] sm:$0xf] %vm1139, %v1054
  %1184 = vst.msk [vmem:[%s3 + $0xb0] sm:$0xf] %vm1139, %v1055
  %1185 = vst.msk [vmem:[%s3 + $0xb4] sm:$0xf] %vm1139, %v1056
  %1186 = vst.msk [vmem:[%s3 + $0xb8] sm:$0xf] %vm1139, %v1057
  %1187 = vst.msk [vmem:[%s3 + $0xbc] sm:$0xf] %vm1139, %v1058
  %1188 = vst.msk [vmem:[%s3 + $0xc0] sm:$0xf] %vm1139, %v1059
  %1189 = vst.msk [vmem:[%s3 + $0xc4] sm:$0xf] %vm1139, %v1060
  %1190 = vst.msk [vmem:[%s3 + $0xc8] sm:$0xf] %vm1139, %v1061
  %1191 = vst.msk [vmem:[%s3 + $0xcc] sm:$0xf] %vm1139, %v1062
  %1192 = vst.msk [vmem:[%s3 + $0xd0] sm:$0xf] %vm1139, %v1063
  %1193 = vst.msk [vmem:[%s3 + $0xd4] sm:$0xf] %vm1139, %v1064
  %1194 = vst.msk [vmem:[%s3 + $0xd8] sm:$0xf] %vm1139, %v1065
  %1195 = vst.msk [vmem:[%s3 + $0xdc] sm:$0xf] %vm1139, %v1066
  %1196 = vst.msk [vmem:[%s3 + $0xe0] sm:$0xf] %vm1139, %v1067
  %1197 = vst.msk [vmem:[%s3 + $0xe4] sm:$0xf] %vm1139, %v1068
  %1198 = vst.msk [vmem:[%s3 + $0xe8] sm:$0xf] %vm1139, %v1069
  %1199 = vst.msk [vmem:[%s3 + $0xec] sm:$0xf] %vm1139, %v1070
  %1200 = vst.msk [vmem:[%s3 + $0xf0] sm:$0xf] %vm1139, %v1071
  %1201 = vst.msk [vmem:[%s3 + $0xf4] sm:$0xf] %vm1139, %v1072
  %1202 = vst.msk [vmem:[%s3 + $0xf8] sm:$0xf] %vm1139, %v1073
  %1203 = vst.msk [vmem:[%s3 + $0xfc] sm:$0xf] %vm1139, %v1074
  // Predicated region
  $region14: #{decoder_forward.27} parent=0 // pred_check
    _
  $region15: #{decoder_forward.27} parent=0 // pred_check_branch
    %1205 = sbr.rel (0) target = $region17
  $region16: #{decoder_forward.27} parent=0 // pred_region
    _
  $region17: #{decoder_forward.27} parent=0 // pred_fallthru
    _
  // Predicated region
  $region18: #{decoder_forward.27} parent=0 // pred_check
    _
  $region19: #{decoder_forward.27} parent=0 // pred_check_branch
    %1207 = sbr.rel (0) target = $region21
  $region20: #{decoder_forward.27} parent=0 // pred_region
    _
  $region21: #{decoder_forward.27} parent=0 // pred_fallthru
    _

// kernel: decoder_forward.28
$region0: #{decoder_forward.28}
  #allocation0 [shape = 'u32[]', space=smem, size = 0x4, offset = 0x4, fixed_abs, tag = 'smem constant byte address 0x4 - core index']
  #allocation1 [shape = 'u32[144,128]{1,0:T(1,128)}', space=vmem, size = 0x12000, scoped, tag = 'internal scratch']
  %s0 = inlined_call_operand.vmem [shape: bf16[512,64], index: 0, kind: input, shape index: {}]
  %s1 = inlined_call_operand.vmem [shape: bf16[64,12], index: 1, kind: input, shape index: {}]
  %s2 = inlined_call_operand.vmem [shape: f32[1,12], index: 2, kind: input, shape index: {}]
  %s3 = inlined_call_operand.vmem [shape: bf16[512,12], index: 3, kind: output, shape index: {}]
  %s4 = sld [smem:[#allocation0]]
  $region22: #{decoder_forward.28} parent=0
    _
  %s6 = ssub.s32 1, %s4
  %s7 = scalar_select 0, %s6, %s4
  // Predicated region
  $region2: #{decoder_forward.28} parent=0 // pred_check
    _
  $region3: #{decoder_forward.28} parent=0 // pred_check_branch
    %9 = sbr.rel (0) target = $region5
  $region4: #{decoder_forward.28} parent=0 // pred_region
    _
  $region5: #{decoder_forward.28} parent=0 // pred_fallthru
    _
  // Predicated region
  $region6: #{decoder_forward.28} parent=0 // pred_check
    _
  $region7: #{decoder_forward.28} parent=0 // pred_check_branch
    %11 = sbr.rel (0) target = $region9
  $region8: #{decoder_forward.28} parent=0 // pred_region
    _
  $region9: #{decoder_forward.28} parent=0 // pred_fallthru
    _
  // Predicated region
  $region10: #{decoder_forward.28} parent=0 // pred_check
    _
  $region11: #{decoder_forward.28} parent=0 // pred_check_branch
    %13 = sbr.rel (0) target = $region13
  $region12: #{decoder_forward.28} parent=0 // pred_region
    _
  $region13: #{decoder_forward.28} parent=0 // pred_fallthru
    _
  %v15 = vld [vmem:[%s0] sm:$0xf]
  %v16 = vld [vmem:[%s0 + $0x4] sm:$0xf]
  %v17 = vld [vmem:[%s0 + $0x8] sm:$0xf]
  %v18 = vld [vmem:[%s0 + $0xc] sm:$0xf]
  %v19 = vld [vmem:[%s0 + $0x10] sm:$0xf]
  %v20 = vld [vmem:[%s0 + $0x14] sm:$0xf]
  %v21 = vld [vmem:[%s0 + $0x18] sm:$0xf]
  %v22 = vld [vmem:[%s0 + $0x1c] sm:$0xf]
  %v23 = vld [vmem:[%s0 + $0x20] sm:$0xf]
  %v24 = vld [vmem:[%s0 + $0x24] sm:$0xf]
  %v25 = vld [vmem:[%s0 + $0x28] sm:$0xf]
  %v26 = vld [vmem:[%s0 + $0x2c] sm:$0xf]
  %v27 = vld [vmem:[%s0 + $0x30] sm:$0xf]
  %v28 = vld [vmem:[%s0 + $0x34] sm:$0xf]
  %v29 = vld [vmem:[%s0 + $0x38] sm:$0xf]
  %v30 = vld [vmem:[%s0 + $0x3c] sm:$0xf]
  %v31 = vld [vmem:[%s0 + $0x40] sm:$0xf]
  %v32 = vld [vmem:[%s0 + $0x44] sm:$0xf]
  %v33 = vld [vmem:[%s0 + $0x48] sm:$0xf]
  %v34 = vld [vmem:[%s0 + $0x4c] sm:$0xf]
  %v35 = vld [vmem:[%s0 + $0x50] sm:$0xf]
  %v36 = vld [vmem:[%s0 + $0x54] sm:$0xf]
  %v37 = vld [vmem:[%s0 + $0x58] sm:$0xf]
  %v38 = vld [vmem:[%s0 + $0x5c] sm:$0xf]
  %v39 = vld [vmem:[%s0 + $0x60] sm:$0xf]
  %v40 = vld [vmem:[%s0 + $0x64] sm:$0xf]
  %v41 = vld [vmem:[%s0 + $0x68] sm:$0xf]
  %v42 = vld [vmem:[%s0 + $0x6c] sm:$0xf]
  %v43 = vld [vmem:[%s0 + $0x70] sm:$0xf]
  %v44 = vld [vmem:[%s0 + $0x74] sm:$0xf]
  %v45 = vld [vmem:[%s0 + $0x78] sm:$0xf]
  %v46 = vld [vmem:[%s0 + $0x7c] sm:$0xf]
  %v47 = vld [vmem:[%s0 + $0x80] sm:$0xf]
  %v48 = vld [vmem:[%s0 + $0x84] sm:$0xf]
  %v49 = vld [vmem:[%s0 + $0x88] sm:$0xf]
  %v50 = vld [vmem:[%s0 + $0x8c] sm:$0xf]
  %v51 = vld [vmem:[%s0 + $0x90] sm:$0xf]
  %v52 = vld [vmem:[%s0 + $0x94] sm:$0xf]
  %v53 = vld [vmem:[%s0 + $0x98] sm:$0xf]
  %v54 = vld [vmem:[%s0 + $0x9c] sm:$0xf]
  %v55 = vld [vmem:[%s0 + $0xa0] sm:$0xf]
  %v56 = vld [vmem:[%s0 + $0xa4] sm:$0xf]
  %v57 = vld [vmem:[%s0 + $0xa8] sm:$0xf]
  %v58 = vld [vmem:[%s0 + $0xac] sm:$0xf]
  %v59 = vld [vmem:[%s0 + $0xb0] sm:$0xf]
  %v60 = vld [vmem:[%s0 + $0xb4] sm:$0xf]
  %v61 = vld [vmem:[%s0 + $0xb8] sm:$0xf]
  %v62 = vld [vmem:[%s0 + $0xbc] sm:$0xf]
  %v63 = vld [vmem:[%s0 + $0xc0] sm:$0xf]
  %v64 = vld [vmem:[%s0 + $0xc4] sm:$0xf]
  %v65 = vld [vmem:[%s0 + $0xc8] sm:$0xf]
  %v66 = vld [vmem:[%s0 + $0xcc] sm:$0xf]
  %v67 = vld [vmem:[%s0 + $0xd0] sm:$0xf]
  %v68 = vld [vmem:[%s0 + $0xd4] sm:$0xf]
  %v69 = vld [vmem:[%s0 + $0xd8] sm:$0xf]
  %v70 = vld [vmem:[%s0 + $0xdc] sm:$0xf]
  %v71 = vld [vmem:[%s0 + $0xe0] sm:$0xf]
  %v72 = vld [vmem:[%s0 + $0xe4] sm:$0xf]
  %v73 = vld [vmem:[%s0 + $0xe8] sm:$0xf]
  %v74 = vld [vmem:[%s0 + $0xec] sm:$0xf]
  %v75 = vld [vmem:[%s0 + $0xf0] sm:$0xf]
  %v76 = vld [vmem:[%s0 + $0xf4] sm:$0xf]
  %v77 = vld [vmem:[%s0 + $0xf8] sm:$0xf]
  %v78 = vld [vmem:[%s0 + $0xfc] sm:$0xf]
  %v79 = vld [vmem:[%s1] sm:$0xf]
  %v80 = vld [vmem:[%s1 + $0x4] sm:$0xf]
  %v81 = vld [vmem:[%s1 + $0x8] sm:$0xf]
  %v82 = vld [vmem:[%s1 + $0xc] sm:$0xf]
  %v83 = vld [vmem:[%s1 + $0x10] sm:$0xf]
  %v84 = vld [vmem:[%s1 + $0x14] sm:$0xf]
  %v85 = vld [vmem:[%s1 + $0x18] sm:$0xf]
  %v86 = vld [vmem:[%s1 + $0x1c] sm:$0xf]
  %v87 = vld [vmem:[%s2] sm:$0x1]
  %v89 = vlaneseq
  %v90 = vshrl.u32 %v89, 7
  %v91 = vsub.s32 0, %v90
  %v92 = vrot.slane %v87, %v91
  %v158 = vunpack.c.l.b16 %v15
  %v159 = vunpack.c.l.b16 %v16
  %v160 = vunpack.c.l.b16 %v17
  %v161 = vunpack.c.l.b16 %v18
  %v162 = vunpack.c.l.b16 %v19
  %v163 = vunpack.c.l.b16 %v20
  %v164 = vunpack.c.l.b16 %v21
  %v165 = vunpack.c.l.b16 %v22
  %v166 = vunpack.c.l.b16 %v23
  %v167 = vunpack.c.l.b16 %v24
  %v168 = vunpack.c.l.b16 %v25
  %v169 = vunpack.c.l.b16 %v26
  %v170 = vunpack.c.l.b16 %v27
  %v171 = vunpack.c.l.b16 %v28
  %v172 = vunpack.c.l.b16 %v29
  %v173 = vunpack.c.l.b16 %v30
  %v174 = vunpack.c.l.b16 %v31
  %v175 = vunpack.c.l.b16 %v32
  %v176 = vunpack.c.l.b16 %v33
  %v177 = vunpack.c.l.b16 %v34
  %v178 = vunpack.c.l.b16 %v35
  %v179 = vunpack.c.l.b16 %v36
  %v180 = vunpack.c.l.b16 %v37
  %v181 = vunpack.c.l.b16 %v38
  %v182 = vunpack.c.l.b16 %v39
  %v183 = vunpack.c.l.b16 %v40
  %v184 = vunpack.c.l.b16 %v41
  %v185 = vunpack.c.l.b16 %v42
  %v186 = vunpack.c.l.b16 %v43
  %v187 = vunpack.c.l.b16 %v44
  %v188 = vunpack.c.l.b16 %v45
  %v189 = vunpack.c.l.b16 %v46
  %v190 = vunpack.c.l.b16 %v47
  %v191 = vunpack.c.l.b16 %v48
  %v192 = vunpack.c.l.b16 %v49
  %v193 = vunpack.c.l.b16 %v50
  %v194 = vunpack.c.l.b16 %v51
  %v195 = vunpack.c.l.b16 %v52
  %v196 = vunpack.c.l.b16 %v53
  %v197 = vunpack.c.l.b16 %v54
  %v198 = vunpack.c.l.b16 %v55
  %v199 = vunpack.c.l.b16 %v56
  %v200 = vunpack.c.l.b16 %v57
  %v201 = vunpack.c.l.b16 %v58
  %v202 = vunpack.c.l.b16 %v59
  %v203 = vunpack.c.l.b16 %v60
  %v204 = vunpack.c.l.b16 %v61
  %v205 = vunpack.c.l.b16 %v62
  %v206 = vunpack.c.l.b16 %v63
  %v207 = vunpack.c.l.b16 %v64
  %v208 = vunpack.c.l.b16 %v65
  %v209 = vunpack.c.l.b16 %v66
  %v210 = vunpack.c.l.b16 %v67
  %v211 = vunpack.c.l.b16 %v68
  %v212 = vunpack.c.l.b16 %v69
  %v213 = vunpack.c.l.b16 %v70
  %v214 = vunpack.c.l.b16 %v71
  %v215 = vunpack.c.l.b16 %v72
  %v216 = vunpack.c.l.b16 %v73
  %v217 = vunpack.c.l.b16 %v74
  %v218 = vunpack.c.l.b16 %v75
  %v219 = vunpack.c.l.b16 %v76
  %v220 = vunpack.c.l.b16 %v77
  %v221 = vunpack.c.l.b16 %v78
  %v222 = vpack.c.b16 %v159, %v158
  %v223 = vpack.c.b16 %v161, %v160
  %v224 = vpack.c.b16 %v163, %v162
  %v225 = vpack.c.b16 %v165, %v164
  %v226 = vpack.c.b16 %v167, %v166
  %v227 = vpack.c.b16 %v169, %v168
  %v228 = vpack.c.b16 %v171, %v170
  %v229 = vpack.c.b16 %v173, %v172
  %v230 = vpack.c.b16 %v175, %v174
  %v231 = vpack.c.b16 %v177, %v176
  %v232 = vpack.c.b16 %v179, %v178
  %v233 = vpack.c.b16 %v181, %v180
  %v234 = vpack.c.b16 %v183, %v182
  %v235 = vpack.c.b16 %v185, %v184
  %v236 = vpack.c.b16 %v187, %v186
  %v237 = vpack.c.b16 %v189, %v188
  %v238 = vpack.c.b16 %v191, %v190
  %v239 = vpack.c.b16 %v193, %v192
  %v240 = vpack.c.b16 %v195, %v194
  %v241 = vpack.c.b16 %v197, %v196
  %v242 = vpack.c.b16 %v199, %v198
  %v243 = vpack.c.b16 %v201, %v200
  %v244 = vpack.c.b16 %v203, %v202
  %v245 = vpack.c.b16 %v205, %v204
  %v246 = vpack.c.b16 %v207, %v206
  %v247 = vpack.c.b16 %v209, %v208
  %v248 = vpack.c.b16 %v211, %v210
  %v249 = vpack.c.b16 %v213, %v212
  %v250 = vpack.c.b16 %v215, %v214
  %v251 = vpack.c.b16 %v217, %v216
  %v252 = vpack.c.b16 %v219, %v218
  %v253 = vpack.c.b16 %v221, %v220
  %v262 = vunpack.c.l.b16 %v79
  %v263 = vunpack.c.l.b16 %v80
  %v264 = vunpack.c.l.b16 %v81
  %v265 = vunpack.c.l.b16 %v82
  %v266 = vunpack.c.l.b16 %v83
  %v267 = vunpack.c.l.b16 %v84
  %v268 = vunpack.c.l.b16 %v85
  %v269 = vunpack.c.l.b16 %v86
  %v270 = vpack.c.b16 %v263, %v262
  %v271 = vpack.c.b16 %v265, %v264
  %v272 = vpack.c.b16 %v267, %v266
  %v273 = vpack.c.b16 %v269, %v268
  %vm278 = vcmask 523264
  %v280 = vsel %vm278, %v222, 0
  %v283 = vsel %vm278, %v223, 0
  %v286 = vsel %vm278, %v224, 0
  %v289 = vsel %vm278, %v225, 0
  %v292 = vsel %vm278, %v226, 0
  %v295 = vsel %vm278, %v227, 0
  %v298 = vsel %vm278, %v228, 0
  %v301 = vsel %vm278, %v229, 0
  %v304 = vsel %vm278, %v230, 0
  %v307 = vsel %vm278, %v231, 0
  %v310 = vsel %vm278, %v232, 0
  %v313 = vsel %vm278, %v233, 0
  %v316 = vsel %vm278, %v234, 0
  %v319 = vsel %vm278, %v235, 0
  %v322 = vsel %vm278, %v236, 0
  %v325 = vsel %vm278, %v237, 0
  %v328 = vsel %vm278, %v238, 0
  %v331 = vsel %vm278, %v239, 0
  %v334 = vsel %vm278, %v240, 0
  %v337 = vsel %vm278, %v241, 0
  %v340 = vsel %vm278, %v242, 0
  %v343 = vsel %vm278, %v243, 0
  %v346 = vsel %vm278, %v244, 0
  %v349 = vsel %vm278, %v245, 0
  %v352 = vsel %vm278, %v246, 0
  %v355 = vsel %vm278, %v247, 0
  %v358 = vsel %vm278, %v248, 0
  %v361 = vsel %vm278, %v249, 0
  %v364 = vsel %vm278, %v250, 0
  %v367 = vsel %vm278, %v251, 0
  %v370 = vsel %vm278, %v252, 0
  %v373 = vsel %vm278, %v253, 0
  %375 = vmatprep.subr.bf16.mxu0 0
  %376 = vmatpush1.bf16.msra.mxu0 0
  %377 = vmatprep.subr.bf16.mxu0 0
  %378 = vmatpush1.bf16.msra.mxu0 0
  %379 = vmatprep.subr.bf16.mxu0 0
  %380 = vmatpush1.bf16.msra.mxu0 0
  %381 = vmatprep.subr.bf16.mxu0 0
  %382 = vmatpush1.bf16.msra.mxu0 0
  %383 = vmatprep.subr.bf16.mxu0 0
  %384 = vmatpush1.bf16.msra.mxu0 %v273
  %385 = vmatprep.subr.bf16.mxu0 0
  %386 = vmatpush1.bf16.msra.mxu0 %v272
  %387 = vmatprep.subr.bf16.mxu0 0
  %388 = vmatpush1.bf16.msra.mxu0 %v271
  %389 = vmatprep.subr.bf16.mxu0 0
  %390 = vmatpush1.bf16.msra.mxu0 %v270
  %391 = vmatprep.subr.bf16.mxu0 0
  %392 = vmatpush2.bf16.msra.mxu0 0
  %393 = vmatprep.subr.bf16.mxu0 0
  %394 = vmatpush2.bf16.msra.mxu0 0
  %395 = vmatprep.subr.bf16.mxu0 0
  %396 = vmatpush2.bf16.msra.mxu0 0
  %397 = vmatprep.subr.bf16.mxu0 0
  %398 = vmatpush2.bf16.msra.mxu0 0
  %399 = vmatprep.subr.bf16.mxu0 0
  %400 = vmatpush2.bf16.msra.mxu0 0
  %401 = vmatprep.subr.bf16.mxu0 0
  %402 = vmatpush2.bf16.msra.mxu0 0
  %403 = vmatprep.subr.bf16.mxu0 0
  %404 = vmatpush2.bf16.msra.mxu0 0
  %405 = vmatprep.subr.bf16.mxu0 0
  %406 = vmatpush2.bf16.msra.mxu0 0
  %407 = vmatprep.mubr.bf16.mxu0 0
  %408 = vmatmul.mubr.bf16.gmra.mxu0 %v280
  %v409 = vpop.f32.mrf.mxu0
  %v410 = vadd.f32 %v92, %v409
  %v411 = vpop.f32.mrf.mxu0
  %v412 = vpop.f32.mrf.mxu0
  %v413 = vadd.f32 %v92, %v412
  %v414 = vpop.f32.mrf.mxu0
  %415 = vmatprep.mubr.bf16.mxu0 0
  %416 = vmatmul.mubr.bf16.gmra.mxu0 %v283
  %v417 = vpop.f32.mrf.mxu0
  %v418 = vadd.f32 %v92, %v417
  %v419 = vpop.f32.mrf.mxu0
  %v420 = vpop.f32.mrf.mxu0
  %v421 = vadd.f32 %v92, %v420
  %v422 = vpop.f32.mrf.mxu0
  %423 = vmatprep.mubr.bf16.mxu0 0
  %424 = vmatmul.mubr.bf16.gmra.mxu0 %v286
  %v425 = vpop.f32.mrf.mxu0
  %v426 = vadd.f32 %v92, %v425
  %v427 = vpop.f32.mrf.mxu0
  %v428 = vpop.f32.mrf.mxu0
  %v429 = vadd.f32 %v92, %v428
  %v430 = vpop.f32.mrf.mxu0
  %431 = vmatprep.mubr.bf16.mxu0 0
  %432 = vmatmul.mubr.bf16.gmra.mxu0 %v289
  %v433 = vpop.f32.mrf.mxu0
  %v434 = vadd.f32 %v92, %v433
  %v435 = vpop.f32.mrf.mxu0
  %v436 = vpop.f32.mrf.mxu0
  %v437 = vadd.f32 %v92, %v436
  %v438 = vpop.f32.mrf.mxu0
  %439 = vmatprep.mubr.bf16.mxu0 0
  %440 = vmatmul.mubr.bf16.gmra.mxu0 %v292
  %v441 = vpop.f32.mrf.mxu0
  %v442 = vadd.f32 %v92, %v441
  %v443 = vpop.f32.mrf.mxu0
  %v444 = vpop.f32.mrf.mxu0
  %v445 = vadd.f32 %v92, %v444
  %v446 = vpop.f32.mrf.mxu0
  %447 = vmatprep.mubr.bf16.mxu0 0
  %448 = vmatmul.mubr.bf16.gmra.mxu0 %v295
  %v449 = vpop.f32.mrf.mxu0
  %v450 = vadd.f32 %v92, %v449
  %v451 = vpop.f32.mrf.mxu0
  %v452 = vpop.f32.mrf.mxu0
  %v453 = vadd.f32 %v92, %v452
  %v454 = vpop.f32.mrf.mxu0
  %455 = vmatprep.mubr.bf16.mxu0 0
  %456 = vmatmul.mubr.bf16.gmra.mxu0 %v298
  %v457 = vpop.f32.mrf.mxu0
  %v458 = vadd.f32 %v92, %v457
  %v459 = vpop.f32.mrf.mxu0
  %v460 = vpop.f32.mrf.mxu0
  %v461 = vadd.f32 %v92, %v460
  %v462 = vpop.f32.mrf.mxu0
  %463 = vmatprep.mubr.bf16.mxu0 0
  %464 = vmatmul.mubr.bf16.gmra.mxu0 %v301
  %v465 = vpop.f32.mrf.mxu0
  %v466 = vadd.f32 %v92, %v465
  %v467 = vpop.f32.mrf.mxu0
  %v468 = vpop.f32.mrf.mxu0
  %v469 = vadd.f32 %v92, %v468
  %v470 = vpop.f32.mrf.mxu0
  %471 = vmatprep.mubr.bf16.mxu0 0
  %472 = vmatmul.mubr.bf16.gmra.mxu0 %v304
  %v473 = vpop.f32.mrf.mxu0
  %v474 = vadd.f32 %v92, %v473
  %v475 = vpop.f32.mrf.mxu0
  %v476 = vpop.f32.mrf.mxu0
  %v477 = vadd.f32 %v92, %v476
  %v478 = vpop.f32.mrf.mxu0
  %479 = vmatprep.mubr.bf16.mxu0 0
  %480 = vmatmul.mubr.bf16.gmra.mxu0 %v307
  %v481 = vpop.f32.mrf.mxu0
  %v482 = vadd.f32 %v92, %v481
  %v483 = vpop.f32.mrf.mxu0
  %v484 = vpop.f32.mrf.mxu0
  %v485 = vadd.f32 %v92, %v484
  %v486 = vpop.f32.mrf.mxu0
  %487 = vmatprep.mubr.bf16.mxu0 0
  %488 = vmatmul.mubr.bf16.gmra.mxu0 %v310
  %v489 = vpop.f32.mrf.mxu0
  %v490 = vadd.f32 %v92, %v489
  %v491 = vpop.f32.mrf.mxu0
  %v492 = vpop.f32.mrf.mxu0
  %v493 = vadd.f32 %v92, %v492
  %v494 = vpop.f32.mrf.mxu0
  %495 = vmatprep.mubr.bf16.mxu0 0
  %496 = vmatmul.mubr.bf16.gmra.mxu0 %v313
  %v497 = vpop.f32.mrf.mxu0
  %v498 = vadd.f32 %v92, %v497
  %v499 = vpop.f32.mrf.mxu0
  %v500 = vpop.f32.mrf.mxu0
  %v501 = vadd.f32 %v92, %v500
  %v502 = vpop.f32.mrf.mxu0
  %503 = vmatprep.mubr.bf16.mxu0 0
  %504 = vmatmul.mubr.bf16.gmra.mxu0 %v316
  %v505 = vpop.f32.mrf.mxu0
  %v506 = vadd.f32 %v92, %v505
  %v507 = vpop.f32.mrf.mxu0
  %v508 = vpop.f32.mrf.mxu0
  %v509 = vadd.f32 %v92, %v508
  %v510 = vpop.f32.mrf.mxu0
  %511 = vmatprep.mubr.bf16.mxu0 0
  %512 = vmatmul.mubr.bf16.gmra.mxu0 %v319
  %v513 = vpop.f32.mrf.mxu0
  %v514 = vadd.f32 %v92, %v513
  %v515 = vpop.f32.mrf.mxu0
  %v516 = vpop.f32.mrf.mxu0
  %v517 = vadd.f32 %v92, %v516
  %v518 = vpop.f32.mrf.mxu0
  %519 = vmatprep.mubr.bf16.mxu0 0
  %520 = vmatmul.mubr.bf16.gmra.mxu0 %v322
  %v521 = vpop.f32.mrf.mxu0
  %v522 = vadd.f32 %v92, %v521
  %v523 = vpop.f32.mrf.mxu0
  %v524 = vpop.f32.mrf.mxu0
  %v525 = vadd.f32 %v92, %v524
  %v526 = vpop.f32.mrf.mxu0
  %527 = vmatprep.mubr.bf16.mxu0 0
  %528 = vmatmul.mubr.bf16.gmra.mxu0 %v325
  %v529 = vpop.f32.mrf.mxu0
  %v530 = vadd.f32 %v92, %v529
  %v531 = vpop.f32.mrf.mxu0
  %v532 = vpop.f32.mrf.mxu0
  %v533 = vadd.f32 %v92, %v532
  %v534 = vpop.f32.mrf.mxu0
  %535 = vmatprep.mubr.bf16.mxu0 0
  %536 = vmatmul.mubr.bf16.gmra.mxu0 %v328
  %v537 = vpop.f32.mrf.mxu0
  %v538 = vadd.f32 %v92, %v537
  %v539 = vpop.f32.mrf.mxu0
  %v540 = vpop.f32.mrf.mxu0
  %v541 = vadd.f32 %v92, %v540
  %v542 = vpop.f32.mrf.mxu0
  %543 = vmatprep.mubr.bf16.mxu0 0
  %544 = vmatmul.mubr.bf16.gmra.mxu0 %v331
  %v545 = vpop.f32.mrf.mxu0
  %v546 = vadd.f32 %v92, %v545
  %v547 = vpop.f32.mrf.mxu0
  %v548 = vpop.f32.mrf.mxu0
  %v549 = vadd.f32 %v92, %v548
  %v550 = vpop.f32.mrf.mxu0
  %551 = vmatprep.mubr.bf16.mxu0 0
  %552 = vmatmul.mubr.bf16.gmra.mxu0 %v334
  %v553 = vpop.f32.mrf.mxu0
  %v554 = vadd.f32 %v92, %v553
  %v555 = vpop.f32.mrf.mxu0
  %v556 = vpop.f32.mrf.mxu0
  %v557 = vadd.f32 %v92, %v556
  %v558 = vpop.f32.mrf.mxu0
  %559 = vmatprep.mubr.bf16.mxu0 0
  %560 = vmatmul.mubr.bf16.gmra.mxu0 %v337
  %v561 = vpop.f32.mrf.mxu0
  %v562 = vadd.f32 %v92, %v561
  %v563 = vpop.f32.mrf.mxu0
  %v564 = vpop.f32.mrf.mxu0
  %v565 = vadd.f32 %v92, %v564
  %v566 = vpop.f32.mrf.mxu0
  %567 = vmatprep.mubr.bf16.mxu0 0
  %568 = vmatmul.mubr.bf16.gmra.mxu0 %v340
  %v569 = vpop.f32.mrf.mxu0
  %v570 = vadd.f32 %v92, %v569
  %v571 = vpop.f32.mrf.mxu0
  %v572 = vpop.f32.mrf.mxu0
  %v573 = vadd.f32 %v92, %v572
  %v574 = vpop.f32.mrf.mxu0
  %575 = vmatprep.mubr.bf16.mxu0 0
  %576 = vmatmul.mubr.bf16.gmra.mxu0 %v343
  %v577 = vpop.f32.mrf.mxu0
  %v578 = vadd.f32 %v92, %v577
  %v579 = vpop.f32.mrf.mxu0
  %v580 = vpop.f32.mrf.mxu0
  %v581 = vadd.f32 %v92, %v580
  %v582 = vpop.f32.mrf.mxu0
  %583 = vmatprep.mubr.bf16.mxu0 0
  %584 = vmatmul.mubr.bf16.gmra.mxu0 %v346
  %v585 = vpop.f32.mrf.mxu0
  %v586 = vadd.f32 %v92, %v585
  %v587 = vpop.f32.mrf.mxu0
  %v588 = vpop.f32.mrf.mxu0
  %v589 = vadd.f32 %v92, %v588
  %v590 = vpop.f32.mrf.mxu0
  %591 = vmatprep.mubr.bf16.mxu0 0
  %592 = vmatmul.mubr.bf16.gmra.mxu0 %v349
  %v593 = vpop.f32.mrf.mxu0
  %v594 = vadd.f32 %v92, %v593
  %v595 = vpop.f32.mrf.mxu0
  %v596 = vpop.f32.mrf.mxu0
  %v597 = vadd.f32 %v92, %v596
  %v598 = vpop.f32.mrf.mxu0
  %599 = vmatprep.mubr.bf16.mxu0 0
  %600 = vmatmul.mubr.bf16.gmra.mxu0 %v352
  %v601 = vpop.f32.mrf.mxu0
  %v602 = vadd.f32 %v92, %v601
  %v603 = vpop.f32.mrf.mxu0
  %v604 = vpop.f32.mrf.mxu0
  %v605 = vadd.f32 %v92, %v604
  %v606 = vpop.f32.mrf.mxu0
  %607 = vmatprep.mubr.bf16.mxu0 0
  %608 = vmatmul.mubr.bf16.gmra.mxu0 %v355
  %v609 = vpop.f32.mrf.mxu0
  %v610 = vadd.f32 %v92, %v609
  %v611 = vpop.f32.mrf.mxu0
  %v612 = vpop.f32.mrf.mxu0
  %v613 = vadd.f32 %v92, %v612
  %v614 = vpop.f32.mrf.mxu0
  %615 = vmatprep.mubr.bf16.mxu0 0
  %616 = vmatmul.mubr.bf16.gmra.mxu0 %v358
  %v617 = vpop.f32.mrf.mxu0
  %v618 = vadd.f32 %v92, %v617
  %v619 = vpop.f32.mrf.mxu0
  %v620 = vpop.f32.mrf.mxu0
  %v621 = vadd.f32 %v92, %v620
  %v622 = vpop.f32.mrf.mxu0
  %623 = vmatprep.mubr.bf16.mxu0 0
  %624 = vmatmul.mubr.bf16.gmra.mxu0 %v361
  %v625 = vpop.f32.mrf.mxu0
  %v626 = vadd.f32 %v92, %v625
  %v627 = vpop.f32.mrf.mxu0
  %v628 = vpop.f32.mrf.mxu0
  %v629 = vadd.f32 %v92, %v628
  %v630 = vpop.f32.mrf.mxu0
  %631 = vmatprep.mubr.bf16.mxu0 0
  %632 = vmatmul.mubr.bf16.gmra.mxu0 %v364
  %v633 = vpop.f32.mrf.mxu0
  %v634 = vadd.f32 %v92, %v633
  %v635 = vpop.f32.mrf.mxu0
  %v636 = vpop.f32.mrf.mxu0
  %v637 = vadd.f32 %v92, %v636
  %v638 = vpop.f32.mrf.mxu0
  %639 = vmatprep.mubr.bf16.mxu0 0
  %640 = vmatmul.mubr.bf16.gmra.mxu0 %v367
  %v641 = vpop.f32.mrf.mxu0
  %v642 = vadd.f32 %v92, %v641
  %v643 = vpop.f32.mrf.mxu0
  %v644 = vpop.f32.mrf.mxu0
  %v645 = vadd.f32 %v92, %v644
  %v646 = vpop.f32.mrf.mxu0
  %647 = vmatprep.mubr.bf16.mxu0 0
  %648 = vmatmul.mubr.bf16.gmra.mxu0 %v370
  %v649 = vpop.f32.mrf.mxu0
  %v650 = vadd.f32 %v92, %v649
  %v651 = vpop.f32.mrf.mxu0
  %v652 = vpop.f32.mrf.mxu0
  %v653 = vadd.f32 %v92, %v652
  %v654 = vpop.f32.mrf.mxu0
  %655 = vmatprep.mubr.bf16.mxu0 0
  %656 = vmatmul.mubr.bf16.gmra.mxu0 %v373
  %v657 = vpop.f32.mrf.mxu0
  %v658 = vadd.f32 %v92, %v657
  %v659 = vpop.f32.mrf.mxu0
  %v660 = vpop.f32.mrf.mxu0
  %v661 = vadd.f32 %v92, %v660
  %v662 = vpop.f32.mrf.mxu0
  %663 = vdwg.mxu0
  %v664 = vpack.c.bf16 %v413, %v410
  %v665 = vpack.c.bf16 %v421, %v418
  %v666 = vpack.c.bf16 %v429, %v426
  %v667 = vpack.c.bf16 %v437, %v434
  %v668 = vpack.c.bf16 %v445, %v442
  %v669 = vpack.c.bf16 %v453, %v450
  %v670 = vpack.c.bf16 %v461, %v458
  %v671 = vpack.c.bf16 %v469, %v466
  %v672 = vpack.c.bf16 %v477, %v474
  %v673 = vpack.c.bf16 %v485, %v482
  %v674 = vpack.c.bf16 %v493, %v490
  %v675 = vpack.c.bf16 %v501, %v498
  %v676 = vpack.c.bf16 %v509, %v506
  %v677 = vpack.c.bf16 %v517, %v514
  %v678 = vpack.c.bf16 %v525, %v522
  %v679 = vpack.c.bf16 %v533, %v530
  %v680 = vpack.c.bf16 %v541, %v538
  %v681 = vpack.c.bf16 %v549, %v546
  %v682 = vpack.c.bf16 %v557, %v554
  %v683 = vpack.c.bf16 %v565, %v562
  %v684 = vpack.c.bf16 %v573, %v570
  %v685 = vpack.c.bf16 %v581, %v578
  %v686 = vpack.c.bf16 %v589, %v586
  %v687 = vpack.c.bf16 %v597, %v594
  %v688 = vpack.c.bf16 %v605, %v602
  %v689 = vpack.c.bf16 %v613, %v610
  %v690 = vpack.c.bf16 %v621, %v618
  %v691 = vpack.c.bf16 %v629, %v626
  %v692 = vpack.c.bf16 %v637, %v634
  %v693 = vpack.c.bf16 %v645, %v642
  %v694 = vpack.c.bf16 %v653, %v650
  %v695 = vpack.c.bf16 %v661, %v658
  %v728 = vunpack.c.l.b16 %v664
  %v729 = vunpack.c.h.b16 %v664
  %v730 = vunpack.c.l.b16 %v665
  %v731 = vunpack.c.h.b16 %v665
  %v732 = vunpack.c.l.b16 %v666
  %v733 = vunpack.c.h.b16 %v666
  %v734 = vunpack.c.l.b16 %v667
  %v735 = vunpack.c.h.b16 %v667
  %v736 = vunpack.c.l.b16 %v668
  %v737 = vunpack.c.h.b16 %v668
  %v738 = vunpack.c.l.b16 %v669
  %v739 = vunpack.c.h.b16 %v669
  %v740 = vunpack.c.l.b16 %v670
  %v741 = vunpack.c.h.b16 %v670
  %v742 = vunpack.c.l.b16 %v671
  %v743 = vunpack.c.h.b16 %v671
  %v744 = vunpack.c.l.b16 %v672
  %v745 = vunpack.c.h.b16 %v672
  %v746 = vunpack.c.l.b16 %v673
  %v747 = vunpack.c.h.b16 %v673
  %v748 = vunpack.c.l.b16 %v674
  %v749 = vunpack.c.h.b16 %v674
  %v750 = vunpack.c.l.b16 %v675
  %v751 = vunpack.c.h.b16 %v675
  %v752 = vunpack.c.l.b16 %v676
  %v753 = vunpack.c.h.b16 %v676
  %v754 = vunpack.c.l.b16 %v677
  %v755 = vunpack.c.h.b16 %v677
  %v756 = vunpack.c.l.b16 %v678
  %v757 = vunpack.c.h.b16 %v678
  %v758 = vunpack.c.l.b16 %v679
  %v759 = vunpack.c.h.b16 %v679
  %v760 = vunpack.c.l.b16 %v680
  %v761 = vunpack.c.h.b16 %v680
  %v762 = vunpack.c.l.b16 %v681
  %v763 = vunpack.c.h.b16 %v681
  %v764 = vunpack.c.l.b16 %v682
  %v765 = vunpack.c.h.b16 %v682
  %v766 = vunpack.c.l.b16 %v683
  %v767 = vunpack.c.h.b16 %v683
  %v768 = vunpack.c.l.b16 %v684
  %v769 = vunpack.c.h.b16 %v684
  %v770 = vunpack.c.l.b16 %v685
  %v771 = vunpack.c.h.b16 %v685
  %v772 = vunpack.c.l.b16 %v686
  %v773 = vunpack.c.h.b16 %v686
  %v774 = vunpack.c.l.b16 %v687
  %v775 = vunpack.c.h.b16 %v687
  %v776 = vunpack.c.l.b16 %v688
  %v777 = vunpack.c.h.b16 %v688
  %v778 = vunpack.c.l.b16 %v689
  %v779 = vunpack.c.h.b16 %v689
  %v780 = vunpack.c.l.b16 %v690
  %v781 = vunpack.c.h.b16 %v690
  %v782 = vunpack.c.l.b16 %v691
  %v783 = vunpack.c.h.b16 %v691
  %v784 = vunpack.c.l.b16 %v692
  %v785 = vunpack.c.h.b16 %v692
  %v786 = vunpack.c.l.b16 %v693
  %v787 = vunpack.c.h.b16 %v693
  %v788 = vunpack.c.l.b16 %v694
  %v789 = vunpack.c.h.b16 %v694
  %v790 = vunpack.c.l.b16 %v695
  %v791 = vunpack.c.h.b16 %v695
  %v792 = vpack.c.b16 %v728, %v728
  %v793 = vpack.c.b16 %v729, %v729
  %v794 = vpack.c.b16 %v730, %v730
  %v795 = vpack.c.b16 %v731, %v731
  %v796 = vpack.c.b16 %v732, %v732
  %v797 = vpack.c.b16 %v733, %v733
  %v798 = vpack.c.b16 %v734, %v734
  %v799 = vpack.c.b16 %v735, %v735
  %v800 = vpack.c.b16 %v736, %v736
  %v801 = vpack.c.b16 %v737, %v737
  %v802 = vpack.c.b16 %v738, %v738
  %v803 = vpack.c.b16 %v739, %v739
  %v804 = vpack.c.b16 %v740, %v740
  %v805 = vpack.c.b16 %v741, %v741
  %v806 = vpack.c.b16 %v742, %v742
  %v807 = vpack.c.b16 %v743, %v743
  %v808 = vpack.c.b16 %v744, %v744
  %v809 = vpack.c.b16 %v745, %v745
  %v810 = vpack.c.b16 %v746, %v746
  %v811 = vpack.c.b16 %v747, %v747
  %v812 = vpack.c.b16 %v748, %v748
  %v813 = vpack.c.b16 %v749, %v749
  %v814 = vpack.c.b16 %v750, %v750
  %v815 = vpack.c.b16 %v751, %v751
  %v816 = vpack.c.b16 %v752, %v752
  %v817 = vpack.c.b16 %v753, %v753
  %v818 = vpack.c.b16 %v754, %v754
  %v819 = vpack.c.b16 %v755, %v755
  %v820 = vpack.c.b16 %v756, %v756
  %v821 = vpack.c.b16 %v757, %v757
  %v822 = vpack.c.b16 %v758, %v758
  %v823 = vpack.c.b16 %v759, %v759
  %v824 = vpack.c.b16 %v760, %v760
  %v825 = vpack.c.b16 %v761, %v761
  %v826 = vpack.c.b16 %v762, %v762
  %v827 = vpack.c.b16 %v763, %v763
  %v828 = vpack.c.b16 %v764, %v764
  %v829 = vpack.c.b16 %v765, %v765
  %v830 = vpack.c.b16 %v766, %v766
  %v831 = vpack.c.b16 %v767, %v767
  %v832 = vpack.c.b16 %v768, %v768
  %v833 = vpack.c.b16 %v769, %v769
  %v834 = vpack.c.b16 %v770, %v770
  %v835 = vpack.c.b16 %v771, %v771
  %v836 = vpack.c.b16 %v772, %v772
  %v837 = vpack.c.b16 %v773, %v773
  %v838 = vpack.c.b16 %v774, %v774
  %v839 = vpack.c.b16 %v775, %v775
  %v840 = vpack.c.b16 %v776, %v776
  %v841 = vpack.c.b16 %v777, %v777
  %v842 = vpack.c.b16 %v778, %v778
  %v843 = vpack.c.b16 %v779, %v779
  %v844 = vpack.c.b16 %v780, %v780
  %v845 = vpack.c.b16 %v781, %v781
  %v846 = vpack.c.b16 %v782, %v782
  %v847 = vpack.c.b16 %v783, %v783
  %v848 = vpack.c.b16 %v784, %v784
  %v849 = vpack.c.b16 %v785, %v785
  %v850 = vpack.c.b16 %v786, %v786
  %v851 = vpack.c.b16 %v787, %v787
  %v852 = vpack.c.b16 %v788, %v788
  %v853 = vpack.c.b16 %v789, %v789
  %v854 = vpack.c.b16 %v790, %v790
  %v855 = vpack.c.b16 %v791, %v791
  %vm920 = vcmask 93184
  %921 = vst.msk [vmem:[%s3] sm:$0xf] %vm920, %v792
  %922 = vst.msk [vmem:[%s3 + $0x4] sm:$0xf] %vm920, %v793
  %923 = vst.msk [vmem:[%s3 + $0x8] sm:$0xf] %vm920, %v794
  %924 = vst.msk [vmem:[%s3 + $0xc] sm:$0xf] %vm920, %v795
  %925 = vst.msk [vmem:[%s3 + $0x10] sm:$0xf] %vm920, %v796
  %926 = vst.msk [vmem:[%s3 + $0x14] sm:$0xf] %vm920, %v797
  %927 = vst.msk [vmem:[%s3 + $0x18] sm:$0xf] %vm920, %v798
  %928 = vst.msk [vmem:[%s3 + $0x1c] sm:$0xf] %vm920, %v799
  %929 = vst.msk [vmem:[%s3 + $0x20] sm:$0xf] %vm920, %v800
  %930 = vst.msk [vmem:[%s3 + $0x24] sm:$0xf] %vm920, %v801
  %931 = vst.msk [vmem:[%s3 + $0x28] sm:$0xf] %vm920, %v802
  %932 = vst.msk [vmem:[%s3 + $0x2c] sm:$0xf] %vm920, %v803
  %933 = vst.msk [vmem:[%s3 + $0x30] sm:$0xf] %vm920, %v804
  %934 = vst.msk [vmem:[%s3 + $0x34] sm:$0xf] %vm920, %v805
  %935 = vst.msk [vmem:[%s3 + $0x38] sm:$0xf] %vm920, %v806
  %936 = vst.msk [vmem:[%s3 + $0x3c] sm:$0xf] %vm920, %v807
  %937 = vst.msk [vmem:[%s3 + $0x40] sm:$0xf] %vm920, %v808
  %938 = vst.msk [vmem:[%s3 + $0x44] sm:$0xf] %vm920, %v809
  %939 = vst.msk [vmem:[%s3 + $0x48] sm:$0xf] %vm920, %v810
  %940 = vst.msk [vmem:[%s3 + $0x4c] sm:$0xf] %vm920, %v811
  %941 = vst.msk [vmem:[%s3 + $0x50] sm:$0xf] %vm920, %v812
  %942 = vst.msk [vmem:[%s3 + $0x54] sm:$0xf] %vm920, %v813
  %943 = vst.msk [vmem:[%s3 + $0x58] sm:$0xf] %vm920, %v814
  %944 = vst.msk [vmem:[%s3 + $0x5c] sm:$0xf] %vm920, %v815
  %945 = vst.msk [vmem:[%s3 + $0x60] sm:$0xf] %vm920, %v816
  %946 = vst.msk [vmem:[%s3 + $0x64] sm:$0xf] %vm920, %v817
  %947 = vst.msk [vmem:[%s3 + $0x68] sm:$0xf] %vm920, %v818
  %948 = vst.msk [vmem:[%s3 + $0x6c] sm:$0xf] %vm920, %v819
  %949 = vst.msk [vmem:[%s3 + $0x70] sm:$0xf] %vm920, %v820
  %950 = vst.msk [vmem:[%s3 + $0x74] sm:$0xf] %vm920, %v821
  %951 = vst.msk [vmem:[%s3 + $0x78] sm:$0xf] %vm920, %v822
  %952 = vst.msk [vmem:[%s3 + $0x7c] sm:$0xf] %vm920, %v823
  %953 = vst.msk [vmem:[%s3 + $0x80] sm:$0xf] %vm920, %v824
  %954 = vst.msk [vmem:[%s3 + $0x84] sm:$0xf] %vm920, %v825
  %955 = vst.msk [vmem:[%s3 + $0x88] sm:$0xf] %vm920, %v826
  %956 = vst.msk [vmem:[%s3 + $0x8c] sm:$0xf] %vm920, %v827
  %957 = vst.msk [vmem:[%s3 + $0x90] sm:$0xf] %vm920, %v828
  %958 = vst.msk [vmem:[%s3 + $0x94] sm:$0xf] %vm920, %v829
  %959 = vst.msk [vmem:[%s3 + $0x98] sm:$0xf] %vm920, %v830
  %960 = vst.msk [vmem:[%s3 + $0x9c] sm:$0xf] %vm920, %v831
  %961 = vst.msk [vmem:[%s3 + $0xa0] sm:$0xf] %vm920, %v832
  %962 = vst.msk [vmem:[%s3 + $0xa4] sm:$0xf] %vm920, %v833
  %963 = vst.msk [vmem:[%s3 + $0xa8] sm:$0xf] %vm920, %v834
  %964 = vst.msk [vmem:[%s3 + $0xac] sm:$0xf] %vm920, %v835
  %965 = vst.msk [vmem:[%s3 + $0xb0] sm:$0xf] %vm920, %v836
  %966 = vst.msk [vmem:[%s3 + $0xb4] sm:$0xf] %vm920, %v837
  %967 = vst.msk [vmem:[%s3 + $0xb8] sm:$0xf] %vm920, %v838
  %968 = vst.msk [vmem:[%s3 + $0xbc] sm:$0xf] %vm920, %v839
  %969 = vst.msk [vmem:[%s3 + $0xc0] sm:$0xf] %vm920, %v840
  %970 = vst.msk [vmem:[%s3 + $0xc4] sm:$0xf] %vm920, %v841
  %971 = vst.msk [vmem:[%s3 + $0xc8] sm:$0xf] %vm920, %v842
  %972 = vst.msk [vmem:[%s3 + $0xcc] sm:$0xf] %vm920, %v843
  %973 = vst.msk [vmem:[%s3 + $0xd0] sm:$0xf] %vm920, %v844
  %974 = vst.msk [vmem:[%s3 + $0xd4] sm:$0xf] %vm920, %v845
  %975 = vst.msk [vmem:[%s3 + $0xd8] sm:$0xf] %vm920, %v846
  %976 = vst.msk [vmem:[%s3 + $0xdc] sm:$0xf] %vm920, %v847
  %977 = vst.msk [vmem:[%s3 + $0xe0] sm:$0xf] %vm920, %v848
  %978 = vst.msk [vmem:[%s3 + $0xe4] sm:$0xf] %vm920, %v849
  %979 = vst.msk [vmem:[%s3 + $0xe8] sm:$0xf] %vm920, %v850
  %980 = vst.msk [vmem:[%s3 + $0xec] sm:$0xf] %vm920, %v851
  %981 = vst.msk [vmem:[%s3 + $0xf0] sm:$0xf] %vm920, %v852
  %982 = vst.msk [vmem:[%s3 + $0xf4] sm:$0xf] %vm920, %v853
  %983 = vst.msk [vmem:[%s3 + $0xf8] sm:$0xf] %vm920, %v854
  %984 = vst.msk [vmem:[%s3 + $0xfc] sm:$0xf] %vm920, %v855
  // Predicated region
  $region14: #{decoder_forward.28} parent=0 // pred_check
    _
  $region15: #{decoder_forward.28} parent=0 // pred_check_branch
    %986 = sbr.rel (0) target = $region17
  $region16: #{decoder_forward.28} parent=0 // pred_region
    _
  $region17: #{decoder_forward.28} parent=0 // pred_fallthru
    _
  // Predicated region
  $region18: #{decoder_forward.28} parent=0 // pred_check
    _
  $region19: #{decoder_forward.28} parent=0 // pred_check_branch
    %988 = sbr.rel (0) target = $region21
  $region20: #{decoder_forward.28} parent=0 // pred_region
    _
  $region21: #{decoder_forward.28} parent=0 // pred_fallthru
    _

// kernel: decoder_forward.30
$region0: #{decoder_forward.30}
  #allocation0 [shape = 'u32[]', space=smem, size = 0x4, offset = 0x4, fixed_abs, tag = 'smem constant byte address 0x4 - core index']
  #allocation1 [shape = 'u32[144,128]{1,0:T(1,128)}', space=vmem, size = 0x12000, scoped, tag = 'internal scratch']
  %s0 = inlined_call_operand.vmem [shape: bf16[2048,28], index: 0, kind: input, shape index: {}]
  %s1 = inlined_call_operand.vmem [shape: bf16[28,8], index: 1, kind: input, shape index: {}]
  %s2 = inlined_call_operand.vmem [shape: f32[1,8], index: 2, kind: input, shape index: {}]
  %s3 = inlined_call_operand.vmem [shape: bf16[2048,8], index: 3, kind: output, shape index: {}]
  %s4 = sld [smem:[#allocation0]]
  $region45: #{decoder_forward.30} parent=0
    _
  %s6 = ssub.s32 1, %s4
  %s7 = scalar_select 0, %s6, %s4
  loop: start=0, step=1, limit=6
  $region2: #{decoder_forward.30} parent=0 // loop_pre_header
    _
  $region3: #{decoder_forward.30} parent=0 // loop_header
    %s9 = sphi 0, %s13
    %p10 = scmp.ge.s32.totalorder %s9, 6
    %s19 = sphi 0, %s21
    %s22 = sphi 0, %s19
    %s23 = sphi 0, %s22
    %s39 = sphi 0, %s23
    %s43 = sphi 0, %s43
    %s45 = sphi 0, %s43
    %s46 = sphi 0, %s45
    %s60 = sphi 0, %s46
    %s64 = sphi 0, %s64
    %s66 = sphi 0, %s64
    %s67 = sphi 0, %s66
    %s81 = sphi 0, %s67
    %s87 = sphi 0, %s89
    %s90 = sphi 0, %s87
    %s91 = sphi 0, %s90
    %s107 = sphi 0, %s91
  $region4: #{decoder_forward.30} parent=0 // loop_header_branch
    %12 = sbr.rel (%p10) target = $region8
  $region5: #{decoder_forward.30} parent=0 // loop_body
    %s14 = ssub.s32 %s9, 1
    %s15 = ssub.s32 %s9, 2
    %s16 = sadd.s32 %s9, 1
    %s17 = ssub.s32 %s9, %s16
    %p18 = scmp.eq.s32.totalorder %s17, 0
    %s20 = sadd.s32 %s19, 1
    %s21 = scalar_select %p18, %s19, %s20
    %p24 = pneg %p18
    %p25 = scmp.eq.s32.totalorder %s9, 3
    %p26 = por %p24, %p25
    %p27 = scmp.ne.s32.totalorder %s19, %s22
    %p28 = scmp.eq.s32.totalorder %s9, 0
    %p29 = por %p27, %p28
    %p30 = scmp.ne.s32.totalorder %s19, %s22
    %p31 = scmp.eq.s32.totalorder %s14, 3
    %p32 = por %p30, %p31
    %p33 = scmp.ne.s32.totalorder %s22, %s23
    %p34 = scmp.eq.s32.totalorder %s14, 0
    %p35 = por %p33, %p34
    %p36 = scmp.ne.s32.totalorder %s22, %s23
    %p37 = scmp.eq.s32.totalorder %s15, 3
    %p38 = por %p36, %p37
    %p40 = scmp.ne.s32.totalorder %s23, %s39
    %p41 = scmp.eq.s32.totalorder %s15, 0
    %p42 = por %p40, %p41
    %s44 = sadd.s32 %s43, 1
    %p47 = scmp.eq.s32.totalorder %s9, 3
    %p48 = scmp.ne.s32.totalorder %s43, %s45
    %p49 = scmp.eq.s32.totalorder %s9, 0
    %p50 = por %p48, %p49
    %p51 = scmp.ne.s32.totalorder %s43, %s45
    %p52 = scmp.eq.s32.totalorder %s14, 3
    %p53 = por %p51, %p52
    %p54 = scmp.ne.s32.totalorder %s45, %s46
    %p55 = scmp.eq.s32.totalorder %s14, 0
    %p56 = por %p54, %p55
    %p57 = scmp.ne.s32.totalorder %s45, %s46
    %p58 = scmp.eq.s32.totalorder %s15, 3
    %p59 = por %p57, %p58
    %p61 = scmp.ne.s32.totalorder %s46, %s60
    %p62 = scmp.eq.s32.totalorder %s15, 0
    %p63 = por %p61, %p62
    %s65 = sadd.s32 %s64, 1
    %p68 = scmp.eq.s32.totalorder %s9, 3
    %p69 = scmp.ne.s32.totalorder %s64, %s66
    %p70 = scmp.eq.s32.totalorder %s9, 0
    %p71 = por %p69, %p70
    %p72 = scmp.ne.s32.totalorder %s64, %s66
    %p73 = scmp.eq.s32.totalorder %s14, 3
    %p74 = por %p72, %p73
    %p75 = scmp.ne.s32.totalorder %s66, %s67
    %p76 = scmp.eq.s32.totalorder %s14, 0
    %p77 = por %p75, %p76
    %p78 = scmp.ne.s32.totalorder %s66, %s67
    %p79 = scmp.eq.s32.totalorder %s15, 3
    %p80 = por %p78, %p79
    %p82 = scmp.ne.s32.totalorder %s67, %s81
    %p83 = scmp.eq.s32.totalorder %s15, 0
    %p84 = por %p82, %p83
    %s85 = ssub.s32 %s9, %s16
    %p86 = scmp.eq.s32.totalorder %s85, 0
    %s88 = sadd.s32 %s87, 1
    %s89 = scalar_select %p86, %s87, %s88
    %p92 = pneg %p86
    %p93 = scmp.eq.s32.totalorder %s9, 3
    %p94 = por %p92, %p93
    %p95 = scmp.ne.s32.totalorder %s87, %s90
    %p96 = scmp.eq.s32.totalorder %s9, 0
    %p97 = por %p95, %p96
    %p98 = scmp.ne.s32.totalorder %s87, %s90
    %p99 = scmp.eq.s32.totalorder %s14, 3
    %p100 = por %p98, %p99
    %p101 = scmp.ne.s32.totalorder %s90, %s91
    %p102 = scmp.eq.s32.totalorder %s14, 0
    %p103 = por %p101, %p102
    %p104 = scmp.ne.s32.totalorder %s90, %s91
    %p105 = scmp.eq.s32.totalorder %s15, 3
    %p106 = por %p104, %p105
    %p108 = scmp.ne.s32.totalorder %s91, %s107
    %p109 = scmp.eq.s32.totalorder %s15, 0
    %p110 = por %p108, %p109
    %p111 = scmp.le.s32.totalorder 1, %s9
    %p112 = scmp.lt.s32.totalorder %s9, 5
    %p113 = pnand %p111, %p112
    %p114 = pneg %p113
    // Predicated region
    $region9: #{decoder_forward.30} parent=5 // pred_check
      _
    $region10: #{decoder_forward.30} parent=5 // pred_check_branch
      %116 = sbr.rel (%p113) target = $region12
    $region11: #{decoder_forward.30} parent=5 // pred_region
      %s117 = ssub.s32 %s9, 1
      // Predicated region
      $region13: #{decoder_forward.30} parent=11 // pred_check
        %p118 = pneg %p56
      $region14: #{decoder_forward.30} parent=11 // pred_check_branch
        %120 = sbr.rel (%p118) target = $region16
      $region15: #{decoder_forward.30} parent=11 // pred_region
        _
      $region16: #{decoder_forward.30} parent=11 // pred_fallthru
        _
      // Predicated region
      $region17: #{decoder_forward.30} parent=11 // pred_check
        %p121 = pneg %p77
      $region18: #{decoder_forward.30} parent=11 // pred_check_branch
        %123 = sbr.rel (%p121) target = $region20
      $region19: #{decoder_forward.30} parent=11 // pred_region
        _
      $region20: #{decoder_forward.30} parent=11 // pred_fallthru
        _
    $region12: #{decoder_forward.30} parent=5 // pred_fallthru
      _
    %p124 = scmp.lt.s32.totalorder %s9, 4
    // Predicated region
    $region21: #{decoder_forward.30} parent=5 // pred_check
      %p125 = pneg %p124
    $region22: #{decoder_forward.30} parent=5 // pred_check_branch
      %127 = sbr.rel (%p125) target = $region24
    $region23: #{decoder_forward.30} parent=5 // pred_region
      // Predicated region
      $region25: #{decoder_forward.30} parent=23 // pred_check
        %p128 = pneg %p29
      $region26: #{decoder_forward.30} parent=23 // pred_check_branch
        %130 = sbr.rel (%p128) target = $region28
      $region27: #{decoder_forward.30} parent=23 // pred_region
        %s131 = smul.u32 64, %s9
        %p132 = scmp.lt.s32.totalorder %s131, 255
        %s133 = scalar_select %p132, %s131, 255
        %s134 = smul.addr %s133, 4
        %s135 = scalar_lea.vmem %s0, %s134
        %s136 = smul.u32 64, %s9
      $region28: #{decoder_forward.30} parent=23 // pred_fallthru
        _
    $region24: #{decoder_forward.30} parent=5 // pred_fallthru
      _
    %p137 = scmp.le.s32.totalorder 1, %s9
    %p138 = scmp.lt.s32.totalorder %s9, 5
    %p139 = pnand %p137, %p138
    %p140 = pneg %p139
    // Predicated region
    $region29: #{decoder_forward.30} parent=5 // pred_check
      _
    $region30: #{decoder_forward.30} parent=5 // pred_check_branch
      %142 = sbr.rel (%p139) target = $region32
    $region31: #{decoder_forward.30} parent=5 // pred_region
      %s143 = ssub.s32 %s9, 1
      %s144 = smul.u32 64, %s14
      %p145 = scmp.lt.s32.totalorder %s144, 255
      %s146 = scalar_select %p145, %s144, 255
      %s147 = smul.addr %s146, 4
      %s148 = scalar_lea.vmem %s0, %s147
      %p149 = pneg %p35
      %p150 = pneg %p32
      %p151 = pneg %p56
      %p152 = pneg %p53
      %p153 = pneg %p77
      %p154 = pneg %p74
      %p155 = pneg %p103
      %p156 = pneg %p100
      %s157 = smul.u32 64, %s14
      %p158 = scmp.lt.s32.totalorder %s157, 255
      %s159 = scalar_select %p158, %s157, 255
      %s160 = smul.addr %s159, 4
      %s161 = scalar_lea.vmem %s3, %s160
      %s162 = smul.u32 64, %s14
      %p163 = scmp.lt.s32.totalorder %s162, 255
      %s164 = scalar_select %p163, %s162, 255
      %s165 = smul.addr %s164, 4
      %s166 = scalar_lea.vmem %s0, %s165
      %s167 = smul.u32 64, %s14
      %s168 = smul.u32 64, %s14
      %p169 = scmp.lt.s32.totalorder %s168, 255
      %s170 = scalar_select %p169, %s168, 255
      %s171 = smul.addr %s170, 4
      %s172 = scalar_lea.vmem %s3, %s171
      %s173 = smul.u32 64, %s14
      %v175 = vld [vmem:[%s166] sm:$0xf]
      %v176 = vld [vmem:[%s166 + $0x4] sm:$0xf]
      %v177 = vld [vmem:[%s166 + $0x8] sm:$0xf]
      %v178 = vld [vmem:[%s166 + $0xc] sm:$0xf]
      %v179 = vld [vmem:[%s166 + $0x10] sm:$0xf]
      %v180 = vld [vmem:[%s166 + $0x14] sm:$0xf]
      %v181 = vld [vmem:[%s166 + $0x18] sm:$0xf]
      %v182 = vld [vmem:[%s166 + $0x1c] sm:$0xf]
      %v183 = vld [vmem:[%s166 + $0x20] sm:$0xf]
      %v184 = vld [vmem:[%s166 + $0x24] sm:$0xf]
      %v185 = vld [vmem:[%s166 + $0x28] sm:$0xf]
      %v186 = vld [vmem:[%s166 + $0x2c] sm:$0xf]
      %v187 = vld [vmem:[%s166 + $0x30] sm:$0xf]
      %v188 = vld [vmem:[%s166 + $0x34] sm:$0xf]
      %v189 = vld [vmem:[%s166 + $0x38] sm:$0xf]
      %v190 = vld [vmem:[%s166 + $0x3c] sm:$0xf]
      %v191 = vld [vmem:[%s166 + $0x40] sm:$0xf]
      %v192 = vld [vmem:[%s166 + $0x44] sm:$0xf]
      %v193 = vld [vmem:[%s166 + $0x48] sm:$0xf]
      %v194 = vld [vmem:[%s166 + $0x4c] sm:$0xf]
      %v195 = vld [vmem:[%s166 + $0x50] sm:$0xf]
      %v196 = vld [vmem:[%s166 + $0x54] sm:$0xf]
      %v197 = vld [vmem:[%s166 + $0x58] sm:$0xf]
      %v198 = vld [vmem:[%s166 + $0x5c] sm:$0xf]
      %v199 = vld [vmem:[%s166 + $0x60] sm:$0xf]
      %v200 = vld [vmem:[%s166 + $0x64] sm:$0xf]
      %v201 = vld [vmem:[%s166 + $0x68] sm:$0xf]
      %v202 = vld [vmem:[%s166 + $0x6c] sm:$0xf]
      %v203 = vld [vmem:[%s166 + $0x70] sm:$0xf]
      %v204 = vld [vmem:[%s166 + $0x74] sm:$0xf]
      %v205 = vld [vmem:[%s166 + $0x78] sm:$0xf]
      %v206 = vld [vmem:[%s166 + $0x7c] sm:$0xf]
      %v207 = vld [vmem:[%s166 + $0x80] sm:$0xf]
      %v208 = vld [vmem:[%s166 + $0x84] sm:$0xf]
      %v209 = vld [vmem:[%s166 + $0x88] sm:$0xf]
      %v210 = vld [vmem:[%s166 + $0x8c] sm:$0xf]
      %v211 = vld [vmem:[%s166 + $0x90] sm:$0xf]
      %v212 = vld [vmem:[%s166 + $0x94] sm:$0xf]
      %v213 = vld [vmem:[%s166 + $0x98] sm:$0xf]
      %v214 = vld [vmem:[%s166 + $0x9c] sm:$0xf]
      %v215 = vld [vmem:[%s166 + $0xa0] sm:$0xf]
      %v216 = vld [vmem:[%s166 + $0xa4] sm:$0xf]
      %v217 = vld [vmem:[%s166 + $0xa8] sm:$0xf]
      %v218 = vld [vmem:[%s166 + $0xac] sm:$0xf]
      %v219 = vld [vmem:[%s166 + $0xb0] sm:$0xf]
      %v220 = vld [vmem:[%s166 + $0xb4] sm:$0xf]
      %v221 = vld [vmem:[%s166 + $0xb8] sm:$0xf]
      %v222 = vld [vmem:[%s166 + $0xbc] sm:$0xf]
      %v223 = vld [vmem:[%s166 + $0xc0] sm:$0xf]
      %v224 = vld [vmem:[%s166 + $0xc4] sm:$0xf]
      %v225 = vld [vmem:[%s166 + $0xc8] sm:$0xf]
      %v226 = vld [vmem:[%s166 + $0xcc] sm:$0xf]
      %v227 = vld [vmem:[%s166 + $0xd0] sm:$0xf]
      %v228 = vld [vmem:[%s166 + $0xd4] sm:$0xf]
      %v229 = vld [vmem:[%s166 + $0xd8] sm:$0xf]
      %v230 = vld [vmem:[%s166 + $0xdc] sm:$0xf]
      %v231 = vld [vmem:[%s166 + $0xe0] sm:$0xf]
      %v232 = vld [vmem:[%s166 + $0xe4] sm:$0xf]
      %v233 = vld [vmem:[%s166 + $0xe8] sm:$0xf]
      %v234 = vld [vmem:[%s166 + $0xec] sm:$0xf]
      %v235 = vld [vmem:[%s166 + $0xf0] sm:$0xf]
      %v236 = vld [vmem:[%s166 + $0xf4] sm:$0xf]
      %v237 = vld [vmem:[%s166 + $0xf8] sm:$0xf]
      %v238 = vld [vmem:[%s166 + $0xfc] sm:$0xf]
      %v239 = vld [vmem:[%s1] sm:$0xf]
      %v240 = vld [vmem:[%s1 + $0x4] sm:$0xf]
      %v241 = vld [vmem:[%s1 + $0x8] sm:$0xf]
      %v242 = vld [vmem:[%s1 + $0xc] sm:$0x3]
      %v243 = vld [vmem:[%s2] sm:$0x1]
      %v245 = vlaneseq
      %v246 = vshrl.u32 %v245, 7
      %v247 = vsub.s32 0, %v246
      %v248 = vrot.slane %v243, %v247
      %v314 = vunpack.c.l.b16 %v175
      %v315 = vunpack.c.l.b16 %v176
      %v316 = vunpack.c.l.b16 %v177
      %v317 = vunpack.c.l.b16 %v178
      %v318 = vunpack.c.l.b16 %v179
      %v319 = vunpack.c.l.b16 %v180
      %v320 = vunpack.c.l.b16 %v181
      %v321 = vunpack.c.l.b16 %v182
      %v322 = vunpack.c.l.b16 %v183
      %v323 = vunpack.c.l.b16 %v184
      %v324 = vunpack.c.l.b16 %v185
      %v325 = vunpack.c.l.b16 %v186
      %v326 = vunpack.c.l.b16 %v187
      %v327 = vunpack.c.l.b16 %v188
      %v328 = vunpack.c.l.b16 %v189
      %v329 = vunpack.c.l.b16 %v190
      %v330 = vunpack.c.l.b16 %v191
      %v331 = vunpack.c.l.b16 %v192
      %v332 = vunpack.c.l.b16 %v193
      %v333 = vunpack.c.l.b16 %v194
      %v334 = vunpack.c.l.b16 %v195
      %v335 = vunpack.c.l.b16 %v196
      %v336 = vunpack.c.l.b16 %v197
      %v337 = vunpack.c.l.b16 %v198
      %v338 = vunpack.c.l.b16 %v199
      %v339 = vunpack.c.l.b16 %v200
      %v340 = vunpack.c.l.b16 %v201
      %v341 = vunpack.c.l.b16 %v202
      %v342 = vunpack.c.l.b16 %v203
      %v343 = vunpack.c.l.b16 %v204
      %v344 = vunpack.c.l.b16 %v205
      %v345 = vunpack.c.l.b16 %v206
      %v346 = vunpack.c.l.b16 %v207
      %v347 = vunpack.c.l.b16 %v208
      %v348 = vunpack.c.l.b16 %v209
      %v349 = vunpack.c.l.b16 %v210
      %v350 = vunpack.c.l.b16 %v211
      %v351 = vunpack.c.l.b16 %v212
      %v352 = vunpack.c.l.b16 %v213
      %v353 = vunpack.c.l.b16 %v214
      %v354 = vunpack.c.l.b16 %v215
      %v355 = vunpack.c.l.b16 %v216
      %v356 = vunpack.c.l.b16 %v217
      %v357 = vunpack.c.l.b16 %v218
      %v358 = vunpack.c.l.b16 %v219
      %v359 = vunpack.c.l.b16 %v220
      %v360 = vunpack.c.l.b16 %v221
      %v361 = vunpack.c.l.b16 %v222
      %v362 = vunpack.c.l.b16 %v223
      %v363 = vunpack.c.l.b16 %v224
      %v364 = vunpack.c.l.b16 %v225
      %v365 = vunpack.c.l.b16 %v226
      %v366 = vunpack.c.l.b16 %v227
      %v367 = vunpack.c.l.b16 %v228
      %v368 = vunpack.c.l.b16 %v229
      %v369 = vunpack.c.l.b16 %v230
      %v370 = vunpack.c.l.b16 %v231
      %v371 = vunpack.c.l.b16 %v232
      %v372 = vunpack.c.l.b16 %v233
      %v373 = vunpack.c.l.b16 %v234
      %v374 = vunpack.c.l.b16 %v235
      %v375 = vunpack.c.l.b16 %v236
      %v376 = vunpack.c.l.b16 %v237
      %v377 = vunpack.c.l.b16 %v238
      %v378 = vpack.c.b16 %v315, %v314
      %v379 = vpack.c.b16 %v317, %v316
      %v380 = vpack.c.b16 %v319, %v318
      %v381 = vpack.c.b16 %v321, %v320
      %v382 = vpack.c.b16 %v323, %v322
      %v383 = vpack.c.b16 %v325, %v324
      %v384 = vpack.c.b16 %v327, %v326
      %v385 = vpack.c.b16 %v329, %v328
      %v386 = vpack.c.b16 %v331, %v330
      %v387 = vpack.c.b16 %v333, %v332
      %v388 = vpack.c.b16 %v335, %v334
      %v389 = vpack.c.b16 %v337, %v336
      %v390 = vpack.c.b16 %v339, %v338
      %v391 = vpack.c.b16 %v341, %v340
      %v392 = vpack.c.b16 %v343, %v342
      %v393 = vpack.c.b16 %v345, %v344
      %v394 = vpack.c.b16 %v347, %v346
      %v395 = vpack.c.b16 %v349, %v348
      %v396 = vpack.c.b16 %v351, %v350
      %v397 = vpack.c.b16 %v353, %v352
      %v398 = vpack.c.b16 %v355, %v354
      %v399 = vpack.c.b16 %v357, %v356
      %v400 = vpack.c.b16 %v359, %v358
      %v401 = vpack.c.b16 %v361, %v360
      %v402 = vpack.c.b16 %v363, %v362
      %v403 = vpack.c.b16 %v365, %v364
      %v404 = vpack.c.b16 %v367, %v366
      %v405 = vpack.c.b16 %v369, %v368
      %v406 = vpack.c.b16 %v371, %v370
      %v407 = vpack.c.b16 %v373, %v372
      %v408 = vpack.c.b16 %v375, %v374
      %v409 = vpack.c.b16 %v377, %v376
      %v414 = vunpack.c.l.b16 %v239
      %v415 = vunpack.c.l.b16 %v240
      %v416 = vunpack.c.l.b16 %v241
      %v417 = vunpack.c.l.b16 %v242
      %v418 = vpack.c.b16 %v415, %v414
      %v419 = vpack.c.b16 %v417, %v416
      %vm421 = vcmask 228352
      %v423 = vsel %vm421, %v378, 0
      %v426 = vsel %vm421, %v379, 0
      %v429 = vsel %vm421, %v380, 0
      %v432 = vsel %vm421, %v381, 0
      %v435 = vsel %vm421, %v382, 0
      %v438 = vsel %vm421, %v383, 0
      %v441 = vsel %vm421, %v384, 0
      %v444 = vsel %vm421, %v385, 0
      %v447 = vsel %vm421, %v386, 0
      %v450 = vsel %vm421, %v387, 0
      %v453 = vsel %vm421, %v388, 0
      %v456 = vsel %vm421, %v389, 0
      %v459 = vsel %vm421, %v390, 0
      %v462 = vsel %vm421, %v391, 0
      %v465 = vsel %vm421, %v392, 0
      %v468 = vsel %vm421, %v393, 0
      %v471 = vsel %vm421, %v394, 0
      %v474 = vsel %vm421, %v395, 0
      %v477 = vsel %vm421, %v396, 0
      %v480 = vsel %vm421, %v397, 0
      %v483 = vsel %vm421, %v398, 0
      %v486 = vsel %vm421, %v399, 0
      %v489 = vsel %vm421, %v400, 0
      %v492 = vsel %vm421, %v401, 0
      %v495 = vsel %vm421, %v402, 0
      %v498 = vsel %vm421, %v403, 0
      %v501 = vsel %vm421, %v404, 0
      %v504 = vsel %vm421, %v405, 0
      %v507 = vsel %vm421, %v406, 0
      %v510 = vsel %vm421, %v407, 0
      %v513 = vsel %vm421, %v408, 0
      %v516 = vsel %vm421, %v409, 0
      %vm518 = vcmask 1045504
      %v520 = vsel %vm518, %v419, 0
      %522 = vmatprep.subr.bf16.mxu0 0
      %523 = vmatpush1.bf16.msra.mxu0 0
      %524 = vmatprep.subr.bf16.mxu0 0
      %525 = vmatpush1.bf16.msra.mxu0 0
      %526 = vmatprep.subr.bf16.mxu0 0
      %527 = vmatpush1.bf16.msra.mxu0 0
      %528 = vmatprep.subr.bf16.mxu0 0
      %529 = vmatpush1.bf16.msra.mxu0 0
      %530 = vmatprep.subr.bf16.mxu0 0
      %531 = vmatpush1.bf16.msra.mxu0 0
      %532 = vmatprep.subr.bf16.mxu0 0
      %533 = vmatpush1.bf16.msra.mxu0 0
      %534 = vmatprep.subr.bf16.mxu0 0
      %535 = vmatpush1.bf16.msra.mxu0 %v520
      %536 = vmatprep.subr.bf16.mxu0 0
      %537 = vmatpush1.bf16.msra.mxu0 %v418
      %538 = vmatprep.subr.bf16.mxu0 0
      %539 = vmatpush2.bf16.msra.mxu0 0
      %540 = vmatprep.subr.bf16.mxu0 0
      %541 = vmatpush2.bf16.msra.mxu0 0
      %542 = vmatprep.subr.bf16.mxu0 0
      %543 = vmatpush2.bf16.msra.mxu0 0
      %544 = vmatprep.subr.bf16.mxu0 0
      %545 = vmatpush2.bf16.msra.mxu0 0
      %546 = vmatprep.subr.bf16.mxu0 0
      %547 = vmatpush2.bf16.msra.mxu0 0
      %548 = vmatprep.subr.bf16.mxu0 0
      %549 = vmatpush2.bf16.msra.mxu0 0
      %550 = vmatprep.subr.bf16.mxu0 0
      %551 = vmatpush2.bf16.msra.mxu0 0
      %552 = vmatprep.subr.bf16.mxu0 0
      %553 = vmatpush2.bf16.msra.mxu0 0
      %554 = vmatprep.mubr.bf16.mxu0 0
      %555 = vmatmul.mubr.bf16.gmra.mxu0 %v423
      %v556 = vpop.f32.mrf.mxu0
      %v557 = vadd.f32 %v248, %v556
      %v558 = vpop.f32.mrf.mxu0
      %v559 = vpop.f32.mrf.mxu0
      %v560 = vadd.f32 %v248, %v559
      %v561 = vpop.f32.mrf.mxu0
      %562 = vmatprep.mubr.bf16.mxu0 0
      %563 = vmatmul.mubr.bf16.gmra.mxu0 %v426
      %v564 = vpop.f32.mrf.mxu0
      %v565 = vadd.f32 %v248, %v564
      %v566 = vpop.f32.mrf.mxu0
      %v567 = vpop.f32.mrf.mxu0
      %v568 = vadd.f32 %v248, %v567
      %v569 = vpop.f32.mrf.mxu0
      %570 = vmatprep.mubr.bf16.mxu0 0
      %571 = vmatmul.mubr.bf16.gmra.mxu0 %v429
      %v572 = vpop.f32.mrf.mxu0
      %v573 = vadd.f32 %v248, %v572
      %v574 = vpop.f32.mrf.mxu0
      %v575 = vpop.f32.mrf.mxu0
      %v576 = vadd.f32 %v248, %v575
      %v577 = vpop.f32.mrf.mxu0
      %578 = vmatprep.mubr.bf16.mxu0 0
      %579 = vmatmul.mubr.bf16.gmra.mxu0 %v432
      %v580 = vpop.f32.mrf.mxu0
      %v581 = vadd.f32 %v248, %v580
      %v582 = vpop.f32.mrf.mxu0
      %v583 = vpop.f32.mrf.mxu0
      %v584 = vadd.f32 %v248, %v583
      %v585 = vpop.f32.mrf.mxu0
      %586 = vmatprep.mubr.bf16.mxu0 0
      %587 = vmatmul.mubr.bf16.gmra.mxu0 %v435
      %v588 = vpop.f32.mrf.mxu0
      %v589 = vadd.f32 %v248, %v588
      %v590 = vpop.f32.mrf.mxu0
      %v591 = vpop.f32.mrf.mxu0
      %v592 = vadd.f32 %v248, %v591
      %v593 = vpop.f32.mrf.mxu0
      %594 = vmatprep.mubr.bf16.mxu0 0
      %595 = vmatmul.mubr.bf16.gmra.mxu0 %v438
      %v596 = vpop.f32.mrf.mxu0
      %v597 = vadd.f32 %v248, %v596
      %v598 = vpop.f32.mrf.mxu0
      %v599 = vpop.f32.mrf.mxu0
      %v600 = vadd.f32 %v248, %v599
      %v601 = vpop.f32.mrf.mxu0
      %602 = vmatprep.mubr.bf16.mxu0 0
      %603 = vmatmul.mubr.bf16.gmra.mxu0 %v441
      %v604 = vpop.f32.mrf.mxu0
      %v605 = vadd.f32 %v248, %v604
      %v606 = vpop.f32.mrf.mxu0
      %v607 = vpop.f32.mrf.mxu0
      %v608 = vadd.f32 %v248, %v607
      %v609 = vpop.f32.mrf.mxu0
      %610 = vmatprep.mubr.bf16.mxu0 0
      %611 = vmatmul.mubr.bf16.gmra.mxu0 %v444
      %v612 = vpop.f32.mrf.mxu0
      %v613 = vadd.f32 %v248, %v612
      %v614 = vpop.f32.mrf.mxu0
      %v615 = vpop.f32.mrf.mxu0
      %v616 = vadd.f32 %v248, %v615
      %v617 = vpop.f32.mrf.mxu0
      %618 = vmatprep.mubr.bf16.mxu0 0
      %619 = vmatmul.mubr.bf16.gmra.mxu0 %v447
      %v620 = vpop.f32.mrf.mxu0
      %v621 = vadd.f32 %v248, %v620
      %v622 = vpop.f32.mrf.mxu0
      %v623 = vpop.f32.mrf.mxu0
      %v624 = vadd.f32 %v248, %v623
      %v625 = vpop.f32.mrf.mxu0
      %626 = vmatprep.mubr.bf16.mxu0 0
      %627 = vmatmul.mubr.bf16.gmra.mxu0 %v450
      %v628 = vpop.f32.mrf.mxu0
      %v629 = vadd.f32 %v248, %v628
      %v630 = vpop.f32.mrf.mxu0
      %v631 = vpop.f32.mrf.mxu0
      %v632 = vadd.f32 %v248, %v631
      %v633 = vpop.f32.mrf.mxu0
      %634 = vmatprep.mubr.bf16.mxu0 0
      %635 = vmatmul.mubr.bf16.gmra.mxu0 %v453
      %v636 = vpop.f32.mrf.mxu0
      %v637 = vadd.f32 %v248, %v636
      %v638 = vpop.f32.mrf.mxu0
      %v639 = vpop.f32.mrf.mxu0
      %v640 = vadd.f32 %v248, %v639
      %v641 = vpop.f32.mrf.mxu0
      %642 = vmatprep.mubr.bf16.mxu0 0
      %643 = vmatmul.mubr.bf16.gmra.mxu0 %v456
      %v644 = vpop.f32.mrf.mxu0
      %v645 = vadd.f32 %v248, %v644
      %v646 = vpop.f32.mrf.mxu0
      %v647 = vpop.f32.mrf.mxu0
      %v648 = vadd.f32 %v248, %v647
      %v649 = vpop.f32.mrf.mxu0
      %650 = vmatprep.mubr.bf16.mxu0 0
      %651 = vmatmul.mubr.bf16.gmra.mxu0 %v459
      %v652 = vpop.f32.mrf.mxu0
      %v653 = vadd.f32 %v248, %v652
      %v654 = vpop.f32.mrf.mxu0
      %v655 = vpop.f32.mrf.mxu0
      %v656 = vadd.f32 %v248, %v655
      %v657 = vpop.f32.mrf.mxu0
      %658 = vmatprep.mubr.bf16.mxu0 0
      %659 = vmatmul.mubr.bf16.gmra.mxu0 %v462
      %v660 = vpop.f32.mrf.mxu0
      %v661 = vadd.f32 %v248, %v660
      %v662 = vpop.f32.mrf.mxu0
      %v663 = vpop.f32.mrf.mxu0
      %v664 = vadd.f32 %v248, %v663
      %v665 = vpop.f32.mrf.mxu0
      %666 = vmatprep.mubr.bf16.mxu0 0
      %667 = vmatmul.mubr.bf16.gmra.mxu0 %v465
      %v668 = vpop.f32.mrf.mxu0
      %v669 = vadd.f32 %v248, %v668
      %v670 = vpop.f32.mrf.mxu0
      %v671 = vpop.f32.mrf.mxu0
      %v672 = vadd.f32 %v248, %v671
      %v673 = vpop.f32.mrf.mxu0
      %674 = vmatprep.mubr.bf16.mxu0 0
      %675 = vmatmul.mubr.bf16.gmra.mxu0 %v468
      %v676 = vpop.f32.mrf.mxu0
      %v677 = vadd.f32 %v248, %v676
      %v678 = vpop.f32.mrf.mxu0
      %v679 = vpop.f32.mrf.mxu0
      %v680 = vadd.f32 %v248, %v679
      %v681 = vpop.f32.mrf.mxu0
      %682 = vmatprep.mubr.bf16.mxu0 0
      %683 = vmatmul.mubr.bf16.gmra.mxu0 %v471
      %v684 = vpop.f32.mrf.mxu0
      %v685 = vadd.f32 %v248, %v684
      %v686 = vpop.f32.mrf.mxu0
      %v687 = vpop.f32.mrf.mxu0
      %v688 = vadd.f32 %v248, %v687
      %v689 = vpop.f32.mrf.mxu0
      %690 = vmatprep.mubr.bf16.mxu0 0
      %691 = vmatmul.mubr.bf16.gmra.mxu0 %v474
      %v692 = vpop.f32.mrf.mxu0
      %v693 = vadd.f32 %v248, %v692
      %v694 = vpop.f32.mrf.mxu0
      %v695 = vpop.f32.mrf.mxu0
      %v696 = vadd.f32 %v248, %v695
      %v697 = vpop.f32.mrf.mxu0
      %698 = vmatprep.mubr.bf16.mxu0 0
      %699 = vmatmul.mubr.bf16.gmra.mxu0 %v477
      %v700 = vpop.f32.mrf.mxu0
      %v701 = vadd.f32 %v248, %v700
      %v702 = vpop.f32.mrf.mxu0
      %v703 = vpop.f32.mrf.mxu0
      %v704 = vadd.f32 %v248, %v703
      %v705 = vpop.f32.mrf.mxu0
      %706 = vmatprep.mubr.bf16.mxu0 0
      %707 = vmatmul.mubr.bf16.gmra.mxu0 %v480
      %v708 = vpop.f32.mrf.mxu0
      %v709 = vadd.f32 %v248, %v708
      %v710 = vpop.f32.mrf.mxu0
      %v711 = vpop.f32.mrf.mxu0
      %v712 = vadd.f32 %v248, %v711
      %v713 = vpop.f32.mrf.mxu0
      %714 = vmatprep.mubr.bf16.mxu0 0
      %715 = vmatmul.mubr.bf16.gmra.mxu0 %v483
      %v716 = vpop.f32.mrf.mxu0
      %v717 = vadd.f32 %v248, %v716
      %v718 = vpop.f32.mrf.mxu0
      %v719 = vpop.f32.mrf.mxu0
      %v720 = vadd.f32 %v248, %v719
      %v721 = vpop.f32.mrf.mxu0
      %722 = vmatprep.mubr.bf16.mxu0 0
      %723 = vmatmul.mubr.bf16.gmra.mxu0 %v486
      %v724 = vpop.f32.mrf.mxu0
      %v725 = vadd.f32 %v248, %v724
      %v726 = vpop.f32.mrf.mxu0
      %v727 = vpop.f32.mrf.mxu0
      %v728 = vadd.f32 %v248, %v727
      %v729 = vpop.f32.mrf.mxu0
      %730 = vmatprep.mubr.bf16.mxu0 0
      %731 = vmatmul.mubr.bf16.gmra.mxu0 %v489
      %v732 = vpop.f32.mrf.mxu0
      %v733 = vadd.f32 %v248, %v732
      %v734 = vpop.f32.mrf.mxu0
      %v735 = vpop.f32.mrf.mxu0
      %v736 = vadd.f32 %v248, %v735
      %v737 = vpop.f32.mrf.mxu0
      %738 = vmatprep.mubr.bf16.mxu0 0
      %739 = vmatmul.mubr.bf16.gmra.mxu0 %v492
      %v740 = vpop.f32.mrf.mxu0
      %v741 = vadd.f32 %v248, %v740
      %v742 = vpop.f32.mrf.mxu0
      %v743 = vpop.f32.mrf.mxu0
      %v744 = vadd.f32 %v248, %v743
      %v745 = vpop.f32.mrf.mxu0
      %746 = vmatprep.mubr.bf16.mxu0 0
      %747 = vmatmul.mubr.bf16.gmra.mxu0 %v495
      %v748 = vpop.f32.mrf.mxu0
      %v749 = vadd.f32 %v248, %v748
      %v750 = vpop.f32.mrf.mxu0
      %v751 = vpop.f32.mrf.mxu0
      %v752 = vadd.f32 %v248, %v751
      %v753 = vpop.f32.mrf.mxu0
      %754 = vmatprep.mubr.bf16.mxu0 0
      %755 = vmatmul.mubr.bf16.gmra.mxu0 %v498
      %v756 = vpop.f32.mrf.mxu0
      %v757 = vadd.f32 %v248, %v756
      %v758 = vpop.f32.mrf.mxu0
      %v759 = vpop.f32.mrf.mxu0
      %v760 = vadd.f32 %v248, %v759
      %v761 = vpop.f32.mrf.mxu0
      %762 = vmatprep.mubr.bf16.mxu0 0
      %763 = vmatmul.mubr.bf16.gmra.mxu0 %v501
      %v764 = vpop.f32.mrf.mxu0
      %v765 = vadd.f32 %v248, %v764
      %v766 = vpop.f32.mrf.mxu0
      %v767 = vpop.f32.mrf.mxu0
      %v768 = vadd.f32 %v248, %v767
      %v769 = vpop.f32.mrf.mxu0
      %770 = vmatprep.mubr.bf16.mxu0 0
      %771 = vmatmul.mubr.bf16.gmra.mxu0 %v504
      %v772 = vpop.f32.mrf.mxu0
      %v773 = vadd.f32 %v248, %v772
      %v774 = vpop.f32.mrf.mxu0
      %v775 = vpop.f32.mrf.mxu0
      %v776 = vadd.f32 %v248, %v775
      %v777 = vpop.f32.mrf.mxu0
      %778 = vmatprep.mubr.bf16.mxu0 0
      %779 = vmatmul.mubr.bf16.gmra.mxu0 %v507
      %v780 = vpop.f32.mrf.mxu0
      %v781 = vadd.f32 %v248, %v780
      %v782 = vpop.f32.mrf.mxu0
      %v783 = vpop.f32.mrf.mxu0
      %v784 = vadd.f32 %v248, %v783
      %v785 = vpop.f32.mrf.mxu0
      %786 = vmatprep.mubr.bf16.mxu0 0
      %787 = vmatmul.mubr.bf16.gmra.mxu0 %v510
      %v788 = vpop.f32.mrf.mxu0
      %v789 = vadd.f32 %v248, %v788
      %v790 = vpop.f32.mrf.mxu0
      %v791 = vpop.f32.mrf.mxu0
      %v792 = vadd.f32 %v248, %v791
      %v793 = vpop.f32.mrf.mxu0
      %794 = vmatprep.mubr.bf16.mxu0 0
      %795 = vmatmul.mubr.bf16.gmra.mxu0 %v513
      %v796 = vpop.f32.mrf.mxu0
      %v797 = vadd.f32 %v248, %v796
      %v798 = vpop.f32.mrf.mxu0
      %v799 = vpop.f32.mrf.mxu0
      %v800 = vadd.f32 %v248, %v799
      %v801 = vpop.f32.mrf.mxu0
      %802 = vmatprep.mubr.bf16.mxu0 0
      %803 = vmatmul.mubr.bf16.gmra.mxu0 %v516
      %v804 = vpop.f32.mrf.mxu0
      %v805 = vadd.f32 %v248, %v804
      %v806 = vpop.f32.mrf.mxu0
      %v807 = vpop.f32.mrf.mxu0
      %v808 = vadd.f32 %v248, %v807
      %v809 = vpop.f32.mrf.mxu0
      %810 = vdwg.mxu0
      %v811 = vpack.c.bf16 %v560, %v557
      %v812 = vpack.c.bf16 %v568, %v565
      %v813 = vpack.c.bf16 %v576, %v573
      %v814 = vpack.c.bf16 %v584, %v581
      %v815 = vpack.c.bf16 %v592, %v589
      %v816 = vpack.c.bf16 %v600, %v597
      %v817 = vpack.c.bf16 %v608, %v605
      %v818 = vpack.c.bf16 %v616, %v613
      %v819 = vpack.c.bf16 %v624, %v621
      %v820 = vpack.c.bf16 %v632, %v629
      %v821 = vpack.c.bf16 %v640, %v637
      %v822 = vpack.c.bf16 %v648, %v645
      %v823 = vpack.c.bf16 %v656, %v653
      %v824 = vpack.c.bf16 %v664, %v661
      %v825 = vpack.c.bf16 %v672, %v669
      %v826 = vpack.c.bf16 %v680, %v677
      %v827 = vpack.c.bf16 %v688, %v685
      %v828 = vpack.c.bf16 %v696, %v693
      %v829 = vpack.c.bf16 %v704, %v701
      %v830 = vpack.c.bf16 %v712, %v709
      %v831 = vpack.c.bf16 %v720, %v717
      %v832 = vpack.c.bf16 %v728, %v725
      %v833 = vpack.c.bf16 %v736, %v733
      %v834 = vpack.c.bf16 %v744, %v741
      %v835 = vpack.c.bf16 %v752, %v749
      %v836 = vpack.c.bf16 %v760, %v757
      %v837 = vpack.c.bf16 %v768, %v765
      %v838 = vpack.c.bf16 %v776, %v773
      %v839 = vpack.c.bf16 %v784, %v781
      %v840 = vpack.c.bf16 %v792, %v789
      %v841 = vpack.c.bf16 %v800, %v797
      %v842 = vpack.c.bf16 %v808, %v805
      %v875 = vunpack.c.l.b16 %v811
      %v876 = vunpack.c.h.b16 %v811
      %v877 = vunpack.c.l.b16 %v812
      %v878 = vunpack.c.h.b16 %v812
      %v879 = vunpack.c.l.b16 %v813
      %v880 = vunpack.c.h.b16 %v813
      %v881 = vunpack.c.l.b16 %v814
      %v882 = vunpack.c.h.b16 %v814
      %v883 = vunpack.c.l.b16 %v815
      %v884 = vunpack.c.h.b16 %v815
      %v885 = vunpack.c.l.b16 %v816
      %v886 = vunpack.c.h.b16 %v816
      %v887 = vunpack.c.l.b16 %v817
      %v888 = vunpack.c.h.b16 %v817
      %v889 = vunpack.c.l.b16 %v818
      %v890 = vunpack.c.h.b16 %v818
      %v891 = vunpack.c.l.b16 %v819
      %v892 = vunpack.c.h.b16 %v819
      %v893 = vunpack.c.l.b16 %v820
      %v894 = vunpack.c.h.b16 %v820
      %v895 = vunpack.c.l.b16 %v821
      %v896 = vunpack.c.h.b16 %v821
      %v897 = vunpack.c.l.b16 %v822
      %v898 = vunpack.c.h.b16 %v822
      %v899 = vunpack.c.l.b16 %v823
      %v900 = vunpack.c.h.b16 %v823
      %v901 = vunpack.c.l.b16 %v824
      %v902 = vunpack.c.h.b16 %v824
      %v903 = vunpack.c.l.b16 %v825
      %v904 = vunpack.c.h.b16 %v825
      %v905 = vunpack.c.l.b16 %v826
      %v906 = vunpack.c.h.b16 %v826
      %v907 = vunpack.c.l.b16 %v827
      %v908 = vunpack.c.h.b16 %v827
      %v909 = vunpack.c.l.b16 %v828
      %v910 = vunpack.c.h.b16 %v828
      %v911 = vunpack.c.l.b16 %v829
      %v912 = vunpack.c.h.b16 %v829
      %v913 = vunpack.c.l.b16 %v830
      %v914 = vunpack.c.h.b16 %v830
      %v915 = vunpack.c.l.b16 %v831
      %v916 = vunpack.c.h.b16 %v831
      %v917 = vunpack.c.l.b16 %v832
      %v918 = vunpack.c.h.b16 %v832
      %v919 = vunpack.c.l.b16 %v833
      %v920 = vunpack.c.h.b16 %v833
      %v921 = vunpack.c.l.b16 %v834
      %v922 = vunpack.c.h.b16 %v834
      %v923 = vunpack.c.l.b16 %v835
      %v924 = vunpack.c.h.b16 %v835
      %v925 = vunpack.c.l.b16 %v836
      %v926 = vunpack.c.h.b16 %v836
      %v927 = vunpack.c.l.b16 %v837
      %v928 = vunpack.c.h.b16 %v837
      %v929 = vunpack.c.l.b16 %v838
      %v930 = vunpack.c.h.b16 %v838
      %v931 = vunpack.c.l.b16 %v839
      %v932 = vunpack.c.h.b16 %v839
      %v933 = vunpack.c.l.b16 %v840
      %v934 = vunpack.c.h.b16 %v840
      %v935 = vunpack.c.l.b16 %v841
      %v936 = vunpack.c.h.b16 %v841
      %v937 = vunpack.c.l.b16 %v842
      %v938 = vunpack.c.h.b16 %v842
      %v939 = vpack.c.b16 %v875, %v875
      %v940 = vpack.c.b16 %v876, %v876
      %v941 = vpack.c.b16 %v877, %v877
      %v942 = vpack.c.b16 %v878, %v878
      %v943 = vpack.c.b16 %v879, %v879
      %v944 = vpack.c.b16 %v880, %v880
      %v945 = vpack.c.b16 %v881, %v881
      %v946 = vpack.c.b16 %v882, %v882
      %v947 = vpack.c.b16 %v883, %v883
      %v948 = vpack.c.b16 %v884, %v884
      %v949 = vpack.c.b16 %v885, %v885
      %v950 = vpack.c.b16 %v886, %v886
      %v951 = vpack.c.b16 %v887, %v887
      %v952 = vpack.c.b16 %v888, %v888
      %v953 = vpack.c.b16 %v889, %v889
      %v954 = vpack.c.b16 %v890, %v890
      %v955 = vpack.c.b16 %v891, %v891
      %v956 = vpack.c.b16 %v892, %v892
      %v957 = vpack.c.b16 %v893, %v893
      %v958 = vpack.c.b16 %v894, %v894
      %v959 = vpack.c.b16 %v895, %v895
      %v960 = vpack.c.b16 %v896, %v896
      %v961 = vpack.c.b16 %v897, %v897
      %v962 = vpack.c.b16 %v898, %v898
      %v963 = vpack.c.b16 %v899, %v899
      %v964 = vpack.c.b16 %v900, %v900
      %v965 = vpack.c.b16 %v901, %v901
      %v966 = vpack.c.b16 %v902, %v902
      %v967 = vpack.c.b16 %v903, %v903
      %v968 = vpack.c.b16 %v904, %v904
      %v969 = vpack.c.b16 %v905, %v905
      %v970 = vpack.c.b16 %v906, %v906
      %v971 = vpack.c.b16 %v907, %v907
      %v972 = vpack.c.b16 %v908, %v908
      %v973 = vpack.c.b16 %v909, %v909
      %v974 = vpack.c.b16 %v910, %v910
      %v975 = vpack.c.b16 %v911, %v911
      %v976 = vpack.c.b16 %v912, %v912
      %v977 = vpack.c.b16 %v913, %v913
      %v978 = vpack.c.b16 %v914, %v914
      %v979 = vpack.c.b16 %v915, %v915
      %v980 = vpack.c.b16 %v916, %v916
      %v981 = vpack.c.b16 %v917, %v917
      %v982 = vpack.c.b16 %v918, %v918
      %v983 = vpack.c.b16 %v919, %v919
      %v984 = vpack.c.b16 %v920, %v920
      %v985 = vpack.c.b16 %v921, %v921
      %v986 = vpack.c.b16 %v922, %v922
      %v987 = vpack.c.b16 %v923, %v923
      %v988 = vpack.c.b16 %v924, %v924
      %v989 = vpack.c.b16 %v925, %v925
      %v990 = vpack.c.b16 %v926, %v926
      %v991 = vpack.c.b16 %v927, %v927
      %v992 = vpack.c.b16 %v928, %v928
      %v993 = vpack.c.b16 %v929, %v929
      %v994 = vpack.c.b16 %v930, %v930
      %v995 = vpack.c.b16 %v931, %v931
      %v996 = vpack.c.b16 %v932, %v932
      %v997 = vpack.c.b16 %v933, %v933
      %v998 = vpack.c.b16 %v934, %v934
      %v999 = vpack.c.b16 %v935, %v935
      %v1000 = vpack.c.b16 %v936, %v936
      %v1001 = vpack.c.b16 %v937, %v937
      %v1002 = vpack.c.b16 %v938, %v938
      %vm1067 = vcmask 60416
      %1068 = vst.msk [vmem:[%s172] sm:$0xf] %vm1067, %v939
      %1069 = vst.msk [vmem:[%s172 + $0x4] sm:$0xf] %vm1067, %v940
      %1070 = vst.msk [vmem:[%s172 + $0x8] sm:$0xf] %vm1067, %v941
      %1071 = vst.msk [vmem:[%s172 + $0xc] sm:$0xf] %vm1067, %v942
      %1072 = vst.msk [vmem:[%s172 + $0x10] sm:$0xf] %vm1067, %v943
      %1073 = vst.msk [vmem:[%s172 + $0x14] sm:$0xf] %vm1067, %v944
      %1074 = vst.msk [vmem:[%s172 + $0x18] sm:$0xf] %vm1067, %v945
      %1075 = vst.msk [vmem:[%s172 + $0x1c] sm:$0xf] %vm1067, %v946
      %1076 = vst.msk [vmem:[%s172 + $0x20] sm:$0xf] %vm1067, %v947
      %1077 = vst.msk [vmem:[%s172 + $0x24] sm:$0xf] %vm1067, %v948
      %1078 = vst.msk [vmem:[%s172 + $0x28] sm:$0xf] %vm1067, %v949
      %1079 = vst.msk [vmem:[%s172 + $0x2c] sm:$0xf] %vm1067, %v950
      %1080 = vst.msk [vmem:[%s172 + $0x30] sm:$0xf] %vm1067, %v951
      %1081 = vst.msk [vmem:[%s172 + $0x34] sm:$0xf] %vm1067, %v952
      %1082 = vst.msk [vmem:[%s172 + $0x38] sm:$0xf] %vm1067, %v953
      %1083 = vst.msk [vmem:[%s172 + $0x3c] sm:$0xf] %vm1067, %v954
      %1084 = vst.msk [vmem:[%s172 + $0x40] sm:$0xf] %vm1067, %v955
      %1085 = vst.msk [vmem:[%s172 + $0x44] sm:$0xf] %vm1067, %v956
      %1086 = vst.msk [vmem:[%s172 + $0x48] sm:$0xf] %vm1067, %v957
      %1087 = vst.msk [vmem:[%s172 + $0x4c] sm:$0xf] %vm1067, %v958
      %1088 = vst.msk [vmem:[%s172 + $0x50] sm:$0xf] %vm1067, %v959
      %1089 = vst.msk [vmem:[%s172 + $0x54] sm:$0xf] %vm1067, %v960
      %1090 = vst.msk [vmem:[%s172 + $0x58] sm:$0xf] %vm1067, %v961
      %1091 = vst.msk [vmem:[%s172 + $0x5c] sm:$0xf] %vm1067, %v962
      %1092 = vst.msk [vmem:[%s172 + $0x60] sm:$0xf] %vm1067, %v963
      %1093 = vst.msk [vmem:[%s172 + $0x64] sm:$0xf] %vm1067, %v964
      %1094 = vst.msk [vmem:[%s172 + $0x68] sm:$0xf] %vm1067, %v965
      %1095 = vst.msk [vmem:[%s172 + $0x6c] sm:$0xf] %vm1067, %v966
      %1096 = vst.msk [vmem:[%s172 + $0x70] sm:$0xf] %vm1067, %v967
      %1097 = vst.msk [vmem:[%s172 + $0x74] sm:$0xf] %vm1067, %v968
      %1098 = vst.msk [vmem:[%s172 + $0x78] sm:$0xf] %vm1067, %v969
      %1099 = vst.msk [vmem:[%s172 + $0x7c] sm:$0xf] %vm1067, %v970
      %1100 = vst.msk [vmem:[%s172 + $0x80] sm:$0xf] %vm1067, %v971
      %1101 = vst.msk [vmem:[%s172 + $0x84] sm:$0xf] %vm1067, %v972
      %1102 = vst.msk [vmem:[%s172 + $0x88] sm:$0xf] %vm1067, %v973
      %1103 = vst.msk [vmem:[%s172 + $0x8c] sm:$0xf] %vm1067, %v974
      %1104 = vst.msk [vmem:[%s172 + $0x90] sm:$0xf] %vm1067, %v975
      %1105 = vst.msk [vmem:[%s172 + $0x94] sm:$0xf] %vm1067, %v976
      %1106 = vst.msk [vmem:[%s172 + $0x98] sm:$0xf] %vm1067, %v977
      %1107 = vst.msk [vmem:[%s172 + $0x9c] sm:$0xf] %vm1067, %v978
      %1108 = vst.msk [vmem:[%s172 + $0xa0] sm:$0xf] %vm1067, %v979
      %1109 = vst.msk [vmem:[%s172 + $0xa4] sm:$0xf] %vm1067, %v980
      %1110 = vst.msk [vmem:[%s172 + $0xa8] sm:$0xf] %vm1067, %v981
      %1111 = vst.msk [vmem:[%s172 + $0xac] sm:$0xf] %vm1067, %v982
      %1112 = vst.msk [vmem:[%s172 + $0xb0] sm:$0xf] %vm1067, %v983
      %1113 = vst.msk [vmem:[%s172 + $0xb4] sm:$0xf] %vm1067, %v984
      %1114 = vst.msk [vmem:[%s172 + $0xb8] sm:$0xf] %vm1067, %v985
      %1115 = vst.msk [vmem:[%s172 + $0xbc] sm:$0xf] %vm1067, %v986
      %1116 = vst.msk [vmem:[%s172 + $0xc0] sm:$0xf] %vm1067, %v987
      %1117 = vst.msk [vmem:[%s172 + $0xc4] sm:$0xf] %vm1067, %v988
      %1118 = vst.msk [vmem:[%s172 + $0xc8] sm:$0xf] %vm1067, %v989
      %1119 = vst.msk [vmem:[%s172 + $0xcc] sm:$0xf] %vm1067, %v990
      %1120 = vst.msk [vmem:[%s172 + $0xd0] sm:$0xf] %vm1067, %v991
      %1121 = vst.msk [vmem:[%s172 + $0xd4] sm:$0xf] %vm1067, %v992
      %1122 = vst.msk [vmem:[%s172 + $0xd8] sm:$0xf] %vm1067, %v993
      %1123 = vst.msk [vmem:[%s172 + $0xdc] sm:$0xf] %vm1067, %v994
      %1124 = vst.msk [vmem:[%s172 + $0xe0] sm:$0xf] %vm1067, %v995
      %1125 = vst.msk [vmem:[%s172 + $0xe4] sm:$0xf] %vm1067, %v996
      %1126 = vst.msk [vmem:[%s172 + $0xe8] sm:$0xf] %vm1067, %v997
      %1127 = vst.msk [vmem:[%s172 + $0xec] sm:$0xf] %vm1067, %v998
      %1128 = vst.msk [vmem:[%s172 + $0xf0] sm:$0xf] %vm1067, %v999
      %1129 = vst.msk [vmem:[%s172 + $0xf4] sm:$0xf] %vm1067, %v1000
      %1130 = vst.msk [vmem:[%s172 + $0xf8] sm:$0xf] %vm1067, %v1001
      %1131 = vst.msk [vmem:[%s172 + $0xfc] sm:$0xf] %vm1067, %v1002
      %s1132 = smul.u32 64, %s14
      %p1133 = scmp.lt.s32.totalorder %s1132, 255
      %s1134 = scalar_select %p1133, %s1132, 255
      %s1135 = smul.addr %s1134, 4
      %s1136 = scalar_lea.vmem %s3, %s1135
      // Predicated region
      $region33: #{decoder_forward.30} parent=31 // pred_check
        %p1137 = pneg %p100
      $region34: #{decoder_forward.30} parent=31 // pred_check_branch
        %1139 = sbr.rel (%p1137) target = $region36
      $region35: #{decoder_forward.30} parent=31 // pred_region
        %s1140 = smul.u32 64, %s14
      $region36: #{decoder_forward.30} parent=31 // pred_fallthru
        _
    $region32: #{decoder_forward.30} parent=5 // pred_fallthru
      _
    %p1141 = scmp.le.s32.totalorder 2, %s9
    // Predicated region
    $region37: #{decoder_forward.30} parent=5 // pred_check
      %p1142 = pneg %p1141
    $region38: #{decoder_forward.30} parent=5 // pred_check_branch
      %1144 = sbr.rel (%p1142) target = $region40
    $region39: #{decoder_forward.30} parent=5 // pred_region
      %s1145 = ssub.s32 %s9, 2
      // Predicated region
      $region41: #{decoder_forward.30} parent=39 // pred_check
        %p1146 = pneg %p106
      $region42: #{decoder_forward.30} parent=39 // pred_check_branch
        %1148 = sbr.rel (%p1146) target = $region44
      $region43: #{decoder_forward.30} parent=39 // pred_region
        %s1149 = smul.u32 64, %s15
        %p1150 = scmp.lt.s32.totalorder %s1149, 255
        %s1151 = scalar_select %p1150, %s1149, 255
        %s1152 = smul.addr %s1151, 4
        %s1153 = scalar_lea.vmem %s3, %s1152
      $region44: #{decoder_forward.30} parent=39 // pred_fallthru
        _
    $region40: #{decoder_forward.30} parent=5 // pred_fallthru
      _
  $region6: #{decoder_forward.30} parent=0 // loop_footer
    %s13 = sadd.s32 1, %s9
  $region7: #{decoder_forward.30} parent=0 // loop_footer_branch
    %8 = sbr.rel target = $region3
  $region8: #{decoder_forward.30} parent=0 // loop_exit
    _

// kernel: decoder_forward.31
$region0: #{decoder_forward.31}
  #allocation0 [shape = 'u32[]', space=smem, size = 0x4, offset = 0x4, fixed_abs, tag = 'smem constant byte address 0x4 - core index']
  #allocation1 [shape = 'u32[144,128]{1,0:T(1,128)}', space=vmem, size = 0x12000, scoped, tag = 'internal scratch']
  %s0 = inlined_call_operand.vmem [shape: bf16[2048,72], index: 0, kind: input, shape index: {}]
  %s1 = inlined_call_operand.vmem [shape: bf16[72,8], index: 1, kind: input, shape index: {}]
  %s2 = inlined_call_operand.vmem [shape: f32[1,8], index: 2, kind: input, shape index: {}]
  %s3 = inlined_call_operand.vmem [shape: bf16[2048,8], index: 3, kind: output, shape index: {}]
  %s4 = sld [smem:[#allocation0]]
  $region45: #{decoder_forward.31} parent=0
    _
  %s6 = ssub.s32 1, %s4
  %s7 = scalar_select 0, %s6, %s4
  loop: start=0, step=1, limit=6
  $region2: #{decoder_forward.31} parent=0 // loop_pre_header
    _
  $region3: #{decoder_forward.31} parent=0 // loop_header
    %s9 = sphi 0, %s13
    %p10 = scmp.ge.s32.totalorder %s9, 6
    %s19 = sphi 0, %s21
    %s22 = sphi 0, %s19
    %s23 = sphi 0, %s22
    %s39 = sphi 0, %s23
    %s43 = sphi 0, %s43
    %s45 = sphi 0, %s43
    %s46 = sphi 0, %s45
    %s60 = sphi 0, %s46
    %s64 = sphi 0, %s64
    %s66 = sphi 0, %s64
    %s67 = sphi 0, %s66
    %s81 = sphi 0, %s67
    %s87 = sphi 0, %s89
    %s90 = sphi 0, %s87
    %s91 = sphi 0, %s90
    %s107 = sphi 0, %s91
  $region4: #{decoder_forward.31} parent=0 // loop_header_branch
    %12 = sbr.rel (%p10) target = $region8
  $region5: #{decoder_forward.31} parent=0 // loop_body
    %s14 = ssub.s32 %s9, 1
    %s15 = ssub.s32 %s9, 2
    %s16 = sadd.s32 %s9, 1
    %s17 = ssub.s32 %s9, %s16
    %p18 = scmp.eq.s32.totalorder %s17, 0
    %s20 = sadd.s32 %s19, 1
    %s21 = scalar_select %p18, %s19, %s20
    %p24 = pneg %p18
    %p25 = scmp.eq.s32.totalorder %s9, 3
    %p26 = por %p24, %p25
    %p27 = scmp.ne.s32.totalorder %s19, %s22
    %p28 = scmp.eq.s32.totalorder %s9, 0
    %p29 = por %p27, %p28
    %p30 = scmp.ne.s32.totalorder %s19, %s22
    %p31 = scmp.eq.s32.totalorder %s14, 3
    %p32 = por %p30, %p31
    %p33 = scmp.ne.s32.totalorder %s22, %s23
    %p34 = scmp.eq.s32.totalorder %s14, 0
    %p35 = por %p33, %p34
    %p36 = scmp.ne.s32.totalorder %s22, %s23
    %p37 = scmp.eq.s32.totalorder %s15, 3
    %p38 = por %p36, %p37
    %p40 = scmp.ne.s32.totalorder %s23, %s39
    %p41 = scmp.eq.s32.totalorder %s15, 0
    %p42 = por %p40, %p41
    %s44 = sadd.s32 %s43, 1
    %p47 = scmp.eq.s32.totalorder %s9, 3
    %p48 = scmp.ne.s32.totalorder %s43, %s45
    %p49 = scmp.eq.s32.totalorder %s9, 0
    %p50 = por %p48, %p49
    %p51 = scmp.ne.s32.totalorder %s43, %s45
    %p52 = scmp.eq.s32.totalorder %s14, 3
    %p53 = por %p51, %p52
    %p54 = scmp.ne.s32.totalorder %s45, %s46
    %p55 = scmp.eq.s32.totalorder %s14, 0
    %p56 = por %p54, %p55
    %p57 = scmp.ne.s32.totalorder %s45, %s46
    %p58 = scmp.eq.s32.totalorder %s15, 3
    %p59 = por %p57, %p58
    %p61 = scmp.ne.s32.totalorder %s46, %s60
    %p62 = scmp.eq.s32.totalorder %s15, 0
    %p63 = por %p61, %p62
    %s65 = sadd.s32 %s64, 1
    %p68 = scmp.eq.s32.totalorder %s9, 3
    %p69 = scmp.ne.s32.totalorder %s64, %s66
    %p70 = scmp.eq.s32.totalorder %s9, 0
    %p71 = por %p69, %p70
    %p72 = scmp.ne.s32.totalorder %s64, %s66
    %p73 = scmp.eq.s32.totalorder %s14, 3
    %p74 = por %p72, %p73
    %p75 = scmp.ne.s32.totalorder %s66, %s67
    %p76 = scmp.eq.s32.totalorder %s14, 0
    %p77 = por %p75, %p76
    %p78 = scmp.ne.s32.totalorder %s66, %s67
    %p79 = scmp.eq.s32.totalorder %s15, 3
    %p80 = por %p78, %p79
    %p82 = scmp.ne.s32.totalorder %s67, %s81
    %p83 = scmp.eq.s32.totalorder %s15, 0
    %p84 = por %p82, %p83
    %s85 = ssub.s32 %s9, %s16
    %p86 = scmp.eq.s32.totalorder %s85, 0
    %s88 = sadd.s32 %s87, 1
    %s89 = scalar_select %p86, %s87, %s88
    %p92 = pneg %p86
    %p93 = scmp.eq.s32.totalorder %s9, 3
    %p94 = por %p92, %p93
    %p95 = scmp.ne.s32.totalorder %s87, %s90
    %p96 = scmp.eq.s32.totalorder %s9, 0
    %p97 = por %p95, %p96
    %p98 = scmp.ne.s32.totalorder %s87, %s90
    %p99 = scmp.eq.s32.totalorder %s14, 3
    %p100 = por %p98, %p99
    %p101 = scmp.ne.s32.totalorder %s90, %s91
    %p102 = scmp.eq.s32.totalorder %s14, 0
    %p103 = por %p101, %p102
    %p104 = scmp.ne.s32.totalorder %s90, %s91
    %p105 = scmp.eq.s32.totalorder %s15, 3
    %p106 = por %p104, %p105
    %p108 = scmp.ne.s32.totalorder %s91, %s107
    %p109 = scmp.eq.s32.totalorder %s15, 0
    %p110 = por %p108, %p109
    %p111 = scmp.le.s32.totalorder 1, %s9
    %p112 = scmp.lt.s32.totalorder %s9, 5
    %p113 = pnand %p111, %p112
    %p114 = pneg %p113
    // Predicated region
    $region9: #{decoder_forward.31} parent=5 // pred_check
      _
    $region10: #{decoder_forward.31} parent=5 // pred_check_branch
      %116 = sbr.rel (%p113) target = $region12
    $region11: #{decoder_forward.31} parent=5 // pred_region
      %s117 = ssub.s32 %s9, 1
      // Predicated region
      $region13: #{decoder_forward.31} parent=11 // pred_check
        %p118 = pneg %p56
      $region14: #{decoder_forward.31} parent=11 // pred_check_branch
        %120 = sbr.rel (%p118) target = $region16
      $region15: #{decoder_forward.31} parent=11 // pred_region
        _
      $region16: #{decoder_forward.31} parent=11 // pred_fallthru
        _
      // Predicated region
      $region17: #{decoder_forward.31} parent=11 // pred_check
        %p121 = pneg %p77
      $region18: #{decoder_forward.31} parent=11 // pred_check_branch
        %123 = sbr.rel (%p121) target = $region20
      $region19: #{decoder_forward.31} parent=11 // pred_region
        _
      $region20: #{decoder_forward.31} parent=11 // pred_fallthru
        _
    $region12: #{decoder_forward.31} parent=5 // pred_fallthru
      _
    %p124 = scmp.lt.s32.totalorder %s9, 4
    // Predicated region
    $region21: #{decoder_forward.31} parent=5 // pred_check
      %p125 = pneg %p124
    $region22: #{decoder_forward.31} parent=5 // pred_check_branch
      %127 = sbr.rel (%p125) target = $region24
    $region23: #{decoder_forward.31} parent=5 // pred_region
      // Predicated region
      $region25: #{decoder_forward.31} parent=23 // pred_check
        %p128 = pneg %p29
      $region26: #{decoder_forward.31} parent=23 // pred_check_branch
        %130 = sbr.rel (%p128) target = $region28
      $region27: #{decoder_forward.31} parent=23 // pred_region
        %s131 = smul.u32 64, %s9
        %p132 = scmp.lt.s32.totalorder %s131, 255
        %s133 = scalar_select %p132, %s131, 255
        %s134 = smul.addr %s133, 4
        %s135 = scalar_lea.vmem %s0, %s134
        %s136 = smul.u32 64, %s9
      $region28: #{decoder_forward.31} parent=23 // pred_fallthru
        _
    $region24: #{decoder_forward.31} parent=5 // pred_fallthru
      _
    %p137 = scmp.le.s32.totalorder 1, %s9
    %p138 = scmp.lt.s32.totalorder %s9, 5
    %p139 = pnand %p137, %p138
    %p140 = pneg %p139
    // Predicated region
    $region29: #{decoder_forward.31} parent=5 // pred_check
      _
    $region30: #{decoder_forward.31} parent=5 // pred_check_branch
      %142 = sbr.rel (%p139) target = $region32
    $region31: #{decoder_forward.31} parent=5 // pred_region
      %s143 = ssub.s32 %s9, 1
      %s144 = smul.u32 64, %s14
      %p145 = scmp.lt.s32.totalorder %s144, 255
      %s146 = scalar_select %p145, %s144, 255
      %s147 = smul.addr %s146, 4
      %s148 = scalar_lea.vmem %s0, %s147
      %p149 = pneg %p35
      %p150 = pneg %p32
      %p151 = pneg %p56
      %p152 = pneg %p53
      %p153 = pneg %p77
      %p154 = pneg %p74
      %p155 = pneg %p103
      %p156 = pneg %p100
      %s157 = smul.u32 64, %s14
      %p158 = scmp.lt.s32.totalorder %s157, 255
      %s159 = scalar_select %p158, %s157, 255
      %s160 = smul.addr %s159, 4
      %s161 = scalar_lea.vmem %s3, %s160
      %s162 = smul.u32 64, %s14
      %p163 = scmp.lt.s32.totalorder %s162, 255
      %s164 = scalar_select %p163, %s162, 255
      %s165 = smul.addr %s164, 4
      %s166 = scalar_lea.vmem %s0, %s165
      %s167 = smul.u32 64, %s14
      %s168 = smul.u32 64, %s14
      %p169 = scmp.lt.s32.totalorder %s168, 255
      %s170 = scalar_select %p169, %s168, 255
      %s171 = smul.addr %s170, 4
      %s172 = scalar_lea.vmem %s3, %s171
      %s173 = smul.u32 64, %s14
      %v175 = vld [vmem:[%s166] sm:$0xf]
      %v176 = vld [vmem:[%s166 + $0x4] sm:$0xf]
      %v177 = vld [vmem:[%s166 + $0x8] sm:$0xf]
      %v178 = vld [vmem:[%s166 + $0xc] sm:$0xf]
      %v179 = vld [vmem:[%s166 + $0x10] sm:$0xf]
      %v180 = vld [vmem:[%s166 + $0x14] sm:$0xf]
      %v181 = vld [vmem:[%s166 + $0x18] sm:$0xf]
      %v182 = vld [vmem:[%s166 + $0x1c] sm:$0xf]
      %v183 = vld [vmem:[%s166 + $0x20] sm:$0xf]
      %v184 = vld [vmem:[%s166 + $0x24] sm:$0xf]
      %v185 = vld [vmem:[%s166 + $0x28] sm:$0xf]
      %v186 = vld [vmem:[%s166 + $0x2c] sm:$0xf]
      %v187 = vld [vmem:[%s166 + $0x30] sm:$0xf]
      %v188 = vld [vmem:[%s166 + $0x34] sm:$0xf]
      %v189 = vld [vmem:[%s166 + $0x38] sm:$0xf]
      %v190 = vld [vmem:[%s166 + $0x3c] sm:$0xf]
      %v191 = vld [vmem:[%s166 + $0x40] sm:$0xf]
      %v192 = vld [vmem:[%s166 + $0x44] sm:$0xf]
      %v193 = vld [vmem:[%s166 + $0x48] sm:$0xf]
      %v194 = vld [vmem:[%s166 + $0x4c] sm:$0xf]
      %v195 = vld [vmem:[%s166 + $0x50] sm:$0xf]
      %v196 = vld [vmem:[%s166 + $0x54] sm:$0xf]
      %v197 = vld [vmem:[%s166 + $0x58] sm:$0xf]
      %v198 = vld [vmem:[%s166 + $0x5c] sm:$0xf]
      %v199 = vld [vmem:[%s166 + $0x60] sm:$0xf]
      %v200 = vld [vmem:[%s166 + $0x64] sm:$0xf]
      %v201 = vld [vmem:[%s166 + $0x68] sm:$0xf]
      %v202 = vld [vmem:[%s166 + $0x6c] sm:$0xf]
      %v203 = vld [vmem:[%s166 + $0x70] sm:$0xf]
      %v204 = vld [vmem:[%s166 + $0x74] sm:$0xf]
      %v205 = vld [vmem:[%s166 + $0x78] sm:$0xf]
      %v206 = vld [vmem:[%s166 + $0x7c] sm:$0xf]
      %v207 = vld [vmem:[%s166 + $0x80] sm:$0xf]
      %v208 = vld [vmem:[%s166 + $0x84] sm:$0xf]
      %v209 = vld [vmem:[%s166 + $0x88] sm:$0xf]
      %v210 = vld [vmem:[%s166 + $0x8c] sm:$0xf]
      %v211 = vld [vmem:[%s166 + $0x90] sm:$0xf]
      %v212 = vld [vmem:[%s166 + $0x94] sm:$0xf]
      %v213 = vld [vmem:[%s166 + $0x98] sm:$0xf]
      %v214 = vld [vmem:[%s166 + $0x9c] sm:$0xf]
      %v215 = vld [vmem:[%s166 + $0xa0] sm:$0xf]
      %v216 = vld [vmem:[%s166 + $0xa4] sm:$0xf]
      %v217 = vld [vmem:[%s166 + $0xa8] sm:$0xf]
      %v218 = vld [vmem:[%s166 + $0xac] sm:$0xf]
      %v219 = vld [vmem:[%s166 + $0xb0] sm:$0xf]
      %v220 = vld [vmem:[%s166 + $0xb4] sm:$0xf]
      %v221 = vld [vmem:[%s166 + $0xb8] sm:$0xf]
      %v222 = vld [vmem:[%s166 + $0xbc] sm:$0xf]
      %v223 = vld [vmem:[%s166 + $0xc0] sm:$0xf]
      %v224 = vld [vmem:[%s166 + $0xc4] sm:$0xf]
      %v225 = vld [vmem:[%s166 + $0xc8] sm:$0xf]
      %v226 = vld [vmem:[%s166 + $0xcc] sm:$0xf]
      %v227 = vld [vmem:[%s166 + $0xd0] sm:$0xf]
      %v228 = vld [vmem:[%s166 + $0xd4] sm:$0xf]
      %v229 = vld [vmem:[%s166 + $0xd8] sm:$0xf]
      %v230 = vld [vmem:[%s166 + $0xdc] sm:$0xf]
      %v231 = vld [vmem:[%s166 + $0xe0] sm:$0xf]
      %v232 = vld [vmem:[%s166 + $0xe4] sm:$0xf]
      %v233 = vld [vmem:[%s166 + $0xe8] sm:$0xf]
      %v234 = vld [vmem:[%s166 + $0xec] sm:$0xf]
      %v235 = vld [vmem:[%s166 + $0xf0] sm:$0xf]
      %v236 = vld [vmem:[%s166 + $0xf4] sm:$0xf]
      %v237 = vld [vmem:[%s166 + $0xf8] sm:$0xf]
      %v238 = vld [vmem:[%s166 + $0xfc] sm:$0xf]
      %v239 = vld [vmem:[%s1] sm:$0xf]
      %v240 = vld [vmem:[%s1 + $0x4] sm:$0xf]
      %v241 = vld [vmem:[%s1 + $0x8] sm:$0xf]
      %v242 = vld [vmem:[%s1 + $0xc] sm:$0xf]
      %v243 = vld [vmem:[%s1 + $0x10] sm:$0xf]
      %v244 = vld [vmem:[%s1 + $0x14] sm:$0xf]
      %v245 = vld [vmem:[%s1 + $0x18] sm:$0xf]
      %v246 = vld [vmem:[%s1 + $0x1c] sm:$0xf]
      %v247 = vld [vmem:[%s1 + $0x20] sm:$0xf]
      %v248 = vld [vmem:[%s2] sm:$0x1]
      %v250 = vlaneseq
      %v251 = vshrl.u32 %v250, 7
      %v252 = vsub.s32 0, %v251
      %v253 = vrot.slane %v248, %v252
      %v319 = vunpack.c.l.b16 %v175
      %v320 = vunpack.c.l.b16 %v176
      %v321 = vunpack.c.l.b16 %v177
      %v322 = vunpack.c.l.b16 %v178
      %v323 = vunpack.c.l.b16 %v179
      %v324 = vunpack.c.l.b16 %v180
      %v325 = vunpack.c.l.b16 %v181
      %v326 = vunpack.c.l.b16 %v182
      %v327 = vunpack.c.l.b16 %v183
      %v328 = vunpack.c.l.b16 %v184
      %v329 = vunpack.c.l.b16 %v185
      %v330 = vunpack.c.l.b16 %v186
      %v331 = vunpack.c.l.b16 %v187
      %v332 = vunpack.c.l.b16 %v188
      %v333 = vunpack.c.l.b16 %v189
      %v334 = vunpack.c.l.b16 %v190
      %v335 = vunpack.c.l.b16 %v191
      %v336 = vunpack.c.l.b16 %v192
      %v337 = vunpack.c.l.b16 %v193
      %v338 = vunpack.c.l.b16 %v194
      %v339 = vunpack.c.l.b16 %v195
      %v340 = vunpack.c.l.b16 %v196
      %v341 = vunpack.c.l.b16 %v197
      %v342 = vunpack.c.l.b16 %v198
      %v343 = vunpack.c.l.b16 %v199
      %v344 = vunpack.c.l.b16 %v200
      %v345 = vunpack.c.l.b16 %v201
      %v346 = vunpack.c.l.b16 %v202
      %v347 = vunpack.c.l.b16 %v203
      %v348 = vunpack.c.l.b16 %v204
      %v349 = vunpack.c.l.b16 %v205
      %v350 = vunpack.c.l.b16 %v206
      %v351 = vunpack.c.l.b16 %v207
      %v352 = vunpack.c.l.b16 %v208
      %v353 = vunpack.c.l.b16 %v209
      %v354 = vunpack.c.l.b16 %v210
      %v355 = vunpack.c.l.b16 %v211
      %v356 = vunpack.c.l.b16 %v212
      %v357 = vunpack.c.l.b16 %v213
      %v358 = vunpack.c.l.b16 %v214
      %v359 = vunpack.c.l.b16 %v215
      %v360 = vunpack.c.l.b16 %v216
      %v361 = vunpack.c.l.b16 %v217
      %v362 = vunpack.c.l.b16 %v218
      %v363 = vunpack.c.l.b16 %v219
      %v364 = vunpack.c.l.b16 %v220
      %v365 = vunpack.c.l.b16 %v221
      %v366 = vunpack.c.l.b16 %v222
      %v367 = vunpack.c.l.b16 %v223
      %v368 = vunpack.c.l.b16 %v224
      %v369 = vunpack.c.l.b16 %v225
      %v370 = vunpack.c.l.b16 %v226
      %v371 = vunpack.c.l.b16 %v227
      %v372 = vunpack.c.l.b16 %v228
      %v373 = vunpack.c.l.b16 %v229
      %v374 = vunpack.c.l.b16 %v230
      %v375 = vunpack.c.l.b16 %v231
      %v376 = vunpack.c.l.b16 %v232
      %v377 = vunpack.c.l.b16 %v233
      %v378 = vunpack.c.l.b16 %v234
      %v379 = vunpack.c.l.b16 %v235
      %v380 = vunpack.c.l.b16 %v236
      %v381 = vunpack.c.l.b16 %v237
      %v382 = vunpack.c.l.b16 %v238
      %v383 = vpack.c.b16 %v320, %v319
      %v384 = vpack.c.b16 %v322, %v321
      %v385 = vpack.c.b16 %v324, %v323
      %v386 = vpack.c.b16 %v326, %v325
      %v387 = vpack.c.b16 %v328, %v327
      %v388 = vpack.c.b16 %v330, %v329
      %v389 = vpack.c.b16 %v332, %v331
      %v390 = vpack.c.b16 %v334, %v333
      %v391 = vpack.c.b16 %v336, %v335
      %v392 = vpack.c.b16 %v338, %v337
      %v393 = vpack.c.b16 %v340, %v339
      %v394 = vpack.c.b16 %v342, %v341
      %v395 = vpack.c.b16 %v344, %v343
      %v396 = vpack.c.b16 %v346, %v345
      %v397 = vpack.c.b16 %v348, %v347
      %v398 = vpack.c.b16 %v350, %v349
      %v399 = vpack.c.b16 %v352, %v351
      %v400 = vpack.c.b16 %v354, %v353
      %v401 = vpack.c.b16 %v356, %v355
      %v402 = vpack.c.b16 %v358, %v357
      %v403 = vpack.c.b16 %v360, %v359
      %v404 = vpack.c.b16 %v362, %v361
      %v405 = vpack.c.b16 %v364, %v363
      %v406 = vpack.c.b16 %v366, %v365
      %v407 = vpack.c.b16 %v368, %v367
      %v408 = vpack.c.b16 %v370, %v369
      %v409 = vpack.c.b16 %v372, %v371
      %v410 = vpack.c.b16 %v374, %v373
      %v411 = vpack.c.b16 %v376, %v375
      %v412 = vpack.c.b16 %v378, %v377
      %v413 = vpack.c.b16 %v380, %v379
      %v414 = vpack.c.b16 %v382, %v381
      %v424 = vunpack.c.l.b16 %v239
      %v425 = vunpack.c.l.b16 %v240
      %v426 = vunpack.c.l.b16 %v241
      %v427 = vunpack.c.l.b16 %v242
      %v428 = vunpack.c.l.b16 %v243
      %v429 = vunpack.c.l.b16 %v244
      %v430 = vunpack.c.l.b16 %v245
      %v431 = vunpack.c.l.b16 %v246
      %v432 = vunpack.c.l.b16 %v247
      %v433 = vpack.c.b16 %v425, %v424
      %v434 = vpack.c.b16 %v427, %v426
      %v435 = vpack.c.b16 %v429, %v428
      %v436 = vpack.c.b16 %v431, %v430
      %v437 = vpack.c.b16 %v432, %v432
      %vm442 = vcmask 588800
      %v444 = vsel %vm442, %v383, 0
      %v447 = vsel %vm442, %v384, 0
      %v450 = vsel %vm442, %v385, 0
      %v453 = vsel %vm442, %v386, 0
      %v456 = vsel %vm442, %v387, 0
      %v459 = vsel %vm442, %v388, 0
      %v462 = vsel %vm442, %v389, 0
      %v465 = vsel %vm442, %v390, 0
      %v468 = vsel %vm442, %v391, 0
      %v471 = vsel %vm442, %v392, 0
      %v474 = vsel %vm442, %v393, 0
      %v477 = vsel %vm442, %v394, 0
      %v480 = vsel %vm442, %v395, 0
      %v483 = vsel %vm442, %v396, 0
      %v486 = vsel %vm442, %v397, 0
      %v489 = vsel %vm442, %v398, 0
      %v492 = vsel %vm442, %v399, 0
      %v495 = vsel %vm442, %v400, 0
      %v498 = vsel %vm442, %v401, 0
      %v501 = vsel %vm442, %v402, 0
      %v504 = vsel %vm442, %v403, 0
      %v507 = vsel %vm442, %v404, 0
      %v510 = vsel %vm442, %v405, 0
      %v513 = vsel %vm442, %v406, 0
      %v516 = vsel %vm442, %v407, 0
      %v519 = vsel %vm442, %v408, 0
      %v522 = vsel %vm442, %v409, 0
      %v525 = vsel %vm442, %v410, 0
      %v528 = vsel %vm442, %v411, 0
      %v531 = vsel %vm442, %v412, 0
      %v534 = vsel %vm442, %v413, 0
      %v537 = vsel %vm442, %v414, 0
      %vm539 = vcmask 1043456
      %v541 = vsel %vm539, %v437, 0
      %543 = vmatprep.subr.bf16.mxu0 0
      %544 = vmatpush1.bf16.msra.mxu0 0
      %545 = vmatprep.subr.bf16.mxu0 0
      %546 = vmatpush1.bf16.msra.mxu0 0
      %547 = vmatprep.subr.bf16.mxu0 0
      %548 = vmatpush1.bf16.msra.mxu0 0
      %549 = vmatprep.subr.bf16.mxu0 0
      %550 = vmatpush1.bf16.msra.mxu0 %v541
      %551 = vmatprep.subr.bf16.mxu0 0
      %552 = vmatpush1.bf16.msra.mxu0 %v436
      %553 = vmatprep.subr.bf16.mxu0 0
      %554 = vmatpush1.bf16.msra.mxu0 %v435
      %555 = vmatprep.subr.bf16.mxu0 0
      %556 = vmatpush1.bf16.msra.mxu0 %v434
      %557 = vmatprep.subr.bf16.mxu0 0
      %558 = vmatpush1.bf16.msra.mxu0 %v433
      %559 = vmatprep.subr.bf16.mxu0 0
      %560 = vmatpush2.bf16.msra.mxu0 0
      %561 = vmatprep.subr.bf16.mxu0 0
      %562 = vmatpush2.bf16.msra.mxu0 0
      %563 = vmatprep.subr.bf16.mxu0 0
      %564 = vmatpush2.bf16.msra.mxu0 0
      %565 = vmatprep.subr.bf16.mxu0 0
      %566 = vmatpush2.bf16.msra.mxu0 0
      %567 = vmatprep.subr.bf16.mxu0 0
      %568 = vmatpush2.bf16.msra.mxu0 0
      %569 = vmatprep.subr.bf16.mxu0 0
      %570 = vmatpush2.bf16.msra.mxu0 0
      %571 = vmatprep.subr.bf16.mxu0 0
      %572 = vmatpush2.bf16.msra.mxu0 0
      %573 = vmatprep.subr.bf16.mxu0 0
      %574 = vmatpush2.bf16.msra.mxu0 0
      %575 = vmatprep.mubr.bf16.mxu0 0
      %576 = vmatmul.mubr.bf16.gmra.mxu0 %v444
      %v577 = vpop.f32.mrf.mxu0
      %v578 = vadd.f32 %v253, %v577
      %v579 = vpop.f32.mrf.mxu0
      %v580 = vpop.f32.mrf.mxu0
      %v581 = vadd.f32 %v253, %v580
      %v582 = vpop.f32.mrf.mxu0
      %583 = vmatprep.mubr.bf16.mxu0 0
      %584 = vmatmul.mubr.bf16.gmra.mxu0 %v447
      %v585 = vpop.f32.mrf.mxu0
      %v586 = vadd.f32 %v253, %v585
      %v587 = vpop.f32.mrf.mxu0
      %v588 = vpop.f32.mrf.mxu0
      %v589 = vadd.f32 %v253, %v588
      %v590 = vpop.f32.mrf.mxu0
      %591 = vmatprep.mubr.bf16.mxu0 0
      %592 = vmatmul.mubr.bf16.gmra.mxu0 %v450
      %v593 = vpop.f32.mrf.mxu0
      %v594 = vadd.f32 %v253, %v593
      %v595 = vpop.f32.mrf.mxu0
      %v596 = vpop.f32.mrf.mxu0
      %v597 = vadd.f32 %v253, %v596
      %v598 = vpop.f32.mrf.mxu0
      %599 = vmatprep.mubr.bf16.mxu0 0
      %600 = vmatmul.mubr.bf16.gmra.mxu0 %v453
      %v601 = vpop.f32.mrf.mxu0
      %v602 = vadd.f32 %v253, %v601
      %v603 = vpop.f32.mrf.mxu0
      %v604 = vpop.f32.mrf.mxu0
      %v605 = vadd.f32 %v253, %v604
      %v606 = vpop.f32.mrf.mxu0
      %607 = vmatprep.mubr.bf16.mxu0 0
      %608 = vmatmul.mubr.bf16.gmra.mxu0 %v456
      %v609 = vpop.f32.mrf.mxu0
      %v610 = vadd.f32 %v253, %v609
      %v611 = vpop.f32.mrf.mxu0
      %v612 = vpop.f32.mrf.mxu0
      %v613 = vadd.f32 %v253, %v612
      %v614 = vpop.f32.mrf.mxu0
      %615 = vmatprep.mubr.bf16.mxu0 0
      %616 = vmatmul.mubr.bf16.gmra.mxu0 %v459
      %v617 = vpop.f32.mrf.mxu0
      %v618 = vadd.f32 %v253, %v617
      %v619 = vpop.f32.mrf.mxu0
      %v620 = vpop.f32.mrf.mxu0
      %v621 = vadd.f32 %v253, %v620
      %v622 = vpop.f32.mrf.mxu0
      %623 = vmatprep.mubr.bf16.mxu0 0
      %624 = vmatmul.mubr.bf16.gmra.mxu0 %v462
      %v625 = vpop.f32.mrf.mxu0
      %v626 = vadd.f32 %v253, %v625
      %v627 = vpop.f32.mrf.mxu0
      %v628 = vpop.f32.mrf.mxu0
      %v629 = vadd.f32 %v253, %v628
      %v630 = vpop.f32.mrf.mxu0
      %631 = vmatprep.mubr.bf16.mxu0 0
      %632 = vmatmul.mubr.bf16.gmra.mxu0 %v465
      %v633 = vpop.f32.mrf.mxu0
      %v634 = vadd.f32 %v253, %v633
      %v635 = vpop.f32.mrf.mxu0
      %v636 = vpop.f32.mrf.mxu0
      %v637 = vadd.f32 %v253, %v636
      %v638 = vpop.f32.mrf.mxu0
      %639 = vmatprep.mubr.bf16.mxu0 0
      %640 = vmatmul.mubr.bf16.gmra.mxu0 %v468
      %v641 = vpop.f32.mrf.mxu0
      %v642 = vadd.f32 %v253, %v641
      %v643 = vpop.f32.mrf.mxu0
      %v644 = vpop.f32.mrf.mxu0
      %v645 = vadd.f32 %v253, %v644
      %v646 = vpop.f32.mrf.mxu0
      %647 = vmatprep.mubr.bf16.mxu0 0
      %648 = vmatmul.mubr.bf16.gmra.mxu0 %v471
      %v649 = vpop.f32.mrf.mxu0
      %v650 = vadd.f32 %v253, %v649
      %v651 = vpop.f32.mrf.mxu0
      %v652 = vpop.f32.mrf.mxu0
      %v653 = vadd.f32 %v253, %v652
      %v654 = vpop.f32.mrf.mxu0
      %655 = vmatprep.mubr.bf16.mxu0 0
      %656 = vmatmul.mubr.bf16.gmra.mxu0 %v474
      %v657 = vpop.f32.mrf.mxu0
      %v658 = vadd.f32 %v253, %v657
      %v659 = vpop.f32.mrf.mxu0
      %v660 = vpop.f32.mrf.mxu0
      %v661 = vadd.f32 %v253, %v660
      %v662 = vpop.f32.mrf.mxu0
      %663 = vmatprep.mubr.bf16.mxu0 0
      %664 = vmatmul.mubr.bf16.gmra.mxu0 %v477
      %v665 = vpop.f32.mrf.mxu0
      %v666 = vadd.f32 %v253, %v665
      %v667 = vpop.f32.mrf.mxu0
      %v668 = vpop.f32.mrf.mxu0
      %v669 = vadd.f32 %v253, %v668
      %v670 = vpop.f32.mrf.mxu0
      %671 = vmatprep.mubr.bf16.mxu0 0
      %672 = vmatmul.mubr.bf16.gmra.mxu0 %v480
      %v673 = vpop.f32.mrf.mxu0
      %v674 = vadd.f32 %v253, %v673
      %v675 = vpop.f32.mrf.mxu0
      %v676 = vpop.f32.mrf.mxu0
      %v677 = vadd.f32 %v253, %v676
      %v678 = vpop.f32.mrf.mxu0
      %679 = vmatprep.mubr.bf16.mxu0 0
      %680 = vmatmul.mubr.bf16.gmra.mxu0 %v483
      %v681 = vpop.f32.mrf.mxu0
      %v682 = vadd.f32 %v253, %v681
      %v683 = vpop.f32.mrf.mxu0
      %v684 = vpop.f32.mrf.mxu0
      %v685 = vadd.f32 %v253, %v684
      %v686 = vpop.f32.mrf.mxu0
      %687 = vmatprep.mubr.bf16.mxu0 0
      %688 = vmatmul.mubr.bf16.gmra.mxu0 %v486
      %v689 = vpop.f32.mrf.mxu0
      %v690 = vadd.f32 %v253, %v689
      %v691 = vpop.f32.mrf.mxu0
      %v692 = vpop.f32.mrf.mxu0
      %v693 = vadd.f32 %v253, %v692
      %v694 = vpop.f32.mrf.mxu0
      %695 = vmatprep.mubr.bf16.mxu0 0
      %696 = vmatmul.mubr.bf16.gmra.mxu0 %v489
      %v697 = vpop.f32.mrf.mxu0
      %v698 = vadd.f32 %v253, %v697
      %v699 = vpop.f32.mrf.mxu0
      %v700 = vpop.f32.mrf.mxu0
      %v701 = vadd.f32 %v253, %v700
      %v702 = vpop.f32.mrf.mxu0
      %703 = vmatprep.mubr.bf16.mxu0 0
      %704 = vmatmul.mubr.bf16.gmra.mxu0 %v492
      %v705 = vpop.f32.mrf.mxu0
      %v706 = vadd.f32 %v253, %v705
      %v707 = vpop.f32.mrf.mxu0
      %v708 = vpop.f32.mrf.mxu0
      %v709 = vadd.f32 %v253, %v708
      %v710 = vpop.f32.mrf.mxu0
      %711 = vmatprep.mubr.bf16.mxu0 0
      %712 = vmatmul.mubr.bf16.gmra.mxu0 %v495
      %v713 = vpop.f32.mrf.mxu0
      %v714 = vadd.f32 %v253, %v713
      %v715 = vpop.f32.mrf.mxu0
      %v716 = vpop.f32.mrf.mxu0
      %v717 = vadd.f32 %v253, %v716
      %v718 = vpop.f32.mrf.mxu0
      %719 = vmatprep.mubr.bf16.mxu0 0
      %720 = vmatmul.mubr.bf16.gmra.mxu0 %v498
      %v721 = vpop.f32.mrf.mxu0
      %v722 = vadd.f32 %v253, %v721
      %v723 = vpop.f32.mrf.mxu0
      %v724 = vpop.f32.mrf.mxu0
      %v725 = vadd.f32 %v253, %v724
      %v726 = vpop.f32.mrf.mxu0
      %727 = vmatprep.mubr.bf16.mxu0 0
      %728 = vmatmul.mubr.bf16.gmra.mxu0 %v501
      %v729 = vpop.f32.mrf.mxu0
      %v730 = vadd.f32 %v253, %v729
      %v731 = vpop.f32.mrf.mxu0
      %v732 = vpop.f32.mrf.mxu0
      %v733 = vadd.f32 %v253, %v732
      %v734 = vpop.f32.mrf.mxu0
      %735 = vmatprep.mubr.bf16.mxu0 0
      %736 = vmatmul.mubr.bf16.gmra.mxu0 %v504
      %v737 = vpop.f32.mrf.mxu0
      %v738 = vadd.f32 %v253, %v737
      %v739 = vpop.f32.mrf.mxu0
      %v740 = vpop.f32.mrf.mxu0
      %v741 = vadd.f32 %v253, %v740
      %v742 = vpop.f32.mrf.mxu0
      %743 = vmatprep.mubr.bf16.mxu0 0
      %744 = vmatmul.mubr.bf16.gmra.mxu0 %v507
      %v745 = vpop.f32.mrf.mxu0
      %v746 = vadd.f32 %v253, %v745
      %v747 = vpop.f32.mrf.mxu0
      %v748 = vpop.f32.mrf.mxu0
      %v749 = vadd.f32 %v253, %v748
      %v750 = vpop.f32.mrf.mxu0
      %751 = vmatprep.mubr.bf16.mxu0 0
      %752 = vmatmul.mubr.bf16.gmra.mxu0 %v510
      %v753 = vpop.f32.mrf.mxu0
      %v754 = vadd.f32 %v253, %v753
      %v755 = vpop.f32.mrf.mxu0
      %v756 = vpop.f32.mrf.mxu0
      %v757 = vadd.f32 %v253, %v756
      %v758 = vpop.f32.mrf.mxu0
      %759 = vmatprep.mubr.bf16.mxu0 0
      %760 = vmatmul.mubr.bf16.gmra.mxu0 %v513
      %v761 = vpop.f32.mrf.mxu0
      %v762 = vadd.f32 %v253, %v761
      %v763 = vpop.f32.mrf.mxu0
      %v764 = vpop.f32.mrf.mxu0
      %v765 = vadd.f32 %v253, %v764
      %v766 = vpop.f32.mrf.mxu0
      %767 = vmatprep.mubr.bf16.mxu0 0
      %768 = vmatmul.mubr.bf16.gmra.mxu0 %v516
      %v769 = vpop.f32.mrf.mxu0
      %v770 = vadd.f32 %v253, %v769
      %v771 = vpop.f32.mrf.mxu0
      %v772 = vpop.f32.mrf.mxu0
      %v773 = vadd.f32 %v253, %v772
      %v774 = vpop.f32.mrf.mxu0
      %775 = vmatprep.mubr.bf16.mxu0 0
      %776 = vmatmul.mubr.bf16.gmra.mxu0 %v519
      %v777 = vpop.f32.mrf.mxu0
      %v778 = vadd.f32 %v253, %v777
      %v779 = vpop.f32.mrf.mxu0
      %v780 = vpop.f32.mrf.mxu0
      %v781 = vadd.f32 %v253, %v780
      %v782 = vpop.f32.mrf.mxu0
      %783 = vmatprep.mubr.bf16.mxu0 0
      %784 = vmatmul.mubr.bf16.gmra.mxu0 %v522
      %v785 = vpop.f32.mrf.mxu0
      %v786 = vadd.f32 %v253, %v785
      %v787 = vpop.f32.mrf.mxu0
      %v788 = vpop.f32.mrf.mxu0
      %v789 = vadd.f32 %v253, %v788
      %v790 = vpop.f32.mrf.mxu0
      %791 = vmatprep.mubr.bf16.mxu0 0
      %792 = vmatmul.mubr.bf16.gmra.mxu0 %v525
      %v793 = vpop.f32.mrf.mxu0
      %v794 = vadd.f32 %v253, %v793
      %v795 = vpop.f32.mrf.mxu0
      %v796 = vpop.f32.mrf.mxu0
      %v797 = vadd.f32 %v253, %v796
      %v798 = vpop.f32.mrf.mxu0
      %799 = vmatprep.mubr.bf16.mxu0 0
      %800 = vmatmul.mubr.bf16.gmra.mxu0 %v528
      %v801 = vpop.f32.mrf.mxu0
      %v802 = vadd.f32 %v253, %v801
      %v803 = vpop.f32.mrf.mxu0
      %v804 = vpop.f32.mrf.mxu0
      %v805 = vadd.f32 %v253, %v804
      %v806 = vpop.f32.mrf.mxu0
      %807 = vmatprep.mubr.bf16.mxu0 0
      %808 = vmatmul.mubr.bf16.gmra.mxu0 %v531
      %v809 = vpop.f32.mrf.mxu0
      %v810 = vadd.f32 %v253, %v809
      %v811 = vpop.f32.mrf.mxu0
      %v812 = vpop.f32.mrf.mxu0
      %v813 = vadd.f32 %v253, %v812
      %v814 = vpop.f32.mrf.mxu0
      %815 = vmatprep.mubr.bf16.mxu0 0
      %816 = vmatmul.mubr.bf16.gmra.mxu0 %v534
      %v817 = vpop.f32.mrf.mxu0
      %v818 = vadd.f32 %v253, %v817
      %v819 = vpop.f32.mrf.mxu0
      %v820 = vpop.f32.mrf.mxu0
      %v821 = vadd.f32 %v253, %v820
      %v822 = vpop.f32.mrf.mxu0
      %823 = vmatprep.mubr.bf16.mxu0 0
      %824 = vmatmul.mubr.bf16.gmra.mxu0 %v537
      %v825 = vpop.f32.mrf.mxu0
      %v826 = vadd.f32 %v253, %v825
      %v827 = vpop.f32.mrf.mxu0
      %v828 = vpop.f32.mrf.mxu0
      %v829 = vadd.f32 %v253, %v828
      %v830 = vpop.f32.mrf.mxu0
      %831 = vdwg.mxu0
      %vm832 = vcmp.ge.f32.partialorder %v578, 0.0
      %vm833 = vcmp.ge.f32.partialorder %v581, 0.0
      %vm834 = vcmp.ge.f32.partialorder %v586, 0.0
      %vm835 = vcmp.ge.f32.partialorder %v589, 0.0
      %vm836 = vcmp.ge.f32.partialorder %v594, 0.0
      %vm837 = vcmp.ge.f32.partialorder %v597, 0.0
      %vm838 = vcmp.ge.f32.partialorder %v602, 0.0
      %vm839 = vcmp.ge.f32.partialorder %v605, 0.0
      %vm840 = vcmp.ge.f32.partialorder %v610, 0.0
      %vm841 = vcmp.ge.f32.partialorder %v613, 0.0
      %vm842 = vcmp.ge.f32.partialorder %v618, 0.0
      %vm843 = vcmp.ge.f32.partialorder %v621, 0.0
      %vm844 = vcmp.ge.f32.partialorder %v626, 0.0
      %vm845 = vcmp.ge.f32.partialorder %v629, 0.0
      %vm846 = vcmp.ge.f32.partialorder %v634, 0.0
      %vm847 = vcmp.ge.f32.partialorder %v637, 0.0
      %vm848 = vcmp.ge.f32.partialorder %v642, 0.0
      %vm849 = vcmp.ge.f32.partialorder %v645, 0.0
      %vm850 = vcmp.ge.f32.partialorder %v650, 0.0
      %vm851 = vcmp.ge.f32.partialorder %v653, 0.0
      %vm852 = vcmp.ge.f32.partialorder %v658, 0.0
      %vm853 = vcmp.ge.f32.partialorder %v661, 0.0
      %vm854 = vcmp.ge.f32.partialorder %v666, 0.0
      %vm855 = vcmp.ge.f32.partialorder %v669, 0.0
      %vm856 = vcmp.ge.f32.partialorder %v674, 0.0
      %vm857 = vcmp.ge.f32.partialorder %v677, 0.0
      %vm858 = vcmp.ge.f32.partialorder %v682, 0.0
      %vm859 = vcmp.ge.f32.partialorder %v685, 0.0
      %vm860 = vcmp.ge.f32.partialorder %v690, 0.0
      %vm861 = vcmp.ge.f32.partialorder %v693, 0.0
      %vm862 = vcmp.ge.f32.partialorder %v698, 0.0
      %vm863 = vcmp.ge.f32.partialorder %v701, 0.0
      %vm864 = vcmp.ge.f32.partialorder %v706, 0.0
      %vm865 = vcmp.ge.f32.partialorder %v709, 0.0
      %vm866 = vcmp.ge.f32.partialorder %v714, 0.0
      %vm867 = vcmp.ge.f32.partialorder %v717, 0.0
      %vm868 = vcmp.ge.f32.partialorder %v722, 0.0
      %vm869 = vcmp.ge.f32.partialorder %v725, 0.0
      %vm870 = vcmp.ge.f32.partialorder %v730, 0.0
      %vm871 = vcmp.ge.f32.partialorder %v733, 0.0
      %vm872 = vcmp.ge.f32.partialorder %v738, 0.0
      %vm873 = vcmp.ge.f32.partialorder %v741, 0.0
      %vm874 = vcmp.ge.f32.partialorder %v746, 0.0
      %vm875 = vcmp.ge.f32.partialorder %v749, 0.0
      %vm876 = vcmp.ge.f32.partialorder %v754, 0.0
      %vm877 = vcmp.ge.f32.partialorder %v757, 0.0
      %vm878 = vcmp.ge.f32.partialorder %v762, 0.0
      %vm879 = vcmp.ge.f32.partialorder %v765, 0.0
      %vm880 = vcmp.ge.f32.partialorder %v770, 0.0
      %vm881 = vcmp.ge.f32.partialorder %v773, 0.0
      %vm882 = vcmp.ge.f32.partialorder %v778, 0.0
      %vm883 = vcmp.ge.f32.partialorder %v781, 0.0
      %vm884 = vcmp.ge.f32.partialorder %v786, 0.0
      %vm885 = vcmp.ge.f32.partialorder %v789, 0.0
      %vm886 = vcmp.ge.f32.partialorder %v794, 0.0
      %vm887 = vcmp.ge.f32.partialorder %v797, 0.0
      %vm888 = vcmp.ge.f32.partialorder %v802, 0.0
      %vm889 = vcmp.ge.f32.partialorder %v805, 0.0
      %vm890 = vcmp.ge.f32.partialorder %v810, 0.0
      %vm891 = vcmp.ge.f32.partialorder %v813, 0.0
      %vm892 = vcmp.ge.f32.partialorder %v818, 0.0
      %vm893 = vcmp.ge.f32.partialorder %v821, 0.0
      %vm894 = vcmp.ge.f32.partialorder %v826, 0.0
      %vm895 = vcmp.ge.f32.partialorder %v829, 0.0
      %v896 = vmul.f32 %v578, 0.01
      %v897 = vmul.f32 %v581, 0.01
      %v898 = vmul.f32 %v586, 0.01
      %v899 = vmul.f32 %v589, 0.01
      %v900 = vmul.f32 %v594, 0.01
      %v901 = vmul.f32 %v597, 0.01
      %v902 = vmul.f32 %v602, 0.01
      %v903 = vmul.f32 %v605, 0.01
      %v904 = vmul.f32 %v610, 0.01
      %v905 = vmul.f32 %v613, 0.01
      %v906 = vmul.f32 %v618, 0.01
      %v907 = vmul.f32 %v621, 0.01
      %v908 = vmul.f32 %v626, 0.01
      %v909 = vmul.f32 %v629, 0.01
      %v910 = vmul.f32 %v634, 0.01
      %v911 = vmul.f32 %v637, 0.01
      %v912 = vmul.f32 %v642, 0.01
      %v913 = vmul.f32 %v645, 0.01
      %v914 = vmul.f32 %v650, 0.01
      %v915 = vmul.f32 %v653, 0.01
      %v916 = vmul.f32 %v658, 0.01
      %v917 = vmul.f32 %v661, 0.01
      %v918 = vmul.f32 %v666, 0.01
      %v919 = vmul.f32 %v669, 0.01
      %v920 = vmul.f32 %v674, 0.01
      %v921 = vmul.f32 %v677, 0.01
      %v922 = vmul.f32 %v682, 0.01
      %v923 = vmul.f32 %v685, 0.01
      %v924 = vmul.f32 %v690, 0.01
      %v925 = vmul.f32 %v693, 0.01
      %v926 = vmul.f32 %v698, 0.01
      %v927 = vmul.f32 %v701, 0.01
      %v928 = vmul.f32 %v706, 0.01
      %v929 = vmul.f32 %v709, 0.01
      %v930 = vmul.f32 %v714, 0.01
      %v931 = vmul.f32 %v717, 0.01
      %v932 = vmul.f32 %v722, 0.01
      %v933 = vmul.f32 %v725, 0.01
      %v934 = vmul.f32 %v730, 0.01
      %v935 = vmul.f32 %v733, 0.01
      %v936 = vmul.f32 %v738, 0.01
      %v937 = vmul.f32 %v741, 0.01
      %v938 = vmul.f32 %v746, 0.01
      %v939 = vmul.f32 %v749, 0.01
      %v940 = vmul.f32 %v754, 0.01
      %v941 = vmul.f32 %v757, 0.01
      %v942 = vmul.f32 %v762, 0.01
      %v943 = vmul.f32 %v765, 0.01
      %v944 = vmul.f32 %v770, 0.01
      %v945 = vmul.f32 %v773, 0.01
      %v946 = vmul.f32 %v778, 0.01
      %v947 = vmul.f32 %v781, 0.01
      %v948 = vmul.f32 %v786, 0.01
      %v949 = vmul.f32 %v789, 0.01
      %v950 = vmul.f32 %v794, 0.01
      %v951 = vmul.f32 %v797, 0.01
      %v952 = vmul.f32 %v802, 0.01
      %v953 = vmul.f32 %v805, 0.01
      %v954 = vmul.f32 %v810, 0.01
      %v955 = vmul.f32 %v813, 0.01
      %v956 = vmul.f32 %v818, 0.01
      %v957 = vmul.f32 %v821, 0.01
      %v958 = vmul.f32 %v826, 0.01
      %v959 = vmul.f32 %v829, 0.01
      %v960 = vsel %vm832, %v578, %v896
      %v961 = vsel %vm833, %v581, %v897
      %v962 = vsel %vm834, %v586, %v898
      %v963 = vsel %vm835, %v589, %v899
      %v964 = vsel %vm836, %v594, %v900
      %v965 = vsel %vm837, %v597, %v901
      %v966 = vsel %vm838, %v602, %v902
      %v967 = vsel %vm839, %v605, %v903
      %v968 = vsel %vm840, %v610, %v904
      %v969 = vsel %vm841, %v613, %v905
      %v970 = vsel %vm842, %v618, %v906
      %v971 = vsel %vm843, %v621, %v907
      %v972 = vsel %vm844, %v626, %v908
      %v973 = vsel %vm845, %v629, %v909
      %v974 = vsel %vm846, %v634, %v910
      %v975 = vsel %vm847, %v637, %v911
      %v976 = vsel %vm848, %v642, %v912
      %v977 = vsel %vm849, %v645, %v913
      %v978 = vsel %vm850, %v650, %v914
      %v979 = vsel %vm851, %v653, %v915
      %v980 = vsel %vm852, %v658, %v916
      %v981 = vsel %vm853, %v661, %v917
      %v982 = vsel %vm854, %v666, %v918
      %v983 = vsel %vm855, %v669, %v919
      %v984 = vsel %vm856, %v674, %v920
      %v985 = vsel %vm857, %v677, %v921
      %v986 = vsel %vm858, %v682, %v922
      %v987 = vsel %vm859, %v685, %v923
      %v988 = vsel %vm860, %v690, %v924
      %v989 = vsel %vm861, %v693, %v925
      %v990 = vsel %vm862, %v698, %v926
      %v991 = vsel %vm863, %v701, %v927
      %v992 = vsel %vm864, %v706, %v928
      %v993 = vsel %vm865, %v709, %v929
      %v994 = vsel %vm866, %v714, %v930
      %v995 = vsel %vm867, %v717, %v931
      %v996 = vsel %vm868, %v722, %v932
      %v997 = vsel %vm869, %v725, %v933
      %v998 = vsel %vm870, %v730, %v934
      %v999 = vsel %vm871, %v733, %v935
      %v1000 = vsel %vm872, %v738, %v936
      %v1001 = vsel %vm873, %v741, %v937
      %v1002 = vsel %vm874, %v746, %v938
      %v1003 = vsel %vm875, %v749, %v939
      %v1004 = vsel %vm876, %v754, %v940
      %v1005 = vsel %vm877, %v757, %v941
      %v1006 = vsel %vm878, %v762, %v942
      %v1007 = vsel %vm879, %v765, %v943
      %v1008 = vsel %vm880, %v770, %v944
      %v1009 = vsel %vm881, %v773, %v945
      %v1010 = vsel %vm882, %v778, %v946
      %v1011 = vsel %vm883, %v781, %v947
      %v1012 = vsel %vm884, %v786, %v948
      %v1013 = vsel %vm885, %v789, %v949
      %v1014 = vsel %vm886, %v794, %v950
      %v1015 = vsel %vm887, %v797, %v951
      %v1016 = vsel %vm888, %v802, %v952
      %v1017 = vsel %vm889, %v805, %v953
      %v1018 = vsel %vm890, %v810, %v954
      %v1019 = vsel %vm891, %v813, %v955
      %v1020 = vsel %vm892, %v818, %v956
      %v1021 = vsel %vm893, %v821, %v957
      %v1022 = vsel %vm894, %v826, %v958
      %v1023 = vsel %vm895, %v829, %v959
      %v1024 = vpack.c.bf16 %v961, %v960
      %v1025 = vpack.c.bf16 %v963, %v962
      %v1026 = vpack.c.bf16 %v965, %v964
      %v1027 = vpack.c.bf16 %v967, %v966
      %v1028 = vpack.c.bf16 %v969, %v968
      %v1029 = vpack.c.bf16 %v971, %v970
      %v1030 = vpack.c.bf16 %v973, %v972
      %v1031 = vpack.c.bf16 %v975, %v974
      %v1032 = vpack.c.bf16 %v977, %v976
      %v1033 = vpack.c.bf16 %v979, %v978
      %v1034 = vpack.c.bf16 %v981, %v980
      %v1035 = vpack.c.bf16 %v983, %v982
      %v1036 = vpack.c.bf16 %v985, %v984
      %v1037 = vpack.c.bf16 %v987, %v986
      %v1038 = vpack.c.bf16 %v989, %v988
      %v1039 = vpack.c.bf16 %v991, %v990
      %v1040 = vpack.c.bf16 %v993, %v992
      %v1041 = vpack.c.bf16 %v995, %v994
      %v1042 = vpack.c.bf16 %v997, %v996
      %v1043 = vpack.c.bf16 %v999, %v998
      %v1044 = vpack.c.bf16 %v1001, %v1000
      %v1045 = vpack.c.bf16 %v1003, %v1002
      %v1046 = vpack.c.bf16 %v1005, %v1004
      %v1047 = vpack.c.bf16 %v1007, %v1006
      %v1048 = vpack.c.bf16 %v1009, %v1008
      %v1049 = vpack.c.bf16 %v1011, %v1010
      %v1050 = vpack.c.bf16 %v1013, %v1012
      %v1051 = vpack.c.bf16 %v1015, %v1014
      %v1052 = vpack.c.bf16 %v1017, %v1016
      %v1053 = vpack.c.bf16 %v1019, %v1018
      %v1054 = vpack.c.bf16 %v1021, %v1020
      %v1055 = vpack.c.bf16 %v1023, %v1022
      %v1088 = vunpack.c.l.b16 %v1024
      %v1089 = vunpack.c.h.b16 %v1024
      %v1090 = vunpack.c.l.b16 %v1025
      %v1091 = vunpack.c.h.b16 %v1025
      %v1092 = vunpack.c.l.b16 %v1026
      %v1093 = vunpack.c.h.b16 %v1026
      %v1094 = vunpack.c.l.b16 %v1027
      %v1095 = vunpack.c.h.b16 %v1027
      %v1096 = vunpack.c.l.b16 %v1028
      %v1097 = vunpack.c.h.b16 %v1028
      %v1098 = vunpack.c.l.b16 %v1029
      %v1099 = vunpack.c.h.b16 %v1029
      %v1100 = vunpack.c.l.b16 %v1030
      %v1101 = vunpack.c.h.b16 %v1030
      %v1102 = vunpack.c.l.b16 %v1031
      %v1103 = vunpack.c.h.b16 %v1031
      %v1104 = vunpack.c.l.b16 %v1032
      %v1105 = vunpack.c.h.b16 %v1032
      %v1106 = vunpack.c.l.b16 %v1033
      %v1107 = vunpack.c.h.b16 %v1033
      %v1108 = vunpack.c.l.b16 %v1034
      %v1109 = vunpack.c.h.b16 %v1034
      %v1110 = vunpack.c.l.b16 %v1035
      %v1111 = vunpack.c.h.b16 %v1035
      %v1112 = vunpack.c.l.b16 %v1036
      %v1113 = vunpack.c.h.b16 %v1036
      %v1114 = vunpack.c.l.b16 %v1037
      %v1115 = vunpack.c.h.b16 %v1037
      %v1116 = vunpack.c.l.b16 %v1038
      %v1117 = vunpack.c.h.b16 %v1038
      %v1118 = vunpack.c.l.b16 %v1039
      %v1119 = vunpack.c.h.b16 %v1039
      %v1120 = vunpack.c.l.b16 %v1040
      %v1121 = vunpack.c.h.b16 %v1040
      %v1122 = vunpack.c.l.b16 %v1041
      %v1123 = vunpack.c.h.b16 %v1041
      %v1124 = vunpack.c.l.b16 %v1042
      %v1125 = vunpack.c.h.b16 %v1042
      %v1126 = vunpack.c.l.b16 %v1043
      %v1127 = vunpack.c.h.b16 %v1043
      %v1128 = vunpack.c.l.b16 %v1044
      %v1129 = vunpack.c.h.b16 %v1044
      %v1130 = vunpack.c.l.b16 %v1045
      %v1131 = vunpack.c.h.b16 %v1045
      %v1132 = vunpack.c.l.b16 %v1046
      %v1133 = vunpack.c.h.b16 %v1046
      %v1134 = vunpack.c.l.b16 %v1047
      %v1135 = vunpack.c.h.b16 %v1047
      %v1136 = vunpack.c.l.b16 %v1048
      %v1137 = vunpack.c.h.b16 %v1048
      %v1138 = vunpack.c.l.b16 %v1049
      %v1139 = vunpack.c.h.b16 %v1049
      %v1140 = vunpack.c.l.b16 %v1050
      %v1141 = vunpack.c.h.b16 %v1050
      %v1142 = vunpack.c.l.b16 %v1051
      %v1143 = vunpack.c.h.b16 %v1051
      %v1144 = vunpack.c.l.b16 %v1052
      %v1145 = vunpack.c.h.b16 %v1052
      %v1146 = vunpack.c.l.b16 %v1053
      %v1147 = vunpack.c.h.b16 %v1053
      %v1148 = vunpack.c.l.b16 %v1054
      %v1149 = vunpack.c.h.b16 %v1054
      %v1150 = vunpack.c.l.b16 %v1055
      %v1151 = vunpack.c.h.b16 %v1055
      %v1152 = vpack.c.b16 %v1088, %v1088
      %v1153 = vpack.c.b16 %v1089, %v1089
      %v1154 = vpack.c.b16 %v1090, %v1090
      %v1155 = vpack.c.b16 %v1091, %v1091
      %v1156 = vpack.c.b16 %v1092, %v1092
      %v1157 = vpack.c.b16 %v1093, %v1093
      %v1158 = vpack.c.b16 %v1094, %v1094
      %v1159 = vpack.c.b16 %v1095, %v1095
      %v1160 = vpack.c.b16 %v1096, %v1096
      %v1161 = vpack.c.b16 %v1097, %v1097
      %v1162 = vpack.c.b16 %v1098, %v1098
      %v1163 = vpack.c.b16 %v1099, %v1099
      %v1164 = vpack.c.b16 %v1100, %v1100
      %v1165 = vpack.c.b16 %v1101, %v1101
      %v1166 = vpack.c.b16 %v1102, %v1102
      %v1167 = vpack.c.b16 %v1103, %v1103
      %v1168 = vpack.c.b16 %v1104, %v1104
      %v1169 = vpack.c.b16 %v1105, %v1105
      %v1170 = vpack.c.b16 %v1106, %v1106
      %v1171 = vpack.c.b16 %v1107, %v1107
      %v1172 = vpack.c.b16 %v1108, %v1108
      %v1173 = vpack.c.b16 %v1109, %v1109
      %v1174 = vpack.c.b16 %v1110, %v1110
      %v1175 = vpack.c.b16 %v1111, %v1111
      %v1176 = vpack.c.b16 %v1112, %v1112
      %v1177 = vpack.c.b16 %v1113, %v1113
      %v1178 = vpack.c.b16 %v1114, %v1114
      %v1179 = vpack.c.b16 %v1115, %v1115
      %v1180 = vpack.c.b16 %v1116, %v1116
      %v1181 = vpack.c.b16 %v1117, %v1117
      %v1182 = vpack.c.b16 %v1118, %v1118
      %v1183 = vpack.c.b16 %v1119, %v1119
      %v1184 = vpack.c.b16 %v1120, %v1120
      %v1185 = vpack.c.b16 %v1121, %v1121
      %v1186 = vpack.c.b16 %v1122, %v1122
      %v1187 = vpack.c.b16 %v1123, %v1123
      %v1188 = vpack.c.b16 %v1124, %v1124
      %v1189 = vpack.c.b16 %v1125, %v1125
      %v1190 = vpack.c.b16 %v1126, %v1126
      %v1191 = vpack.c.b16 %v1127, %v1127
      %v1192 = vpack.c.b16 %v1128, %v1128
      %v1193 = vpack.c.b16 %v1129, %v1129
      %v1194 = vpack.c.b16 %v1130, %v1130
      %v1195 = vpack.c.b16 %v1131, %v1131
      %v1196 = vpack.c.b16 %v1132, %v1132
      %v1197 = vpack.c.b16 %v1133, %v1133
      %v1198 = vpack.c.b16 %v1134, %v1134
      %v1199 = vpack.c.b16 %v1135, %v1135
      %v1200 = vpack.c.b16 %v1136, %v1136
      %v1201 = vpack.c.b16 %v1137, %v1137
      %v1202 = vpack.c.b16 %v1138, %v1138
      %v1203 = vpack.c.b16 %v1139, %v1139
      %v1204 = vpack.c.b16 %v1140, %v1140
      %v1205 = vpack.c.b16 %v1141, %v1141
      %v1206 = vpack.c.b16 %v1142, %v1142
      %v1207 = vpack.c.b16 %v1143, %v1143
      %v1208 = vpack.c.b16 %v1144, %v1144
      %v1209 = vpack.c.b16 %v1145, %v1145
      %v1210 = vpack.c.b16 %v1146, %v1146
      %v1211 = vpack.c.b16 %v1147, %v1147
      %v1212 = vpack.c.b16 %v1148, %v1148
      %v1213 = vpack.c.b16 %v1149, %v1149
      %v1214 = vpack.c.b16 %v1150, %v1150
      %v1215 = vpack.c.b16 %v1151, %v1151
      %vm1280 = vcmask 60416
      %1281 = vst.msk [vmem:[%s172] sm:$0xf] %vm1280, %v1152
      %1282 = vst.msk [vmem:[%s172 + $0x4] sm:$0xf] %vm1280, %v1153
      %1283 = vst.msk [vmem:[%s172 + $0x8] sm:$0xf] %vm1280, %v1154
      %1284 = vst.msk [vmem:[%s172 + $0xc] sm:$0xf] %vm1280, %v1155
      %1285 = vst.msk [vmem:[%s172 + $0x10] sm:$0xf] %vm1280, %v1156
      %1286 = vst.msk [vmem:[%s172 + $0x14] sm:$0xf] %vm1280, %v1157
      %1287 = vst.msk [vmem:[%s172 + $0x18] sm:$0xf] %vm1280, %v1158
      %1288 = vst.msk [vmem:[%s172 + $0x1c] sm:$0xf] %vm1280, %v1159
      %1289 = vst.msk [vmem:[%s172 + $0x20] sm:$0xf] %vm1280, %v1160
      %1290 = vst.msk [vmem:[%s172 + $0x24] sm:$0xf] %vm1280, %v1161
      %1291 = vst.msk [vmem:[%s172 + $0x28] sm:$0xf] %vm1280, %v1162
      %1292 = vst.msk [vmem:[%s172 + $0x2c] sm:$0xf] %vm1280, %v1163
      %1293 = vst.msk [vmem:[%s172 + $0x30] sm:$0xf] %vm1280, %v1164
      %1294 = vst.msk [vmem:[%s172 + $0x34] sm:$0xf] %vm1280, %v1165
      %1295 = vst.msk [vmem:[%s172 + $0x38] sm:$0xf] %vm1280, %v1166
      %1296 = vst.msk [vmem:[%s172 + $0x3c] sm:$0xf] %vm1280, %v1167
      %1297 = vst.msk [vmem:[%s172 + $0x40] sm:$0xf] %vm1280, %v1168
      %1298 = vst.msk [vmem:[%s172 + $0x44] sm:$0xf] %vm1280, %v1169
      %1299 = vst.msk [vmem:[%s172 + $0x48] sm:$0xf] %vm1280, %v1170
      %1300 = vst.msk [vmem:[%s172 + $0x4c] sm:$0xf] %vm1280, %v1171
      %1301 = vst.msk [vmem:[%s172 + $0x50] sm:$0xf] %vm1280, %v1172
      %1302 = vst.msk [vmem:[%s172 + $0x54] sm:$0xf] %vm1280, %v1173
      %1303 = vst.msk [vmem:[%s172 + $0x58] sm:$0xf] %vm1280, %v1174
      %1304 = vst.msk [vmem:[%s172 + $0x5c] sm:$0xf] %vm1280, %v1175
      %1305 = vst.msk [vmem:[%s172 + $0x60] sm:$0xf] %vm1280, %v1176
      %1306 = vst.msk [vmem:[%s172 + $0x64] sm:$0xf] %vm1280, %v1177
      %1307 = vst.msk [vmem:[%s172 + $0x68] sm:$0xf] %vm1280, %v1178
      %1308 = vst.msk [vmem:[%s172 + $0x6c] sm:$0xf] %vm1280, %v1179
      %1309 = vst.msk [vmem:[%s172 + $0x70] sm:$0xf] %vm1280, %v1180
      %1310 = vst.msk [vmem:[%s172 + $0x74] sm:$0xf] %vm1280, %v1181
      %1311 = vst.msk [vmem:[%s172 + $0x78] sm:$0xf] %vm1280, %v1182
      %1312 = vst.msk [vmem:[%s172 + $0x7c] sm:$0xf] %vm1280, %v1183
      %1313 = vst.msk [vmem:[%s172 + $0x80] sm:$0xf] %vm1280, %v1184
      %1314 = vst.msk [vmem:[%s172 + $0x84] sm:$0xf] %vm1280, %v1185
      %1315 = vst.msk [vmem:[%s172 + $0x88] sm:$0xf] %vm1280, %v1186
      %1316 = vst.msk [vmem:[%s172 + $0x8c] sm:$0xf] %vm1280, %v1187
      %1317 = vst.msk [vmem:[%s172 + $0x90] sm:$0xf] %vm1280, %v1188
      %1318 = vst.msk [vmem:[%s172 + $0x94] sm:$0xf] %vm1280, %v1189
      %1319 = vst.msk [vmem:[%s172 + $0x98] sm:$0xf] %vm1280, %v1190
      %1320 = vst.msk [vmem:[%s172 + $0x9c] sm:$0xf] %vm1280, %v1191
      %1321 = vst.msk [vmem:[%s172 + $0xa0] sm:$0xf] %vm1280, %v1192
      %1322 = vst.msk [vmem:[%s172 + $0xa4] sm:$0xf] %vm1280, %v1193
      %1323 = vst.msk [vmem:[%s172 + $0xa8] sm:$0xf] %vm1280, %v1194
      %1324 = vst.msk [vmem:[%s172 + $0xac] sm:$0xf] %vm1280, %v1195
      %1325 = vst.msk [vmem:[%s172 + $0xb0] sm:$0xf] %vm1280, %v1196
      %1326 = vst.msk [vmem:[%s172 + $0xb4] sm:$0xf] %vm1280, %v1197
      %1327 = vst.msk [vmem:[%s172 + $0xb8] sm:$0xf] %vm1280, %v1198
      %1328 = vst.msk [vmem:[%s172 + $0xbc] sm:$0xf] %vm1280, %v1199
      %1329 = vst.msk [vmem:[%s172 + $0xc0] sm:$0xf] %vm1280, %v1200
      %1330 = vst.msk [vmem:[%s172 + $0xc4] sm:$0xf] %vm1280, %v1201
      %1331 = vst.msk [vmem:[%s172 + $0xc8] sm:$0xf] %vm1280, %v1202
      %1332 = vst.msk [vmem:[%s172 + $0xcc] sm:$0xf] %vm1280, %v1203
      %1333 = vst.msk [vmem:[%s172 + $0xd0] sm:$0xf] %vm1280, %v1204
      %1334 = vst.msk [vmem:[%s172 + $0xd4] sm:$0xf] %vm1280, %v1205
      %1335 = vst.msk [vmem:[%s172 + $0xd8] sm:$0xf] %vm1280, %v1206
      %1336 = vst.msk [vmem:[%s172 + $0xdc] sm:$0xf] %vm1280, %v1207
      %1337 = vst.msk [vmem:[%s172 + $0xe0] sm:$0xf] %vm1280, %v1208
      %1338 = vst.msk [vmem:[%s172 + $0xe4] sm:$0xf] %vm1280, %v1209
      %1339 = vst.msk [vmem:[%s172 + $0xe8] sm:$0xf] %vm1280, %v1210
      %1340 = vst.msk [vmem:[%s172 + $0xec] sm:$0xf] %vm1280, %v1211
      %1341 = vst.msk [vmem:[%s172 + $0xf0] sm:$0xf] %vm1280, %v1212
      %1342 = vst.msk [vmem:[%s172 + $0xf4] sm:$0xf] %vm1280, %v1213
      %1343 = vst.msk [vmem:[%s172 + $0xf8] sm:$0xf] %vm1280, %v1214
      %1344 = vst.msk [vmem:[%s172 + $0xfc] sm:$0xf] %vm1280, %v1215
      %s1345 = smul.u32 64, %s14
      %p1346 = scmp.lt.s32.totalorder %s1345, 255
      %s1347 = scalar_select %p1346, %s1345, 255
      %s1348 = smul.addr %s1347, 4
      %s1349 = scalar_lea.vmem %s3, %s1348
      // Predicated region
      $region33: #{decoder_forward.31} parent=31 // pred_check
        %p1350 = pneg %p100
      $region34: #{decoder_forward.31} parent=31 // pred_check_branch
        %1352 = sbr.rel (%p1350) target = $region36
      $region35: #{decoder_forward.31} parent=31 // pred_region
        %s1353 = smul.u32 64, %s14
      $region36: #{decoder_forward.31} parent=31 // pred_fallthru
        _
    $region32: #{decoder_forward.31} parent=5 // pred_fallthru
      _
    %p1354 = scmp.le.s32.totalorder 2, %s9
    // Predicated region
    $region37: #{decoder_forward.31} parent=5 // pred_check
      %p1355 = pneg %p1354
    $region38: #{decoder_forward.31} parent=5 // pred_check_branch
      %1357 = sbr.rel (%p1355) target = $region40
    $region39: #{decoder_forward.31} parent=5 // pred_region
      %s1358 = ssub.s32 %s9, 2
      // Predicated region
      $region41: #{decoder_forward.31} parent=39 // pred_check
        %p1359 = pneg %p106
      $region42: #{decoder_forward.31} parent=39 // pred_check_branch
        %1361 = sbr.rel (%p1359) target = $region44
      $region43: #{decoder_forward.31} parent=39 // pred_region
        %s1362 = smul.u32 64, %s15
        %p1363 = scmp.lt.s32.totalorder %s1362, 255
        %s1364 = scalar_select %p1363, %s1362, 255
        %s1365 = smul.addr %s1364, 4
        %s1366 = scalar_lea.vmem %s3, %s1365
      $region44: #{decoder_forward.31} parent=39 // pred_fallthru
        _
    $region40: #{decoder_forward.31} parent=5 // pred_fallthru
      _
  $region6: #{decoder_forward.31} parent=0 // loop_footer
    %s13 = sadd.s32 1, %s9
  $region7: #{decoder_forward.31} parent=0 // loop_footer_branch
    %8 = sbr.rel target = $region3
  $region8: #{decoder_forward.31} parent=0 // loop_exit
    _

// kernel: decoder_forward.32
$region0: #{decoder_forward.32}
  #allocation0 [shape = 'u32[]', space=smem, size = 0x4, offset = 0x4, fixed_abs, tag = 'smem constant byte address 0x4 - core index']
  #allocation1 [shape = 'u32[144,128]{1,0:T(1,128)}', space=vmem, size = 0x12000, scoped, tag = 'internal scratch']
  %s0 = inlined_call_operand.vmem [shape: bf16[2048,36], index: 0, kind: input, shape index: {}]
  %s1 = inlined_call_operand.vmem [shape: bf16[36,8], index: 1, kind: input, shape index: {}]
  %s2 = inlined_call_operand.vmem [shape: f32[1,8], index: 2, kind: input, shape index: {}]
  %s3 = inlined_call_operand.vmem [shape: bf16[2048,8], index: 3, kind: output, shape index: {}]
  %s4 = sld [smem:[#allocation0]]
  $region45: #{decoder_forward.32} parent=0
    _
  %s6 = ssub.s32 1, %s4
  %s7 = scalar_select 0, %s6, %s4
  loop: start=0, step=1, limit=6
  $region2: #{decoder_forward.32} parent=0 // loop_pre_header
    _
  $region3: #{decoder_forward.32} parent=0 // loop_header
    %s9 = sphi 0, %s13
    %p10 = scmp.ge.s32.totalorder %s9, 6
    %s19 = sphi 0, %s21
    %s22 = sphi 0, %s19
    %s23 = sphi 0, %s22
    %s39 = sphi 0, %s23
    %s43 = sphi 0, %s43
    %s45 = sphi 0, %s43
    %s46 = sphi 0, %s45
    %s60 = sphi 0, %s46
    %s64 = sphi 0, %s64
    %s66 = sphi 0, %s64
    %s67 = sphi 0, %s66
    %s81 = sphi 0, %s67
    %s87 = sphi 0, %s89
    %s90 = sphi 0, %s87
    %s91 = sphi 0, %s90
    %s107 = sphi 0, %s91
  $region4: #{decoder_forward.32} parent=0 // loop_header_branch
    %12 = sbr.rel (%p10) target = $region8
  $region5: #{decoder_forward.32} parent=0 // loop_body
    %s14 = ssub.s32 %s9, 1
    %s15 = ssub.s32 %s9, 2
    %s16 = sadd.s32 %s9, 1
    %s17 = ssub.s32 %s9, %s16
    %p18 = scmp.eq.s32.totalorder %s17, 0
    %s20 = sadd.s32 %s19, 1
    %s21 = scalar_select %p18, %s19, %s20
    %p24 = pneg %p18
    %p25 = scmp.eq.s32.totalorder %s9, 3
    %p26 = por %p24, %p25
    %p27 = scmp.ne.s32.totalorder %s19, %s22
    %p28 = scmp.eq.s32.totalorder %s9, 0
    %p29 = por %p27, %p28
    %p30 = scmp.ne.s32.totalorder %s19, %s22
    %p31 = scmp.eq.s32.totalorder %s14, 3
    %p32 = por %p30, %p31
    %p33 = scmp.ne.s32.totalorder %s22, %s23
    %p34 = scmp.eq.s32.totalorder %s14, 0
    %p35 = por %p33, %p34
    %p36 = scmp.ne.s32.totalorder %s22, %s23
    %p37 = scmp.eq.s32.totalorder %s15, 3
    %p38 = por %p36, %p37
    %p40 = scmp.ne.s32.totalorder %s23, %s39
    %p41 = scmp.eq.s32.totalorder %s15, 0
    %p42 = por %p40, %p41
    %s44 = sadd.s32 %s43, 1
    %p47 = scmp.eq.s32.totalorder %s9, 3
    %p48 = scmp.ne.s32.totalorder %s43, %s45
    %p49 = scmp.eq.s32.totalorder %s9, 0
    %p50 = por %p48, %p49
    %p51 = scmp.ne.s32.totalorder %s43, %s45
    %p52 = scmp.eq.s32.totalorder %s14, 3
    %p53 = por %p51, %p52
    %p54 = scmp.ne.s32.totalorder %s45, %s46
    %p55 = scmp.eq.s32.totalorder %s14, 0
    %p56 = por %p54, %p55
    %p57 = scmp.ne.s32.totalorder %s45, %s46
    %p58 = scmp.eq.s32.totalorder %s15, 3
    %p59 = por %p57, %p58
    %p61 = scmp.ne.s32.totalorder %s46, %s60
    %p62 = scmp.eq.s32.totalorder %s15, 0
    %p63 = por %p61, %p62
    %s65 = sadd.s32 %s64, 1
    %p68 = scmp.eq.s32.totalorder %s9, 3
    %p69 = scmp.ne.s32.totalorder %s64, %s66
    %p70 = scmp.eq.s32.totalorder %s9, 0
    %p71 = por %p69, %p70
    %p72 = scmp.ne.s32.totalorder %s64, %s66
    %p73 = scmp.eq.s32.totalorder %s14, 3
    %p74 = por %p72, %p73
    %p75 = scmp.ne.s32.totalorder %s66, %s67
    %p76 = scmp.eq.s32.totalorder %s14, 0
    %p77 = por %p75, %p76
    %p78 = scmp.ne.s32.totalorder %s66, %s67
    %p79 = scmp.eq.s32.totalorder %s15, 3
    %p80 = por %p78, %p79
    %p82 = scmp.ne.s32.totalorder %s67, %s81
    %p83 = scmp.eq.s32.totalorder %s15, 0
    %p84 = por %p82, %p83
    %s85 = ssub.s32 %s9, %s16
    %p86 = scmp.eq.s32.totalorder %s85, 0
    %s88 = sadd.s32 %s87, 1
    %s89 = scalar_select %p86, %s87, %s88
    %p92 = pneg %p86
    %p93 = scmp.eq.s32.totalorder %s9, 3
    %p94 = por %p92, %p93
    %p95 = scmp.ne.s32.totalorder %s87, %s90
    %p96 = scmp.eq.s32.totalorder %s9, 0
    %p97 = por %p95, %p96
    %p98 = scmp.ne.s32.totalorder %s87, %s90
    %p99 = scmp.eq.s32.totalorder %s14, 3
    %p100 = por %p98, %p99
    %p101 = scmp.ne.s32.totalorder %s90, %s91
    %p102 = scmp.eq.s32.totalorder %s14, 0
    %p103 = por %p101, %p102
    %p104 = scmp.ne.s32.totalorder %s90, %s91
    %p105 = scmp.eq.s32.totalorder %s15, 3
    %p106 = por %p104, %p105
    %p108 = scmp.ne.s32.totalorder %s91, %s107
    %p109 = scmp.eq.s32.totalorder %s15, 0
    %p110 = por %p108, %p109
    %p111 = scmp.le.s32.totalorder 1, %s9
    %p112 = scmp.lt.s32.totalorder %s9, 5
    %p113 = pnand %p111, %p112
    %p114 = pneg %p113
    // Predicated region
    $region9: #{decoder_forward.32} parent=5 // pred_check
      _
    $region10: #{decoder_forward.32} parent=5 // pred_check_branch
      %116 = sbr.rel (%p113) target = $region12
    $region11: #{decoder_forward.32} parent=5 // pred_region
      %s117 = ssub.s32 %s9, 1
      // Predicated region
      $region13: #{decoder_forward.32} parent=11 // pred_check
        %p118 = pneg %p56
      $region14: #{decoder_forward.32} parent=11 // pred_check_branch
        %120 = sbr.rel (%p118) target = $region16
      $region15: #{decoder_forward.32} parent=11 // pred_region
        _
      $region16: #{decoder_forward.32} parent=11 // pred_fallthru
        _
      // Predicated region
      $region17: #{decoder_forward.32} parent=11 // pred_check
        %p121 = pneg %p77
      $region18: #{decoder_forward.32} parent=11 // pred_check_branch
        %123 = sbr.rel (%p121) target = $region20
      $region19: #{decoder_forward.32} parent=11 // pred_region
        _
      $region20: #{decoder_forward.32} parent=11 // pred_fallthru
        _
    $region12: #{decoder_forward.32} parent=5 // pred_fallthru
      _
    %p124 = scmp.lt.s32.totalorder %s9, 4
    // Predicated region
    $region21: #{decoder_forward.32} parent=5 // pred_check
      %p125 = pneg %p124
    $region22: #{decoder_forward.32} parent=5 // pred_check_branch
      %127 = sbr.rel (%p125) target = $region24
    $region23: #{decoder_forward.32} parent=5 // pred_region
      // Predicated region
      $region25: #{decoder_forward.32} parent=23 // pred_check
        %p128 = pneg %p29
      $region26: #{decoder_forward.32} parent=23 // pred_check_branch
        %130 = sbr.rel (%p128) target = $region28
      $region27: #{decoder_forward.32} parent=23 // pred_region
        %s131 = smul.u32 64, %s9
        %p132 = scmp.lt.s32.totalorder %s131, 255
        %s133 = scalar_select %p132, %s131, 255
        %s134 = smul.addr %s133, 4
        %s135 = scalar_lea.vmem %s0, %s134
        %s136 = smul.u32 64, %s9
      $region28: #{decoder_forward.32} parent=23 // pred_fallthru
        _
    $region24: #{decoder_forward.32} parent=5 // pred_fallthru
      _
    %p137 = scmp.le.s32.totalorder 1, %s9
    %p138 = scmp.lt.s32.totalorder %s9, 5
    %p139 = pnand %p137, %p138
    %p140 = pneg %p139
    // Predicated region
    $region29: #{decoder_forward.32} parent=5 // pred_check
      _
    $region30: #{decoder_forward.32} parent=5 // pred_check_branch
      %142 = sbr.rel (%p139) target = $region32
    $region31: #{decoder_forward.32} parent=5 // pred_region
      %s143 = ssub.s32 %s9, 1
      %s144 = smul.u32 64, %s14
      %p145 = scmp.lt.s32.totalorder %s144, 255
      %s146 = scalar_select %p145, %s144, 255
      %s147 = smul.addr %s146, 4
      %s148 = scalar_lea.vmem %s0, %s147
      %p149 = pneg %p35
      %p150 = pneg %p32
      %p151 = pneg %p56
      %p152 = pneg %p53
      %p153 = pneg %p77
      %p154 = pneg %p74
      %p155 = pneg %p103
      %p156 = pneg %p100
      %s157 = smul.u32 64, %s14
      %p158 = scmp.lt.s32.totalorder %s157, 255
      %s159 = scalar_select %p158, %s157, 255
      %s160 = smul.addr %s159, 4
      %s161 = scalar_lea.vmem %s3, %s160
      %s162 = smul.u32 64, %s14
      %p163 = scmp.lt.s32.totalorder %s162, 255
      %s164 = scalar_select %p163, %s162, 255
      %s165 = smul.addr %s164, 4
      %s166 = scalar_lea.vmem %s0, %s165
      %s167 = smul.u32 64, %s14
      %s168 = smul.u32 64, %s14
      %p169 = scmp.lt.s32.totalorder %s168, 255
      %s170 = scalar_select %p169, %s168, 255
      %s171 = smul.addr %s170, 4
      %s172 = scalar_lea.vmem %s3, %s171
      %s173 = smul.u32 64, %s14
      %v175 = vld [vmem:[%s166] sm:$0xf]
      %v176 = vld [vmem:[%s166 + $0x4] sm:$0xf]
      %v177 = vld [vmem:[%s166 + $0x8] sm:$0xf]
      %v178 = vld [vmem:[%s166 + $0xc] sm:$0xf]
      %v179 = vld [vmem:[%s166 + $0x10] sm:$0xf]
      %v180 = vld [vmem:[%s166 + $0x14] sm:$0xf]
      %v181 = vld [vmem:[%s166 + $0x18] sm:$0xf]
      %v182 = vld [vmem:[%s166 + $0x1c] sm:$0xf]
      %v183 = vld [vmem:[%s166 + $0x20] sm:$0xf]
      %v184 = vld [vmem:[%s166 + $0x24] sm:$0xf]
      %v185 = vld [vmem:[%s166 + $0x28] sm:$0xf]
      %v186 = vld [vmem:[%s166 + $0x2c] sm:$0xf]
      %v187 = vld [vmem:[%s166 + $0x30] sm:$0xf]
      %v188 = vld [vmem:[%s166 + $0x34] sm:$0xf]
      %v189 = vld [vmem:[%s166 + $0x38] sm:$0xf]
      %v190 = vld [vmem:[%s166 + $0x3c] sm:$0xf]
      %v191 = vld [vmem:[%s166 + $0x40] sm:$0xf]
      %v192 = vld [vmem:[%s166 + $0x44] sm:$0xf]
      %v193 = vld [vmem:[%s166 + $0x48] sm:$0xf]
      %v194 = vld [vmem:[%s166 + $0x4c] sm:$0xf]
      %v195 = vld [vmem:[%s166 + $0x50] sm:$0xf]
      %v196 = vld [vmem:[%s166 + $0x54] sm:$0xf]
      %v197 = vld [vmem:[%s166 + $0x58] sm:$0xf]
      %v198 = vld [vmem:[%s166 + $0x5c] sm:$0xf]
      %v199 = vld [vmem:[%s166 + $0x60] sm:$0xf]
      %v200 = vld [vmem:[%s166 + $0x64] sm:$0xf]
      %v201 = vld [vmem:[%s166 + $0x68] sm:$0xf]
      %v202 = vld [vmem:[%s166 + $0x6c] sm:$0xf]
      %v203 = vld [vmem:[%s166 + $0x70] sm:$0xf]
      %v204 = vld [vmem:[%s166 + $0x74] sm:$0xf]
      %v205 = vld [vmem:[%s166 + $0x78] sm:$0xf]
      %v206 = vld [vmem:[%s166 + $0x7c] sm:$0xf]
      %v207 = vld [vmem:[%s166 + $0x80] sm:$0xf]
      %v208 = vld [vmem:[%s166 + $0x84] sm:$0xf]
      %v209 = vld [vmem:[%s166 + $0x88] sm:$0xf]
      %v210 = vld [vmem:[%s166 + $0x8c] sm:$0xf]
      %v211 = vld [vmem:[%s166 + $0x90] sm:$0xf]
      %v212 = vld [vmem:[%s166 + $0x94] sm:$0xf]
      %v213 = vld [vmem:[%s166 + $0x98] sm:$0xf]
      %v214 = vld [vmem:[%s166 + $0x9c] sm:$0xf]
      %v215 = vld [vmem:[%s166 + $0xa0] sm:$0xf]
      %v216 = vld [vmem:[%s166 + $0xa4] sm:$0xf]
      %v217 = vld [vmem:[%s166 + $0xa8] sm:$0xf]
      %v218 = vld [vmem:[%s166 + $0xac] sm:$0xf]
      %v219 = vld [vmem:[%s166 + $0xb0] sm:$0xf]
      %v220 = vld [vmem:[%s166 + $0xb4] sm:$0xf]
      %v221 = vld [vmem:[%s166 + $0xb8] sm:$0xf]
      %v222 = vld [vmem:[%s166 + $0xbc] sm:$0xf]
      %v223 = vld [vmem:[%s166 + $0xc0] sm:$0xf]
      %v224 = vld [vmem:[%s166 + $0xc4] sm:$0xf]
      %v225 = vld [vmem:[%s166 + $0xc8] sm:$0xf]
      %v226 = vld [vmem:[%s166 + $0xcc] sm:$0xf]
      %v227 = vld [vmem:[%s166 + $0xd0] sm:$0xf]
      %v228 = vld [vmem:[%s166 + $0xd4] sm:$0xf]
      %v229 = vld [vmem:[%s166 + $0xd8] sm:$0xf]
      %v230 = vld [vmem:[%s166 + $0xdc] sm:$0xf]
      %v231 = vld [vmem:[%s166 + $0xe0] sm:$0xf]
      %v232 = vld [vmem:[%s166 + $0xe4] sm:$0xf]
      %v233 = vld [vmem:[%s166 + $0xe8] sm:$0xf]
      %v234 = vld [vmem:[%s166 + $0xec] sm:$0xf]
      %v235 = vld [vmem:[%s166 + $0xf0] sm:$0xf]
      %v236 = vld [vmem:[%s166 + $0xf4] sm:$0xf]
      %v237 = vld [vmem:[%s166 + $0xf8] sm:$0xf]
      %v238 = vld [vmem:[%s166 + $0xfc] sm:$0xf]
      %v239 = vld [vmem:[%s1] sm:$0xf]
      %v240 = vld [vmem:[%s1 + $0x4] sm:$0xf]
      %v241 = vld [vmem:[%s1 + $0x8] sm:$0xf]
      %v242 = vld [vmem:[%s1 + $0xc] sm:$0xf]
      %v243 = vld [vmem:[%s1 + $0x10] sm:$0x3]
      %v244 = vld [vmem:[%s2] sm:$0x1]
      %v246 = vlaneseq
      %v247 = vshrl.u32 %v246, 7
      %v248 = vsub.s32 0, %v247
      %v249 = vrot.slane %v244, %v248
      %v315 = vunpack.c.l.b16 %v175
      %v316 = vunpack.c.l.b16 %v176
      %v317 = vunpack.c.l.b16 %v177
      %v318 = vunpack.c.l.b16 %v178
      %v319 = vunpack.c.l.b16 %v179
      %v320 = vunpack.c.l.b16 %v180
      %v321 = vunpack.c.l.b16 %v181
      %v322 = vunpack.c.l.b16 %v182
      %v323 = vunpack.c.l.b16 %v183
      %v324 = vunpack.c.l.b16 %v184
      %v325 = vunpack.c.l.b16 %v185
      %v326 = vunpack.c.l.b16 %v186
      %v327 = vunpack.c.l.b16 %v187
      %v328 = vunpack.c.l.b16 %v188
      %v329 = vunpack.c.l.b16 %v189
      %v330 = vunpack.c.l.b16 %v190
      %v331 = vunpack.c.l.b16 %v191
      %v332 = vunpack.c.l.b16 %v192
      %v333 = vunpack.c.l.b16 %v193
      %v334 = vunpack.c.l.b16 %v194
      %v335 = vunpack.c.l.b16 %v195
      %v336 = vunpack.c.l.b16 %v196
      %v337 = vunpack.c.l.b16 %v197
      %v338 = vunpack.c.l.b16 %v198
      %v339 = vunpack.c.l.b16 %v199
      %v340 = vunpack.c.l.b16 %v200
      %v341 = vunpack.c.l.b16 %v201
      %v342 = vunpack.c.l.b16 %v202
      %v343 = vunpack.c.l.b16 %v203
      %v344 = vunpack.c.l.b16 %v204
      %v345 = vunpack.c.l.b16 %v205
      %v346 = vunpack.c.l.b16 %v206
      %v347 = vunpack.c.l.b16 %v207
      %v348 = vunpack.c.l.b16 %v208
      %v349 = vunpack.c.l.b16 %v209
      %v350 = vunpack.c.l.b16 %v210
      %v351 = vunpack.c.l.b16 %v211
      %v352 = vunpack.c.l.b16 %v212
      %v353 = vunpack.c.l.b16 %v213
      %v354 = vunpack.c.l.b16 %v214
      %v355 = vunpack.c.l.b16 %v215
      %v356 = vunpack.c.l.b16 %v216
      %v357 = vunpack.c.l.b16 %v217
      %v358 = vunpack.c.l.b16 %v218
      %v359 = vunpack.c.l.b16 %v219
      %v360 = vunpack.c.l.b16 %v220
      %v361 = vunpack.c.l.b16 %v221
      %v362 = vunpack.c.l.b16 %v222
      %v363 = vunpack.c.l.b16 %v223
      %v364 = vunpack.c.l.b16 %v224
      %v365 = vunpack.c.l.b16 %v225
      %v366 = vunpack.c.l.b16 %v226
      %v367 = vunpack.c.l.b16 %v227
      %v368 = vunpack.c.l.b16 %v228
      %v369 = vunpack.c.l.b16 %v229
      %v370 = vunpack.c.l.b16 %v230
      %v371 = vunpack.c.l.b16 %v231
      %v372 = vunpack.c.l.b16 %v232
      %v373 = vunpack.c.l.b16 %v233
      %v374 = vunpack.c.l.b16 %v234
      %v375 = vunpack.c.l.b16 %v235
      %v376 = vunpack.c.l.b16 %v236
      %v377 = vunpack.c.l.b16 %v237
      %v378 = vunpack.c.l.b16 %v238
      %v379 = vpack.c.b16 %v316, %v315
      %v380 = vpack.c.b16 %v318, %v317
      %v381 = vpack.c.b16 %v320, %v319
      %v382 = vpack.c.b16 %v322, %v321
      %v383 = vpack.c.b16 %v324, %v323
      %v384 = vpack.c.b16 %v326, %v325
      %v385 = vpack.c.b16 %v328, %v327
      %v386 = vpack.c.b16 %v330, %v329
      %v387 = vpack.c.b16 %v332, %v331
      %v388 = vpack.c.b16 %v334, %v333
      %v389 = vpack.c.b16 %v336, %v335
      %v390 = vpack.c.b16 %v338, %v337
      %v391 = vpack.c.b16 %v340, %v339
      %v392 = vpack.c.b16 %v342, %v341
      %v393 = vpack.c.b16 %v344, %v343
      %v394 = vpack.c.b16 %v346, %v345
      %v395 = vpack.c.b16 %v348, %v347
      %v396 = vpack.c.b16 %v350, %v349
      %v397 = vpack.c.b16 %v352, %v351
      %v398 = vpack.c.b16 %v354, %v353
      %v399 = vpack.c.b16 %v356, %v355
      %v400 = vpack.c.b16 %v358, %v357
      %v401 = vpack.c.b16 %v360, %v359
      %v402 = vpack.c.b16 %v362, %v361
      %v403 = vpack.c.b16 %v364, %v363
      %v404 = vpack.c.b16 %v366, %v365
      %v405 = vpack.c.b16 %v368, %v367
      %v406 = vpack.c.b16 %v370, %v369
      %v407 = vpack.c.b16 %v372, %v371
      %v408 = vpack.c.b16 %v374, %v373
      %v409 = vpack.c.b16 %v376, %v375
      %v410 = vpack.c.b16 %v378, %v377
      %v416 = vunpack.c.l.b16 %v239
      %v417 = vunpack.c.l.b16 %v240
      %v418 = vunpack.c.l.b16 %v241
      %v419 = vunpack.c.l.b16 %v242
      %v420 = vunpack.c.l.b16 %v243
      %v421 = vpack.c.b16 %v417, %v416
      %v422 = vpack.c.b16 %v419, %v418
      %v423 = vpack.c.b16 %v420, %v420
      %vm426 = vcmask 293888
      %v428 = vsel %vm426, %v379, 0
      %v431 = vsel %vm426, %v380, 0
      %v434 = vsel %vm426, %v381, 0
      %v437 = vsel %vm426, %v382, 0
      %v440 = vsel %vm426, %v383, 0
      %v443 = vsel %vm426, %v384, 0
      %v446 = vsel %vm426, %v385, 0
      %v449 = vsel %vm426, %v386, 0
      %v452 = vsel %vm426, %v387, 0
      %v455 = vsel %vm426, %v388, 0
      %v458 = vsel %vm426, %v389, 0
      %v461 = vsel %vm426, %v390, 0
      %v464 = vsel %vm426, %v391, 0
      %v467 = vsel %vm426, %v392, 0
      %v470 = vsel %vm426, %v393, 0
      %v473 = vsel %vm426, %v394, 0
      %v476 = vsel %vm426, %v395, 0
      %v479 = vsel %vm426, %v396, 0
      %v482 = vsel %vm426, %v397, 0
      %v485 = vsel %vm426, %v398, 0
      %v488 = vsel %vm426, %v399, 0
      %v491 = vsel %vm426, %v400, 0
      %v494 = vsel %vm426, %v401, 0
      %v497 = vsel %vm426, %v402, 0
      %v500 = vsel %vm426, %v403, 0
      %v503 = vsel %vm426, %v404, 0
      %v506 = vsel %vm426, %v405, 0
      %v509 = vsel %vm426, %v406, 0
      %v512 = vsel %vm426, %v407, 0
      %v515 = vsel %vm426, %v408, 0
      %v518 = vsel %vm426, %v409, 0
      %v521 = vsel %vm426, %v410, 0
      %vm523 = vcmask 1041408
      %v525 = vsel %vm523, %v423, 0
      %527 = vmatprep.subr.bf16.mxu0 0
      %528 = vmatpush1.bf16.msra.mxu0 0
      %529 = vmatprep.subr.bf16.mxu0 0
      %530 = vmatpush1.bf16.msra.mxu0 0
      %531 = vmatprep.subr.bf16.mxu0 0
      %532 = vmatpush1.bf16.msra.mxu0 0
      %533 = vmatprep.subr.bf16.mxu0 0
      %534 = vmatpush1.bf16.msra.mxu0 0
      %535 = vmatprep.subr.bf16.mxu0 0
      %536 = vmatpush1.bf16.msra.mxu0 0
      %537 = vmatprep.subr.bf16.mxu0 0
      %538 = vmatpush1.bf16.msra.mxu0 %v525
      %539 = vmatprep.subr.bf16.mxu0 0
      %540 = vmatpush1.bf16.msra.mxu0 %v422
      %541 = vmatprep.subr.bf16.mxu0 0
      %542 = vmatpush1.bf16.msra.mxu0 %v421
      %543 = vmatprep.subr.bf16.mxu0 0
      %544 = vmatpush2.bf16.msra.mxu0 0
      %545 = vmatprep.subr.bf16.mxu0 0
      %546 = vmatpush2.bf16.msra.mxu0 0
      %547 = vmatprep.subr.bf16.mxu0 0
      %548 = vmatpush2.bf16.msra.mxu0 0
      %549 = vmatprep.subr.bf16.mxu0 0
      %550 = vmatpush2.bf16.msra.mxu0 0
      %551 = vmatprep.subr.bf16.mxu0 0
      %552 = vmatpush2.bf16.msra.mxu0 0
      %553 = vmatprep.subr.bf16.mxu0 0
      %554 = vmatpush2.bf16.msra.mxu0 0
      %555 = vmatprep.subr.bf16.mxu0 0
      %556 = vmatpush2.bf16.msra.mxu0 0
      %557 = vmatprep.subr.bf16.mxu0 0
      %558 = vmatpush2.bf16.msra.mxu0 0
      %559 = vmatprep.mubr.bf16.mxu0 0
      %560 = vmatmul.mubr.bf16.gmra.mxu0 %v428
      %v561 = vpop.f32.mrf.mxu0
      %v562 = vadd.f32 %v249, %v561
      %v563 = vpop.f32.mrf.mxu0
      %v564 = vpop.f32.mrf.mxu0
      %v565 = vadd.f32 %v249, %v564
      %v566 = vpop.f32.mrf.mxu0
      %567 = vmatprep.mubr.bf16.mxu0 0
      %568 = vmatmul.mubr.bf16.gmra.mxu0 %v431
      %v569 = vpop.f32.mrf.mxu0
      %v570 = vadd.f32 %v249, %v569
      %v571 = vpop.f32.mrf.mxu0
      %v572 = vpop.f32.mrf.mxu0
      %v573 = vadd.f32 %v249, %v572
      %v574 = vpop.f32.mrf.mxu0
      %575 = vmatprep.mubr.bf16.mxu0 0
      %576 = vmatmul.mubr.bf16.gmra.mxu0 %v434
      %v577 = vpop.f32.mrf.mxu0
      %v578 = vadd.f32 %v249, %v577
      %v579 = vpop.f32.mrf.mxu0
      %v580 = vpop.f32.mrf.mxu0
      %v581 = vadd.f32 %v249, %v580
      %v582 = vpop.f32.mrf.mxu0
      %583 = vmatprep.mubr.bf16.mxu0 0
      %584 = vmatmul.mubr.bf16.gmra.mxu0 %v437
      %v585 = vpop.f32.mrf.mxu0
      %v586 = vadd.f32 %v249, %v585
      %v587 = vpop.f32.mrf.mxu0
      %v588 = vpop.f32.mrf.mxu0
      %v589 = vadd.f32 %v249, %v588
      %v590 = vpop.f32.mrf.mxu0
      %591 = vmatprep.mubr.bf16.mxu0 0
      %592 = vmatmul.mubr.bf16.gmra.mxu0 %v440
      %v593 = vpop.f32.mrf.mxu0
      %v594 = vadd.f32 %v249, %v593
      %v595 = vpop.f32.mrf.mxu0
      %v596 = vpop.f32.mrf.mxu0
      %v597 = vadd.f32 %v249, %v596
      %v598 = vpop.f32.mrf.mxu0
      %599 = vmatprep.mubr.bf16.mxu0 0
      %600 = vmatmul.mubr.bf16.gmra.mxu0 %v443
      %v601 = vpop.f32.mrf.mxu0
      %v602 = vadd.f32 %v249, %v601
      %v603 = vpop.f32.mrf.mxu0
      %v604 = vpop.f32.mrf.mxu0
      %v605 = vadd.f32 %v249, %v604
      %v606 = vpop.f32.mrf.mxu0
      %607 = vmatprep.mubr.bf16.mxu0 0
      %608 = vmatmul.mubr.bf16.gmra.mxu0 %v446
      %v609 = vpop.f32.mrf.mxu0
      %v610 = vadd.f32 %v249, %v609
      %v611 = vpop.f32.mrf.mxu0
      %v612 = vpop.f32.mrf.mxu0
      %v613 = vadd.f32 %v249, %v612
      %v614 = vpop.f32.mrf.mxu0
      %615 = vmatprep.mubr.bf16.mxu0 0
      %616 = vmatmul.mubr.bf16.gmra.mxu0 %v449
      %v617 = vpop.f32.mrf.mxu0
      %v618 = vadd.f32 %v249, %v617
      %v619 = vpop.f32.mrf.mxu0
      %v620 = vpop.f32.mrf.mxu0
      %v621 = vadd.f32 %v249, %v620
      %v622 = vpop.f32.mrf.mxu0
      %623 = vmatprep.mubr.bf16.mxu0 0
      %624 = vmatmul.mubr.bf16.gmra.mxu0 %v452
      %v625 = vpop.f32.mrf.mxu0
      %v626 = vadd.f32 %v249, %v625
      %v627 = vpop.f32.mrf.mxu0
      %v628 = vpop.f32.mrf.mxu0
      %v629 = vadd.f32 %v249, %v628
      %v630 = vpop.f32.mrf.mxu0
      %631 = vmatprep.mubr.bf16.mxu0 0
      %632 = vmatmul.mubr.bf16.gmra.mxu0 %v455
      %v633 = vpop.f32.mrf.mxu0
      %v634 = vadd.f32 %v249, %v633
      %v635 = vpop.f32.mrf.mxu0
      %v636 = vpop.f32.mrf.mxu0
      %v637 = vadd.f32 %v249, %v636
      %v638 = vpop.f32.mrf.mxu0
      %639 = vmatprep.mubr.bf16.mxu0 0
      %640 = vmatmul.mubr.bf16.gmra.mxu0 %v458
      %v641 = vpop.f32.mrf.mxu0
      %v642 = vadd.f32 %v249, %v641
      %v643 = vpop.f32.mrf.mxu0
      %v644 = vpop.f32.mrf.mxu0
      %v645 = vadd.f32 %v249, %v644
      %v646 = vpop.f32.mrf.mxu0
      %647 = vmatprep.mubr.bf16.mxu0 0
      %648 = vmatmul.mubr.bf16.gmra.mxu0 %v461
      %v649 = vpop.f32.mrf.mxu0
      %v650 = vadd.f32 %v249, %v649
      %v651 = vpop.f32.mrf.mxu0
      %v652 = vpop.f32.mrf.mxu0
      %v653 = vadd.f32 %v249, %v652
      %v654 = vpop.f32.mrf.mxu0
      %655 = vmatprep.mubr.bf16.mxu0 0
      %656 = vmatmul.mubr.bf16.gmra.mxu0 %v464
      %v657 = vpop.f32.mrf.mxu0
      %v658 = vadd.f32 %v249, %v657
      %v659 = vpop.f32.mrf.mxu0
      %v660 = vpop.f32.mrf.mxu0
      %v661 = vadd.f32 %v249, %v660
      %v662 = vpop.f32.mrf.mxu0
      %663 = vmatprep.mubr.bf16.mxu0 0
      %664 = vmatmul.mubr.bf16.gmra.mxu0 %v467
      %v665 = vpop.f32.mrf.mxu0
      %v666 = vadd.f32 %v249, %v665
      %v667 = vpop.f32.mrf.mxu0
      %v668 = vpop.f32.mrf.mxu0
      %v669 = vadd.f32 %v249, %v668
      %v670 = vpop.f32.mrf.mxu0
      %671 = vmatprep.mubr.bf16.mxu0 0
      %672 = vmatmul.mubr.bf16.gmra.mxu0 %v470
      %v673 = vpop.f32.mrf.mxu0
      %v674 = vadd.f32 %v249, %v673
      %v675 = vpop.f32.mrf.mxu0
      %v676 = vpop.f32.mrf.mxu0
      %v677 = vadd.f32 %v249, %v676
      %v678 = vpop.f32.mrf.mxu0
      %679 = vmatprep.mubr.bf16.mxu0 0
      %680 = vmatmul.mubr.bf16.gmra.mxu0 %v473
      %v681 = vpop.f32.mrf.mxu0
      %v682 = vadd.f32 %v249, %v681
      %v683 = vpop.f32.mrf.mxu0
      %v684 = vpop.f32.mrf.mxu0
      %v685 = vadd.f32 %v249, %v684
      %v686 = vpop.f32.mrf.mxu0
      %687 = vmatprep.mubr.bf16.mxu0 0
      %688 = vmatmul.mubr.bf16.gmra.mxu0 %v476
      %v689 = vpop.f32.mrf.mxu0
      %v690 = vadd.f32 %v249, %v689
      %v691 = vpop.f32.mrf.mxu0
      %v692 = vpop.f32.mrf.mxu0
      %v693 = vadd.f32 %v249, %v692
      %v694 = vpop.f32.mrf.mxu0
      %695 = vmatprep.mubr.bf16.mxu0 0
      %696 = vmatmul.mubr.bf16.gmra.mxu0 %v479
      %v697 = vpop.f32.mrf.mxu0
      %v698 = vadd.f32 %v249, %v697
      %v699 = vpop.f32.mrf.mxu0
      %v700 = vpop.f32.mrf.mxu0
      %v701 = vadd.f32 %v249, %v700
      %v702 = vpop.f32.mrf.mxu0
      %703 = vmatprep.mubr.bf16.mxu0 0
      %704 = vmatmul.mubr.bf16.gmra.mxu0 %v482
      %v705 = vpop.f32.mrf.mxu0
      %v706 = vadd.f32 %v249, %v705
      %v707 = vpop.f32.mrf.mxu0
      %v708 = vpop.f32.mrf.mxu0
      %v709 = vadd.f32 %v249, %v708
      %v710 = vpop.f32.mrf.mxu0
      %711 = vmatprep.mubr.bf16.mxu0 0
      %712 = vmatmul.mubr.bf16.gmra.mxu0 %v485
      %v713 = vpop.f32.mrf.mxu0
      %v714 = vadd.f32 %v249, %v713
      %v715 = vpop.f32.mrf.mxu0
      %v716 = vpop.f32.mrf.mxu0
      %v717 = vadd.f32 %v249, %v716
      %v718 = vpop.f32.mrf.mxu0
      %719 = vmatprep.mubr.bf16.mxu0 0
      %720 = vmatmul.mubr.bf16.gmra.mxu0 %v488
      %v721 = vpop.f32.mrf.mxu0
      %v722 = vadd.f32 %v249, %v721
      %v723 = vpop.f32.mrf.mxu0
      %v724 = vpop.f32.mrf.mxu0
      %v725 = vadd.f32 %v249, %v724
      %v726 = vpop.f32.mrf.mxu0
      %727 = vmatprep.mubr.bf16.mxu0 0
      %728 = vmatmul.mubr.bf16.gmra.mxu0 %v491
      %v729 = vpop.f32.mrf.mxu0
      %v730 = vadd.f32 %v249, %v729
      %v731 = vpop.f32.mrf.mxu0
      %v732 = vpop.f32.mrf.mxu0
      %v733 = vadd.f32 %v249, %v732
      %v734 = vpop.f32.mrf.mxu0
      %735 = vmatprep.mubr.bf16.mxu0 0
      %736 = vmatmul.mubr.bf16.gmra.mxu0 %v494
      %v737 = vpop.f32.mrf.mxu0
      %v738 = vadd.f32 %v249, %v737
      %v739 = vpop.f32.mrf.mxu0
      %v740 = vpop.f32.mrf.mxu0
      %v741 = vadd.f32 %v249, %v740
      %v742 = vpop.f32.mrf.mxu0
      %743 = vmatprep.mubr.bf16.mxu0 0
      %744 = vmatmul.mubr.bf16.gmra.mxu0 %v497
      %v745 = vpop.f32.mrf.mxu0
      %v746 = vadd.f32 %v249, %v745
      %v747 = vpop.f32.mrf.mxu0
      %v748 = vpop.f32.mrf.mxu0
      %v749 = vadd.f32 %v249, %v748
      %v750 = vpop.f32.mrf.mxu0
      %751 = vmatprep.mubr.bf16.mxu0 0
      %752 = vmatmul.mubr.bf16.gmra.mxu0 %v500
      %v753 = vpop.f32.mrf.mxu0
      %v754 = vadd.f32 %v249, %v753
      %v755 = vpop.f32.mrf.mxu0
      %v756 = vpop.f32.mrf.mxu0
      %v757 = vadd.f32 %v249, %v756
      %v758 = vpop.f32.mrf.mxu0
      %759 = vmatprep.mubr.bf16.mxu0 0
      %760 = vmatmul.mubr.bf16.gmra.mxu0 %v503
      %v761 = vpop.f32.mrf.mxu0
      %v762 = vadd.f32 %v249, %v761
      %v763 = vpop.f32.mrf.mxu0
      %v764 = vpop.f32.mrf.mxu0
      %v765 = vadd.f32 %v249, %v764
      %v766 = vpop.f32.mrf.mxu0
      %767 = vmatprep.mubr.bf16.mxu0 0
      %768 = vmatmul.mubr.bf16.gmra.mxu0 %v506
      %v769 = vpop.f32.mrf.mxu0
      %v770 = vadd.f32 %v249, %v769
      %v771 = vpop.f32.mrf.mxu0
      %v772 = vpop.f32.mrf.mxu0
      %v773 = vadd.f32 %v249, %v772
      %v774 = vpop.f32.mrf.mxu0
      %775 = vmatprep.mubr.bf16.mxu0 0
      %776 = vmatmul.mubr.bf16.gmra.mxu0 %v509
      %v777 = vpop.f32.mrf.mxu0
      %v778 = vadd.f32 %v249, %v777
      %v779 = vpop.f32.mrf.mxu0
      %v780 = vpop.f32.mrf.mxu0
      %v781 = vadd.f32 %v249, %v780
      %v782 = vpop.f32.mrf.mxu0
      %783 = vmatprep.mubr.bf16.mxu0 0
      %784 = vmatmul.mubr.bf16.gmra.mxu0 %v512
      %v785 = vpop.f32.mrf.mxu0
      %v786 = vadd.f32 %v249, %v785
      %v787 = vpop.f32.mrf.mxu0
      %v788 = vpop.f32.mrf.mxu0
      %v789 = vadd.f32 %v249, %v788
      %v790 = vpop.f32.mrf.mxu0
      %791 = vmatprep.mubr.bf16.mxu0 0
      %792 = vmatmul.mubr.bf16.gmra.mxu0 %v515
      %v793 = vpop.f32.mrf.mxu0
      %v794 = vadd.f32 %v249, %v793
      %v795 = vpop.f32.mrf.mxu0
      %v796 = vpop.f32.mrf.mxu0
      %v797 = vadd.f32 %v249, %v796
      %v798 = vpop.f32.mrf.mxu0
      %799 = vmatprep.mubr.bf16.mxu0 0
      %800 = vmatmul.mubr.bf16.gmra.mxu0 %v518
      %v801 = vpop.f32.mrf.mxu0
      %v802 = vadd.f32 %v249, %v801
      %v803 = vpop.f32.mrf.mxu0
      %v804 = vpop.f32.mrf.mxu0
      %v805 = vadd.f32 %v249, %v804
      %v806 = vpop.f32.mrf.mxu0
      %807 = vmatprep.mubr.bf16.mxu0 0
      %808 = vmatmul.mubr.bf16.gmra.mxu0 %v521
      %v809 = vpop.f32.mrf.mxu0
      %v810 = vadd.f32 %v249, %v809
      %v811 = vpop.f32.mrf.mxu0
      %v812 = vpop.f32.mrf.mxu0
      %v813 = vadd.f32 %v249, %v812
      %v814 = vpop.f32.mrf.mxu0
      %815 = vdwg.mxu0
      %v816 = vpack.c.bf16 %v565, %v562
      %v817 = vpack.c.bf16 %v573, %v570
      %v818 = vpack.c.bf16 %v581, %v578
      %v819 = vpack.c.bf16 %v589, %v586
      %v820 = vpack.c.bf16 %v597, %v594
      %v821 = vpack.c.bf16 %v605, %v602
      %v822 = vpack.c.bf16 %v613, %v610
      %v823 = vpack.c.bf16 %v621, %v618
      %v824 = vpack.c.bf16 %v629, %v626
      %v825 = vpack.c.bf16 %v637, %v634
      %v826 = vpack.c.bf16 %v645, %v642
      %v827 = vpack.c.bf16 %v653, %v650
      %v828 = vpack.c.bf16 %v661, %v658
      %v829 = vpack.c.bf16 %v669, %v666
      %v830 = vpack.c.bf16 %v677, %v674
      %v831 = vpack.c.bf16 %v685, %v682
      %v832 = vpack.c.bf16 %v693, %v690
      %v833 = vpack.c.bf16 %v701, %v698
      %v834 = vpack.c.bf16 %v709, %v706
      %v835 = vpack.c.bf16 %v717, %v714
      %v836 = vpack.c.bf16 %v725, %v722
      %v837 = vpack.c.bf16 %v733, %v730
      %v838 = vpack.c.bf16 %v741, %v738
      %v839 = vpack.c.bf16 %v749, %v746
      %v840 = vpack.c.bf16 %v757, %v754
      %v841 = vpack.c.bf16 %v765, %v762
      %v842 = vpack.c.bf16 %v773, %v770
      %v843 = vpack.c.bf16 %v781, %v778
      %v844 = vpack.c.bf16 %v789, %v786
      %v845 = vpack.c.bf16 %v797, %v794
      %v846 = vpack.c.bf16 %v805, %v802
      %v847 = vpack.c.bf16 %v813, %v810
      %v880 = vunpack.c.l.b16 %v816
      %v881 = vunpack.c.h.b16 %v816
      %v882 = vunpack.c.l.b16 %v817
      %v883 = vunpack.c.h.b16 %v817
      %v884 = vunpack.c.l.b16 %v818
      %v885 = vunpack.c.h.b16 %v818
      %v886 = vunpack.c.l.b16 %v819
      %v887 = vunpack.c.h.b16 %v819
      %v888 = vunpack.c.l.b16 %v820
      %v889 = vunpack.c.h.b16 %v820
      %v890 = vunpack.c.l.b16 %v821
      %v891 = vunpack.c.h.b16 %v821
      %v892 = vunpack.c.l.b16 %v822
      %v893 = vunpack.c.h.b16 %v822
      %v894 = vunpack.c.l.b16 %v823
      %v895 = vunpack.c.h.b16 %v823
      %v896 = vunpack.c.l.b16 %v824
      %v897 = vunpack.c.h.b16 %v824
      %v898 = vunpack.c.l.b16 %v825
      %v899 = vunpack.c.h.b16 %v825
      %v900 = vunpack.c.l.b16 %v826
      %v901 = vunpack.c.h.b16 %v826
      %v902 = vunpack.c.l.b16 %v827
      %v903 = vunpack.c.h.b16 %v827
      %v904 = vunpack.c.l.b16 %v828
      %v905 = vunpack.c.h.b16 %v828
      %v906 = vunpack.c.l.b16 %v829
      %v907 = vunpack.c.h.b16 %v829
      %v908 = vunpack.c.l.b16 %v830
      %v909 = vunpack.c.h.b16 %v830
      %v910 = vunpack.c.l.b16 %v831
      %v911 = vunpack.c.h.b16 %v831
      %v912 = vunpack.c.l.b16 %v832
      %v913 = vunpack.c.h.b16 %v832
      %v914 = vunpack.c.l.b16 %v833
      %v915 = vunpack.c.h.b16 %v833
      %v916 = vunpack.c.l.b16 %v834
      %v917 = vunpack.c.h.b16 %v834
      %v918 = vunpack.c.l.b16 %v835
      %v919 = vunpack.c.h.b16 %v835
      %v920 = vunpack.c.l.b16 %v836
      %v921 = vunpack.c.h.b16 %v836
      %v922 = vunpack.c.l.b16 %v837
      %v923 = vunpack.c.h.b16 %v837
      %v924 = vunpack.c.l.b16 %v838
      %v925 = vunpack.c.h.b16 %v838
      %v926 = vunpack.c.l.b16 %v839
      %v927 = vunpack.c.h.b16 %v839
      %v928 = vunpack.c.l.b16 %v840
      %v929 = vunpack.c.h.b16 %v840
      %v930 = vunpack.c.l.b16 %v841
      %v931 = vunpack.c.h.b16 %v841
      %v932 = vunpack.c.l.b16 %v842
      %v933 = vunpack.c.h.b16 %v842
      %v934 = vunpack.c.l.b16 %v843
      %v935 = vunpack.c.h.b16 %v843
      %v936 = vunpack.c.l.b16 %v844
      %v937 = vunpack.c.h.b16 %v844
      %v938 = vunpack.c.l.b16 %v845
      %v939 = vunpack.c.h.b16 %v845
      %v940 = vunpack.c.l.b16 %v846
      %v941 = vunpack.c.h.b16 %v846
      %v942 = vunpack.c.l.b16 %v847
      %v943 = vunpack.c.h.b16 %v847
      %v944 = vpack.c.b16 %v880, %v880
      %v945 = vpack.c.b16 %v881, %v881
      %v946 = vpack.c.b16 %v882, %v882
      %v947 = vpack.c.b16 %v883, %v883
      %v948 = vpack.c.b16 %v884, %v884
      %v949 = vpack.c.b16 %v885, %v885
      %v950 = vpack.c.b16 %v886, %v886
      %v951 = vpack.c.b16 %v887, %v887
      %v952 = vpack.c.b16 %v888, %v888
      %v953 = vpack.c.b16 %v889, %v889
      %v954 = vpack.c.b16 %v890, %v890
      %v955 = vpack.c.b16 %v891, %v891
      %v956 = vpack.c.b16 %v892, %v892
      %v957 = vpack.c.b16 %v893, %v893
      %v958 = vpack.c.b16 %v894, %v894
      %v959 = vpack.c.b16 %v895, %v895
      %v960 = vpack.c.b16 %v896, %v896
      %v961 = vpack.c.b16 %v897, %v897
      %v962 = vpack.c.b16 %v898, %v898
      %v963 = vpack.c.b16 %v899, %v899
      %v964 = vpack.c.b16 %v900, %v900
      %v965 = vpack.c.b16 %v901, %v901
      %v966 = vpack.c.b16 %v902, %v902
      %v967 = vpack.c.b16 %v903, %v903
      %v968 = vpack.c.b16 %v904, %v904
      %v969 = vpack.c.b16 %v905, %v905
      %v970 = vpack.c.b16 %v906, %v906
      %v971 = vpack.c.b16 %v907, %v907
      %v972 = vpack.c.b16 %v908, %v908
      %v973 = vpack.c.b16 %v909, %v909
      %v974 = vpack.c.b16 %v910, %v910
      %v975 = vpack.c.b16 %v911, %v911
      %v976 = vpack.c.b16 %v912, %v912
      %v977 = vpack.c.b16 %v913, %v913
      %v978 = vpack.c.b16 %v914, %v914
      %v979 = vpack.c.b16 %v915, %v915
      %v980 = vpack.c.b16 %v916, %v916
      %v981 = vpack.c.b16 %v917, %v917
      %v982 = vpack.c.b16 %v918, %v918
      %v983 = vpack.c.b16 %v919, %v919
      %v984 = vpack.c.b16 %v920, %v920
      %v985 = vpack.c.b16 %v921, %v921
      %v986 = vpack.c.b16 %v922, %v922
      %v987 = vpack.c.b16 %v923, %v923
      %v988 = vpack.c.b16 %v924, %v924
      %v989 = vpack.c.b16 %v925, %v925
      %v990 = vpack.c.b16 %v926, %v926
      %v991 = vpack.c.b16 %v927, %v927
      %v992 = vpack.c.b16 %v928, %v928
      %v993 = vpack.c.b16 %v929, %v929
      %v994 = vpack.c.b16 %v930, %v930
      %v995 = vpack.c.b16 %v931, %v931
      %v996 = vpack.c.b16 %v932, %v932
      %v997 = vpack.c.b16 %v933, %v933
      %v998 = vpack.c.b16 %v934, %v934
      %v999 = vpack.c.b16 %v935, %v935
      %v1000 = vpack.c.b16 %v936, %v936
      %v1001 = vpack.c.b16 %v937, %v937
      %v1002 = vpack.c.b16 %v938, %v938
      %v1003 = vpack.c.b16 %v939, %v939
      %v1004 = vpack.c.b16 %v940, %v940
      %v1005 = vpack.c.b16 %v941, %v941
      %v1006 = vpack.c.b16 %v942, %v942
      %v1007 = vpack.c.b16 %v943, %v943
      %vm1072 = vcmask 60416
      %1073 = vst.msk [vmem:[%s172] sm:$0xf] %vm1072, %v944
      %1074 = vst.msk [vmem:[%s172 + $0x4] sm:$0xf] %vm1072, %v945
      %1075 = vst.msk [vmem:[%s172 + $0x8] sm:$0xf] %vm1072, %v946
      %1076 = vst.msk [vmem:[%s172 + $0xc] sm:$0xf] %vm1072, %v947
      %1077 = vst.msk [vmem:[%s172 + $0x10] sm:$0xf] %vm1072, %v948
      %1078 = vst.msk [vmem:[%s172 + $0x14] sm:$0xf] %vm1072, %v949
      %1079 = vst.msk [vmem:[%s172 + $0x18] sm:$0xf] %vm1072, %v950
      %1080 = vst.msk [vmem:[%s172 + $0x1c] sm:$0xf] %vm1072, %v951
      %1081 = vst.msk [vmem:[%s172 + $0x20] sm:$0xf] %vm1072, %v952
      %1082 = vst.msk [vmem:[%s172 + $0x24] sm:$0xf] %vm1072, %v953
      %1083 = vst.msk [vmem:[%s172 + $0x28] sm:$0xf] %vm1072, %v954
      %1084 = vst.msk [vmem:[%s172 + $0x2c] sm:$0xf] %vm1072, %v955
      %1085 = vst.msk [vmem:[%s172 + $0x30] sm:$0xf] %vm1072, %v956
      %1086 = vst.msk [vmem:[%s172 + $0x34] sm:$0xf] %vm1072, %v957
      %1087 = vst.msk [vmem:[%s172 + $0x38] sm:$0xf] %vm1072, %v958
      %1088 = vst.msk [vmem:[%s172 + $0x3c] sm:$0xf] %vm1072, %v959
      %1089 = vst.msk [vmem:[%s172 + $0x40] sm:$0xf] %vm1072, %v960
      %1090 = vst.msk [vmem:[%s172 + $0x44] sm:$0xf] %vm1072, %v961
      %1091 = vst.msk [vmem:[%s172 + $0x48] sm:$0xf] %vm1072, %v962
      %1092 = vst.msk [vmem:[%s172 + $0x4c] sm:$0xf] %vm1072, %v963
      %1093 = vst.msk [vmem:[%s172 + $0x50] sm:$0xf] %vm1072, %v964
      %1094 = vst.msk [vmem:[%s172 + $0x54] sm:$0xf] %vm1072, %v965
      %1095 = vst.msk [vmem:[%s172 + $0x58] sm:$0xf] %vm1072, %v966
      %1096 = vst.msk [vmem:[%s172 + $0x5c] sm:$0xf] %vm1072, %v967
      %1097 = vst.msk [vmem:[%s172 + $0x60] sm:$0xf] %vm1072, %v968
      %1098 = vst.msk [vmem:[%s172 + $0x64] sm:$0xf] %vm1072, %v969
      %1099 = vst.msk [vmem:[%s172 + $0x68] sm:$0xf] %vm1072, %v970
      %1100 = vst.msk [vmem:[%s172 + $0x6c] sm:$0xf] %vm1072, %v971
      %1101 = vst.msk [vmem:[%s172 + $0x70] sm:$0xf] %vm1072, %v972
      %1102 = vst.msk [vmem:[%s172 + $0x74] sm:$0xf] %vm1072, %v973
      %1103 = vst.msk [vmem:[%s172 + $0x78] sm:$0xf] %vm1072, %v974
      %1104 = vst.msk [vmem:[%s172 + $0x7c] sm:$0xf] %vm1072, %v975
      %1105 = vst.msk [vmem:[%s172 + $0x80] sm:$0xf] %vm1072, %v976
      %1106 = vst.msk [vmem:[%s172 + $0x84] sm:$0xf] %vm1072, %v977
      %1107 = vst.msk [vmem:[%s172 + $0x88] sm:$0xf] %vm1072, %v978
      %1108 = vst.msk [vmem:[%s172 + $0x8c] sm:$0xf] %vm1072, %v979
      %1109 = vst.msk [vmem:[%s172 + $0x90] sm:$0xf] %vm1072, %v980
      %1110 = vst.msk [vmem:[%s172 + $0x94] sm:$0xf] %vm1072, %v981
      %1111 = vst.msk [vmem:[%s172 + $0x98] sm:$0xf] %vm1072, %v982
      %1112 = vst.msk [vmem:[%s172 + $0x9c] sm:$0xf] %vm1072, %v983
      %1113 = vst.msk [vmem:[%s172 + $0xa0] sm:$0xf] %vm1072, %v984
      %1114 = vst.msk [vmem:[%s172 + $0xa4] sm:$0xf] %vm1072, %v985
      %1115 = vst.msk [vmem:[%s172 + $0xa8] sm:$0xf] %vm1072, %v986
      %1116 = vst.msk [vmem:[%s172 + $0xac] sm:$0xf] %vm1072, %v987
      %1117 = vst.msk [vmem:[%s172 + $0xb0] sm:$0xf] %vm1072, %v988
      %1118 = vst.msk [vmem:[%s172 + $0xb4] sm:$0xf] %vm1072, %v989
      %1119 = vst.msk [vmem:[%s172 + $0xb8] sm:$0xf] %vm1072, %v990
      %1120 = vst.msk [vmem:[%s172 + $0xbc] sm:$0xf] %vm1072, %v991
      %1121 = vst.msk [vmem:[%s172 + $0xc0] sm:$0xf] %vm1072, %v992
      %1122 = vst.msk [vmem:[%s172 + $0xc4] sm:$0xf] %vm1072, %v993
      %1123 = vst.msk [vmem:[%s172 + $0xc8] sm:$0xf] %vm1072, %v994
      %1124 = vst.msk [vmem:[%s172 + $0xcc] sm:$0xf] %vm1072, %v995
      %1125 = vst.msk [vmem:[%s172 + $0xd0] sm:$0xf] %vm1072, %v996
      %1126 = vst.msk [vmem:[%s172 + $0xd4] sm:$0xf] %vm1072, %v997
      %1127 = vst.msk [vmem:[%s172 + $0xd8] sm:$0xf] %vm1072, %v998
      %1128 = vst.msk [vmem:[%s172 + $0xdc] sm:$0xf] %vm1072, %v999
      %1129 = vst.msk [vmem:[%s172 + $0xe0] sm:$0xf] %vm1072, %v1000
      %1130 = vst.msk [vmem:[%s172 + $0xe4] sm:$0xf] %vm1072, %v1001
      %1131 = vst.msk [vmem:[%s172 + $0xe8] sm:$0xf] %vm1072, %v1002
      %1132 = vst.msk [vmem:[%s172 + $0xec] sm:$0xf] %vm1072, %v1003
      %1133 = vst.msk [vmem:[%s172 + $0xf0] sm:$0xf] %vm1072, %v1004
      %1134 = vst.msk [vmem:[%s172 + $0xf4] sm:$0xf] %vm1072, %v1005
      %1135 = vst.msk [vmem:[%s172 + $0xf8] sm:$0xf] %vm1072, %v1006
      %1136 = vst.msk [vmem:[%s172 + $0xfc] sm:$0xf] %vm1072, %v1007
      %s1137 = smul.u32 64, %s14
      %p1138 = scmp.lt.s32.totalorder %s1137, 255
      %s1139 = scalar_select %p1138, %s1137, 255
      %s1140 = smul.addr %s1139, 4
      %s1141 = scalar_lea.vmem %s3, %s1140
      // Predicated region
      $region33: #{decoder_forward.32} parent=31 // pred_check
        %p1142 = pneg %p100
      $region34: #{decoder_forward.32} parent=31 // pred_check_branch
        %1144 = sbr.rel (%p1142) target = $region36
      $region35: #{decoder_forward.32} parent=31 // pred_region
        %s1145 = smul.u32 64, %s14
      $region36: #{decoder_forward.32} parent=31 // pred_fallthru
        _
    $region32: #{decoder_forward.32} parent=5 // pred_fallthru
      _
    %p1146 = scmp.le.s32.totalorder 2, %s9
    // Predicated region
    $region37: #{decoder_forward.32} parent=5 // pred_check
      %p1147 = pneg %p1146
    $region38: #{decoder_forward.32} parent=5 // pred_check_branch
      %1149 = sbr.rel (%p1147) target = $region40
    $region39: #{decoder_forward.32} parent=5 // pred_region
      %s1150 = ssub.s32 %s9, 2
      // Predicated region
      $region41: #{decoder_forward.32} parent=39 // pred_check
        %p1151 = pneg %p106
      $region42: #{decoder_forward.32} parent=39 // pred_check_branch
        %1153 = sbr.rel (%p1151) target = $region44
      $region43: #{decoder_forward.32} parent=39 // pred_region
        %s1154 = smul.u32 64, %s15
        %p1155 = scmp.lt.s32.totalorder %s1154, 255
        %s1156 = scalar_select %p1155, %s1154, 255
        %s1157 = smul.addr %s1156, 4
        %s1158 = scalar_lea.vmem %s3, %s1157
      $region44: #{decoder_forward.32} parent=39 // pred_fallthru
        _
    $region40: #{decoder_forward.32} parent=5 // pred_fallthru
      _
  $region6: #{decoder_forward.32} parent=0 // loop_footer
    %s13 = sadd.s32 1, %s9
  $region7: #{decoder_forward.32} parent=0 // loop_footer_branch
    %8 = sbr.rel target = $region3
  $region8: #{decoder_forward.32} parent=0 // loop_exit
    _

// kernel: decoder_forward.35
$region0: #{decoder_forward.35}
  #allocation0 [shape = 'u32[]', space=smem, size = 0x4, offset = 0x4, fixed_abs, tag = 'smem constant byte address 0x4 - core index']
  #allocation1 [shape = 'u32[144,128]{1,0:T(1,128)}', space=vmem, size = 0x12000, scoped, tag = 'internal scratch']
  %s0 = inlined_call_operand.vmem [shape: bf16[2048,72], index: 0, kind: input, shape index: {}]
  %s1 = inlined_call_operand.vmem [shape: bf16[72,3], index: 1, kind: input, shape index: {}]
  %s2 = inlined_call_operand.vmem [shape: f32[1,3], index: 2, kind: input, shape index: {}]
  %s3 = inlined_call_operand.vmem [shape: f32[1,3], index: 3, kind: input, shape index: {}]
  %s4 = inlined_call_operand.vmem [shape: f32[1,3], index: 4, kind: input, shape index: {}]
  %s5 = inlined_call_operand.vmem [shape: f32[2048,3], index: 5, kind: output, shape index: {}]
  %s6 = sld [smem:[#allocation0]]
  $region53: #{decoder_forward.35} parent=0
    _
  %s8 = ssub.s32 1, %s6
  %s9 = scalar_select 0, %s8, %s6
  loop: start=0, step=1, limit=6
  $region2: #{decoder_forward.35} parent=0 // loop_pre_header
    _
  $region3: #{decoder_forward.35} parent=0 // loop_header
    %s11 = sphi 0, %s15
    %p12 = scmp.ge.s32.totalorder %s11, 6
    %s21 = sphi 0, %s23
    %s24 = sphi 0, %s21
    %s25 = sphi 0, %s24
    %s41 = sphi 0, %s25
    %s45 = sphi 0, %s45
    %s47 = sphi 0, %s45
    %s48 = sphi 0, %s47
    %s62 = sphi 0, %s48
    %s66 = sphi 0, %s66
    %s68 = sphi 0, %s66
    %s69 = sphi 0, %s68
    %s83 = sphi 0, %s69
    %s87 = sphi 0, %s87
    %s89 = sphi 0, %s87
    %s90 = sphi 0, %s89
    %s104 = sphi 0, %s90
    %s108 = sphi 0, %s108
    %s110 = sphi 0, %s108
    %s111 = sphi 0, %s110
    %s125 = sphi 0, %s111
    %s131 = sphi 0, %s133
    %s134 = sphi 0, %s131
    %s135 = sphi 0, %s134
    %s151 = sphi 0, %s135
  $region4: #{decoder_forward.35} parent=0 // loop_header_branch
    %14 = sbr.rel (%p12) target = $region8
  $region5: #{decoder_forward.35} parent=0 // loop_body
    %s16 = ssub.s32 %s11, 1
    %s17 = ssub.s32 %s11, 2
    %s18 = sadd.s32 %s11, 1
    %s19 = ssub.s32 %s11, %s18
    %p20 = scmp.eq.s32.totalorder %s19, 0
    %s22 = sadd.s32 %s21, 1
    %s23 = scalar_select %p20, %s21, %s22
    %p26 = pneg %p20
    %p27 = scmp.eq.s32.totalorder %s11, 3
    %p28 = por %p26, %p27
    %p29 = scmp.ne.s32.totalorder %s21, %s24
    %p30 = scmp.eq.s32.totalorder %s11, 0
    %p31 = por %p29, %p30
    %p32 = scmp.ne.s32.totalorder %s21, %s24
    %p33 = scmp.eq.s32.totalorder %s16, 3
    %p34 = por %p32, %p33
    %p35 = scmp.ne.s32.totalorder %s24, %s25
    %p36 = scmp.eq.s32.totalorder %s16, 0
    %p37 = por %p35, %p36
    %p38 = scmp.ne.s32.totalorder %s24, %s25
    %p39 = scmp.eq.s32.totalorder %s17, 3
    %p40 = por %p38, %p39
    %p42 = scmp.ne.s32.totalorder %s25, %s41
    %p43 = scmp.eq.s32.totalorder %s17, 0
    %p44 = por %p42, %p43
    %s46 = sadd.s32 %s45, 1
    %p49 = scmp.eq.s32.totalorder %s11, 3
    %p50 = scmp.ne.s32.totalorder %s45, %s47
    %p51 = scmp.eq.s32.totalorder %s11, 0
    %p52 = por %p50, %p51
    %p53 = scmp.ne.s32.totalorder %s45, %s47
    %p54 = scmp.eq.s32.totalorder %s16, 3
    %p55 = por %p53, %p54
    %p56 = scmp.ne.s32.totalorder %s47, %s48
    %p57 = scmp.eq.s32.totalorder %s16, 0
    %p58 = por %p56, %p57
    %p59 = scmp.ne.s32.totalorder %s47, %s48
    %p60 = scmp.eq.s32.totalorder %s17, 3
    %p61 = por %p59, %p60
    %p63 = scmp.ne.s32.totalorder %s48, %s62
    %p64 = scmp.eq.s32.totalorder %s17, 0
    %p65 = por %p63, %p64
    %s67 = sadd.s32 %s66, 1
    %p70 = scmp.eq.s32.totalorder %s11, 3
    %p71 = scmp.ne.s32.totalorder %s66, %s68
    %p72 = scmp.eq.s32.totalorder %s11, 0
    %p73 = por %p71, %p72
    %p74 = scmp.ne.s32.totalorder %s66, %s68
    %p75 = scmp.eq.s32.totalorder %s16, 3
    %p76 = por %p74, %p75
    %p77 = scmp.ne.s32.totalorder %s68, %s69
    %p78 = scmp.eq.s32.totalorder %s16, 0
    %p79 = por %p77, %p78
    %p80 = scmp.ne.s32.totalorder %s68, %s69
    %p81 = scmp.eq.s32.totalorder %s17, 3
    %p82 = por %p80, %p81
    %p84 = scmp.ne.s32.totalorder %s69, %s83
    %p85 = scmp.eq.s32.totalorder %s17, 0
    %p86 = por %p84, %p85
    %s88 = sadd.s32 %s87, 1
    %p91 = scmp.eq.s32.totalorder %s11, 3
    %p92 = scmp.ne.s32.totalorder %s87, %s89
    %p93 = scmp.eq.s32.totalorder %s11, 0
    %p94 = por %p92, %p93
    %p95 = scmp.ne.s32.totalorder %s87, %s89
    %p96 = scmp.eq.s32.totalorder %s16, 3
    %p97 = por %p95, %p96
    %p98 = scmp.ne.s32.totalorder %s89, %s90
    %p99 = scmp.eq.s32.totalorder %s16, 0
    %p100 = por %p98, %p99
    %p101 = scmp.ne.s32.totalorder %s89, %s90
    %p102 = scmp.eq.s32.totalorder %s17, 3
    %p103 = por %p101, %p102
    %p105 = scmp.ne.s32.totalorder %s90, %s104
    %p106 = scmp.eq.s32.totalorder %s17, 0
    %p107 = por %p105, %p106
    %s109 = sadd.s32 %s108, 1
    %p112 = scmp.eq.s32.totalorder %s11, 3
    %p113 = scmp.ne.s32.totalorder %s108, %s110
    %p114 = scmp.eq.s32.totalorder %s11, 0
    %p115 = por %p113, %p114
    %p116 = scmp.ne.s32.totalorder %s108, %s110
    %p117 = scmp.eq.s32.totalorder %s16, 3
    %p118 = por %p116, %p117
    %p119 = scmp.ne.s32.totalorder %s110, %s111
    %p120 = scmp.eq.s32.totalorder %s16, 0
    %p121 = por %p119, %p120
    %p122 = scmp.ne.s32.totalorder %s110, %s111
    %p123 = scmp.eq.s32.totalorder %s17, 3
    %p124 = por %p122, %p123
    %p126 = scmp.ne.s32.totalorder %s111, %s125
    %p127 = scmp.eq.s32.totalorder %s17, 0
    %p128 = por %p126, %p127
    %s129 = ssub.s32 %s11, %s18
    %p130 = scmp.eq.s32.totalorder %s129, 0
    %s132 = sadd.s32 %s131, 1
    %s133 = scalar_select %p130, %s131, %s132
    %p136 = pneg %p130
    %p137 = scmp.eq.s32.totalorder %s11, 3
    %p138 = por %p136, %p137
    %p139 = scmp.ne.s32.totalorder %s131, %s134
    %p140 = scmp.eq.s32.totalorder %s11, 0
    %p141 = por %p139, %p140
    %p142 = scmp.ne.s32.totalorder %s131, %s134
    %p143 = scmp.eq.s32.totalorder %s16, 3
    %p144 = por %p142, %p143
    %p145 = scmp.ne.s32.totalorder %s134, %s135
    %p146 = scmp.eq.s32.totalorder %s16, 0
    %p147 = por %p145, %p146
    %p148 = scmp.ne.s32.totalorder %s134, %s135
    %p149 = scmp.eq.s32.totalorder %s17, 3
    %p150 = por %p148, %p149
    %p152 = scmp.ne.s32.totalorder %s135, %s151
    %p153 = scmp.eq.s32.totalorder %s17, 0
    %p154 = por %p152, %p153
    %p155 = scmp.le.s32.totalorder 1, %s11
    %p156 = scmp.lt.s32.totalorder %s11, 5
    %p157 = pnand %p155, %p156
    %p158 = pneg %p157
    // Predicated region
    $region9: #{decoder_forward.35} parent=5 // pred_check
      _
    $region10: #{decoder_forward.35} parent=5 // pred_check_branch
      %160 = sbr.rel (%p157) target = $region12
    $region11: #{decoder_forward.35} parent=5 // pred_region
      %s161 = ssub.s32 %s11, 1
      // Predicated region
      $region13: #{decoder_forward.35} parent=11 // pred_check
        %p162 = pneg %p58
      $region14: #{decoder_forward.35} parent=11 // pred_check_branch
        %164 = sbr.rel (%p162) target = $region16
      $region15: #{decoder_forward.35} parent=11 // pred_region
        _
      $region16: #{decoder_forward.35} parent=11 // pred_fallthru
        _
      // Predicated region
      $region17: #{decoder_forward.35} parent=11 // pred_check
        %p165 = pneg %p79
      $region18: #{decoder_forward.35} parent=11 // pred_check_branch
        %167 = sbr.rel (%p165) target = $region20
      $region19: #{decoder_forward.35} parent=11 // pred_region
        _
      $region20: #{decoder_forward.35} parent=11 // pred_fallthru
        _
      // Predicated region
      $region21: #{decoder_forward.35} parent=11 // pred_check
        %p168 = pneg %p100
      $region22: #{decoder_forward.35} parent=11 // pred_check_branch
        %170 = sbr.rel (%p168) target = $region24
      $region23: #{decoder_forward.35} parent=11 // pred_region
        _
      $region24: #{decoder_forward.35} parent=11 // pred_fallthru
        _
      // Predicated region
      $region25: #{decoder_forward.35} parent=11 // pred_check
        %p171 = pneg %p121
      $region26: #{decoder_forward.35} parent=11 // pred_check_branch
        %173 = sbr.rel (%p171) target = $region28
      $region27: #{decoder_forward.35} parent=11 // pred_region
        _
      $region28: #{decoder_forward.35} parent=11 // pred_fallthru
        _
    $region12: #{decoder_forward.35} parent=5 // pred_fallthru
      _
    %p174 = scmp.lt.s32.totalorder %s11, 4
    // Predicated region
    $region29: #{decoder_forward.35} parent=5 // pred_check
      %p175 = pneg %p174
    $region30: #{decoder_forward.35} parent=5 // pred_check_branch
      %177 = sbr.rel (%p175) target = $region32
    $region31: #{decoder_forward.35} parent=5 // pred_region
      // Predicated region
      $region33: #{decoder_forward.35} parent=31 // pred_check
        %p178 = pneg %p31
      $region34: #{decoder_forward.35} parent=31 // pred_check_branch
        %180 = sbr.rel (%p178) target = $region36
      $region35: #{decoder_forward.35} parent=31 // pred_region
        %s181 = smul.u32 64, %s11
        %p182 = scmp.lt.s32.totalorder %s181, 255
        %s183 = scalar_select %p182, %s181, 255
        %s184 = smul.addr %s183, 4
        %s185 = scalar_lea.vmem %s0, %s184
        %s186 = smul.u32 64, %s11
      $region36: #{decoder_forward.35} parent=31 // pred_fallthru
        _
    $region32: #{decoder_forward.35} parent=5 // pred_fallthru
      _
    %p187 = scmp.le.s32.totalorder 1, %s11
    %p188 = scmp.lt.s32.totalorder %s11, 5
    %p189 = pnand %p187, %p188
    %p190 = pneg %p189
    // Predicated region
    $region37: #{decoder_forward.35} parent=5 // pred_check
      _
    $region38: #{decoder_forward.35} parent=5 // pred_check_branch
      %192 = sbr.rel (%p189) target = $region40
    $region39: #{decoder_forward.35} parent=5 // pred_region
      %s193 = ssub.s32 %s11, 1
      %s194 = smul.u32 64, %s16
      %p195 = scmp.lt.s32.totalorder %s194, 255
      %s196 = scalar_select %p195, %s194, 255
      %s197 = smul.addr %s196, 4
      %s198 = scalar_lea.vmem %s0, %s197
      %p199 = pneg %p37
      %p200 = pneg %p34
      %p201 = pneg %p58
      %p202 = pneg %p55
      %p203 = pneg %p79
      %p204 = pneg %p76
      %p205 = pneg %p100
      %p206 = pneg %p97
      %p207 = pneg %p121
      %p208 = pneg %p118
      %p209 = pneg %p147
      %p210 = pneg %p144
      %s211 = smul.u32 64, %s16
      %p212 = scmp.lt.s32.totalorder %s211, 255
      %s213 = scalar_select %p212, %s211, 255
      %s214 = smul.addr %s213, 8
      %s215 = scalar_lea.vmem %s5, %s214
      %s216 = smul.u32 64, %s16
      %p217 = scmp.lt.s32.totalorder %s216, 255
      %s218 = scalar_select %p217, %s216, 255
      %s219 = smul.addr %s218, 4
      %s220 = scalar_lea.vmem %s0, %s219
      %s221 = smul.u32 64, %s16
      %s222 = smul.u32 64, %s16
      %p223 = scmp.lt.s32.totalorder %s222, 255
      %s224 = scalar_select %p223, %s222, 255
      %s225 = smul.addr %s224, 8
      %s226 = scalar_lea.vmem %s5, %s225
      %s227 = smul.u32 64, %s16
      %v229 = vld [vmem:[%s220] sm:$0xf]
      %v230 = vld [vmem:[%s220 + $0x4] sm:$0xf]
      %v231 = vld [vmem:[%s220 + $0x8] sm:$0xf]
      %v232 = vld [vmem:[%s220 + $0xc] sm:$0xf]
      %v233 = vld [vmem:[%s220 + $0x10] sm:$0xf]
      %v234 = vld [vmem:[%s220 + $0x14] sm:$0xf]
      %v235 = vld [vmem:[%s220 + $0x18] sm:$0xf]
      %v236 = vld [vmem:[%s220 + $0x1c] sm:$0xf]
      %v237 = vld [vmem:[%s220 + $0x20] sm:$0xf]
      %v238 = vld [vmem:[%s220 + $0x24] sm:$0xf]
      %v239 = vld [vmem:[%s220 + $0x28] sm:$0xf]
      %v240 = vld [vmem:[%s220 + $0x2c] sm:$0xf]
      %v241 = vld [vmem:[%s220 + $0x30] sm:$0xf]
      %v242 = vld [vmem:[%s220 + $0x34] sm:$0xf]
      %v243 = vld [vmem:[%s220 + $0x38] sm:$0xf]
      %v244 = vld [vmem:[%s220 + $0x3c] sm:$0xf]
      %v245 = vld [vmem:[%s220 + $0x40] sm:$0xf]
      %v246 = vld [vmem:[%s220 + $0x44] sm:$0xf]
      %v247 = vld [vmem:[%s220 + $0x48] sm:$0xf]
      %v248 = vld [vmem:[%s220 + $0x4c] sm:$0xf]
      %v249 = vld [vmem:[%s220 + $0x50] sm:$0xf]
      %v250 = vld [vmem:[%s220 + $0x54] sm:$0xf]
      %v251 = vld [vmem:[%s220 + $0x58] sm:$0xf]
      %v252 = vld [vmem:[%s220 + $0x5c] sm:$0xf]
      %v253 = vld [vmem:[%s220 + $0x60] sm:$0xf]
      %v254 = vld [vmem:[%s220 + $0x64] sm:$0xf]
      %v255 = vld [vmem:[%s220 + $0x68] sm:$0xf]
      %v256 = vld [vmem:[%s220 + $0x6c] sm:$0xf]
      %v257 = vld [vmem:[%s220 + $0x70] sm:$0xf]
      %v258 = vld [vmem:[%s220 + $0x74] sm:$0xf]
      %v259 = vld [vmem:[%s220 + $0x78] sm:$0xf]
      %v260 = vld [vmem:[%s220 + $0x7c] sm:$0xf]
      %v261 = vld [vmem:[%s220 + $0x80] sm:$0xf]
      %v262 = vld [vmem:[%s220 + $0x84] sm:$0xf]
      %v263 = vld [vmem:[%s220 + $0x88] sm:$0xf]
      %v264 = vld [vmem:[%s220 + $0x8c] sm:$0xf]
      %v265 = vld [vmem:[%s220 + $0x90] sm:$0xf]
      %v266 = vld [vmem:[%s220 + $0x94] sm:$0xf]
      %v267 = vld [vmem:[%s220 + $0x98] sm:$0xf]
      %v268 = vld [vmem:[%s220 + $0x9c] sm:$0xf]
      %v269 = vld [vmem:[%s220 + $0xa0] sm:$0xf]
      %v270 = vld [vmem:[%s220 + $0xa4] sm:$0xf]
      %v271 = vld [vmem:[%s220 + $0xa8] sm:$0xf]
      %v272 = vld [vmem:[%s220 + $0xac] sm:$0xf]
      %v273 = vld [vmem:[%s220 + $0xb0] sm:$0xf]
      %v274 = vld [vmem:[%s220 + $0xb4] sm:$0xf]
      %v275 = vld [vmem:[%s220 + $0xb8] sm:$0xf]
      %v276 = vld [vmem:[%s220 + $0xbc] sm:$0xf]
      %v277 = vld [vmem:[%s220 + $0xc0] sm:$0xf]
      %v278 = vld [vmem:[%s220 + $0xc4] sm:$0xf]
      %v279 = vld [vmem:[%s220 + $0xc8] sm:$0xf]
      %v280 = vld [vmem:[%s220 + $0xcc] sm:$0xf]
      %v281 = vld [vmem:[%s220 + $0xd0] sm:$0xf]
      %v282 = vld [vmem:[%s220 + $0xd4] sm:$0xf]
      %v283 = vld [vmem:[%s220 + $0xd8] sm:$0xf]
      %v284 = vld [vmem:[%s220 + $0xdc] sm:$0xf]
      %v285 = vld [vmem:[%s220 + $0xe0] sm:$0xf]
      %v286 = vld [vmem:[%s220 + $0xe4] sm:$0xf]
      %v287 = vld [vmem:[%s220 + $0xe8] sm:$0xf]
      %v288 = vld [vmem:[%s220 + $0xec] sm:$0xf]
      %v289 = vld [vmem:[%s220 + $0xf0] sm:$0xf]
      %v290 = vld [vmem:[%s220 + $0xf4] sm:$0xf]
      %v291 = vld [vmem:[%s220 + $0xf8] sm:$0xf]
      %v292 = vld [vmem:[%s220 + $0xfc] sm:$0xf]
      %v293 = vld [vmem:[%s1] sm:$0xf]
      %v294 = vld [vmem:[%s1 + $0x4] sm:$0xf]
      %v295 = vld [vmem:[%s1 + $0x8] sm:$0xf]
      %v296 = vld [vmem:[%s1 + $0xc] sm:$0xf]
      %v297 = vld [vmem:[%s1 + $0x10] sm:$0xf]
      %v298 = vld [vmem:[%s1 + $0x14] sm:$0xf]
      %v299 = vld [vmem:[%s1 + $0x18] sm:$0xf]
      %v300 = vld [vmem:[%s1 + $0x1c] sm:$0xf]
      %v301 = vld [vmem:[%s1 + $0x20] sm:$0xf]
      %v302 = vld [vmem:[%s2] sm:$0x1]
      %v304 = vlaneseq
      %v305 = vshrl.u32 %v304, 7
      %v306 = vsub.s32 0, %v305
      %v307 = vrot.slane %v302, %v306
      %v373 = vunpack.c.l.b16 %v229
      %v374 = vunpack.c.l.b16 %v230
      %v375 = vunpack.c.l.b16 %v231
      %v376 = vunpack.c.l.b16 %v232
      %v377 = vunpack.c.l.b16 %v233
      %v378 = vunpack.c.l.b16 %v234
      %v379 = vunpack.c.l.b16 %v235
      %v380 = vunpack.c.l.b16 %v236
      %v381 = vunpack.c.l.b16 %v237
      %v382 = vunpack.c.l.b16 %v238
      %v383 = vunpack.c.l.b16 %v239
      %v384 = vunpack.c.l.b16 %v240
      %v385 = vunpack.c.l.b16 %v241
      %v386 = vunpack.c.l.b16 %v242
      %v387 = vunpack.c.l.b16 %v243
      %v388 = vunpack.c.l.b16 %v244
      %v389 = vunpack.c.l.b16 %v245
      %v390 = vunpack.c.l.b16 %v246
      %v391 = vunpack.c.l.b16 %v247
      %v392 = vunpack.c.l.b16 %v248
      %v393 = vunpack.c.l.b16 %v249
      %v394 = vunpack.c.l.b16 %v250
      %v395 = vunpack.c.l.b16 %v251
      %v396 = vunpack.c.l.b16 %v252
      %v397 = vunpack.c.l.b16 %v253
      %v398 = vunpack.c.l.b16 %v254
      %v399 = vunpack.c.l.b16 %v255
      %v400 = vunpack.c.l.b16 %v256
      %v401 = vunpack.c.l.b16 %v257
      %v402 = vunpack.c.l.b16 %v258
      %v403 = vunpack.c.l.b16 %v259
      %v404 = vunpack.c.l.b16 %v260
      %v405 = vunpack.c.l.b16 %v261
      %v406 = vunpack.c.l.b16 %v262
      %v407 = vunpack.c.l.b16 %v263
      %v408 = vunpack.c.l.b16 %v264
      %v409 = vunpack.c.l.b16 %v265
      %v410 = vunpack.c.l.b16 %v266
      %v411 = vunpack.c.l.b16 %v267
      %v412 = vunpack.c.l.b16 %v268
      %v413 = vunpack.c.l.b16 %v269
      %v414 = vunpack.c.l.b16 %v270
      %v415 = vunpack.c.l.b16 %v271
      %v416 = vunpack.c.l.b16 %v272
      %v417 = vunpack.c.l.b16 %v273
      %v418 = vunpack.c.l.b16 %v274
      %v419 = vunpack.c.l.b16 %v275
      %v420 = vunpack.c.l.b16 %v276
      %v421 = vunpack.c.l.b16 %v277
      %v422 = vunpack.c.l.b16 %v278
      %v423 = vunpack.c.l.b16 %v279
      %v424 = vunpack.c.l.b16 %v280
      %v425 = vunpack.c.l.b16 %v281
      %v426 = vunpack.c.l.b16 %v282
      %v427 = vunpack.c.l.b16 %v283
      %v428 = vunpack.c.l.b16 %v284
      %v429 = vunpack.c.l.b16 %v285
      %v430 = vunpack.c.l.b16 %v286
      %v431 = vunpack.c.l.b16 %v287
      %v432 = vunpack.c.l.b16 %v288
      %v433 = vunpack.c.l.b16 %v289
      %v434 = vunpack.c.l.b16 %v290
      %v435 = vunpack.c.l.b16 %v291
      %v436 = vunpack.c.l.b16 %v292
      %v437 = vpack.c.b16 %v374, %v373
      %v438 = vpack.c.b16 %v376, %v375
      %v439 = vpack.c.b16 %v378, %v377
      %v440 = vpack.c.b16 %v380, %v379
      %v441 = vpack.c.b16 %v382, %v381
      %v442 = vpack.c.b16 %v384, %v383
      %v443 = vpack.c.b16 %v386, %v385
      %v444 = vpack.c.b16 %v388, %v387
      %v445 = vpack.c.b16 %v390, %v389
      %v446 = vpack.c.b16 %v392, %v391
      %v447 = vpack.c.b16 %v394, %v393
      %v448 = vpack.c.b16 %v396, %v395
      %v449 = vpack.c.b16 %v398, %v397
      %v450 = vpack.c.b16 %v400, %v399
      %v451 = vpack.c.b16 %v402, %v401
      %v452 = vpack.c.b16 %v404, %v403
      %v453 = vpack.c.b16 %v406, %v405
      %v454 = vpack.c.b16 %v408, %v407
      %v455 = vpack.c.b16 %v410, %v409
      %v456 = vpack.c.b16 %v412, %v411
      %v457 = vpack.c.b16 %v414, %v413
      %v458 = vpack.c.b16 %v416, %v415
      %v459 = vpack.c.b16 %v418, %v417
      %v460 = vpack.c.b16 %v420, %v419
      %v461 = vpack.c.b16 %v422, %v421
      %v462 = vpack.c.b16 %v424, %v423
      %v463 = vpack.c.b16 %v426, %v425
      %v464 = vpack.c.b16 %v428, %v427
      %v465 = vpack.c.b16 %v430, %v429
      %v466 = vpack.c.b16 %v432, %v431
      %v467 = vpack.c.b16 %v434, %v433
      %v468 = vpack.c.b16 %v436, %v435
      %v478 = vunpack.c.l.b16 %v293
      %v479 = vunpack.c.l.b16 %v294
      %v480 = vunpack.c.l.b16 %v295
      %v481 = vunpack.c.l.b16 %v296
      %v482 = vunpack.c.l.b16 %v297
      %v483 = vunpack.c.l.b16 %v298
      %v484 = vunpack.c.l.b16 %v299
      %v485 = vunpack.c.l.b16 %v300
      %v486 = vunpack.c.l.b16 %v301
      %v487 = vpack.c.b16 %v479, %v478
      %v488 = vpack.c.b16 %v481, %v480
      %v489 = vpack.c.b16 %v483, %v482
      %v490 = vpack.c.b16 %v485, %v484
      %v491 = vpack.c.b16 %v486, %v486
      %vm496 = vcmask 588800
      %v498 = vsel %vm496, %v437, 0
      %v501 = vsel %vm496, %v438, 0
      %v504 = vsel %vm496, %v439, 0
      %v507 = vsel %vm496, %v440, 0
      %v510 = vsel %vm496, %v441, 0
      %v513 = vsel %vm496, %v442, 0
      %v516 = vsel %vm496, %v443, 0
      %v519 = vsel %vm496, %v444, 0
      %v522 = vsel %vm496, %v445, 0
      %v525 = vsel %vm496, %v446, 0
      %v528 = vsel %vm496, %v447, 0
      %v531 = vsel %vm496, %v448, 0
      %v534 = vsel %vm496, %v449, 0
      %v537 = vsel %vm496, %v450, 0
      %v540 = vsel %vm496, %v451, 0
      %v543 = vsel %vm496, %v452, 0
      %v546 = vsel %vm496, %v453, 0
      %v549 = vsel %vm496, %v454, 0
      %v552 = vsel %vm496, %v455, 0
      %v555 = vsel %vm496, %v456, 0
      %v558 = vsel %vm496, %v457, 0
      %v561 = vsel %vm496, %v458, 0
      %v564 = vsel %vm496, %v459, 0
      %v567 = vsel %vm496, %v460, 0
      %v570 = vsel %vm496, %v461, 0
      %v573 = vsel %vm496, %v462, 0
      %v576 = vsel %vm496, %v463, 0
      %v579 = vsel %vm496, %v464, 0
      %v582 = vsel %vm496, %v465, 0
      %v585 = vsel %vm496, %v466, 0
      %v588 = vsel %vm496, %v467, 0
      %v591 = vsel %vm496, %v468, 0
      %vm593 = vcmask 1043456
      %v595 = vsel %vm593, %v491, 0
      %597 = vmatprep.subr.bf16.mxu0 0
      %598 = vmatpush1.bf16.msra.mxu0 0
      %599 = vmatprep.subr.bf16.mxu0 0
      %600 = vmatpush1.bf16.msra.mxu0 0
      %601 = vmatprep.subr.bf16.mxu0 0
      %602 = vmatpush1.bf16.msra.mxu0 0
      %603 = vmatprep.subr.bf16.mxu0 0
      %604 = vmatpush1.bf16.msra.mxu0 %v595
      %605 = vmatprep.subr.bf16.mxu0 0
      %606 = vmatpush1.bf16.msra.mxu0 %v490
      %607 = vmatprep.subr.bf16.mxu0 0
      %608 = vmatpush1.bf16.msra.mxu0 %v489
      %609 = vmatprep.subr.bf16.mxu0 0
      %610 = vmatpush1.bf16.msra.mxu0 %v488
      %611 = vmatprep.subr.bf16.mxu0 0
      %612 = vmatpush1.bf16.msra.mxu0 %v487
      %613 = vmatprep.subr.bf16.mxu0 0
      %614 = vmatpush2.bf16.msra.mxu0 0
      %615 = vmatprep.subr.bf16.mxu0 0
      %616 = vmatpush2.bf16.msra.mxu0 0
      %617 = vmatprep.subr.bf16.mxu0 0
      %618 = vmatpush2.bf16.msra.mxu0 0
      %619 = vmatprep.subr.bf16.mxu0 0
      %620 = vmatpush2.bf16.msra.mxu0 0
      %621 = vmatprep.subr.bf16.mxu0 0
      %622 = vmatpush2.bf16.msra.mxu0 0
      %623 = vmatprep.subr.bf16.mxu0 0
      %624 = vmatpush2.bf16.msra.mxu0 0
      %625 = vmatprep.subr.bf16.mxu0 0
      %626 = vmatpush2.bf16.msra.mxu0 0
      %627 = vmatprep.subr.bf16.mxu0 0
      %628 = vmatpush2.bf16.msra.mxu0 0
      %629 = vmatprep.mubr.bf16.mxu0 0
      %630 = vmatmul.mubr.bf16.gmra.mxu0 %v498
      %v631 = vpop.f32.mrf.mxu0
      %v632 = vadd.f32 %v307, %v631
      %v633 = vpop.f32.mrf.mxu0
      %v634 = vpop.f32.mrf.mxu0
      %v635 = vadd.f32 %v307, %v634
      %v636 = vpop.f32.mrf.mxu0
      %637 = vmatprep.mubr.bf16.mxu0 0
      %638 = vmatmul.mubr.bf16.gmra.mxu0 %v501
      %v639 = vpop.f32.mrf.mxu0
      %v640 = vadd.f32 %v307, %v639
      %v641 = vpop.f32.mrf.mxu0
      %v642 = vpop.f32.mrf.mxu0
      %v643 = vadd.f32 %v307, %v642
      %v644 = vpop.f32.mrf.mxu0
      %645 = vmatprep.mubr.bf16.mxu0 0
      %646 = vmatmul.mubr.bf16.gmra.mxu0 %v504
      %v647 = vpop.f32.mrf.mxu0
      %v648 = vadd.f32 %v307, %v647
      %v649 = vpop.f32.mrf.mxu0
      %v650 = vpop.f32.mrf.mxu0
      %v651 = vadd.f32 %v307, %v650
      %v652 = vpop.f32.mrf.mxu0
      %653 = vmatprep.mubr.bf16.mxu0 0
      %654 = vmatmul.mubr.bf16.gmra.mxu0 %v507
      %v655 = vpop.f32.mrf.mxu0
      %v656 = vadd.f32 %v307, %v655
      %v657 = vpop.f32.mrf.mxu0
      %v658 = vpop.f32.mrf.mxu0
      %v659 = vadd.f32 %v307, %v658
      %v660 = vpop.f32.mrf.mxu0
      %661 = vmatprep.mubr.bf16.mxu0 0
      %662 = vmatmul.mubr.bf16.gmra.mxu0 %v510
      %v663 = vpop.f32.mrf.mxu0
      %v664 = vadd.f32 %v307, %v663
      %v665 = vpop.f32.mrf.mxu0
      %v666 = vpop.f32.mrf.mxu0
      %v667 = vadd.f32 %v307, %v666
      %v668 = vpop.f32.mrf.mxu0
      %669 = vmatprep.mubr.bf16.mxu0 0
      %670 = vmatmul.mubr.bf16.gmra.mxu0 %v513
      %v671 = vpop.f32.mrf.mxu0
      %v672 = vadd.f32 %v307, %v671
      %v673 = vpop.f32.mrf.mxu0
      %v674 = vpop.f32.mrf.mxu0
      %v675 = vadd.f32 %v307, %v674
      %v676 = vpop.f32.mrf.mxu0
      %677 = vmatprep.mubr.bf16.mxu0 0
      %678 = vmatmul.mubr.bf16.gmra.mxu0 %v516
      %v679 = vpop.f32.mrf.mxu0
      %v680 = vadd.f32 %v307, %v679
      %v681 = vpop.f32.mrf.mxu0
      %v682 = vpop.f32.mrf.mxu0
      %v683 = vadd.f32 %v307, %v682
      %v684 = vpop.f32.mrf.mxu0
      %685 = vmatprep.mubr.bf16.mxu0 0
      %686 = vmatmul.mubr.bf16.gmra.mxu0 %v519
      %v687 = vpop.f32.mrf.mxu0
      %v688 = vadd.f32 %v307, %v687
      %v689 = vpop.f32.mrf.mxu0
      %v690 = vpop.f32.mrf.mxu0
      %v691 = vadd.f32 %v307, %v690
      %v692 = vpop.f32.mrf.mxu0
      %693 = vmatprep.mubr.bf16.mxu0 0
      %694 = vmatmul.mubr.bf16.gmra.mxu0 %v522
      %v695 = vpop.f32.mrf.mxu0
      %v696 = vadd.f32 %v307, %v695
      %v697 = vpop.f32.mrf.mxu0
      %v698 = vpop.f32.mrf.mxu0
      %v699 = vadd.f32 %v307, %v698
      %v700 = vpop.f32.mrf.mxu0
      %701 = vmatprep.mubr.bf16.mxu0 0
      %702 = vmatmul.mubr.bf16.gmra.mxu0 %v525
      %v703 = vpop.f32.mrf.mxu0
      %v704 = vadd.f32 %v307, %v703
      %v705 = vpop.f32.mrf.mxu0
      %v706 = vpop.f32.mrf.mxu0
      %v707 = vadd.f32 %v307, %v706
      %v708 = vpop.f32.mrf.mxu0
      %709 = vmatprep.mubr.bf16.mxu0 0
      %710 = vmatmul.mubr.bf16.gmra.mxu0 %v528
      %v711 = vpop.f32.mrf.mxu0
      %v712 = vadd.f32 %v307, %v711
      %v713 = vpop.f32.mrf.mxu0
      %v714 = vpop.f32.mrf.mxu0
      %v715 = vadd.f32 %v307, %v714
      %v716 = vpop.f32.mrf.mxu0
      %717 = vmatprep.mubr.bf16.mxu0 0
      %718 = vmatmul.mubr.bf16.gmra.mxu0 %v531
      %v719 = vpop.f32.mrf.mxu0
      %v720 = vadd.f32 %v307, %v719
      %v721 = vpop.f32.mrf.mxu0
      %v722 = vpop.f32.mrf.mxu0
      %v723 = vadd.f32 %v307, %v722
      %v724 = vpop.f32.mrf.mxu0
      %725 = vmatprep.mubr.bf16.mxu0 0
      %726 = vmatmul.mubr.bf16.gmra.mxu0 %v534
      %v727 = vpop.f32.mrf.mxu0
      %v728 = vadd.f32 %v307, %v727
      %v729 = vpop.f32.mrf.mxu0
      %v730 = vpop.f32.mrf.mxu0
      %v731 = vadd.f32 %v307, %v730
      %v732 = vpop.f32.mrf.mxu0
      %733 = vmatprep.mubr.bf16.mxu0 0
      %734 = vmatmul.mubr.bf16.gmra.mxu0 %v537
      %v735 = vpop.f32.mrf.mxu0
      %v736 = vadd.f32 %v307, %v735
      %v737 = vpop.f32.mrf.mxu0
      %v738 = vpop.f32.mrf.mxu0
      %v739 = vadd.f32 %v307, %v738
      %v740 = vpop.f32.mrf.mxu0
      %741 = vmatprep.mubr.bf16.mxu0 0
      %742 = vmatmul.mubr.bf16.gmra.mxu0 %v540
      %v743 = vpop.f32.mrf.mxu0
      %v744 = vadd.f32 %v307, %v743
      %v745 = vpop.f32.mrf.mxu0
      %v746 = vpop.f32.mrf.mxu0
      %v747 = vadd.f32 %v307, %v746
      %v748 = vpop.f32.mrf.mxu0
      %749 = vmatprep.mubr.bf16.mxu0 0
      %750 = vmatmul.mubr.bf16.gmra.mxu0 %v543
      %v751 = vpop.f32.mrf.mxu0
      %v752 = vadd.f32 %v307, %v751
      %v753 = vpop.f32.mrf.mxu0
      %v754 = vpop.f32.mrf.mxu0
      %v755 = vadd.f32 %v307, %v754
      %v756 = vpop.f32.mrf.mxu0
      %757 = vmatprep.mubr.bf16.mxu0 0
      %758 = vmatmul.mubr.bf16.gmra.mxu0 %v546
      %v759 = vpop.f32.mrf.mxu0
      %v760 = vadd.f32 %v307, %v759
      %v761 = vpop.f32.mrf.mxu0
      %v762 = vpop.f32.mrf.mxu0
      %v763 = vadd.f32 %v307, %v762
      %v764 = vpop.f32.mrf.mxu0
      %765 = vmatprep.mubr.bf16.mxu0 0
      %766 = vmatmul.mubr.bf16.gmra.mxu0 %v549
      %v767 = vpop.f32.mrf.mxu0
      %v768 = vadd.f32 %v307, %v767
      %v769 = vpop.f32.mrf.mxu0
      %v770 = vpop.f32.mrf.mxu0
      %v771 = vadd.f32 %v307, %v770
      %v772 = vpop.f32.mrf.mxu0
      %773 = vmatprep.mubr.bf16.mxu0 0
      %774 = vmatmul.mubr.bf16.gmra.mxu0 %v552
      %v775 = vpop.f32.mrf.mxu0
      %v776 = vadd.f32 %v307, %v775
      %v777 = vpop.f32.mrf.mxu0
      %v778 = vpop.f32.mrf.mxu0
      %v779 = vadd.f32 %v307, %v778
      %v780 = vpop.f32.mrf.mxu0
      %781 = vmatprep.mubr.bf16.mxu0 0
      %782 = vmatmul.mubr.bf16.gmra.mxu0 %v555
      %v783 = vpop.f32.mrf.mxu0
      %v784 = vadd.f32 %v307, %v783
      %v785 = vpop.f32.mrf.mxu0
      %v786 = vpop.f32.mrf.mxu0
      %v787 = vadd.f32 %v307, %v786
      %v788 = vpop.f32.mrf.mxu0
      %789 = vmatprep.mubr.bf16.mxu0 0
      %790 = vmatmul.mubr.bf16.gmra.mxu0 %v558
      %v791 = vpop.f32.mrf.mxu0
      %v792 = vadd.f32 %v307, %v791
      %v793 = vpop.f32.mrf.mxu0
      %v794 = vpop.f32.mrf.mxu0
      %v795 = vadd.f32 %v307, %v794
      %v796 = vpop.f32.mrf.mxu0
      %797 = vmatprep.mubr.bf16.mxu0 0
      %798 = vmatmul.mubr.bf16.gmra.mxu0 %v561
      %v799 = vpop.f32.mrf.mxu0
      %v800 = vadd.f32 %v307, %v799
      %v801 = vpop.f32.mrf.mxu0
      %v802 = vpop.f32.mrf.mxu0
      %v803 = vadd.f32 %v307, %v802
      %v804 = vpop.f32.mrf.mxu0
      %805 = vmatprep.mubr.bf16.mxu0 0
      %806 = vmatmul.mubr.bf16.gmra.mxu0 %v564
      %v807 = vpop.f32.mrf.mxu0
      %v808 = vadd.f32 %v307, %v807
      %v809 = vpop.f32.mrf.mxu0
      %v810 = vpop.f32.mrf.mxu0
      %v811 = vadd.f32 %v307, %v810
      %v812 = vpop.f32.mrf.mxu0
      %813 = vmatprep.mubr.bf16.mxu0 0
      %814 = vmatmul.mubr.bf16.gmra.mxu0 %v567
      %v815 = vpop.f32.mrf.mxu0
      %v816 = vadd.f32 %v307, %v815
      %v817 = vpop.f32.mrf.mxu0
      %v818 = vpop.f32.mrf.mxu0
      %v819 = vadd.f32 %v307, %v818
      %v820 = vpop.f32.mrf.mxu0
      %821 = vmatprep.mubr.bf16.mxu0 0
      %822 = vmatmul.mubr.bf16.gmra.mxu0 %v570
      %v823 = vpop.f32.mrf.mxu0
      %v824 = vadd.f32 %v307, %v823
      %v825 = vpop.f32.mrf.mxu0
      %v826 = vpop.f32.mrf.mxu0
      %v827 = vadd.f32 %v307, %v826
      %v828 = vpop.f32.mrf.mxu0
      %829 = vmatprep.mubr.bf16.mxu0 0
      %830 = vmatmul.mubr.bf16.gmra.mxu0 %v573
      %v831 = vpop.f32.mrf.mxu0
      %v832 = vadd.f32 %v307, %v831
      %v833 = vpop.f32.mrf.mxu0
      %v834 = vpop.f32.mrf.mxu0
      %v835 = vadd.f32 %v307, %v834
      %v836 = vpop.f32.mrf.mxu0
      %837 = vmatprep.mubr.bf16.mxu0 0
      %838 = vmatmul.mubr.bf16.gmra.mxu0 %v576
      %v839 = vpop.f32.mrf.mxu0
      %v840 = vadd.f32 %v307, %v839
      %v841 = vpop.f32.mrf.mxu0
      %v842 = vpop.f32.mrf.mxu0
      %v843 = vadd.f32 %v307, %v842
      %v844 = vpop.f32.mrf.mxu0
      %845 = vmatprep.mubr.bf16.mxu0 0
      %846 = vmatmul.mubr.bf16.gmra.mxu0 %v579
      %v847 = vpop.f32.mrf.mxu0
      %v848 = vadd.f32 %v307, %v847
      %v849 = vpop.f32.mrf.mxu0
      %v850 = vpop.f32.mrf.mxu0
      %v851 = vadd.f32 %v307, %v850
      %v852 = vpop.f32.mrf.mxu0
      %853 = vmatprep.mubr.bf16.mxu0 0
      %854 = vmatmul.mubr.bf16.gmra.mxu0 %v582
      %v855 = vpop.f32.mrf.mxu0
      %v856 = vadd.f32 %v307, %v855
      %v857 = vpop.f32.mrf.mxu0
      %v858 = vpop.f32.mrf.mxu0
      %v859 = vadd.f32 %v307, %v858
      %v860 = vpop.f32.mrf.mxu0
      %861 = vmatprep.mubr.bf16.mxu0 0
      %862 = vmatmul.mubr.bf16.gmra.mxu0 %v585
      %v863 = vpop.f32.mrf.mxu0
      %v864 = vadd.f32 %v307, %v863
      %v865 = vpop.f32.mrf.mxu0
      %v866 = vpop.f32.mrf.mxu0
      %v867 = vadd.f32 %v307, %v866
      %v868 = vpop.f32.mrf.mxu0
      %869 = vmatprep.mubr.bf16.mxu0 0
      %870 = vmatmul.mubr.bf16.gmra.mxu0 %v588
      %v871 = vpop.f32.mrf.mxu0
      %v872 = vadd.f32 %v307, %v871
      %v873 = vpop.f32.mrf.mxu0
      %v874 = vpop.f32.mrf.mxu0
      %v875 = vadd.f32 %v307, %v874
      %v876 = vpop.f32.mrf.mxu0
      %877 = vmatprep.mubr.bf16.mxu0 0
      %878 = vmatmul.mubr.bf16.gmra.mxu0 %v591
      %v879 = vpop.f32.mrf.mxu0
      %v880 = vadd.f32 %v307, %v879
      %v881 = vpop.f32.mrf.mxu0
      %v882 = vpop.f32.mrf.mxu0
      %v883 = vadd.f32 %v307, %v882
      %v884 = vpop.f32.mrf.mxu0
      %885 = vdwg.mxu0
      %vm886 = vcmp.ge.f32.partialorder %v632, 0.0
      %vm887 = vcmp.ge.f32.partialorder %v635, 0.0
      %vm888 = vcmp.ge.f32.partialorder %v640, 0.0
      %vm889 = vcmp.ge.f32.partialorder %v643, 0.0
      %vm890 = vcmp.ge.f32.partialorder %v648, 0.0
      %vm891 = vcmp.ge.f32.partialorder %v651, 0.0
      %vm892 = vcmp.ge.f32.partialorder %v656, 0.0
      %vm893 = vcmp.ge.f32.partialorder %v659, 0.0
      %vm894 = vcmp.ge.f32.partialorder %v664, 0.0
      %vm895 = vcmp.ge.f32.partialorder %v667, 0.0
      %vm896 = vcmp.ge.f32.partialorder %v672, 0.0
      %vm897 = vcmp.ge.f32.partialorder %v675, 0.0
      %vm898 = vcmp.ge.f32.partialorder %v680, 0.0
      %vm899 = vcmp.ge.f32.partialorder %v683, 0.0
      %vm900 = vcmp.ge.f32.partialorder %v688, 0.0
      %vm901 = vcmp.ge.f32.partialorder %v691, 0.0
      %vm902 = vcmp.ge.f32.partialorder %v696, 0.0
      %vm903 = vcmp.ge.f32.partialorder %v699, 0.0
      %vm904 = vcmp.ge.f32.partialorder %v704, 0.0
      %vm905 = vcmp.ge.f32.partialorder %v707, 0.0
      %vm906 = vcmp.ge.f32.partialorder %v712, 0.0
      %vm907 = vcmp.ge.f32.partialorder %v715, 0.0
      %vm908 = vcmp.ge.f32.partialorder %v720, 0.0
      %vm909 = vcmp.ge.f32.partialorder %v723, 0.0
      %vm910 = vcmp.ge.f32.partialorder %v728, 0.0
      %vm911 = vcmp.ge.f32.partialorder %v731, 0.0
      %vm912 = vcmp.ge.f32.partialorder %v736, 0.0
      %vm913 = vcmp.ge.f32.partialorder %v739, 0.0
      %vm914 = vcmp.ge.f32.partialorder %v744, 0.0
      %vm915 = vcmp.ge.f32.partialorder %v747, 0.0
      %vm916 = vcmp.ge.f32.partialorder %v752, 0.0
      %vm917 = vcmp.ge.f32.partialorder %v755, 0.0
      %vm918 = vcmp.ge.f32.partialorder %v760, 0.0
      %vm919 = vcmp.ge.f32.partialorder %v763, 0.0
      %vm920 = vcmp.ge.f32.partialorder %v768, 0.0
      %vm921 = vcmp.ge.f32.partialorder %v771, 0.0
      %vm922 = vcmp.ge.f32.partialorder %v776, 0.0
      %vm923 = vcmp.ge.f32.partialorder %v779, 0.0
      %vm924 = vcmp.ge.f32.partialorder %v784, 0.0
      %vm925 = vcmp.ge.f32.partialorder %v787, 0.0
      %vm926 = vcmp.ge.f32.partialorder %v792, 0.0
      %vm927 = vcmp.ge.f32.partialorder %v795, 0.0
      %vm928 = vcmp.ge.f32.partialorder %v800, 0.0
      %vm929 = vcmp.ge.f32.partialorder %v803, 0.0
      %vm930 = vcmp.ge.f32.partialorder %v808, 0.0
      %vm931 = vcmp.ge.f32.partialorder %v811, 0.0
      %vm932 = vcmp.ge.f32.partialorder %v816, 0.0
      %vm933 = vcmp.ge.f32.partialorder %v819, 0.0
      %vm934 = vcmp.ge.f32.partialorder %v824, 0.0
      %vm935 = vcmp.ge.f32.partialorder %v827, 0.0
      %vm936 = vcmp.ge.f32.partialorder %v832, 0.0
      %vm937 = vcmp.ge.f32.partialorder %v835, 0.0
      %vm938 = vcmp.ge.f32.partialorder %v840, 0.0
      %vm939 = vcmp.ge.f32.partialorder %v843, 0.0
      %vm940 = vcmp.ge.f32.partialorder %v848, 0.0
      %vm941 = vcmp.ge.f32.partialorder %v851, 0.0
      %vm942 = vcmp.ge.f32.partialorder %v856, 0.0
      %vm943 = vcmp.ge.f32.partialorder %v859, 0.0
      %vm944 = vcmp.ge.f32.partialorder %v864, 0.0
      %vm945 = vcmp.ge.f32.partialorder %v867, 0.0
      %vm946 = vcmp.ge.f32.partialorder %v872, 0.0
      %vm947 = vcmp.ge.f32.partialorder %v875, 0.0
      %vm948 = vcmp.ge.f32.partialorder %v880, 0.0
      %vm949 = vcmp.ge.f32.partialorder %v883, 0.0
      %v950 = vmul.f32 %v632, 0.01
      %v951 = vmul.f32 %v635, 0.01
      %v952 = vmul.f32 %v640, 0.01
      %v953 = vmul.f32 %v643, 0.01
      %v954 = vmul.f32 %v648, 0.01
      %v955 = vmul.f32 %v651, 0.01
      %v956 = vmul.f32 %v656, 0.01
      %v957 = vmul.f32 %v659, 0.01
      %v958 = vmul.f32 %v664, 0.01
      %v959 = vmul.f32 %v667, 0.01
      %v960 = vmul.f32 %v672, 0.01
      %v961 = vmul.f32 %v675, 0.01
      %v962 = vmul.f32 %v680, 0.01
      %v963 = vmul.f32 %v683, 0.01
      %v964 = vmul.f32 %v688, 0.01
      %v965 = vmul.f32 %v691, 0.01
      %v966 = vmul.f32 %v696, 0.01
      %v967 = vmul.f32 %v699, 0.01
      %v968 = vmul.f32 %v704, 0.01
      %v969 = vmul.f32 %v707, 0.01
      %v970 = vmul.f32 %v712, 0.01
      %v971 = vmul.f32 %v715, 0.01
      %v972 = vmul.f32 %v720, 0.01
      %v973 = vmul.f32 %v723, 0.01
      %v974 = vmul.f32 %v728, 0.01
      %v975 = vmul.f32 %v731, 0.01
      %v976 = vmul.f32 %v736, 0.01
      %v977 = vmul.f32 %v739, 0.01
      %v978 = vmul.f32 %v744, 0.01
      %v979 = vmul.f32 %v747, 0.01
      %v980 = vmul.f32 %v752, 0.01
      %v981 = vmul.f32 %v755, 0.01
      %v982 = vmul.f32 %v760, 0.01
      %v983 = vmul.f32 %v763, 0.01
      %v984 = vmul.f32 %v768, 0.01
      %v985 = vmul.f32 %v771, 0.01
      %v986 = vmul.f32 %v776, 0.01
      %v987 = vmul.f32 %v779, 0.01
      %v988 = vmul.f32 %v784, 0.01
      %v989 = vmul.f32 %v787, 0.01
      %v990 = vmul.f32 %v792, 0.01
      %v991 = vmul.f32 %v795, 0.01
      %v992 = vmul.f32 %v800, 0.01
      %v993 = vmul.f32 %v803, 0.01
      %v994 = vmul.f32 %v808, 0.01
      %v995 = vmul.f32 %v811, 0.01
      %v996 = vmul.f32 %v816, 0.01
      %v997 = vmul.f32 %v819, 0.01
      %v998 = vmul.f32 %v824, 0.01
      %v999 = vmul.f32 %v827, 0.01
      %v1000 = vmul.f32 %v832, 0.01
      %v1001 = vmul.f32 %v835, 0.01
      %v1002 = vmul.f32 %v840, 0.01
      %v1003 = vmul.f32 %v843, 0.01
      %v1004 = vmul.f32 %v848, 0.01
      %v1005 = vmul.f32 %v851, 0.01
      %v1006 = vmul.f32 %v856, 0.01
      %v1007 = vmul.f32 %v859, 0.01
      %v1008 = vmul.f32 %v864, 0.01
      %v1009 = vmul.f32 %v867, 0.01
      %v1010 = vmul.f32 %v872, 0.01
      %v1011 = vmul.f32 %v875, 0.01
      %v1012 = vmul.f32 %v880, 0.01
      %v1013 = vmul.f32 %v883, 0.01
      %v1014 = vsel %vm886, %v632, %v950
      %v1015 = vsel %vm887, %v635, %v951
      %v1016 = vsel %vm888, %v640, %v952
      %v1017 = vsel %vm889, %v643, %v953
      %v1018 = vsel %vm890, %v648, %v954
      %v1019 = vsel %vm891, %v651, %v955
      %v1020 = vsel %vm892, %v656, %v956
      %v1021 = vsel %vm893, %v659, %v957
      %v1022 = vsel %vm894, %v664, %v958
      %v1023 = vsel %vm895, %v667, %v959
      %v1024 = vsel %vm896, %v672, %v960
      %v1025 = vsel %vm897, %v675, %v961
      %v1026 = vsel %vm898, %v680, %v962
      %v1027 = vsel %vm899, %v683, %v963
      %v1028 = vsel %vm900, %v688, %v964
      %v1029 = vsel %vm901, %v691, %v965
      %v1030 = vsel %vm902, %v696, %v966
      %v1031 = vsel %vm903, %v699, %v967
      %v1032 = vsel %vm904, %v704, %v968
      %v1033 = vsel %vm905, %v707, %v969
      %v1034 = vsel %vm906, %v712, %v970
      %v1035 = vsel %vm907, %v715, %v971
      %v1036 = vsel %vm908, %v720, %v972
      %v1037 = vsel %vm909, %v723, %v973
      %v1038 = vsel %vm910, %v728, %v974
      %v1039 = vsel %vm911, %v731, %v975
      %v1040 = vsel %vm912, %v736, %v976
      %v1041 = vsel %vm913, %v739, %v977
      %v1042 = vsel %vm914, %v744, %v978
      %v1043 = vsel %vm915, %v747, %v979
      %v1044 = vsel %vm916, %v752, %v980
      %v1045 = vsel %vm917, %v755, %v981
      %v1046 = vsel %vm918, %v760, %v982
      %v1047 = vsel %vm919, %v763, %v983
      %v1048 = vsel %vm920, %v768, %v984
      %v1049 = vsel %vm921, %v771, %v985
      %v1050 = vsel %vm922, %v776, %v986
      %v1051 = vsel %vm923, %v779, %v987
      %v1052 = vsel %vm924, %v784, %v988
      %v1053 = vsel %vm925, %v787, %v989
      %v1054 = vsel %vm926, %v792, %v990
      %v1055 = vsel %vm927, %v795, %v991
      %v1056 = vsel %vm928, %v800, %v992
      %v1057 = vsel %vm929, %v803, %v993
      %v1058 = vsel %vm930, %v808, %v994
      %v1059 = vsel %vm931, %v811, %v995
      %v1060 = vsel %vm932, %v816, %v996
      %v1061 = vsel %vm933, %v819, %v997
      %v1062 = vsel %vm934, %v824, %v998
      %v1063 = vsel %vm935, %v827, %v999
      %v1064 = vsel %vm936, %v832, %v1000
      %v1065 = vsel %vm937, %v835, %v1001
      %v1066 = vsel %vm938, %v840, %v1002
      %v1067 = vsel %vm939, %v843, %v1003
      %v1068 = vsel %vm940, %v848, %v1004
      %v1069 = vsel %vm941, %v851, %v1005
      %v1070 = vsel %vm942, %v856, %v1006
      %v1071 = vsel %vm943, %v859, %v1007
      %v1072 = vsel %vm944, %v864, %v1008
      %v1073 = vsel %vm945, %v867, %v1009
      %v1074 = vsel %vm946, %v872, %v1010
      %v1075 = vsel %vm947, %v875, %v1011
      %v1076 = vsel %vm948, %v880, %v1012
      %v1077 = vsel %vm949, %v883, %v1013
      %v1078 = vld [vmem:[%s3] sm:$0x1]
      %v1080 = vlaneseq
      %v1081 = vshrl.u32 %v1080, 7
      %v1082 = vsub.s32 0, %v1081
      %v1083 = vrot.slane %v1078, %v1082
      %v1085 = vmul.f32 %v1014, %v1083
      %v1086 = vmul.f32 %v1015, %v1083
      %v1087 = vmul.f32 %v1016, %v1083
      %v1088 = vmul.f32 %v1017, %v1083
      %v1089 = vmul.f32 %v1018, %v1083
      %v1090 = vmul.f32 %v1019, %v1083
      %v1091 = vmul.f32 %v1020, %v1083
      %v1092 = vmul.f32 %v1021, %v1083
      %v1093 = vmul.f32 %v1022, %v1083
      %v1094 = vmul.f32 %v1023, %v1083
      %v1095 = vmul.f32 %v1024, %v1083
      %v1096 = vmul.f32 %v1025, %v1083
      %v1097 = vmul.f32 %v1026, %v1083
      %v1098 = vmul.f32 %v1027, %v1083
      %v1099 = vmul.f32 %v1028, %v1083
      %v1100 = vmul.f32 %v1029, %v1083
      %v1101 = vmul.f32 %v1030, %v1083
      %v1102 = vmul.f32 %v1031, %v1083
      %v1103 = vmul.f32 %v1032, %v1083
      %v1104 = vmul.f32 %v1033, %v1083
      %v1105 = vmul.f32 %v1034, %v1083
      %v1106 = vmul.f32 %v1035, %v1083
      %v1107 = vmul.f32 %v1036, %v1083
      %v1108 = vmul.f32 %v1037, %v1083
      %v1109 = vmul.f32 %v1038, %v1083
      %v1110 = vmul.f32 %v1039, %v1083
      %v1111 = vmul.f32 %v1040, %v1083
      %v1112 = vmul.f32 %v1041, %v1083
      %v1113 = vmul.f32 %v1042, %v1083
      %v1114 = vmul.f32 %v1043, %v1083
      %v1115 = vmul.f32 %v1044, %v1083
      %v1116 = vmul.f32 %v1045, %v1083
      %v1117 = vmul.f32 %v1046, %v1083
      %v1118 = vmul.f32 %v1047, %v1083
      %v1119 = vmul.f32 %v1048, %v1083
      %v1120 = vmul.f32 %v1049, %v1083
      %v1121 = vmul.f32 %v1050, %v1083
      %v1122 = vmul.f32 %v1051, %v1083
      %v1123 = vmul.f32 %v1052, %v1083
      %v1124 = vmul.f32 %v1053, %v1083
      %v1125 = vmul.f32 %v1054, %v1083
      %v1126 = vmul.f32 %v1055, %v1083
      %v1127 = vmul.f32 %v1056, %v1083
      %v1128 = vmul.f32 %v1057, %v1083
      %v1129 = vmul.f32 %v1058, %v1083
      %v1130 = vmul.f32 %v1059, %v1083
      %v1131 = vmul.f32 %v1060, %v1083
      %v1132 = vmul.f32 %v1061, %v1083
      %v1133 = vmul.f32 %v1062, %v1083
      %v1134 = vmul.f32 %v1063, %v1083
      %v1135 = vmul.f32 %v1064, %v1083
      %v1136 = vmul.f32 %v1065, %v1083
      %v1137 = vmul.f32 %v1066, %v1083
      %v1138 = vmul.f32 %v1067, %v1083
      %v1139 = vmul.f32 %v1068, %v1083
      %v1140 = vmul.f32 %v1069, %v1083
      %v1141 = vmul.f32 %v1070, %v1083
      %v1142 = vmul.f32 %v1071, %v1083
      %v1143 = vmul.f32 %v1072, %v1083
      %v1144 = vmul.f32 %v1073, %v1083
      %v1145 = vmul.f32 %v1074, %v1083
      %v1146 = vmul.f32 %v1075, %v1083
      %v1147 = vmul.f32 %v1076, %v1083
      %v1148 = vmul.f32 %v1077, %v1083
      %v1149 = vld [vmem:[%s4] sm:$0x1]
      %v1151 = vlaneseq
      %v1152 = vshrl.u32 %v1151, 7
      %v1153 = vsub.s32 0, %v1152
      %v1154 = vrot.slane %v1149, %v1153
      %v1156 = vadd.f32 %v1085, %v1154
      %v1157 = vadd.f32 %v1086, %v1154
      %v1158 = vadd.f32 %v1087, %v1154
      %v1159 = vadd.f32 %v1088, %v1154
      %v1160 = vadd.f32 %v1089, %v1154
      %v1161 = vadd.f32 %v1090, %v1154
      %v1162 = vadd.f32 %v1091, %v1154
      %v1163 = vadd.f32 %v1092, %v1154
      %v1164 = vadd.f32 %v1093, %v1154
      %v1165 = vadd.f32 %v1094, %v1154
      %v1166 = vadd.f32 %v1095, %v1154
      %v1167 = vadd.f32 %v1096, %v1154
      %v1168 = vadd.f32 %v1097, %v1154
      %v1169 = vadd.f32 %v1098, %v1154
      %v1170 = vadd.f32 %v1099, %v1154
      %v1171 = vadd.f32 %v1100, %v1154
      %v1172 = vadd.f32 %v1101, %v1154
      %v1173 = vadd.f32 %v1102, %v1154
      %v1174 = vadd.f32 %v1103, %v1154
      %v1175 = vadd.f32 %v1104, %v1154
      %v1176 = vadd.f32 %v1105, %v1154
      %v1177 = vadd.f32 %v1106, %v1154
      %v1178 = vadd.f32 %v1107, %v1154
      %v1179 = vadd.f32 %v1108, %v1154
      %v1180 = vadd.f32 %v1109, %v1154
      %v1181 = vadd.f32 %v1110, %v1154
      %v1182 = vadd.f32 %v1111, %v1154
      %v1183 = vadd.f32 %v1112, %v1154
      %v1184 = vadd.f32 %v1113, %v1154
      %v1185 = vadd.f32 %v1114, %v1154
      %v1186 = vadd.f32 %v1115, %v1154
      %v1187 = vadd.f32 %v1116, %v1154
      %v1188 = vadd.f32 %v1117, %v1154
      %v1189 = vadd.f32 %v1118, %v1154
      %v1190 = vadd.f32 %v1119, %v1154
      %v1191 = vadd.f32 %v1120, %v1154
      %v1192 = vadd.f32 %v1121, %v1154
      %v1193 = vadd.f32 %v1122, %v1154
      %v1194 = vadd.f32 %v1123, %v1154
      %v1195 = vadd.f32 %v1124, %v1154
      %v1196 = vadd.f32 %v1125, %v1154
      %v1197 = vadd.f32 %v1126, %v1154
      %v1198 = vadd.f32 %v1127, %v1154
      %v1199 = vadd.f32 %v1128, %v1154
      %v1200 = vadd.f32 %v1129, %v1154
      %v1201 = vadd.f32 %v1130, %v1154
      %v1202 = vadd.f32 %v1131, %v1154
      %v1203 = vadd.f32 %v1132, %v1154
      %v1204 = vadd.f32 %v1133, %v1154
      %v1205 = vadd.f32 %v1134, %v1154
      %v1206 = vadd.f32 %v1135, %v1154
      %v1207 = vadd.f32 %v1136, %v1154
      %v1208 = vadd.f32 %v1137, %v1154
      %v1209 = vadd.f32 %v1138, %v1154
      %v1210 = vadd.f32 %v1139, %v1154
      %v1211 = vadd.f32 %v1140, %v1154
      %v1212 = vadd.f32 %v1141, %v1154
      %v1213 = vadd.f32 %v1142, %v1154
      %v1214 = vadd.f32 %v1143, %v1154
      %v1215 = vadd.f32 %v1144, %v1154
      %v1216 = vadd.f32 %v1145, %v1154
      %v1217 = vadd.f32 %v1146, %v1154
      %v1218 = vadd.f32 %v1147, %v1154
      %v1219 = vadd.f32 %v1148, %v1154
      %vm1220 = vcmask 23552
      %1221 = vst.msk [vmem:[%s226] sm:$0xff] %vm1220, %v1156
      %1222 = vst.msk [vmem:[%s226 + $0x8] sm:$0xff] %vm1220, %v1157
      %1223 = vst.msk [vmem:[%s226 + $0x10] sm:$0xff] %vm1220, %v1158
      %1224 = vst.msk [vmem:[%s226 + $0x18] sm:$0xff] %vm1220, %v1159
      %1225 = vst.msk [vmem:[%s226 + $0x20] sm:$0xff] %vm1220, %v1160
      %1226 = vst.msk [vmem:[%s226 + $0x28] sm:$0xff] %vm1220, %v1161
      %1227 = vst.msk [vmem:[%s226 + $0x30] sm:$0xff] %vm1220, %v1162
      %1228 = vst.msk [vmem:[%s226 + $0x38] sm:$0xff] %vm1220, %v1163
      %1229 = vst.msk [vmem:[%s226 + $0x40] sm:$0xff] %vm1220, %v1164
      %1230 = vst.msk [vmem:[%s226 + $0x48] sm:$0xff] %vm1220, %v1165
      %1231 = vst.msk [vmem:[%s226 + $0x50] sm:$0xff] %vm1220, %v1166
      %1232 = vst.msk [vmem:[%s226 + $0x58] sm:$0xff] %vm1220, %v1167
      %1233 = vst.msk [vmem:[%s226 + $0x60] sm:$0xff] %vm1220, %v1168
      %1234 = vst.msk [vmem:[%s226 + $0x68] sm:$0xff] %vm1220, %v1169
      %1235 = vst.msk [vmem:[%s226 + $0x70] sm:$0xff] %vm1220, %v1170
      %1236 = vst.msk [vmem:[%s226 + $0x78] sm:$0xff] %vm1220, %v1171
      %1237 = vst.msk [vmem:[%s226 + $0x80] sm:$0xff] %vm1220, %v1172
      %1238 = vst.msk [vmem:[%s226 + $0x88] sm:$0xff] %vm1220, %v1173
      %1239 = vst.msk [vmem:[%s226 + $0x90] sm:$0xff] %vm1220, %v1174
      %1240 = vst.msk [vmem:[%s226 + $0x98] sm:$0xff] %vm1220, %v1175
      %1241 = vst.msk [vmem:[%s226 + $0xa0] sm:$0xff] %vm1220, %v1176
      %1242 = vst.msk [vmem:[%s226 + $0xa8] sm:$0xff] %vm1220, %v1177
      %1243 = vst.msk [vmem:[%s226 + $0xb0] sm:$0xff] %vm1220, %v1178
      %1244 = vst.msk [vmem:[%s226 + $0xb8] sm:$0xff] %vm1220, %v1179
      %1245 = vst.msk [vmem:[%s226 + $0xc0] sm:$0xff] %vm1220, %v1180
      %1246 = vst.msk [vmem:[%s226 + $0xc8] sm:$0xff] %vm1220, %v1181
      %1247 = vst.msk [vmem:[%s226 + $0xd0] sm:$0xff] %vm1220, %v1182
      %1248 = vst.msk [vmem:[%s226 + $0xd8] sm:$0xff] %vm1220, %v1183
      %1249 = vst.msk [vmem:[%s226 + $0xe0] sm:$0xff] %vm1220, %v1184
      %1250 = vst.msk [vmem:[%s226 + $0xe8] sm:$0xff] %vm1220, %v1185
      %1251 = vst.msk [vmem:[%s226 + $0xf0] sm:$0xff] %vm1220, %v1186
      %1252 = vst.msk [vmem:[%s226 + $0xf8] sm:$0xff] %vm1220, %v1187
      %1253 = vst.msk [vmem:[%s226 + $0x100] sm:$0xff] %vm1220, %v1188
      %1254 = vst.msk [vmem:[%s226 + $0x108] sm:$0xff] %vm1220, %v1189
      %1255 = vst.msk [vmem:[%s226 + $0x110] sm:$0xff] %vm1220, %v1190
      %1256 = vst.msk [vmem:[%s226 + $0x118] sm:$0xff] %vm1220, %v1191
      %1257 = vst.msk [vmem:[%s226 + $0x120] sm:$0xff] %vm1220, %v1192
      %1258 = vst.msk [vmem:[%s226 + $0x128] sm:$0xff] %vm1220, %v1193
      %1259 = vst.msk [vmem:[%s226 + $0x130] sm:$0xff] %vm1220, %v1194
      %1260 = vst.msk [vmem:[%s226 + $0x138] sm:$0xff] %vm1220, %v1195
      %1261 = vst.msk [vmem:[%s226 + $0x140] sm:$0xff] %vm1220, %v1196
      %1262 = vst.msk [vmem:[%s226 + $0x148] sm:$0xff] %vm1220, %v1197
      %1263 = vst.msk [vmem:[%s226 + $0x150] sm:$0xff] %vm1220, %v1198
      %1264 = vst.msk [vmem:[%s226 + $0x158] sm:$0xff] %vm1220, %v1199
      %1265 = vst.msk [vmem:[%s226 + $0x160] sm:$0xff] %vm1220, %v1200
      %1266 = vst.msk [vmem:[%s226 + $0x168] sm:$0xff] %vm1220, %v1201
      %1267 = vst.msk [vmem:[%s226 + $0x170] sm:$0xff] %vm1220, %v1202
      %1268 = vst.msk [vmem:[%s226 + $0x178] sm:$0xff] %vm1220, %v1203
      %1269 = vst.msk [vmem:[%s226 + $0x180] sm:$0xff] %vm1220, %v1204
      %1270 = vst.msk [vmem:[%s226 + $0x188] sm:$0xff] %vm1220, %v1205
      %1271 = vst.msk [vmem:[%s226 + $0x190] sm:$0xff] %vm1220, %v1206
      %1272 = vst.msk [vmem:[%s226 + $0x198] sm:$0xff] %vm1220, %v1207
      %1273 = vst.msk [vmem:[%s226 + $0x1a0] sm:$0xff] %vm1220, %v1208
      %1274 = vst.msk [vmem:[%s226 + $0x1a8] sm:$0xff] %vm1220, %v1209
      %1275 = vst.msk [vmem:[%s226 + $0x1b0] sm:$0xff] %vm1220, %v1210
      %1276 = vst.msk [vmem:[%s226 + $0x1b8] sm:$0xff] %vm1220, %v1211
      %1277 = vst.msk [vmem:[%s226 + $0x1c0] sm:$0xff] %vm1220, %v1212
      %1278 = vst.msk [vmem:[%s226 + $0x1c8] sm:$0xff] %vm1220, %v1213
      %1279 = vst.msk [vmem:[%s226 + $0x1d0] sm:$0xff] %vm1220, %v1214
      %1280 = vst.msk [vmem:[%s226 + $0x1d8] sm:$0xff] %vm1220, %v1215
      %1281 = vst.msk [vmem:[%s226 + $0x1e0] sm:$0xff] %vm1220, %v1216
      %1282 = vst.msk [vmem:[%s226 + $0x1e8] sm:$0xff] %vm1220, %v1217
      %1283 = vst.msk [vmem:[%s226 + $0x1f0] sm:$0xff] %vm1220, %v1218
      %1284 = vst.msk [vmem:[%s226 + $0x1f8] sm:$0xff] %vm1220, %v1219
      %s1285 = smul.u32 64, %s16
      %p1286 = scmp.lt.s32.totalorder %s1285, 255
      %s1287 = scalar_select %p1286, %s1285, 255
      %s1288 = smul.addr %s1287, 8
      %s1289 = scalar_lea.vmem %s5, %s1288
      // Predicated region
      $region41: #{decoder_forward.35} parent=39 // pred_check
        %p1290 = pneg %p144
      $region42: #{decoder_forward.35} parent=39 // pred_check_branch
        %1292 = sbr.rel (%p1290) target = $region44
      $region43: #{decoder_forward.35} parent=39 // pred_region
        %s1293 = smul.u32 64, %s16
      $region44: #{decoder_forward.35} parent=39 // pred_fallthru
        _
    $region40: #{decoder_forward.35} parent=5 // pred_fallthru
      _
    %p1294 = scmp.le.s32.totalorder 2, %s11
    // Predicated region
    $region45: #{decoder_forward.35} parent=5 // pred_check
      %p1295 = pneg %p1294
    $region46: #{decoder_forward.35} parent=5 // pred_check_branch
      %1297 = sbr.rel (%p1295) target = $region48
    $region47: #{decoder_forward.35} parent=5 // pred_region
      %s1298 = ssub.s32 %s11, 2
      // Predicated region
      $region49: #{decoder_forward.35} parent=47 // pred_check
        %p1299 = pneg %p150
      $region50: #{decoder_forward.35} parent=47 // pred_check_branch
        %1301 = sbr.rel (%p1299) target = $region52
      $region51: #{decoder_forward.35} parent=47 // pred_region
        %s1302 = smul.u32 64, %s17
        %p1303 = scmp.lt.s32.totalorder %s1302, 255
        %s1304 = scalar_select %p1303, %s1302, 255
        %s1305 = smul.addr %s1304, 8
        %s1306 = scalar_lea.vmem %s5, %s1305
      $region52: #{decoder_forward.35} parent=47 // pred_fallthru
        _
    $region48: #{decoder_forward.35} parent=5 // pred_fallthru
      _
  $region6: #{decoder_forward.35} parent=0 // loop_footer
    %s15 = sadd.s32 1, %s11
  $region7: #{decoder_forward.35} parent=0 // loop_footer_branch
    %10 = sbr.rel target = $region3
  $region8: #{decoder_forward.35} parent=0 // loop_exit
    _

</llo_original>
